<compile_context>
chip_gen: v7x
topology: tpu7x:2x2x1
jax: 0.10.0
libtpu: 0.0.40
codegen_flags: <defaults>
</compile_context>

<pallas_src>
import functools

import jax
import jax.numpy as jnp
import numpy as np
from jax import lax
from jax.experimental import pallas as pl
from jax.experimental.pallas import tpu as pltpu

HIDDEN = 64          # true hidden size of the module
HPAD = 128           # hidden padded to one full 128-lane vreg
IN_DIM = 6           # lstm1 input feature dim
T2, T3 = 8, 3        # forward() slices: out1[:, -8:], out2[:, -3:]


# ---------------------------------------------------------------------------
# Fused Pallas kernel: lstm1 -> lstm2(last 8) -> lstm3(last 3) -> fc
# ---------------------------------------------------------------------------
def _tclstm_kernel(x_ref,                       # (T1*Bp, IN_DIM) time-major, batch-padded
                   wih1_ref, whh1_ref, b1_ref,  # (IN_DIM,4Hp) (Hp,4Hp) (1,4Hp)
                   wih2_ref, whh2_ref, b2_ref,  # (Hp,4Hp)     (Hp,4Hp) (1,4Hp)
                   wih3_ref, whh3_ref, b3_ref,  # (Hp,4Hp)     (Hp,4Hp) (1,4Hp)
                   fw1_ref, fb1_ref,            # (Hp,Hp) (1,Hp)
                   fw2_ref, fb2_ref,            # (Hp,Hp) (1,Hp)   (only [:64,:2] real)
                   fc_ref,                      # out: (Bp, Hp)    (only [:B,:2] real)
                   dqn_ref,                     # out: (T3, Bp, Hp)
                   xp1, xp2, xp3,               # scratch: per-layer input projections
                   y1, y2):                     # scratch: inter-layer activations
    Bp = fc_ref.shape[0]
    Hp = y1.shape[-1]
    T1 = xp1.shape[0] // Bp
    t2 = xp2.shape[0] // Bp
    t3 = xp3.shape[0] // Bp

    def lstm(xp_ref, whh, T, store):
        # h/c carried as values (fully unrolled loop) -> stay in vregs.
        h = jnp.zeros((Bp, Hp), jnp.float32)
        c = jnp.zeros((Bp, Hp), jnp.float32)
        for t in range(T):  # static unroll; all slice starts are constants
            gates = xp_ref[pl.ds(t * Bp, Bp), :] + jnp.dot(
                h, whh, preferred_element_type=jnp.float32)      # (Bp, 4Hp)
            i = jax.nn.sigmoid(gates[:, 0 * Hp:1 * Hp])
            f = jax.nn.sigmoid(gates[:, 1 * Hp:2 * Hp])
            g = jnp.tanh(gates[:, 2 * Hp:3 * Hp])
            o = jax.nn.sigmoid(gates[:, 3 * Hp:4 * Hp])
            c = f * c + i * g
            h = o * jnp.tanh(c)
            store(t, h)
        return h

    # ---- layer 1: project whole sequence in one matmul, then recur ----
    xp1[...] = jnp.dot(x_ref[...], wih1_ref[...],
                       preferred_element_type=jnp.float32) + b1_ref[...]

    def store1(t, h):
        if t >= T1 - t2:                         # keep only the last 8 steps
            y1[pl.ds((t - (T1 - t2)) * Bp, Bp), :] = h

    lstm(xp1, whh1_ref[...], T1, store1)

    # ---- layer 2 on last 8 outputs of layer 1 ----
    xp2[...] = jnp.dot(y1[...], wih2_ref[...],
                       preferred_element_type=jnp.float32) + b2_ref[...]

    def store2(t, h):
        if t >= t2 - t3:                         # keep only the last 3 steps
            y2[pl.ds((t - (t2 - t3)) * Bp, Bp), :] = h

    lstm(xp2, whh2_ref[...], t2, store2)

    # ---- layer 3 on last 3 outputs of layer 2 ----
    xp3[...] = jnp.dot(y2[...], wih3_ref[...],
                       preferred_element_type=jnp.float32) + b3_ref[...]

    def store3(t, h):
        dqn_ref[t] = h                           # (Bp, Hp), static t

    h_last = lstm(xp3, whh3_ref[...], t3, store3)

    # ---- FC head epilogue (Linear(64,64) -> Linear(64,2), no activation) ----
    z = jnp.dot(h_last, fw1_ref[...], preferred_element_type=jnp.float32) + fb1_ref[...]
    fc_ref[...] = jnp.dot(z, fw2_ref[...], preferred_element_type=jnp.float32) + fb2_ref[...]


# ---------------------------------------------------------------------------
# One-time parameter preparation: transpose, combine biases, pad to 128 lanes
# ---------------------------------------------------------------------------
def _pad_gate_matrix(w, in_pad):
    """PyTorch (4H, in_dim) -> padded transposed (in_pad, 4*HPAD).

    Gate order i,f,g,o preserved; each gate block padded to 128 lanes with
    zeros, extra input rows (for H->HPAD padded inputs) are zero."""
    in_dim = w.shape[1]
    wt = w.T.astype(jnp.float32).reshape(in_dim, 4, HIDDEN)
    out = jnp.zeros((in_pad, 4, HPAD), jnp.float32)
    out = out.at[:in_dim, :, :HIDDEN].set(wt)
    return out.reshape(in_pad, 4 * HPAD)


def _pad_gate_bias(b_ih, b_hh):
    b = (b_ih + b_hh).astype(jnp.float32).reshape(4, HIDDEN)
    out = jnp.zeros((4, HPAD), jnp.float32)
    out = out.at[:, :HIDDEN].set(b)
    return out.reshape(1, 4 * HPAD)


def prepare_params(params):
    w_ih1, w_hh1, b_ih1, b_hh1 = params["lstm1"]
    w_ih2, w_hh2, b_ih2, b_hh2 = params["lstm2"]
    w_ih3, w_hh3, b_ih3, b_hh3 = params["lstm3"]
    fw1, fb1, fw2, fb2 = params["fc"]

    fw1_p = jnp.zeros((HPAD, HPAD), jnp.float32).at[:HIDDEN, :HIDDEN].set(
        fw1.T.astype(jnp.float32))
    fb1_p = jnp.zeros((1, HPAD), jnp.float32).at[0, :HIDDEN].set(fb1.astype(jnp.float32))
    fw2_p = jnp.zeros((HPAD, HPAD), jnp.float32).at[:HIDDEN, :2].set(
        fw2.T.astype(jnp.float32))
    fb2_p = jnp.zeros((1, HPAD), jnp.float32).at[0, :2].set(fb2.astype(jnp.float32))

    return dict(
        wih1=_pad_gate_matrix(w_ih1, IN_DIM), whh1=_pad_gate_matrix(w_hh1, HPAD),
        b1=_pad_gate_bias(b_ih1, b_hh1),
        wih2=_pad_gate_matrix(w_ih2, HPAD), whh2=_pad_gate_matrix(w_hh2, HPAD),
        b2=_pad_gate_bias(b_ih2, b_hh2),
        wih3=_pad_gate_matrix(w_ih3, HPAD), whh3=_pad_gate_matrix(w_hh3, HPAD),
        b3=_pad_gate_bias(b_ih3, b_hh3),
        fw1=fw1_p, fb1=fb1_p, fw2=fw2_p, fb2=fb2_p,
    )


# ---------------------------------------------------------------------------
# Forward: single fused pallas_call + tiny pre/post reshapes
# ---------------------------------------------------------------------------
def tclstm_forward(inputs, prepped):
    """inputs: (B, T, 6), T >= 8. Returns (outputs (B,2), DQN_Inputs (B,3,64))."""
    B, T, _ = inputs.shape
    assert T >= T2, "forward() slices out1[:, -8:], so T must be >= 8"
    Bp = max(8, ((B + 7) // 8) * 8)          # sublane-aligned batch

    # batch-first -> time-major, pad batch to Bp, flatten to (T*Bp, IN_DIM)
    x_tm = jnp.transpose(inputs.astype(jnp.float32), (1, 0, 2))
    x_tm = jnp.pad(x_tm, ((0, 0), (0, Bp - B), (0, 0)))
    x_flat = x_tm.reshape(T * Bp, IN_DIM)

    fc_out, dqn_tm = pl.pallas_call(
        _tclstm_kernel,
        out_shape=(
            jax.ShapeDtypeStruct((Bp, HPAD), jnp.float32),       # fc output (padded)
            jax.ShapeDtypeStruct((T3, Bp, HPAD), jnp.float32),   # layer-3 outputs
        ),
        in_specs=[pl.BlockSpec(memory_space=pltpu.MemorySpace.VMEM)] * 14,
        out_specs=(
            pl.BlockSpec(memory_space=pltpu.MemorySpace.VMEM),
            pl.BlockSpec(memory_space=pltpu.MemorySpace.VMEM),
        ),
        scratch_shapes=[
            pltpu.VMEM((T * Bp, 4 * HPAD), jnp.float32),    # xp1: layer-1 input proj
            pltpu.VMEM((T2 * Bp, 4 * HPAD), jnp.float32),   # xp2
            pltpu.VMEM((T3 * Bp, 4 * HPAD), jnp.float32),   # xp3
            pltpu.VMEM((T2 * Bp, HPAD), jnp.float32),       # y1: last 8 outputs of lstm1
            pltpu.VMEM((T3 * Bp, HPAD), jnp.float32),       # y2: last 3 outputs of lstm2
        ],
    )(
        x_flat,
        prepped["wih1"], prepped["whh1"], prepped["b1"],
        prepped["wih2"], prepped["whh2"], prepped["b2"],
        prepped["wih3"], prepped["whh3"], prepped["b3"],
        prepped["fw1"], prepped["fb1"], prepped["fw2"], prepped["fb2"],
    )

    outputs = fc_out[:B, :2]
    dqn_inputs = jnp.transpose(dqn_tm, (1, 0, 2))[:B, :, :HIDDEN]
    return outputs, dqn_inputs


# ---------------------------------------------------------------------------
# Deterministic parameter initialization (matches module shapes)
# ---------------------------------------------------------------------------
def init_params(key):
    def lstm_params(key, in_dim, hidden):
        k = 1.0 / np.sqrt(hidden)
        k1, k2, k3, k4 = jax.random.split(key, 4)
        w_ih = jax.random.uniform(k1, (4 * hidden, in_dim), jnp.float32, -k, k)
        w_hh = jax.random.uniform(k2, (4 * hidden, hidden), jnp.float32, -k, k)
        b_ih = jax.random.uniform(k3, (4 * hidden,), jnp.float32, -k, k)
        b_hh = jax.random.uniform(k4, (4 * hidden,), jnp.float32, -k, k)
        return (w_ih, w_hh, b_ih, b_hh)

    def xavier_uniform(key, shape):
        fan_out, fan_in = shape
        bound = np.sqrt(6.0 / (fan_in + fan_out))
        return jax.random.uniform(key, shape, jnp.float32, -bound, bound)

    k1, k2, k3, k4, k5 = jax.random.split(key, 5)
    return {
        "lstm1": lstm_params(k1, IN_DIM, HIDDEN),
        "lstm2": lstm_params(k2, HIDDEN, HIDDEN),
        "lstm3": lstm_params(k3, HIDDEN, HIDDEN),
        "fc": (
            xavier_uniform(k4, (HIDDEN, HIDDEN)),   # fc[0].weight
            jnp.zeros((HIDDEN,), jnp.float32),      # fc[0].bias
            xavier_uniform(k5, (2, HIDDEN)),        # fc[1].weight
            jnp.zeros((2,), jnp.float32),           # fc[1].bias
        ),
    }


# ---------------------------------------------------------------------------
# Pure-JAX reference (correctness check only)
# ---------------------------------------------------------------------------
def _lstm_ref(x_bt, w_ih, w_hh, b_ih, b_hh):
    B, T, _ = x_bt.shape
    H = w_hh.shape[1]
    bias = b_ih + b_hh

    def step(carry, x_t):
        h, c = carry
        gates = x_t @ w_ih.T + h @ w_hh.T + bias
        i = jax.nn.sigmoid(gates[:, 0:H])
        f = jax.nn.sigmoid(gates[:, H:2 * H])
        g = jnp.tanh(gates[:, 2 * H:3 * H])
        o = jax.nn.sigmoid(gates[:, 3 * H:4 * H])
        c = f * c + i * g
        h = o * jnp.tanh(c)
        return (h, c), h

    h0 = jnp.zeros((B, H), jnp.float32)
    c0 = jnp.zeros((B, H), jnp.float32)
    _, ys = lax.scan(step, (h0, c0), jnp.transpose(x_bt, (1, 0, 2)))
    return jnp.transpose(ys, (1, 0, 2))


def _forward_ref(inputs, params):
    out1 = _lstm_ref(inputs, *params["lstm1"])
    out2 = _lstm_ref(out1[:, -8:], *params["lstm2"])
    out3 = _lstm_ref(out2[:, -3:], *params["lstm3"])
    w1, b1, w2, b2 = params["fc"]
    outputs = (out3[:, -1] @ w1.T + b1) @ w2.T + b2
    return outputs, out3


# ---------------------------------------------------------------------------
if __name__ == "__main__":
    key = jax.random.PRNGKey(0)
    k_param, k_input = jax.random.split(key)

    B, T = 2, 16                                  # (batch, seq, 6), seq >= 8
    params = init_params(k_param)
    inputs = jax.random.normal(k_input, (B, T, IN_DIM), jnp.float32)

    prepped = prepare_params(params)              # one-time weight prep (outside jit)
    fwd = jax.jit(functools.partial(tclstm_forward, prepped=prepped))

    outputs, dqn_inputs = fwd(inputs)
    jax.block_until_ready((outputs, dqn_inputs))

    # Sanity check against a pure-JAX reference of the PyTorch semantics.
    ref_out, ref_dqn = _forward_ref(inputs, params)
    assert outputs.shape == (B, 2) and dqn_inputs.shape == (B, 3, HIDDEN)
    np.testing.assert_allclose(np.asarray(outputs), np.asarray(ref_out), atol=2e-4, rtol=2e-4)
    np.testing.assert_allclose(np.asarray(dqn_inputs), np.asarray(ref_dqn), atol=2e-4, rtol=2e-4)

    print("KERNEL_OK")
</pallas_src>

<mosaic_0001>
module attributes {stable_mosaic.version = 11 : i64} {
  func.func @_tclstm_kernel(%arg0: memref<128x6xf32, #tpu.memory_space<vmem>>, %arg1: memref<6x512xf32, #tpu.memory_space<vmem>>, %arg2: memref<128x512xf32, #tpu.memory_space<vmem>>, %arg3: memref<1x512xf32, #tpu.memory_space<vmem>>, %arg4: memref<128x512xf32, #tpu.memory_space<vmem>>, %arg5: memref<128x512xf32, #tpu.memory_space<vmem>>, %arg6: memref<1x512xf32, #tpu.memory_space<vmem>>, %arg7: memref<128x512xf32, #tpu.memory_space<vmem>>, %arg8: memref<128x512xf32, #tpu.memory_space<vmem>>, %arg9: memref<1x512xf32, #tpu.memory_space<vmem>>, %arg10: memref<128x128xf32, #tpu.memory_space<vmem>>, %arg11: memref<1x128xf32, #tpu.memory_space<vmem>>, %arg12: memref<128x128xf32, #tpu.memory_space<vmem>>, %arg13: memref<1x128xf32, #tpu.memory_space<vmem>>, %arg14: memref<8x128xf32, #tpu.memory_space<vmem>>, %arg15: memref<3x8x128xf32, #tpu.memory_space<vmem>>, %arg16: memref<128x512xf32, #tpu.memory_space<vmem>>, %arg17: memref<64x512xf32, #tpu.memory_space<vmem>>, %arg18: memref<24x512xf32, #tpu.memory_space<vmem>>, %arg19: memref<64x128xf32, #tpu.memory_space<vmem>>, %arg20: memref<24x128xf32, #tpu.memory_space<vmem>>) attributes {dimension_semantics = [], scalar_prefetch = 0 : i64, scratch_operands = 5 : i64, tpu.core_type = #tpu.core_type<tc>} {
    %c0 = arith.constant 0 : index
    %c0_0 = arith.constant 0 : index
    %0 = vector.load %arg0[%c0, %c0_0] : memref<128x6xf32, #tpu.memory_space<vmem>>, vector<128x6xf32>
    %c0_1 = arith.constant 0 : index
    %c0_2 = arith.constant 0 : index
    %1 = vector.load %arg1[%c0_1, %c0_2] : memref<6x512xf32, #tpu.memory_space<vmem>>, vector<6x512xf32>
    %cst = arith.constant dense<0.000000e+00> : vector<128x512xf32>
    %2 = tpu.matmul %0, %1, %cst {dimension_numbers = #tpu.dot_dimension_numbers<[1], [0], [0], [1], [0, 0, 1, 1], [], []>} : vector<128x6xf32>, vector<6x512xf32>, vector<128x512xf32> -> vector<128x512xf32>
    %c0_3 = arith.constant 0 : index
    %c0_4 = arith.constant 0 : index
    %3 = vector.load %arg3[%c0_3, %c0_4] : memref<1x512xf32, #tpu.memory_space<vmem>>, vector<1x512xf32>
    %4 = vector.broadcast %3 : vector<1x512xf32> to vector<128x512xf32>
    %5 = arith.addf %2, %4 : vector<128x512xf32>
    %c0_5 = arith.constant 0 : index
    %c0_6 = arith.constant 0 : index
    %6 = vector.load %arg16[%c0_5, %c0_6] : memref<128x512xf32, #tpu.memory_space<vmem>>, vector<128x512xf32>
    tpu.vector_store %arg16[%c0_5, %c0_6], %5 {strides = array<i32>} : memref<128x512xf32, #tpu.memory_space<vmem>>, vector<128x512xf32>,
    %c0_7 = arith.constant 0 : index
    %c0_8 = arith.constant 0 : index
    %7 = vector.load %arg2[%c0_7, %c0_8] : memref<128x512xf32, #tpu.memory_space<vmem>>, vector<128x512xf32>
    %cst_9 = arith.constant 0.000000e+00 : f32
    %8 = vector.broadcast %cst_9 : f32 to vector<8x128xf32>
    %cst_10 = arith.constant 0.000000e+00 : f32
    %9 = vector.broadcast %cst_10 : f32 to vector<8x128xf32>
    %c0_11 = arith.constant 0 : index
    %c0_12 = arith.constant 0 : index
    %10 = vector.load %arg16[%c0_11, %c0_12] : memref<128x512xf32, #tpu.memory_space<vmem>>, vector<8x512xf32>
    %cst_13 = arith.constant dense<0.000000e+00> : vector<8x512xf32>
    %11 = tpu.matmul %8, %7, %cst_13 {dimension_numbers = #tpu.dot_dimension_numbers<[1], [0], [0], [1], [0, 0, 1, 1], [], []>} : vector<8x128xf32>, vector<128x512xf32>, vector<8x512xf32> -> vector<8x512xf32>
    %12 = arith.addf %10, %11 : vector<8x512xf32>
    %13 = vector.extract_strided_slice %12 {offsets = [0, 0], sizes = [8, 128], strides = [1, 1]} : vector<8x512xf32> to vector<8x128xf32>
    %14 = arith.negf %13 : vector<8x128xf32>
    %15 = math.exp %14 : vector<8x128xf32>
    %cst_14 = arith.constant 1.000000e+00 : f32
    %16 = vector.broadcast %cst_14 : f32 to vector<8x128xf32>
    %17 = arith.addf %16, %15 : vector<8x128xf32>
    %18 = arith.divf %16, %17 : vector<8x128xf32>
    %19 = vector.extract_strided_slice %12 {offsets = [0, 128], sizes = [8, 128], strides = [1, 1]} : vector<8x512xf32> to vector<8x128xf32>
    %20 = arith.negf %19 : vector<8x128xf32>
    %21 = math.exp %20 : vector<8x128xf32>
    %cst_15 = arith.constant 1.000000e+00 : f32
    %22 = vector.broadcast %cst_15 : f32 to vector<8x128xf32>
    %23 = arith.addf %22, %21 : vector<8x128xf32>
    %24 = arith.divf %22, %23 : vector<8x128xf32>
    %25 = vector.extract_strided_slice %12 {offsets = [0, 256], sizes = [8, 128], strides = [1, 1]} : vector<8x512xf32> to vector<8x128xf32>
    %26 = math.tanh %25 : vector<8x128xf32>
    %27 = vector.extract_strided_slice %12 {offsets = [0, 384], sizes = [8, 128], strides = [1, 1]} : vector<8x512xf32> to vector<8x128xf32>
    %28 = arith.negf %27 : vector<8x128xf32>
    %29 = math.exp %28 : vector<8x128xf32>
    %cst_16 = arith.constant 1.000000e+00 : f32
    %30 = vector.broadcast %cst_16 : f32 to vector<8x128xf32>
    %31 = arith.addf %30, %29 : vector<8x128xf32>
    %32 = arith.divf %30, %31 : vector<8x128xf32>
    %33 = arith.mulf %24, %9 : vector<8x128xf32>
    %34 = arith.mulf %18, %26 : vector<8x128xf32>
    %35 = arith.addf %33, %34 : vector<8x128xf32>
    %36 = math.tanh %35 : vector<8x128xf32>
    %37 = arith.mulf %32, %36 : vector<8x128xf32>
    %c8 = arith.constant 8 : index
    %c0_17 = arith.constant 0 : index
    %38 = vector.load %arg16[%c8, %c0_17] : memref<128x512xf32, #tpu.memory_space<vmem>>, vector<8x512xf32>
    %cst_18 = arith.constant dense<0.000000e+00> : vector<8x512xf32>
    %39 = tpu.matmul %37, %7, %cst_18 {dimension_numbers = #tpu.dot_dimension_numbers<[1], [0], [0], [1], [0, 0, 1, 1], [], []>} : vector<8x128xf32>, vector<128x512xf32>, vector<8x512xf32> -> vector<8x512xf32>
    %40 = arith.addf %38, %39 : vector<8x512xf32>
    %41 = vector.extract_strided_slice %40 {offsets = [0, 0], sizes = [8, 128], strides = [1, 1]} : vector<8x512xf32> to vector<8x128xf32>
    %42 = arith.negf %41 : vector<8x128xf32>
    %43 = math.exp %42 : vector<8x128xf32>
    %cst_19 = arith.constant 1.000000e+00 : f32
    %44 = vector.broadcast %cst_19 : f32 to vector<8x128xf32>
    %45 = arith.addf %44, %43 : vector<8x128xf32>
    %46 = arith.divf %44, %45 : vector<8x128xf32>
    %47 = vector.extract_strided_slice %40 {offsets = [0, 128], sizes = [8, 128], strides = [1, 1]} : vector<8x512xf32> to vector<8x128xf32>
    %48 = arith.negf %47 : vector<8x128xf32>
    %49 = math.exp %48 : vector<8x128xf32>
    %cst_20 = arith.constant 1.000000e+00 : f32
    %50 = vector.broadcast %cst_20 : f32 to vector<8x128xf32>
    %51 = arith.addf %50, %49 : vector<8x128xf32>
    %52 = arith.divf %50, %51 : vector<8x128xf32>
    %53 = vector.extract_strided_slice %40 {offsets = [0, 256], sizes = [8, 128], strides = [1, 1]} : vector<8x512xf32> to vector<8x128xf32>
    %54 = math.tanh %53 : vector<8x128xf32>
    %55 = vector.extract_strided_slice %40 {offsets = [0, 384], sizes = [8, 128], strides = [1, 1]} : vector<8x512xf32> to vector<8x128xf32>
    %56 = arith.negf %55 : vector<8x128xf32>
    %57 = math.exp %56 : vector<8x128xf32>
    %cst_21 = arith.constant 1.000000e+00 : f32
    %58 = vector.broadcast %cst_21 : f32 to vector<8x128xf32>
    %59 = arith.addf %58, %57 : vector<8x128xf32>
    %60 = arith.divf %58, %59 : vector<8x128xf32>
    %61 = arith.mulf %52, %35 : vector<8x128xf32>
    %62 = arith.mulf %46, %54 : vector<8x128xf32>
    %63 = arith.addf %61, %62 : vector<8x128xf32>
    %64 = math.tanh %63 : vector<8x128xf32>
    %65 = arith.mulf %60, %64 : vector<8x128xf32>
    %c16 = arith.constant 16 : index
    %c0_22 = arith.constant 0 : index
    %66 = vector.load %arg16[%c16, %c0_22] : memref<128x512xf32, #tpu.memory_space<vmem>>, vector<8x512xf32>
    %cst_23 = arith.constant dense<0.000000e+00> : vector<8x512xf32>
    %67 = tpu.matmul %65, %7, %cst_23 {dimension_numbers = #tpu.dot_dimension_numbers<[1], [0], [0], [1], [0, 0, 1, 1], [], []>} : vector<8x128xf32>, vector<128x512xf32>, vector<8x512xf32> -> vector<8x512xf32>
    %68 = arith.addf %66, %67 : vector<8x512xf32>
    %69 = vector.extract_strided_slice %68 {offsets = [0, 0], sizes = [8, 128], strides = [1, 1]} : vector<8x512xf32> to vector<8x128xf32>
    %70 = arith.negf %69 : vector<8x128xf32>
    %71 = math.exp %70 : vector<8x128xf32>
    %cst_24 = arith.constant 1.000000e+00 : f32
    %72 = vector.broadcast %cst_24 : f32 to vector<8x128xf32>
    %73 = arith.addf %72, %71 : vector<8x128xf32>
    %74 = arith.divf %72, %73 : vector<8x128xf32>
    %75 = vector.extract_strided_slice %68 {offsets = [0, 128], sizes = [8, 128], strides = [1, 1]} : vector<8x512xf32> to vector<8x128xf32>
    %76 = arith.negf %75 : vector<8x128xf32>
    %77 = math.exp %76 : vector<8x128xf32>
    %cst_25 = arith.constant 1.000000e+00 : f32
    %78 = vector.broadcast %cst_25 : f32 to vector<8x128xf32>
    %79 = arith.addf %78, %77 : vector<8x128xf32>
    %80 = arith.divf %78, %79 : vector<8x128xf32>
    %81 = vector.extract_strided_slice %68 {offsets = [0, 256], sizes = [8, 128], strides = [1, 1]} : vector<8x512xf32> to vector<8x128xf32>
    %82 = math.tanh %81 : vector<8x128xf32>
    %83 = vector.extract_strided_slice %68 {offsets = [0, 384], sizes = [8, 128], strides = [1, 1]} : vector<8x512xf32> to vector<8x128xf32>
    %84 = arith.negf %83 : vector<8x128xf32>
    %85 = math.exp %84 : vector<8x128xf32>
    %cst_26 = arith.constant 1.000000e+00 : f32
    %86 = vector.broadcast %cst_26 : f32 to vector<8x128xf32>
    %87 = arith.addf %86, %85 : vector<8x128xf32>
    %88 = arith.divf %86, %87 : vector<8x128xf32>
    %89 = arith.mulf %80, %63 : vector<8x128xf32>
    %90 = arith.mulf %74, %82 : vector<8x128xf32>
    %91 = arith.addf %89, %90 : vector<8x128xf32>
    %92 = math.tanh %91 : vector<8x128xf32>
    %93 = arith.mulf %88, %92 : vector<8x128xf32>
    %c24 = arith.constant 24 : index
    %c0_27 = arith.constant 0 : index
    %94 = vector.load %arg16[%c24, %c0_27] : memref<128x512xf32, #tpu.memory_space<vmem>>, vector<8x512xf32>
    %cst_28 = arith.constant dense<0.000000e+00> : vector<8x512xf32>
    %95 = tpu.matmul %93, %7, %cst_28 {dimension_numbers = #tpu.dot_dimension_numbers<[1], [0], [0], [1], [0, 0, 1, 1], [], []>} : vector<8x128xf32>, vector<128x512xf32>, vector<8x512xf32> -> vector<8x512xf32>
    %96 = arith.addf %94, %95 : vector<8x512xf32>
    %97 = vector.extract_strided_slice %96 {offsets = [0, 0], sizes = [8, 128], strides = [1, 1]} : vector<8x512xf32> to vector<8x128xf32>
    %98 = arith.negf %97 : vector<8x128xf32>
    %99 = math.exp %98 : vector<8x128xf32>
    %cst_29 = arith.constant 1.000000e+00 : f32
    %100 = vector.broadcast %cst_29 : f32 to vector<8x128xf32>
    %101 = arith.addf %100, %99 : vector<8x128xf32>
    %102 = arith.divf %100, %101 : vector<8x128xf32>
    %103 = vector.extract_strided_slice %96 {offsets = [0, 128], sizes = [8, 128], strides = [1, 1]} : vector<8x512xf32> to vector<8x128xf32>
    %104 = arith.negf %103 : vector<8x128xf32>
    %105 = math.exp %104 : vector<8x128xf32>
    %cst_30 = arith.constant 1.000000e+00 : f32
    %106 = vector.broadcast %cst_30 : f32 to vector<8x128xf32>
    %107 = arith.addf %106, %105 : vector<8x128xf32>
    %108 = arith.divf %106, %107 : vector<8x128xf32>
    %109 = vector.extract_strided_slice %96 {offsets = [0, 256], sizes = [8, 128], strides = [1, 1]} : vector<8x512xf32> to vector<8x128xf32>
    %110 = math.tanh %109 : vector<8x128xf32>
    %111 = vector.extract_strided_slice %96 {offsets = [0, 384], sizes = [8, 128], strides = [1, 1]} : vector<8x512xf32> to vector<8x128xf32>
    %112 = arith.negf %111 : vector<8x128xf32>
    %113 = math.exp %112 : vector<8x128xf32>
    %cst_31 = arith.constant 1.000000e+00 : f32
    %114 = vector.broadcast %cst_31 : f32 to vector<8x128xf32>
    %115 = arith.addf %114, %113 : vector<8x128xf32>
    %116 = arith.divf %114, %115 : vector<8x128xf32>
    %117 = arith.mulf %108, %91 : vector<8x128xf32>
    %118 = arith.mulf %102, %110 : vector<8x128xf32>
    %119 = arith.addf %117, %118 : vector<8x128xf32>
    %120 = math.tanh %119 : vector<8x128xf32>
    %121 = arith.mulf %116, %120 : vector<8x128xf32>
    %c32 = arith.constant 32 : index
    %c0_32 = arith.constant 0 : index
    %122 = vector.load %arg16[%c32, %c0_32] : memref<128x512xf32, #tpu.memory_space<vmem>>, vector<8x512xf32>
    %cst_33 = arith.constant dense<0.000000e+00> : vector<8x512xf32>
    %123 = tpu.matmul %121, %7, %cst_33 {dimension_numbers = #tpu.dot_dimension_numbers<[1], [0], [0], [1], [0, 0, 1, 1], [], []>} : vector<8x128xf32>, vector<128x512xf32>, vector<8x512xf32> -> vector<8x512xf32>
    %124 = arith.addf %122, %123 : vector<8x512xf32>
    %125 = vector.extract_strided_slice %124 {offsets = [0, 0], sizes = [8, 128], strides = [1, 1]} : vector<8x512xf32> to vector<8x128xf32>
    %126 = arith.negf %125 : vector<8x128xf32>
    %127 = math.exp %126 : vector<8x128xf32>
    %cst_34 = arith.constant 1.000000e+00 : f32
    %128 = vector.broadcast %cst_34 : f32 to vector<8x128xf32>
    %129 = arith.addf %128, %127 : vector<8x128xf32>
    %130 = arith.divf %128, %129 : vector<8x128xf32>
    %131 = vector.extract_strided_slice %124 {offsets = [0, 128], sizes = [8, 128], strides = [1, 1]} : vector<8x512xf32> to vector<8x128xf32>
    %132 = arith.negf %131 : vector<8x128xf32>
    %133 = math.exp %132 : vector<8x128xf32>
    %cst_35 = arith.constant 1.000000e+00 : f32
    %134 = vector.broadcast %cst_35 : f32 to vector<8x128xf32>
    %135 = arith.addf %134, %133 : vector<8x128xf32>
    %136 = arith.divf %134, %135 : vector<8x128xf32>
    %137 = vector.extract_strided_slice %124 {offsets = [0, 256], sizes = [8, 128], strides = [1, 1]} : vector<8x512xf32> to vector<8x128xf32>
    %138 = math.tanh %137 : vector<8x128xf32>
    %139 = vector.extract_strided_slice %124 {offsets = [0, 384], sizes = [8, 128], strides = [1, 1]} : vector<8x512xf32> to vector<8x128xf32>
    %140 = arith.negf %139 : vector<8x128xf32>
    %141 = math.exp %140 : vector<8x128xf32>
    %cst_36 = arith.constant 1.000000e+00 : f32
    %142 = vector.broadcast %cst_36 : f32 to vector<8x128xf32>
    %143 = arith.addf %142, %141 : vector<8x128xf32>
    %144 = arith.divf %142, %143 : vector<8x128xf32>
    %145 = arith.mulf %136, %119 : vector<8x128xf32>
    %146 = arith.mulf %130, %138 : vector<8x128xf32>
    %147 = arith.addf %145, %146 : vector<8x128xf32>
    %148 = math.tanh %147 : vector<8x128xf32>
    %149 = arith.mulf %144, %148 : vector<8x128xf32>
    %c40 = arith.constant 40 : index
    %c0_37 = arith.constant 0 : index
    %150 = vector.load %arg16[%c40, %c0_37] : memref<128x512xf32, #tpu.memory_space<vmem>>, vector<8x512xf32>
    %cst_38 = arith.constant dense<0.000000e+00> : vector<8x512xf32>
    %151 = tpu.matmul %149, %7, %cst_38 {dimension_numbers = #tpu.dot_dimension_numbers<[1], [0], [0], [1], [0, 0, 1, 1], [], []>} : vector<8x128xf32>, vector<128x512xf32>, vector<8x512xf32> -> vector<8x512xf32>
    %152 = arith.addf %150, %151 : vector<8x512xf32>
    %153 = vector.extract_strided_slice %152 {offsets = [0, 0], sizes = [8, 128], strides = [1, 1]} : vector<8x512xf32> to vector<8x128xf32>
    %154 = arith.negf %153 : vector<8x128xf32>
    %155 = math.exp %154 : vector<8x128xf32>
    %cst_39 = arith.constant 1.000000e+00 : f32
    %156 = vector.broadcast %cst_39 : f32 to vector<8x128xf32>
    %157 = arith.addf %156, %155 : vector<8x128xf32>
    %158 = arith.divf %156, %157 : vector<8x128xf32>
    %159 = vector.extract_strided_slice %152 {offsets = [0, 128], sizes = [8, 128], strides = [1, 1]} : vector<8x512xf32> to vector<8x128xf32>
    %160 = arith.negf %159 : vector<8x128xf32>
    %161 = math.exp %160 : vector<8x128xf32>
    %cst_40 = arith.constant 1.000000e+00 : f32
    %162 = vector.broadcast %cst_40 : f32 to vector<8x128xf32>
    %163 = arith.addf %162, %161 : vector<8x128xf32>
    %164 = arith.divf %162, %163 : vector<8x128xf32>
    %165 = vector.extract_strided_slice %152 {offsets = [0, 256], sizes = [8, 128], strides = [1, 1]} : vector<8x512xf32> to vector<8x128xf32>
    %166 = math.tanh %165 : vector<8x128xf32>
    %167 = vector.extract_strided_slice %152 {offsets = [0, 384], sizes = [8, 128], strides = [1, 1]} : vector<8x512xf32> to vector<8x128xf32>
    %168 = arith.negf %167 : vector<8x128xf32>
    %169 = math.exp %168 : vector<8x128xf32>
    %cst_41 = arith.constant 1.000000e+00 : f32
    %170 = vector.broadcast %cst_41 : f32 to vector<8x128xf32>
    %171 = arith.addf %170, %169 : vector<8x128xf32>
    %172 = arith.divf %170, %171 : vector<8x128xf32>
    %173 = arith.mulf %164, %147 : vector<8x128xf32>
    %174 = arith.mulf %158, %166 : vector<8x128xf32>
    %175 = arith.addf %173, %174 : vector<8x128xf32>
    %176 = math.tanh %175 : vector<8x128xf32>
    %177 = arith.mulf %172, %176 : vector<8x128xf32>
    %c48 = arith.constant 48 : index
    %c0_42 = arith.constant 0 : index
    %178 = vector.load %arg16[%c48, %c0_42] : memref<128x512xf32, #tpu.memory_space<vmem>>, vector<8x512xf32>
    %cst_43 = arith.constant dense<0.000000e+00> : vector<8x512xf32>
    %179 = tpu.matmul %177, %7, %cst_43 {dimension_numbers = #tpu.dot_dimension_numbers<[1], [0], [0], [1], [0, 0, 1, 1], [], []>} : vector<8x128xf32>, vector<128x512xf32>, vector<8x512xf32> -> vector<8x512xf32>
    %180 = arith.addf %178, %179 : vector<8x512xf32>
    %181 = vector.extract_strided_slice %180 {offsets = [0, 0], sizes = [8, 128], strides = [1, 1]} : vector<8x512xf32> to vector<8x128xf32>
    %182 = arith.negf %181 : vector<8x128xf32>
    %183 = math.exp %182 : vector<8x128xf32>
    %cst_44 = arith.constant 1.000000e+00 : f32
    %184 = vector.broadcast %cst_44 : f32 to vector<8x128xf32>
    %185 = arith.addf %184, %183 : vector<8x128xf32>
    %186 = arith.divf %184, %185 : vector<8x128xf32>
    %187 = vector.extract_strided_slice %180 {offsets = [0, 128], sizes = [8, 128], strides = [1, 1]} : vector<8x512xf32> to vector<8x128xf32>
    %188 = arith.negf %187 : vector<8x128xf32>
    %189 = math.exp %188 : vector<8x128xf32>
    %cst_45 = arith.constant 1.000000e+00 : f32
    %190 = vector.broadcast %cst_45 : f32 to vector<8x128xf32>
    %191 = arith.addf %190, %189 : vector<8x128xf32>
    %192 = arith.divf %190, %191 : vector<8x128xf32>
    %193 = vector.extract_strided_slice %180 {offsets = [0, 256], sizes = [8, 128], strides = [1, 1]} : vector<8x512xf32> to vector<8x128xf32>
    %194 = math.tanh %193 : vector<8x128xf32>
    %195 = vector.extract_strided_slice %180 {offsets = [0, 384], sizes = [8, 128], strides = [1, 1]} : vector<8x512xf32> to vector<8x128xf32>
    %196 = arith.negf %195 : vector<8x128xf32>
    %197 = math.exp %196 : vector<8x128xf32>
    %cst_46 = arith.constant 1.000000e+00 : f32
    %198 = vector.broadcast %cst_46 : f32 to vector<8x128xf32>
    %199 = arith.addf %198, %197 : vector<8x128xf32>
    %200 = arith.divf %198, %199 : vector<8x128xf32>
    %201 = arith.mulf %192, %175 : vector<8x128xf32>
    %202 = arith.mulf %186, %194 : vector<8x128xf32>
    %203 = arith.addf %201, %202 : vector<8x128xf32>
    %204 = math.tanh %203 : vector<8x128xf32>
    %205 = arith.mulf %200, %204 : vector<8x128xf32>
    %c56 = arith.constant 56 : index
    %c0_47 = arith.constant 0 : index
    %206 = vector.load %arg16[%c56, %c0_47] : memref<128x512xf32, #tpu.memory_space<vmem>>, vector<8x512xf32>
    %cst_48 = arith.constant dense<0.000000e+00> : vector<8x512xf32>
    %207 = tpu.matmul %205, %7, %cst_48 {dimension_numbers = #tpu.dot_dimension_numbers<[1], [0], [0], [1], [0, 0, 1, 1], [], []>} : vector<8x128xf32>, vector<128x512xf32>, vector<8x512xf32> -> vector<8x512xf32>
    %208 = arith.addf %206, %207 : vector<8x512xf32>
    %209 = vector.extract_strided_slice %208 {offsets = [0, 0], sizes = [8, 128], strides = [1, 1]} : vector<8x512xf32> to vector<8x128xf32>
    %210 = arith.negf %209 : vector<8x128xf32>
    %211 = math.exp %210 : vector<8x128xf32>
    %cst_49 = arith.constant 1.000000e+00 : f32
    %212 = vector.broadcast %cst_49 : f32 to vector<8x128xf32>
    %213 = arith.addf %212, %211 : vector<8x128xf32>
    %214 = arith.divf %212, %213 : vector<8x128xf32>
    %215 = vector.extract_strided_slice %208 {offsets = [0, 128], sizes = [8, 128], strides = [1, 1]} : vector<8x512xf32> to vector<8x128xf32>
    %216 = arith.negf %215 : vector<8x128xf32>
    %217 = math.exp %216 : vector<8x128xf32>
    %cst_50 = arith.constant 1.000000e+00 : f32
    %218 = vector.broadcast %cst_50 : f32 to vector<8x128xf32>
    %219 = arith.addf %218, %217 : vector<8x128xf32>
    %220 = arith.divf %218, %219 : vector<8x128xf32>
    %221 = vector.extract_strided_slice %208 {offsets = [0, 256], sizes = [8, 128], strides = [1, 1]} : vector<8x512xf32> to vector<8x128xf32>
    %222 = math.tanh %221 : vector<8x128xf32>
    %223 = vector.extract_strided_slice %208 {offsets = [0, 384], sizes = [8, 128], strides = [1, 1]} : vector<8x512xf32> to vector<8x128xf32>
    %224 = arith.negf %223 : vector<8x128xf32>
    %225 = math.exp %224 : vector<8x128xf32>
    %cst_51 = arith.constant 1.000000e+00 : f32
    %226 = vector.broadcast %cst_51 : f32 to vector<8x128xf32>
    %227 = arith.addf %226, %225 : vector<8x128xf32>
    %228 = arith.divf %226, %227 : vector<8x128xf32>
    %229 = arith.mulf %220, %203 : vector<8x128xf32>
    %230 = arith.mulf %214, %222 : vector<8x128xf32>
    %231 = arith.addf %229, %230 : vector<8x128xf32>
    %232 = math.tanh %231 : vector<8x128xf32>
    %233 = arith.mulf %228, %232 : vector<8x128xf32>
    %c64 = arith.constant 64 : index
    %c0_52 = arith.constant 0 : index
    %234 = vector.load %arg16[%c64, %c0_52] : memref<128x512xf32, #tpu.memory_space<vmem>>, vector<8x512xf32>
    %cst_53 = arith.constant dense<0.000000e+00> : vector<8x512xf32>
    %235 = tpu.matmul %233, %7, %cst_53 {dimension_numbers = #tpu.dot_dimension_numbers<[1], [0], [0], [1], [0, 0, 1, 1], [], []>} : vector<8x128xf32>, vector<128x512xf32>, vector<8x512xf32> -> vector<8x512xf32>
    %236 = arith.addf %234, %235 : vector<8x512xf32>
    %237 = vector.extract_strided_slice %236 {offsets = [0, 0], sizes = [8, 128], strides = [1, 1]} : vector<8x512xf32> to vector<8x128xf32>
    %238 = arith.negf %237 : vector<8x128xf32>
    %239 = math.exp %238 : vector<8x128xf32>
    %cst_54 = arith.constant 1.000000e+00 : f32
    %240 = vector.broadcast %cst_54 : f32 to vector<8x128xf32>
    %241 = arith.addf %240, %239 : vector<8x128xf32>
    %242 = arith.divf %240, %241 : vector<8x128xf32>
    %243 = vector.extract_strided_slice %236 {offsets = [0, 128], sizes = [8, 128], strides = [1, 1]} : vector<8x512xf32> to vector<8x128xf32>
    %244 = arith.negf %243 : vector<8x128xf32>
    %245 = math.exp %244 : vector<8x128xf32>
    %cst_55 = arith.constant 1.000000e+00 : f32
    %246 = vector.broadcast %cst_55 : f32 to vector<8x128xf32>
    %247 = arith.addf %246, %245 : vector<8x128xf32>
    %248 = arith.divf %246, %247 : vector<8x128xf32>
    %249 = vector.extract_strided_slice %236 {offsets = [0, 256], sizes = [8, 128], strides = [1, 1]} : vector<8x512xf32> to vector<8x128xf32>
    %250 = math.tanh %249 : vector<8x128xf32>
    %251 = vector.extract_strided_slice %236 {offsets = [0, 384], sizes = [8, 128], strides = [1, 1]} : vector<8x512xf32> to vector<8x128xf32>
    %252 = arith.negf %251 : vector<8x128xf32>
    %253 = math.exp %252 : vector<8x128xf32>
    %cst_56 = arith.constant 1.000000e+00 : f32
    %254 = vector.broadcast %cst_56 : f32 to vector<8x128xf32>
    %255 = arith.addf %254, %253 : vector<8x128xf32>
    %256 = arith.divf %254, %255 : vector<8x128xf32>
    %257 = arith.mulf %248, %231 : vector<8x128xf32>
    %258 = arith.mulf %242, %250 : vector<8x128xf32>
    %259 = arith.addf %257, %258 : vector<8x128xf32>
    %260 = math.tanh %259 : vector<8x128xf32>
    %261 = arith.mulf %256, %260 : vector<8x128xf32>
    %c0_57 = arith.constant 0 : index
    %c0_58 = arith.constant 0 : index
    %262 = vector.load %arg19[%c0_57, %c0_58] : memref<64x128xf32, #tpu.memory_space<vmem>>, vector<8x128xf32>
    tpu.vector_store %arg19[%c0_57, %c0_58], %261 {strides = array<i32>} : memref<64x128xf32, #tpu.memory_space<vmem>>, vector<8x128xf32>,
    %c72 = arith.constant 72 : index
    %c0_59 = arith.constant 0 : index
    %263 = vector.load %arg16[%c72, %c0_59] : memref<128x512xf32, #tpu.memory_space<vmem>>, vector<8x512xf32>
    %cst_60 = arith.constant dense<0.000000e+00> : vector<8x512xf32>
    %264 = tpu.matmul %261, %7, %cst_60 {dimension_numbers = #tpu.dot_dimension_numbers<[1], [0], [0], [1], [0, 0, 1, 1], [], []>} : vector<8x128xf32>, vector<128x512xf32>, vector<8x512xf32> -> vector<8x512xf32>
    %265 = arith.addf %263, %264 : vector<8x512xf32>
    %266 = vector.extract_strided_slice %265 {offsets = [0, 0], sizes = [8, 128], strides = [1, 1]} : vector<8x512xf32> to vector<8x128xf32>
    %267 = arith.negf %266 : vector<8x128xf32>
    %268 = math.exp %267 : vector<8x128xf32>
    %cst_61 = arith.constant 1.000000e+00 : f32
    %269 = vector.broadcast %cst_61 : f32 to vector<8x128xf32>
    %270 = arith.addf %269, %268 : vector<8x128xf32>
    %271 = arith.divf %269, %270 : vector<8x128xf32>
    %272 = vector.extract_strided_slice %265 {offsets = [0, 128], sizes = [8, 128], strides = [1, 1]} : vector<8x512xf32> to vector<8x128xf32>
    %273 = arith.negf %272 : vector<8x128xf32>
    %274 = math.exp %273 : vector<8x128xf32>
    %cst_62 = arith.constant 1.000000e+00 : f32
    %275 = vector.broadcast %cst_62 : f32 to vector<8x128xf32>
    %276 = arith.addf %275, %274 : vector<8x128xf32>
    %277 = arith.divf %275, %276 : vector<8x128xf32>
    %278 = vector.extract_strided_slice %265 {offsets = [0, 256], sizes = [8, 128], strides = [1, 1]} : vector<8x512xf32> to vector<8x128xf32>
    %279 = math.tanh %278 : vector<8x128xf32>
    %280 = vector.extract_strided_slice %265 {offsets = [0, 384], sizes = [8, 128], strides = [1, 1]} : vector<8x512xf32> to vector<8x128xf32>
    %281 = arith.negf %280 : vector<8x128xf32>
    %282 = math.exp %281 : vector<8x128xf32>
    %cst_63 = arith.constant 1.000000e+00 : f32
    %283 = vector.broadcast %cst_63 : f32 to vector<8x128xf32>
    %284 = arith.addf %283, %282 : vector<8x128xf32>
    %285 = arith.divf %283, %284 : vector<8x128xf32>
    %286 = arith.mulf %277, %259 : vector<8x128xf32>
    %287 = arith.mulf %271, %279 : vector<8x128xf32>
    %288 = arith.addf %286, %287 : vector<8x128xf32>
    %289 = math.tanh %288 : vector<8x128xf32>
    %290 = arith.mulf %285, %289 : vector<8x128xf32>
    %c8_64 = arith.constant 8 : index
    %c0_65 = arith.constant 0 : index
    %291 = vector.load %arg19[%c8_64, %c0_65] : memref<64x128xf32, #tpu.memory_space<vmem>>, vector<8x128xf32>
    tpu.vector_store %arg19[%c8_64, %c0_65], %290 {strides = array<i32>} : memref<64x128xf32, #tpu.memory_space<vmem>>, vector<8x128xf32>,
    %c80 = arith.constant 80 : index
    %c0_66 = arith.constant 0 : index
    %292 = vector.load %arg16[%c80, %c0_66] : memref<128x512xf32, #tpu.memory_space<vmem>>, vector<8x512xf32>
    %cst_67 = arith.constant dense<0.000000e+00> : vector<8x512xf32>
    %293 = tpu.matmul %290, %7, %cst_67 {dimension_numbers = #tpu.dot_dimension_numbers<[1], [0], [0], [1], [0, 0, 1, 1], [], []>} : vector<8x128xf32>, vector<128x512xf32>, vector<8x512xf32> -> vector<8x512xf32>
    %294 = arith.addf %292, %293 : vector<8x512xf32>
    %295 = vector.extract_strided_slice %294 {offsets = [0, 0], sizes = [8, 128], strides = [1, 1]} : vector<8x512xf32> to vector<8x128xf32>
    %296 = arith.negf %295 : vector<8x128xf32>
    %297 = math.exp %296 : vector<8x128xf32>
    %cst_68 = arith.constant 1.000000e+00 : f32
    %298 = vector.broadcast %cst_68 : f32 to vector<8x128xf32>
    %299 = arith.addf %298, %297 : vector<8x128xf32>
    %300 = arith.divf %298, %299 : vector<8x128xf32>
    %301 = vector.extract_strided_slice %294 {offsets = [0, 128], sizes = [8, 128], strides = [1, 1]} : vector<8x512xf32> to vector<8x128xf32>
    %302 = arith.negf %301 : vector<8x128xf32>
    %303 = math.exp %302 : vector<8x128xf32>
    %cst_69 = arith.constant 1.000000e+00 : f32
    %304 = vector.broadcast %cst_69 : f32 to vector<8x128xf32>
    %305 = arith.addf %304, %303 : vector<8x128xf32>
    %306 = arith.divf %304, %305 : vector<8x128xf32>
    %307 = vector.extract_strided_slice %294 {offsets = [0, 256], sizes = [8, 128], strides = [1, 1]} : vector<8x512xf32> to vector<8x128xf32>
    %308 = math.tanh %307 : vector<8x128xf32>
    %309 = vector.extract_strided_slice %294 {offsets = [0, 384], sizes = [8, 128], strides = [1, 1]} : vector<8x512xf32> to vector<8x128xf32>
    %310 = arith.negf %309 : vector<8x128xf32>
    %311 = math.exp %310 : vector<8x128xf32>
    %cst_70 = arith.constant 1.000000e+00 : f32
    %312 = vector.broadcast %cst_70 : f32 to vector<8x128xf32>
    %313 = arith.addf %312, %311 : vector<8x128xf32>
    %314 = arith.divf %312, %313 : vector<8x128xf32>
    %315 = arith.mulf %306, %288 : vector<8x128xf32>
    %316 = arith.mulf %300, %308 : vector<8x128xf32>
    %317 = arith.addf %315, %316 : vector<8x128xf32>
    %318 = math.tanh %317 : vector<8x128xf32>
    %319 = arith.mulf %314, %318 : vector<8x128xf32>
    %c16_71 = arith.constant 16 : index
    %c0_72 = arith.constant 0 : index
    %320 = vector.load %arg19[%c16_71, %c0_72] : memref<64x128xf32, #tpu.memory_space<vmem>>, vector<8x128xf32>
    tpu.vector_store %arg19[%c16_71, %c0_72], %319 {strides = array<i32>} : memref<64x128xf32, #tpu.memory_space<vmem>>, vector<8x128xf32>,
    %c88 = arith.constant 88 : index
    %c0_73 = arith.constant 0 : index
    %321 = vector.load %arg16[%c88, %c0_73] : memref<128x512xf32, #tpu.memory_space<vmem>>, vector<8x512xf32>
    %cst_74 = arith.constant dense<0.000000e+00> : vector<8x512xf32>
    %322 = tpu.matmul %319, %7, %cst_74 {dimension_numbers = #tpu.dot_dimension_numbers<[1], [0], [0], [1], [0, 0, 1, 1], [], []>} : vector<8x128xf32>, vector<128x512xf32>, vector<8x512xf32> -> vector<8x512xf32>
    %323 = arith.addf %321, %322 : vector<8x512xf32>
    %324 = vector.extract_strided_slice %323 {offsets = [0, 0], sizes = [8, 128], strides = [1, 1]} : vector<8x512xf32> to vector<8x128xf32>
    %325 = arith.negf %324 : vector<8x128xf32>
    %326 = math.exp %325 : vector<8x128xf32>
    %cst_75 = arith.constant 1.000000e+00 : f32
    %327 = vector.broadcast %cst_75 : f32 to vector<8x128xf32>
    %328 = arith.addf %327, %326 : vector<8x128xf32>
    %329 = arith.divf %327, %328 : vector<8x128xf32>
    %330 = vector.extract_strided_slice %323 {offsets = [0, 128], sizes = [8, 128], strides = [1, 1]} : vector<8x512xf32> to vector<8x128xf32>
    %331 = arith.negf %330 : vector<8x128xf32>
    %332 = math.exp %331 : vector<8x128xf32>
    %cst_76 = arith.constant 1.000000e+00 : f32
    %333 = vector.broadcast %cst_76 : f32 to vector<8x128xf32>
    %334 = arith.addf %333, %332 : vector<8x128xf32>
    %335 = arith.divf %333, %334 : vector<8x128xf32>
    %336 = vector.extract_strided_slice %323 {offsets = [0, 256], sizes = [8, 128], strides = [1, 1]} : vector<8x512xf32> to vector<8x128xf32>
    %337 = math.tanh %336 : vector<8x128xf32>
    %338 = vector.extract_strided_slice %323 {offsets = [0, 384], sizes = [8, 128], strides = [1, 1]} : vector<8x512xf32> to vector<8x128xf32>
    %339 = arith.negf %338 : vector<8x128xf32>
    %340 = math.exp %339 : vector<8x128xf32>
    %cst_77 = arith.constant 1.000000e+00 : f32
    %341 = vector.broadcast %cst_77 : f32 to vector<8x128xf32>
    %342 = arith.addf %341, %340 : vector<8x128xf32>
    %343 = arith.divf %341, %342 : vector<8x128xf32>
    %344 = arith.mulf %335, %317 : vector<8x128xf32>
    %345 = arith.mulf %329, %337 : vector<8x128xf32>
    %346 = arith.addf %344, %345 : vector<8x128xf32>
    %347 = math.tanh %346 : vector<8x128xf32>
    %348 = arith.mulf %343, %347 : vector<8x128xf32>
    %c24_78 = arith.constant 24 : index
    %c0_79 = arith.constant 0 : index
    %349 = vector.load %arg19[%c24_78, %c0_79] : memref<64x128xf32, #tpu.memory_space<vmem>>, vector<8x128xf32>
    tpu.vector_store %arg19[%c24_78, %c0_79], %348 {strides = array<i32>} : memref<64x128xf32, #tpu.memory_space<vmem>>, vector<8x128xf32>,
    %c96 = arith.constant 96 : index
    %c0_80 = arith.constant 0 : index
    %350 = vector.load %arg16[%c96, %c0_80] : memref<128x512xf32, #tpu.memory_space<vmem>>, vector<8x512xf32>
    %cst_81 = arith.constant dense<0.000000e+00> : vector<8x512xf32>
    %351 = tpu.matmul %348, %7, %cst_81 {dimension_numbers = #tpu.dot_dimension_numbers<[1], [0], [0], [1], [0, 0, 1, 1], [], []>} : vector<8x128xf32>, vector<128x512xf32>, vector<8x512xf32> -> vector<8x512xf32>
    %352 = arith.addf %350, %351 : vector<8x512xf32>
    %353 = vector.extract_strided_slice %352 {offsets = [0, 0], sizes = [8, 128], strides = [1, 1]} : vector<8x512xf32> to vector<8x128xf32>
    %354 = arith.negf %353 : vector<8x128xf32>
    %355 = math.exp %354 : vector<8x128xf32>
    %cst_82 = arith.constant 1.000000e+00 : f32
    %356 = vector.broadcast %cst_82 : f32 to vector<8x128xf32>
    %357 = arith.addf %356, %355 : vector<8x128xf32>
    %358 = arith.divf %356, %357 : vector<8x128xf32>
    %359 = vector.extract_strided_slice %352 {offsets = [0, 128], sizes = [8, 128], strides = [1, 1]} : vector<8x512xf32> to vector<8x128xf32>
    %360 = arith.negf %359 : vector<8x128xf32>
    %361 = math.exp %360 : vector<8x128xf32>
    %cst_83 = arith.constant 1.000000e+00 : f32
    %362 = vector.broadcast %cst_83 : f32 to vector<8x128xf32>
    %363 = arith.addf %362, %361 : vector<8x128xf32>
    %364 = arith.divf %362, %363 : vector<8x128xf32>
    %365 = vector.extract_strided_slice %352 {offsets = [0, 256], sizes = [8, 128], strides = [1, 1]} : vector<8x512xf32> to vector<8x128xf32>
    %366 = math.tanh %365 : vector<8x128xf32>
    %367 = vector.extract_strided_slice %352 {offsets = [0, 384], sizes = [8, 128], strides = [1, 1]} : vector<8x512xf32> to vector<8x128xf32>
    %368 = arith.negf %367 : vector<8x128xf32>
    %369 = math.exp %368 : vector<8x128xf32>
    %cst_84 = arith.constant 1.000000e+00 : f32
    %370 = vector.broadcast %cst_84 : f32 to vector<8x128xf32>
    %371 = arith.addf %370, %369 : vector<8x128xf32>
    %372 = arith.divf %370, %371 : vector<8x128xf32>
    %373 = arith.mulf %364, %346 : vector<8x128xf32>
    %374 = arith.mulf %358, %366 : vector<8x128xf32>
    %375 = arith.addf %373, %374 : vector<8x128xf32>
    %376 = math.tanh %375 : vector<8x128xf32>
    %377 = arith.mulf %372, %376 : vector<8x128xf32>
    %c32_85 = arith.constant 32 : index
    %c0_86 = arith.constant 0 : index
    %378 = vector.load %arg19[%c32_85, %c0_86] : memref<64x128xf32, #tpu.memory_space<vmem>>, vector<8x128xf32>
    tpu.vector_store %arg19[%c32_85, %c0_86], %377 {strides = array<i32>} : memref<64x128xf32, #tpu.memory_space<vmem>>, vector<8x128xf32>,
    %c104 = arith.constant 104 : index
    %c0_87 = arith.constant 0 : index
    %379 = vector.load %arg16[%c104, %c0_87] : memref<128x512xf32, #tpu.memory_space<vmem>>, vector<8x512xf32>
    %cst_88 = arith.constant dense<0.000000e+00> : vector<8x512xf32>
    %380 = tpu.matmul %377, %7, %cst_88 {dimension_numbers = #tpu.dot_dimension_numbers<[1], [0], [0], [1], [0, 0, 1, 1], [], []>} : vector<8x128xf32>, vector<128x512xf32>, vector<8x512xf32> -> vector<8x512xf32>
    %381 = arith.addf %379, %380 : vector<8x512xf32>
    %382 = vector.extract_strided_slice %381 {offsets = [0, 0], sizes = [8, 128], strides = [1, 1]} : vector<8x512xf32> to vector<8x128xf32>
    %383 = arith.negf %382 : vector<8x128xf32>
    %384 = math.exp %383 : vector<8x128xf32>
    %cst_89 = arith.constant 1.000000e+00 : f32
    %385 = vector.broadcast %cst_89 : f32 to vector<8x128xf32>
    %386 = arith.addf %385, %384 : vector<8x128xf32>
    %387 = arith.divf %385, %386 : vector<8x128xf32>
    %388 = vector.extract_strided_slice %381 {offsets = [0, 128], sizes = [8, 128], strides = [1, 1]} : vector<8x512xf32> to vector<8x128xf32>
    %389 = arith.negf %388 : vector<8x128xf32>
    %390 = math.exp %389 : vector<8x128xf32>
    %cst_90 = arith.constant 1.000000e+00 : f32
    %391 = vector.broadcast %cst_90 : f32 to vector<8x128xf32>
    %392 = arith.addf %391, %390 : vector<8x128xf32>
    %393 = arith.divf %391, %392 : vector<8x128xf32>
    %394 = vector.extract_strided_slice %381 {offsets = [0, 256], sizes = [8, 128], strides = [1, 1]} : vector<8x512xf32> to vector<8x128xf32>
    %395 = math.tanh %394 : vector<8x128xf32>
    %396 = vector.extract_strided_slice %381 {offsets = [0, 384], sizes = [8, 128], strides = [1, 1]} : vector<8x512xf32> to vector<8x128xf32>
    %397 = arith.negf %396 : vector<8x128xf32>
    %398 = math.exp %397 : vector<8x128xf32>
    %cst_91 = arith.constant 1.000000e+00 : f32
    %399 = vector.broadcast %cst_91 : f32 to vector<8x128xf32>
    %400 = arith.addf %399, %398 : vector<8x128xf32>
    %401 = arith.divf %399, %400 : vector<8x128xf32>
    %402 = arith.mulf %393, %375 : vector<8x128xf32>
    %403 = arith.mulf %387, %395 : vector<8x128xf32>
    %404 = arith.addf %402, %403 : vector<8x128xf32>
    %405 = math.tanh %404 : vector<8x128xf32>
    %406 = arith.mulf %401, %405 : vector<8x128xf32>
    %c40_92 = arith.constant 40 : index
    %c0_93 = arith.constant 0 : index
    %407 = vector.load %arg19[%c40_92, %c0_93] : memref<64x128xf32, #tpu.memory_space<vmem>>, vector<8x128xf32>
    tpu.vector_store %arg19[%c40_92, %c0_93], %406 {strides = array<i32>} : memref<64x128xf32, #tpu.memory_space<vmem>>, vector<8x128xf32>,
    %c112 = arith.constant 112 : index
    %c0_94 = arith.constant 0 : index
    %408 = vector.load %arg16[%c112, %c0_94] : memref<128x512xf32, #tpu.memory_space<vmem>>, vector<8x512xf32>
    %cst_95 = arith.constant dense<0.000000e+00> : vector<8x512xf32>
    %409 = tpu.matmul %406, %7, %cst_95 {dimension_numbers = #tpu.dot_dimension_numbers<[1], [0], [0], [1], [0, 0, 1, 1], [], []>} : vector<8x128xf32>, vector<128x512xf32>, vector<8x512xf32> -> vector<8x512xf32>
    %410 = arith.addf %408, %409 : vector<8x512xf32>
    %411 = vector.extract_strided_slice %410 {offsets = [0, 0], sizes = [8, 128], strides = [1, 1]} : vector<8x512xf32> to vector<8x128xf32>
    %412 = arith.negf %411 : vector<8x128xf32>
    %413 = math.exp %412 : vector<8x128xf32>
    %cst_96 = arith.constant 1.000000e+00 : f32
    %414 = vector.broadcast %cst_96 : f32 to vector<8x128xf32>
    %415 = arith.addf %414, %413 : vector<8x128xf32>
    %416 = arith.divf %414, %415 : vector<8x128xf32>
    %417 = vector.extract_strided_slice %410 {offsets = [0, 128], sizes = [8, 128], strides = [1, 1]} : vector<8x512xf32> to vector<8x128xf32>
    %418 = arith.negf %417 : vector<8x128xf32>
    %419 = math.exp %418 : vector<8x128xf32>
    %cst_97 = arith.constant 1.000000e+00 : f32
    %420 = vector.broadcast %cst_97 : f32 to vector<8x128xf32>
    %421 = arith.addf %420, %419 : vector<8x128xf32>
    %422 = arith.divf %420, %421 : vector<8x128xf32>
    %423 = vector.extract_strided_slice %410 {offsets = [0, 256], sizes = [8, 128], strides = [1, 1]} : vector<8x512xf32> to vector<8x128xf32>
    %424 = math.tanh %423 : vector<8x128xf32>
    %425 = vector.extract_strided_slice %410 {offsets = [0, 384], sizes = [8, 128], strides = [1, 1]} : vector<8x512xf32> to vector<8x128xf32>
    %426 = arith.negf %425 : vector<8x128xf32>
    %427 = math.exp %426 : vector<8x128xf32>
    %cst_98 = arith.constant 1.000000e+00 : f32
    %428 = vector.broadcast %cst_98 : f32 to vector<8x128xf32>
    %429 = arith.addf %428, %427 : vector<8x128xf32>
    %430 = arith.divf %428, %429 : vector<8x128xf32>
    %431 = arith.mulf %422, %404 : vector<8x128xf32>
    %432 = arith.mulf %416, %424 : vector<8x128xf32>
    %433 = arith.addf %431, %432 : vector<8x128xf32>
    %434 = math.tanh %433 : vector<8x128xf32>
    %435 = arith.mulf %430, %434 : vector<8x128xf32>
    %c48_99 = arith.constant 48 : index
    %c0_100 = arith.constant 0 : index
    %436 = vector.load %arg19[%c48_99, %c0_100] : memref<64x128xf32, #tpu.memory_space<vmem>>, vector<8x128xf32>
    tpu.vector_store %arg19[%c48_99, %c0_100], %435 {strides = array<i32>} : memref<64x128xf32, #tpu.memory_space<vmem>>, vector<8x128xf32>,
    %c120 = arith.constant 120 : index
    %c0_101 = arith.constant 0 : index
    %437 = vector.load %arg16[%c120, %c0_101] : memref<128x512xf32, #tpu.memory_space<vmem>>, vector<8x512xf32>
    %cst_102 = arith.constant dense<0.000000e+00> : vector<8x512xf32>
    %438 = tpu.matmul %435, %7, %cst_102 {dimension_numbers = #tpu.dot_dimension_numbers<[1], [0], [0], [1], [0, 0, 1, 1], [], []>} : vector<8x128xf32>, vector<128x512xf32>, vector<8x512xf32> -> vector<8x512xf32>
    %439 = arith.addf %437, %438 : vector<8x512xf32>
    %440 = vector.extract_strided_slice %439 {offsets = [0, 0], sizes = [8, 128], strides = [1, 1]} : vector<8x512xf32> to vector<8x128xf32>
    %441 = arith.negf %440 : vector<8x128xf32>
    %442 = math.exp %441 : vector<8x128xf32>
    %cst_103 = arith.constant 1.000000e+00 : f32
    %443 = vector.broadcast %cst_103 : f32 to vector<8x128xf32>
    %444 = arith.addf %443, %442 : vector<8x128xf32>
    %445 = arith.divf %443, %444 : vector<8x128xf32>
    %446 = vector.extract_strided_slice %439 {offsets = [0, 128], sizes = [8, 128], strides = [1, 1]} : vector<8x512xf32> to vector<8x128xf32>
    %447 = arith.negf %446 : vector<8x128xf32>
    %448 = math.exp %447 : vector<8x128xf32>
    %cst_104 = arith.constant 1.000000e+00 : f32
    %449 = vector.broadcast %cst_104 : f32 to vector<8x128xf32>
    %450 = arith.addf %449, %448 : vector<8x128xf32>
    %451 = arith.divf %449, %450 : vector<8x128xf32>
    %452 = vector.extract_strided_slice %439 {offsets = [0, 256], sizes = [8, 128], strides = [1, 1]} : vector<8x512xf32> to vector<8x128xf32>
    %453 = math.tanh %452 : vector<8x128xf32>
    %454 = vector.extract_strided_slice %439 {offsets = [0, 384], sizes = [8, 128], strides = [1, 1]} : vector<8x512xf32> to vector<8x128xf32>
    %455 = arith.negf %454 : vector<8x128xf32>
    %456 = math.exp %455 : vector<8x128xf32>
    %cst_105 = arith.constant 1.000000e+00 : f32
    %457 = vector.broadcast %cst_105 : f32 to vector<8x128xf32>
    %458 = arith.addf %457, %456 : vector<8x128xf32>
    %459 = arith.divf %457, %458 : vector<8x128xf32>
    %460 = arith.mulf %451, %433 : vector<8x128xf32>
    %461 = arith.mulf %445, %453 : vector<8x128xf32>
    %462 = arith.addf %460, %461 : vector<8x128xf32>
    %463 = math.tanh %462 : vector<8x128xf32>
    %464 = arith.mulf %459, %463 : vector<8x128xf32>
    %c56_106 = arith.constant 56 : index
    %c0_107 = arith.constant 0 : index
    %465 = vector.load %arg19[%c56_106, %c0_107] : memref<64x128xf32, #tpu.memory_space<vmem>>, vector<8x128xf32>
    tpu.vector_store %arg19[%c56_106, %c0_107], %464 {strides = array<i32>} : memref<64x128xf32, #tpu.memory_space<vmem>>, vector<8x128xf32>,
    %c0_108 = arith.constant 0 : index
    %c0_109 = arith.constant 0 : index
    %466 = vector.load %arg19[%c0_108, %c0_109] : memref<64x128xf32, #tpu.memory_space<vmem>>, vector<64x128xf32>
    %c0_110 = arith.constant 0 : index
    %c0_111 = arith.constant 0 : index
    %467 = vector.load %arg4[%c0_110, %c0_111] : memref<128x512xf32, #tpu.memory_space<vmem>>, vector<128x512xf32>
    %cst_112 = arith.constant dense<0.000000e+00> : vector<64x512xf32>
    %468 = tpu.matmul %466, %467, %cst_112 {dimension_numbers = #tpu.dot_dimension_numbers<[1], [0], [0], [1], [0, 0, 1, 1], [], []>} : vector<64x128xf32>, vector<128x512xf32>, vector<64x512xf32> -> vector<64x512xf32>
    %c0_113 = arith.constant 0 : index
    %c0_114 = arith.constant 0 : index
    %469 = vector.load %arg6[%c0_113, %c0_114] : memref<1x512xf32, #tpu.memory_space<vmem>>, vector<1x512xf32>
    %470 = vector.broadcast %469 : vector<1x512xf32> to vector<64x512xf32>
    %471 = arith.addf %468, %470 : vector<64x512xf32>
    %c0_115 = arith.constant 0 : index
    %c0_116 = arith.constant 0 : index
    %472 = vector.load %arg17[%c0_115, %c0_116] : memref<64x512xf32, #tpu.memory_space<vmem>>, vector<64x512xf32>
    tpu.vector_store %arg17[%c0_115, %c0_116], %471 {strides = array<i32>} : memref<64x512xf32, #tpu.memory_space<vmem>>, vector<64x512xf32>,
    %c0_117 = arith.constant 0 : index
    %c0_118 = arith.constant 0 : index
    %473 = vector.load %arg5[%c0_117, %c0_118] : memref<128x512xf32, #tpu.memory_space<vmem>>, vector<128x512xf32>
    %cst_119 = arith.constant 0.000000e+00 : f32
    %474 = vector.broadcast %cst_119 : f32 to vector<8x128xf32>
    %cst_120 = arith.constant 0.000000e+00 : f32
    %475 = vector.broadcast %cst_120 : f32 to vector<8x128xf32>
    %c0_121 = arith.constant 0 : index
    %c0_122 = arith.constant 0 : index
    %476 = vector.load %arg17[%c0_121, %c0_122] : memref<64x512xf32, #tpu.memory_space<vmem>>, vector<8x512xf32>
    %cst_123 = arith.constant dense<0.000000e+00> : vector<8x512xf32>
    %477 = tpu.matmul %474, %473, %cst_123 {dimension_numbers = #tpu.dot_dimension_numbers<[1], [0], [0], [1], [0, 0, 1, 1], [], []>} : vector<8x128xf32>, vector<128x512xf32>, vector<8x512xf32> -> vector<8x512xf32>
    %478 = arith.addf %476, %477 : vector<8x512xf32>
    %479 = vector.extract_strided_slice %478 {offsets = [0, 0], sizes = [8, 128], strides = [1, 1]} : vector<8x512xf32> to vector<8x128xf32>
    %480 = arith.negf %479 : vector<8x128xf32>
    %481 = math.exp %480 : vector<8x128xf32>
    %cst_124 = arith.constant 1.000000e+00 : f32
    %482 = vector.broadcast %cst_124 : f32 to vector<8x128xf32>
    %483 = arith.addf %482, %481 : vector<8x128xf32>
    %484 = arith.divf %482, %483 : vector<8x128xf32>
    %485 = vector.extract_strided_slice %478 {offsets = [0, 128], sizes = [8, 128], strides = [1, 1]} : vector<8x512xf32> to vector<8x128xf32>
    %486 = arith.negf %485 : vector<8x128xf32>
    %487 = math.exp %486 : vector<8x128xf32>
    %cst_125 = arith.constant 1.000000e+00 : f32
    %488 = vector.broadcast %cst_125 : f32 to vector<8x128xf32>
    %489 = arith.addf %488, %487 : vector<8x128xf32>
    %490 = arith.divf %488, %489 : vector<8x128xf32>
    %491 = vector.extract_strided_slice %478 {offsets = [0, 256], sizes = [8, 128], strides = [1, 1]} : vector<8x512xf32> to vector<8x128xf32>
    %492 = math.tanh %491 : vector<8x128xf32>
    %493 = vector.extract_strided_slice %478 {offsets = [0, 384], sizes = [8, 128], strides = [1, 1]} : vector<8x512xf32> to vector<8x128xf32>
    %494 = arith.negf %493 : vector<8x128xf32>
    %495 = math.exp %494 : vector<8x128xf32>
    %cst_126 = arith.constant 1.000000e+00 : f32
    %496 = vector.broadcast %cst_126 : f32 to vector<8x128xf32>
    %497 = arith.addf %496, %495 : vector<8x128xf32>
    %498 = arith.divf %496, %497 : vector<8x128xf32>
    %499 = arith.mulf %490, %475 : vector<8x128xf32>
    %500 = arith.mulf %484, %492 : vector<8x128xf32>
    %501 = arith.addf %499, %500 : vector<8x128xf32>
    %502 = math.tanh %501 : vector<8x128xf32>
    %503 = arith.mulf %498, %502 : vector<8x128xf32>
    %c8_127 = arith.constant 8 : index
    %c0_128 = arith.constant 0 : index
    %504 = vector.load %arg17[%c8_127, %c0_128] : memref<64x512xf32, #tpu.memory_space<vmem>>, vector<8x512xf32>
    %cst_129 = arith.constant dense<0.000000e+00> : vector<8x512xf32>
    %505 = tpu.matmul %503, %473, %cst_129 {dimension_numbers = #tpu.dot_dimension_numbers<[1], [0], [0], [1], [0, 0, 1, 1], [], []>} : vector<8x128xf32>, vector<128x512xf32>, vector<8x512xf32> -> vector<8x512xf32>
    %506 = arith.addf %504, %505 : vector<8x512xf32>
    %507 = vector.extract_strided_slice %506 {offsets = [0, 0], sizes = [8, 128], strides = [1, 1]} : vector<8x512xf32> to vector<8x128xf32>
    %508 = arith.negf %507 : vector<8x128xf32>
    %509 = math.exp %508 : vector<8x128xf32>
    %cst_130 = arith.constant 1.000000e+00 : f32
    %510 = vector.broadcast %cst_130 : f32 to vector<8x128xf32>
    %511 = arith.addf %510, %509 : vector<8x128xf32>
    %512 = arith.divf %510, %511 : vector<8x128xf32>
    %513 = vector.extract_strided_slice %506 {offsets = [0, 128], sizes = [8, 128], strides = [1, 1]} : vector<8x512xf32> to vector<8x128xf32>
    %514 = arith.negf %513 : vector<8x128xf32>
    %515 = math.exp %514 : vector<8x128xf32>
    %cst_131 = arith.constant 1.000000e+00 : f32
    %516 = vector.broadcast %cst_131 : f32 to vector<8x128xf32>
    %517 = arith.addf %516, %515 : vector<8x128xf32>
    %518 = arith.divf %516, %517 : vector<8x128xf32>
    %519 = vector.extract_strided_slice %506 {offsets = [0, 256], sizes = [8, 128], strides = [1, 1]} : vector<8x512xf32> to vector<8x128xf32>
    %520 = math.tanh %519 : vector<8x128xf32>
    %521 = vector.extract_strided_slice %506 {offsets = [0, 384], sizes = [8, 128], strides = [1, 1]} : vector<8x512xf32> to vector<8x128xf32>
    %522 = arith.negf %521 : vector<8x128xf32>
    %523 = math.exp %522 : vector<8x128xf32>
    %cst_132 = arith.constant 1.000000e+00 : f32
    %524 = vector.broadcast %cst_132 : f32 to vector<8x128xf32>
    %525 = arith.addf %524, %523 : vector<8x128xf32>
    %526 = arith.divf %524, %525 : vector<8x128xf32>
    %527 = arith.mulf %518, %501 : vector<8x128xf32>
    %528 = arith.mulf %512, %520 : vector<8x128xf32>
    %529 = arith.addf %527, %528 : vector<8x128xf32>
    %530 = math.tanh %529 : vector<8x128xf32>
    %531 = arith.mulf %526, %530 : vector<8x128xf32>
    %c16_133 = arith.constant 16 : index
    %c0_134 = arith.constant 0 : index
    %532 = vector.load %arg17[%c16_133, %c0_134] : memref<64x512xf32, #tpu.memory_space<vmem>>, vector<8x512xf32>
    %cst_135 = arith.constant dense<0.000000e+00> : vector<8x512xf32>
    %533 = tpu.matmul %531, %473, %cst_135 {dimension_numbers = #tpu.dot_dimension_numbers<[1], [0], [0], [1], [0, 0, 1, 1], [], []>} : vector<8x128xf32>, vector<128x512xf32>, vector<8x512xf32> -> vector<8x512xf32>
    %534 = arith.addf %532, %533 : vector<8x512xf32>
    %535 = vector.extract_strided_slice %534 {offsets = [0, 0], sizes = [8, 128], strides = [1, 1]} : vector<8x512xf32> to vector<8x128xf32>
    %536 = arith.negf %535 : vector<8x128xf32>
    %537 = math.exp %536 : vector<8x128xf32>
    %cst_136 = arith.constant 1.000000e+00 : f32
    %538 = vector.broadcast %cst_136 : f32 to vector<8x128xf32>
    %539 = arith.addf %538, %537 : vector<8x128xf32>
    %540 = arith.divf %538, %539 : vector<8x128xf32>
    %541 = vector.extract_strided_slice %534 {offsets = [0, 128], sizes = [8, 128], strides = [1, 1]} : vector<8x512xf32> to vector<8x128xf32>
    %542 = arith.negf %541 : vector<8x128xf32>
    %543 = math.exp %542 : vector<8x128xf32>
    %cst_137 = arith.constant 1.000000e+00 : f32
    %544 = vector.broadcast %cst_137 : f32 to vector<8x128xf32>
    %545 = arith.addf %544, %543 : vector<8x128xf32>
    %546 = arith.divf %544, %545 : vector<8x128xf32>
    %547 = vector.extract_strided_slice %534 {offsets = [0, 256], sizes = [8, 128], strides = [1, 1]} : vector<8x512xf32> to vector<8x128xf32>
    %548 = math.tanh %547 : vector<8x128xf32>
    %549 = vector.extract_strided_slice %534 {offsets = [0, 384], sizes = [8, 128], strides = [1, 1]} : vector<8x512xf32> to vector<8x128xf32>
    %550 = arith.negf %549 : vector<8x128xf32>
    %551 = math.exp %550 : vector<8x128xf32>
    %cst_138 = arith.constant 1.000000e+00 : f32
    %552 = vector.broadcast %cst_138 : f32 to vector<8x128xf32>
    %553 = arith.addf %552, %551 : vector<8x128xf32>
    %554 = arith.divf %552, %553 : vector<8x128xf32>
    %555 = arith.mulf %546, %529 : vector<8x128xf32>
    %556 = arith.mulf %540, %548 : vector<8x128xf32>
    %557 = arith.addf %555, %556 : vector<8x128xf32>
    %558 = math.tanh %557 : vector<8x128xf32>
    %559 = arith.mulf %554, %558 : vector<8x128xf32>
    %c24_139 = arith.constant 24 : index
    %c0_140 = arith.constant 0 : index
    %560 = vector.load %arg17[%c24_139, %c0_140] : memref<64x512xf32, #tpu.memory_space<vmem>>, vector<8x512xf32>
    %cst_141 = arith.constant dense<0.000000e+00> : vector<8x512xf32>
    %561 = tpu.matmul %559, %473, %cst_141 {dimension_numbers = #tpu.dot_dimension_numbers<[1], [0], [0], [1], [0, 0, 1, 1], [], []>} : vector<8x128xf32>, vector<128x512xf32>, vector<8x512xf32> -> vector<8x512xf32>
    %562 = arith.addf %560, %561 : vector<8x512xf32>
    %563 = vector.extract_strided_slice %562 {offsets = [0, 0], sizes = [8, 128], strides = [1, 1]} : vector<8x512xf32> to vector<8x128xf32>
    %564 = arith.negf %563 : vector<8x128xf32>
    %565 = math.exp %564 : vector<8x128xf32>
    %cst_142 = arith.constant 1.000000e+00 : f32
    %566 = vector.broadcast %cst_142 : f32 to vector<8x128xf32>
    %567 = arith.addf %566, %565 : vector<8x128xf32>
    %568 = arith.divf %566, %567 : vector<8x128xf32>
    %569 = vector.extract_strided_slice %562 {offsets = [0, 128], sizes = [8, 128], strides = [1, 1]} : vector<8x512xf32> to vector<8x128xf32>
    %570 = arith.negf %569 : vector<8x128xf32>
    %571 = math.exp %570 : vector<8x128xf32>
    %cst_143 = arith.constant 1.000000e+00 : f32
    %572 = vector.broadcast %cst_143 : f32 to vector<8x128xf32>
    %573 = arith.addf %572, %571 : vector<8x128xf32>
    %574 = arith.divf %572, %573 : vector<8x128xf32>
    %575 = vector.extract_strided_slice %562 {offsets = [0, 256], sizes = [8, 128], strides = [1, 1]} : vector<8x512xf32> to vector<8x128xf32>
    %576 = math.tanh %575 : vector<8x128xf32>
    %577 = vector.extract_strided_slice %562 {offsets = [0, 384], sizes = [8, 128], strides = [1, 1]} : vector<8x512xf32> to vector<8x128xf32>
    %578 = arith.negf %577 : vector<8x128xf32>
    %579 = math.exp %578 : vector<8x128xf32>
    %cst_144 = arith.constant 1.000000e+00 : f32
    %580 = vector.broadcast %cst_144 : f32 to vector<8x128xf32>
    %581 = arith.addf %580, %579 : vector<8x128xf32>
    %582 = arith.divf %580, %581 : vector<8x128xf32>
    %583 = arith.mulf %574, %557 : vector<8x128xf32>
    %584 = arith.mulf %568, %576 : vector<8x128xf32>
    %585 = arith.addf %583, %584 : vector<8x128xf32>
    %586 = math.tanh %585 : vector<8x128xf32>
    %587 = arith.mulf %582, %586 : vector<8x128xf32>
    %c32_145 = arith.constant 32 : index
    %c0_146 = arith.constant 0 : index
    %588 = vector.load %arg17[%c32_145, %c0_146] : memref<64x512xf32, #tpu.memory_space<vmem>>, vector<8x512xf32>
    %cst_147 = arith.constant dense<0.000000e+00> : vector<8x512xf32>
    %589 = tpu.matmul %587, %473, %cst_147 {dimension_numbers = #tpu.dot_dimension_numbers<[1], [0], [0], [1], [0, 0, 1, 1], [], []>} : vector<8x128xf32>, vector<128x512xf32>, vector<8x512xf32> -> vector<8x512xf32>
    %590 = arith.addf %588, %589 : vector<8x512xf32>
    %591 = vector.extract_strided_slice %590 {offsets = [0, 0], sizes = [8, 128], strides = [1, 1]} : vector<8x512xf32> to vector<8x128xf32>
    %592 = arith.negf %591 : vector<8x128xf32>
    %593 = math.exp %592 : vector<8x128xf32>
    %cst_148 = arith.constant 1.000000e+00 : f32
    %594 = vector.broadcast %cst_148 : f32 to vector<8x128xf32>
    %595 = arith.addf %594, %593 : vector<8x128xf32>
    %596 = arith.divf %594, %595 : vector<8x128xf32>
    %597 = vector.extract_strided_slice %590 {offsets = [0, 128], sizes = [8, 128], strides = [1, 1]} : vector<8x512xf32> to vector<8x128xf32>
    %598 = arith.negf %597 : vector<8x128xf32>
    %599 = math.exp %598 : vector<8x128xf32>
    %cst_149 = arith.constant 1.000000e+00 : f32
    %600 = vector.broadcast %cst_149 : f32 to vector<8x128xf32>
    %601 = arith.addf %600, %599 : vector<8x128xf32>
    %602 = arith.divf %600, %601 : vector<8x128xf32>
    %603 = vector.extract_strided_slice %590 {offsets = [0, 256], sizes = [8, 128], strides = [1, 1]} : vector<8x512xf32> to vector<8x128xf32>
    %604 = math.tanh %603 : vector<8x128xf32>
    %605 = vector.extract_strided_slice %590 {offsets = [0, 384], sizes = [8, 128], strides = [1, 1]} : vector<8x512xf32> to vector<8x128xf32>
    %606 = arith.negf %605 : vector<8x128xf32>
    %607 = math.exp %606 : vector<8x128xf32>
    %cst_150 = arith.constant 1.000000e+00 : f32
    %608 = vector.broadcast %cst_150 : f32 to vector<8x128xf32>
    %609 = arith.addf %608, %607 : vector<8x128xf32>
    %610 = arith.divf %608, %609 : vector<8x128xf32>
    %611 = arith.mulf %602, %585 : vector<8x128xf32>
    %612 = arith.mulf %596, %604 : vector<8x128xf32>
    %613 = arith.addf %611, %612 : vector<8x128xf32>
    %614 = math.tanh %613 : vector<8x128xf32>
    %615 = arith.mulf %610, %614 : vector<8x128xf32>
    %c40_151 = arith.constant 40 : index
    %c0_152 = arith.constant 0 : index
    %616 = vector.load %arg17[%c40_151, %c0_152] : memref<64x512xf32, #tpu.memory_space<vmem>>, vector<8x512xf32>
    %cst_153 = arith.constant dense<0.000000e+00> : vector<8x512xf32>
    %617 = tpu.matmul %615, %473, %cst_153 {dimension_numbers = #tpu.dot_dimension_numbers<[1], [0], [0], [1], [0, 0, 1, 1], [], []>} : vector<8x128xf32>, vector<128x512xf32>, vector<8x512xf32> -> vector<8x512xf32>
    %618 = arith.addf %616, %617 : vector<8x512xf32>
    %619 = vector.extract_strided_slice %618 {offsets = [0, 0], sizes = [8, 128], strides = [1, 1]} : vector<8x512xf32> to vector<8x128xf32>
    %620 = arith.negf %619 : vector<8x128xf32>
    %621 = math.exp %620 : vector<8x128xf32>
    %cst_154 = arith.constant 1.000000e+00 : f32
    %622 = vector.broadcast %cst_154 : f32 to vector<8x128xf32>
    %623 = arith.addf %622, %621 : vector<8x128xf32>
    %624 = arith.divf %622, %623 : vector<8x128xf32>
    %625 = vector.extract_strided_slice %618 {offsets = [0, 128], sizes = [8, 128], strides = [1, 1]} : vector<8x512xf32> to vector<8x128xf32>
    %626 = arith.negf %625 : vector<8x128xf32>
    %627 = math.exp %626 : vector<8x128xf32>
    %cst_155 = arith.constant 1.000000e+00 : f32
    %628 = vector.broadcast %cst_155 : f32 to vector<8x128xf32>
    %629 = arith.addf %628, %627 : vector<8x128xf32>
    %630 = arith.divf %628, %629 : vector<8x128xf32>
    %631 = vector.extract_strided_slice %618 {offsets = [0, 256], sizes = [8, 128], strides = [1, 1]} : vector<8x512xf32> to vector<8x128xf32>
    %632 = math.tanh %631 : vector<8x128xf32>
    %633 = vector.extract_strided_slice %618 {offsets = [0, 384], sizes = [8, 128], strides = [1, 1]} : vector<8x512xf32> to vector<8x128xf32>
    %634 = arith.negf %633 : vector<8x128xf32>
    %635 = math.exp %634 : vector<8x128xf32>
    %cst_156 = arith.constant 1.000000e+00 : f32
    %636 = vector.broadcast %cst_156 : f32 to vector<8x128xf32>
    %637 = arith.addf %636, %635 : vector<8x128xf32>
    %638 = arith.divf %636, %637 : vector<8x128xf32>
    %639 = arith.mulf %630, %613 : vector<8x128xf32>
    %640 = arith.mulf %624, %632 : vector<8x128xf32>
    %641 = arith.addf %639, %640 : vector<8x128xf32>
    %642 = math.tanh %641 : vector<8x128xf32>
    %643 = arith.mulf %638, %642 : vector<8x128xf32>
    %c0_157 = arith.constant 0 : index
    %c0_158 = arith.constant 0 : index
    %644 = vector.load %arg20[%c0_157, %c0_158] : memref<24x128xf32, #tpu.memory_space<vmem>>, vector<8x128xf32>
    tpu.vector_store %arg20[%c0_157, %c0_158], %643 {strides = array<i32>} : memref<24x128xf32, #tpu.memory_space<vmem>>, vector<8x128xf32>,
    %c48_159 = arith.constant 48 : index
    %c0_160 = arith.constant 0 : index
    %645 = vector.load %arg17[%c48_159, %c0_160] : memref<64x512xf32, #tpu.memory_space<vmem>>, vector<8x512xf32>
    %cst_161 = arith.constant dense<0.000000e+00> : vector<8x512xf32>
    %646 = tpu.matmul %643, %473, %cst_161 {dimension_numbers = #tpu.dot_dimension_numbers<[1], [0], [0], [1], [0, 0, 1, 1], [], []>} : vector<8x128xf32>, vector<128x512xf32>, vector<8x512xf32> -> vector<8x512xf32>
    %647 = arith.addf %645, %646 : vector<8x512xf32>
    %648 = vector.extract_strided_slice %647 {offsets = [0, 0], sizes = [8, 128], strides = [1, 1]} : vector<8x512xf32> to vector<8x128xf32>
    %649 = arith.negf %648 : vector<8x128xf32>
    %650 = math.exp %649 : vector<8x128xf32>
    %cst_162 = arith.constant 1.000000e+00 : f32
    %651 = vector.broadcast %cst_162 : f32 to vector<8x128xf32>
    %652 = arith.addf %651, %650 : vector<8x128xf32>
    %653 = arith.divf %651, %652 : vector<8x128xf32>
    %654 = vector.extract_strided_slice %647 {offsets = [0, 128], sizes = [8, 128], strides = [1, 1]} : vector<8x512xf32> to vector<8x128xf32>
    %655 = arith.negf %654 : vector<8x128xf32>
    %656 = math.exp %655 : vector<8x128xf32>
    %cst_163 = arith.constant 1.000000e+00 : f32
    %657 = vector.broadcast %cst_163 : f32 to vector<8x128xf32>
    %658 = arith.addf %657, %656 : vector<8x128xf32>
    %659 = arith.divf %657, %658 : vector<8x128xf32>
    %660 = vector.extract_strided_slice %647 {offsets = [0, 256], sizes = [8, 128], strides = [1, 1]} : vector<8x512xf32> to vector<8x128xf32>
    %661 = math.tanh %660 : vector<8x128xf32>
    %662 = vector.extract_strided_slice %647 {offsets = [0, 384], sizes = [8, 128], strides = [1, 1]} : vector<8x512xf32> to vector<8x128xf32>
    %663 = arith.negf %662 : vector<8x128xf32>
    %664 = math.exp %663 : vector<8x128xf32>
    %cst_164 = arith.constant 1.000000e+00 : f32
    %665 = vector.broadcast %cst_164 : f32 to vector<8x128xf32>
    %666 = arith.addf %665, %664 : vector<8x128xf32>
    %667 = arith.divf %665, %666 : vector<8x128xf32>
    %668 = arith.mulf %659, %641 : vector<8x128xf32>
    %669 = arith.mulf %653, %661 : vector<8x128xf32>
    %670 = arith.addf %668, %669 : vector<8x128xf32>
    %671 = math.tanh %670 : vector<8x128xf32>
    %672 = arith.mulf %667, %671 : vector<8x128xf32>
    %c8_165 = arith.constant 8 : index
    %c0_166 = arith.constant 0 : index
    %673 = vector.load %arg20[%c8_165, %c0_166] : memref<24x128xf32, #tpu.memory_space<vmem>>, vector<8x128xf32>
    tpu.vector_store %arg20[%c8_165, %c0_166], %672 {strides = array<i32>} : memref<24x128xf32, #tpu.memory_space<vmem>>, vector<8x128xf32>,
    %c56_167 = arith.constant 56 : index
    %c0_168 = arith.constant 0 : index
    %674 = vector.load %arg17[%c56_167, %c0_168] : memref<64x512xf32, #tpu.memory_space<vmem>>, vector<8x512xf32>
    %cst_169 = arith.constant dense<0.000000e+00> : vector<8x512xf32>
    %675 = tpu.matmul %672, %473, %cst_169 {dimension_numbers = #tpu.dot_dimension_numbers<[1], [0], [0], [1], [0, 0, 1, 1], [], []>} : vector<8x128xf32>, vector<128x512xf32>, vector<8x512xf32> -> vector<8x512xf32>
    %676 = arith.addf %674, %675 : vector<8x512xf32>
    %677 = vector.extract_strided_slice %676 {offsets = [0, 0], sizes = [8, 128], strides = [1, 1]} : vector<8x512xf32> to vector<8x128xf32>
    %678 = arith.negf %677 : vector<8x128xf32>
    %679 = math.exp %678 : vector<8x128xf32>
    %cst_170 = arith.constant 1.000000e+00 : f32
    %680 = vector.broadcast %cst_170 : f32 to vector<8x128xf32>
    %681 = arith.addf %680, %679 : vector<8x128xf32>
    %682 = arith.divf %680, %681 : vector<8x128xf32>
    %683 = vector.extract_strided_slice %676 {offsets = [0, 128], sizes = [8, 128], strides = [1, 1]} : vector<8x512xf32> to vector<8x128xf32>
    %684 = arith.negf %683 : vector<8x128xf32>
    %685 = math.exp %684 : vector<8x128xf32>
    %cst_171 = arith.constant 1.000000e+00 : f32
    %686 = vector.broadcast %cst_171 : f32 to vector<8x128xf32>
    %687 = arith.addf %686, %685 : vector<8x128xf32>
    %688 = arith.divf %686, %687 : vector<8x128xf32>
    %689 = vector.extract_strided_slice %676 {offsets = [0, 256], sizes = [8, 128], strides = [1, 1]} : vector<8x512xf32> to vector<8x128xf32>
    %690 = math.tanh %689 : vector<8x128xf32>
    %691 = vector.extract_strided_slice %676 {offsets = [0, 384], sizes = [8, 128], strides = [1, 1]} : vector<8x512xf32> to vector<8x128xf32>
    %692 = arith.negf %691 : vector<8x128xf32>
    %693 = math.exp %692 : vector<8x128xf32>
    %cst_172 = arith.constant 1.000000e+00 : f32
    %694 = vector.broadcast %cst_172 : f32 to vector<8x128xf32>
    %695 = arith.addf %694, %693 : vector<8x128xf32>
    %696 = arith.divf %694, %695 : vector<8x128xf32>
    %697 = arith.mulf %688, %670 : vector<8x128xf32>
    %698 = arith.mulf %682, %690 : vector<8x128xf32>
    %699 = arith.addf %697, %698 : vector<8x128xf32>
    %700 = math.tanh %699 : vector<8x128xf32>
    %701 = arith.mulf %696, %700 : vector<8x128xf32>
    %c16_173 = arith.constant 16 : index
    %c0_174 = arith.constant 0 : index
    %702 = vector.load %arg20[%c16_173, %c0_174] : memref<24x128xf32, #tpu.memory_space<vmem>>, vector<8x128xf32>
    tpu.vector_store %arg20[%c16_173, %c0_174], %701 {strides = array<i32>} : memref<24x128xf32, #tpu.memory_space<vmem>>, vector<8x128xf32>,
    %c0_175 = arith.constant 0 : index
    %c0_176 = arith.constant 0 : index
    %703 = vector.load %arg20[%c0_175, %c0_176] : memref<24x128xf32, #tpu.memory_space<vmem>>, vector<24x128xf32>
    %c0_177 = arith.constant 0 : index
    %c0_178 = arith.constant 0 : index
    %704 = vector.load %arg7[%c0_177, %c0_178] : memref<128x512xf32, #tpu.memory_space<vmem>>, vector<128x512xf32>
    %cst_179 = arith.constant dense<0.000000e+00> : vector<24x512xf32>
    %705 = tpu.matmul %703, %704, %cst_179 {dimension_numbers = #tpu.dot_dimension_numbers<[1], [0], [0], [1], [0, 0, 1, 1], [], []>} : vector<24x128xf32>, vector<128x512xf32>, vector<24x512xf32> -> vector<24x512xf32>
    %c0_180 = arith.constant 0 : index
    %c0_181 = arith.constant 0 : index
    %706 = vector.load %arg9[%c0_180, %c0_181] : memref<1x512xf32, #tpu.memory_space<vmem>>, vector<1x512xf32>
    %707 = vector.broadcast %706 : vector<1x512xf32> to vector<24x512xf32>
    %708 = arith.addf %705, %707 : vector<24x512xf32>
    %c0_182 = arith.constant 0 : index
    %c0_183 = arith.constant 0 : index
    %709 = vector.load %arg18[%c0_182, %c0_183] : memref<24x512xf32, #tpu.memory_space<vmem>>, vector<24x512xf32>
    tpu.vector_store %arg18[%c0_182, %c0_183], %708 {strides = array<i32>} : memref<24x512xf32, #tpu.memory_space<vmem>>, vector<24x512xf32>,
    %c0_184 = arith.constant 0 : index
    %c0_185 = arith.constant 0 : index
    %710 = vector.load %arg8[%c0_184, %c0_185] : memref<128x512xf32, #tpu.memory_space<vmem>>, vector<128x512xf32>
    %cst_186 = arith.constant 0.000000e+00 : f32
    %711 = vector.broadcast %cst_186 : f32 to vector<8x128xf32>
    %cst_187 = arith.constant 0.000000e+00 : f32
    %712 = vector.broadcast %cst_187 : f32 to vector<8x128xf32>
    %c0_188 = arith.constant 0 : index
    %c0_189 = arith.constant 0 : index
    %713 = vector.load %arg18[%c0_188, %c0_189] : memref<24x512xf32, #tpu.memory_space<vmem>>, vector<8x512xf32>
    %cst_190 = arith.constant dense<0.000000e+00> : vector<8x512xf32>
    %714 = tpu.matmul %711, %710, %cst_190 {dimension_numbers = #tpu.dot_dimension_numbers<[1], [0], [0], [1], [0, 0, 1, 1], [], []>} : vector<8x128xf32>, vector<128x512xf32>, vector<8x512xf32> -> vector<8x512xf32>
    %715 = arith.addf %713, %714 : vector<8x512xf32>
    %716 = vector.extract_strided_slice %715 {offsets = [0, 0], sizes = [8, 128], strides = [1, 1]} : vector<8x512xf32> to vector<8x128xf32>
    %717 = arith.negf %716 : vector<8x128xf32>
    %718 = math.exp %717 : vector<8x128xf32>
    %cst_191 = arith.constant 1.000000e+00 : f32
    %719 = vector.broadcast %cst_191 : f32 to vector<8x128xf32>
    %720 = arith.addf %719, %718 : vector<8x128xf32>
    %721 = arith.divf %719, %720 : vector<8x128xf32>
    %722 = vector.extract_strided_slice %715 {offsets = [0, 128], sizes = [8, 128], strides = [1, 1]} : vector<8x512xf32> to vector<8x128xf32>
    %723 = arith.negf %722 : vector<8x128xf32>
    %724 = math.exp %723 : vector<8x128xf32>
    %cst_192 = arith.constant 1.000000e+00 : f32
    %725 = vector.broadcast %cst_192 : f32 to vector<8x128xf32>
    %726 = arith.addf %725, %724 : vector<8x128xf32>
    %727 = arith.divf %725, %726 : vector<8x128xf32>
    %728 = vector.extract_strided_slice %715 {offsets = [0, 256], sizes = [8, 128], strides = [1, 1]} : vector<8x512xf32> to vector<8x128xf32>
    %729 = math.tanh %728 : vector<8x128xf32>
    %730 = vector.extract_strided_slice %715 {offsets = [0, 384], sizes = [8, 128], strides = [1, 1]} : vector<8x512xf32> to vector<8x128xf32>
    %731 = arith.negf %730 : vector<8x128xf32>
    %732 = math.exp %731 : vector<8x128xf32>
    %cst_193 = arith.constant 1.000000e+00 : f32
    %733 = vector.broadcast %cst_193 : f32 to vector<8x128xf32>
    %734 = arith.addf %733, %732 : vector<8x128xf32>
    %735 = arith.divf %733, %734 : vector<8x128xf32>
    %736 = arith.mulf %727, %712 : vector<8x128xf32>
    %737 = arith.mulf %721, %729 : vector<8x128xf32>
    %738 = arith.addf %736, %737 : vector<8x128xf32>
    %739 = math.tanh %738 : vector<8x128xf32>
    %740 = arith.mulf %735, %739 : vector<8x128xf32>
    %c0_194 = arith.constant 0 : index
    %c0_195 = arith.constant 0 : index
    %c0_196 = arith.constant 0 : index
    %741 = vector.load %arg15[%c0_194, %c0_195, %c0_196] : memref<3x8x128xf32, #tpu.memory_space<vmem>>, vector<1x8x128xf32>
    %742 = vector.shape_cast %741 : vector<1x8x128xf32> to vector<8x128xf32>
    %743 = vector.shape_cast %740 : vector<8x128xf32> to vector<1x8x128xf32>
    tpu.vector_store %arg15[%c0_194, %c0_195, %c0_196], %743 {strides = array<i32>} : memref<3x8x128xf32, #tpu.memory_space<vmem>>, vector<1x8x128xf32>,
    %c8_197 = arith.constant 8 : index
    %c0_198 = arith.constant 0 : index
    %744 = vector.load %arg18[%c8_197, %c0_198] : memref<24x512xf32, #tpu.memory_space<vmem>>, vector<8x512xf32>
    %cst_199 = arith.constant dense<0.000000e+00> : vector<8x512xf32>
    %745 = tpu.matmul %740, %710, %cst_199 {dimension_numbers = #tpu.dot_dimension_numbers<[1], [0], [0], [1], [0, 0, 1, 1], [], []>} : vector<8x128xf32>, vector<128x512xf32>, vector<8x512xf32> -> vector<8x512xf32>
    %746 = arith.addf %744, %745 : vector<8x512xf32>
    %747 = vector.extract_strided_slice %746 {offsets = [0, 0], sizes = [8, 128], strides = [1, 1]} : vector<8x512xf32> to vector<8x128xf32>
    %748 = arith.negf %747 : vector<8x128xf32>
    %749 = math.exp %748 : vector<8x128xf32>
    %cst_200 = arith.constant 1.000000e+00 : f32
    %750 = vector.broadcast %cst_200 : f32 to vector<8x128xf32>
    %751 = arith.addf %750, %749 : vector<8x128xf32>
    %752 = arith.divf %750, %751 : vector<8x128xf32>
    %753 = vector.extract_strided_slice %746 {offsets = [0, 128], sizes = [8, 128], strides = [1, 1]} : vector<8x512xf32> to vector<8x128xf32>
    %754 = arith.negf %753 : vector<8x128xf32>
    %755 = math.exp %754 : vector<8x128xf32>
    %cst_201 = arith.constant 1.000000e+00 : f32
    %756 = vector.broadcast %cst_201 : f32 to vector<8x128xf32>
    %757 = arith.addf %756, %755 : vector<8x128xf32>
    %758 = arith.divf %756, %757 : vector<8x128xf32>
    %759 = vector.extract_strided_slice %746 {offsets = [0, 256], sizes = [8, 128], strides = [1, 1]} : vector<8x512xf32> to vector<8x128xf32>
    %760 = math.tanh %759 : vector<8x128xf32>
    %761 = vector.extract_strided_slice %746 {offsets = [0, 384], sizes = [8, 128], strides = [1, 1]} : vector<8x512xf32> to vector<8x128xf32>
    %762 = arith.negf %761 : vector<8x128xf32>
    %763 = math.exp %762 : vector<8x128xf32>
    %cst_202 = arith.constant 1.000000e+00 : f32
    %764 = vector.broadcast %cst_202 : f32 to vector<8x128xf32>
    %765 = arith.addf %764, %763 : vector<8x128xf32>
    %766 = arith.divf %764, %765 : vector<8x128xf32>
    %767 = arith.mulf %758, %738 : vector<8x128xf32>
    %768 = arith.mulf %752, %760 : vector<8x128xf32>
    %769 = arith.addf %767, %768 : vector<8x128xf32>
    %770 = math.tanh %769 : vector<8x128xf32>
    %771 = arith.mulf %766, %770 : vector<8x128xf32>
    %c1 = arith.constant 1 : index
    %c0_203 = arith.constant 0 : index
    %c0_204 = arith.constant 0 : index
    %772 = vector.load %arg15[%c1, %c0_203, %c0_204] : memref<3x8x128xf32, #tpu.memory_space<vmem>>, vector<1x8x128xf32>
    %773 = vector.shape_cast %772 : vector<1x8x128xf32> to vector<8x128xf32>
    %774 = vector.shape_cast %771 : vector<8x128xf32> to vector<1x8x128xf32>
    tpu.vector_store %arg15[%c1, %c0_203, %c0_204], %774 {strides = array<i32>} : memref<3x8x128xf32, #tpu.memory_space<vmem>>, vector<1x8x128xf32>,
    %c16_205 = arith.constant 16 : index
    %c0_206 = arith.constant 0 : index
    %775 = vector.load %arg18[%c16_205, %c0_206] : memref<24x512xf32, #tpu.memory_space<vmem>>, vector<8x512xf32>
    %cst_207 = arith.constant dense<0.000000e+00> : vector<8x512xf32>
    %776 = tpu.matmul %771, %710, %cst_207 {dimension_numbers = #tpu.dot_dimension_numbers<[1], [0], [0], [1], [0, 0, 1, 1], [], []>} : vector<8x128xf32>, vector<128x512xf32>, vector<8x512xf32> -> vector<8x512xf32>
    %777 = arith.addf %775, %776 : vector<8x512xf32>
    %778 = vector.extract_strided_slice %777 {offsets = [0, 0], sizes = [8, 128], strides = [1, 1]} : vector<8x512xf32> to vector<8x128xf32>
    %779 = arith.negf %778 : vector<8x128xf32>
    %780 = math.exp %779 : vector<8x128xf32>
    %cst_208 = arith.constant 1.000000e+00 : f32
    %781 = vector.broadcast %cst_208 : f32 to vector<8x128xf32>
    %782 = arith.addf %781, %780 : vector<8x128xf32>
    %783 = arith.divf %781, %782 : vector<8x128xf32>
    %784 = vector.extract_strided_slice %777 {offsets = [0, 128], sizes = [8, 128], strides = [1, 1]} : vector<8x512xf32> to vector<8x128xf32>
    %785 = arith.negf %784 : vector<8x128xf32>
    %786 = math.exp %785 : vector<8x128xf32>
    %cst_209 = arith.constant 1.000000e+00 : f32
    %787 = vector.broadcast %cst_209 : f32 to vector<8x128xf32>
    %788 = arith.addf %787, %786 : vector<8x128xf32>
    %789 = arith.divf %787, %788 : vector<8x128xf32>
    %790 = vector.extract_strided_slice %777 {offsets = [0, 256], sizes = [8, 128], strides = [1, 1]} : vector<8x512xf32> to vector<8x128xf32>
    %791 = math.tanh %790 : vector<8x128xf32>
    %792 = vector.extract_strided_slice %777 {offsets = [0, 384], sizes = [8, 128], strides = [1, 1]} : vector<8x512xf32> to vector<8x128xf32>
    %793 = arith.negf %792 : vector<8x128xf32>
    %794 = math.exp %793 : vector<8x128xf32>
    %cst_210 = arith.constant 1.000000e+00 : f32
    %795 = vector.broadcast %cst_210 : f32 to vector<8x128xf32>
    %796 = arith.addf %795, %794 : vector<8x128xf32>
    %797 = arith.divf %795, %796 : vector<8x128xf32>
    %798 = arith.mulf %789, %769 : vector<8x128xf32>
    %799 = arith.mulf %783, %791 : vector<8x128xf32>
    %800 = arith.addf %798, %799 : vector<8x128xf32>
    %801 = math.tanh %800 : vector<8x128xf32>
    %802 = arith.mulf %797, %801 : vector<8x128xf32>
    %c2 = arith.constant 2 : index
    %c0_211 = arith.constant 0 : index
    %c0_212 = arith.constant 0 : index
    %803 = vector.load %arg15[%c2, %c0_211, %c0_212] : memref<3x8x128xf32, #tpu.memory_space<vmem>>, vector<1x8x128xf32>
    %804 = vector.shape_cast %803 : vector<1x8x128xf32> to vector<8x128xf32>
    %805 = vector.shape_cast %802 : vector<8x128xf32> to vector<1x8x128xf32>
    tpu.vector_store %arg15[%c2, %c0_211, %c0_212], %805 {strides = array<i32>} : memref<3x8x128xf32, #tpu.memory_space<vmem>>, vector<1x8x128xf32>,
    %c0_213 = arith.constant 0 : index
    %c0_214 = arith.constant 0 : index
    %806 = vector.load %arg10[%c0_213, %c0_214] : memref<128x128xf32, #tpu.memory_space<vmem>>, vector<128x128xf32>
    %cst_215 = arith.constant dense<0.000000e+00> : vector<8x128xf32>
    %807 = tpu.matmul %802, %806, %cst_215 {dimension_numbers = #tpu.dot_dimension_numbers<[1], [0], [0], [1], [0, 0, 1, 1], [], []>} : vector<8x128xf32>, vector<128x128xf32>, vector<8x128xf32> -> vector<8x128xf32>
    %c0_216 = arith.constant 0 : index
    %c0_217 = arith.constant 0 : index
    %808 = vector.load %arg11[%c0_216, %c0_217] : memref<1x128xf32, #tpu.memory_space<vmem>>, vector<1x128xf32>
    %809 = vector.broadcast %808 : vector<1x128xf32> to vector<8x128xf32>
    %810 = arith.addf %807, %809 : vector<8x128xf32>
    %c0_218 = arith.constant 0 : index
    %c0_219 = arith.constant 0 : index
    %811 = vector.load %arg12[%c0_218, %c0_219] : memref<128x128xf32, #tpu.memory_space<vmem>>, vector<128x128xf32>
    %cst_220 = arith.constant dense<0.000000e+00> : vector<8x128xf32>
    %812 = tpu.matmul %810, %811, %cst_220 {dimension_numbers = #tpu.dot_dimension_numbers<[1], [0], [0], [1], [0, 0, 1, 1], [], []>} : vector<8x128xf32>, vector<128x128xf32>, vector<8x128xf32> -> vector<8x128xf32>
    %c0_221 = arith.constant 0 : index
    %c0_222 = arith.constant 0 : index
    %813 = vector.load %arg13[%c0_221, %c0_222] : memref<1x128xf32, #tpu.memory_space<vmem>>, vector<1x128xf32>
    %814 = vector.broadcast %813 : vector<1x128xf32> to vector<8x128xf32>
    %815 = arith.addf %812, %814 : vector<8x128xf32>
    %c0_223 = arith.constant 0 : index
    %c0_224 = arith.constant 0 : index
    %816 = vector.load %arg14[%c0_223, %c0_224] : memref<8x128xf32, #tpu.memory_space<vmem>>, vector<8x128xf32>
    tpu.vector_store %arg14[%c0_223, %c0_224], %815 {strides = array<i32>} : memref<8x128xf32, #tpu.memory_space<vmem>>, vector<8x128xf32>,
    return
  }
}

</mosaic_0001>

<llo_original>
// kernel: tclstm_forward.1
$region0: #{tclstm_forward.1}
  #allocation0 [shape = 'u32[]', space=smem, size = 0x4, offset = 0x4, fixed_abs, tag = 'smem constant byte address 0x4 - core index']
  #allocation1 [shape = 'u32[144,128]{1,0:T(1,128)}', space=vmem, size = 0x12000, scoped, tag = 'internal scratch']
  #allocation2 [shape = 'f32[128,512]{1,0:T(8,128)}', space=vmem, size = 0x40000, scoped, tag = 'scratch operand']
  #allocation3 [shape = 'f32[64,512]{1,0:T(8,128)}', space=vmem, size = 0x20000, scoped, tag = 'scratch operand']
  #allocation4 [shape = 'f32[24,512]{1,0:T(8,128)}', space=vmem, size = 0xc000, scoped, tag = 'scratch operand']
  #allocation5 [shape = 'f32[64,128]{1,0:T(8,128)}', space=vmem, size = 0x8000, scoped, tag = 'scratch operand']
  #allocation6 [shape = 'f32[24,128]{1,0:T(8,128)}', space=vmem, size = 0x3000, scoped, tag = 'scratch operand']
  %s0 = inlined_call_operand.vmem [shape: f32[128,6], index: 0, kind: input, shape index: {}]
  %s1 = inlined_call_operand.hbm [shape: f32[6,512], index: 1, kind: input, shape index: {}]
  %s2 = inlined_call_operand.hbm [shape: f32[128,512], index: 2, kind: input, shape index: {}]
  %s3 = inlined_call_operand.hbm [shape: f32[1,512], index: 3, kind: input, shape index: {}]
  %s4 = inlined_call_operand.hbm [shape: f32[128,512], index: 4, kind: input, shape index: {}]
  %s5 = inlined_call_operand.hbm [shape: f32[128,512], index: 5, kind: input, shape index: {}]
  %s6 = inlined_call_operand.hbm [shape: f32[1,512], index: 6, kind: input, shape index: {}]
  %s7 = inlined_call_operand.hbm [shape: f32[128,512], index: 7, kind: input, shape index: {}]
  %s8 = inlined_call_operand.hbm [shape: f32[128,512], index: 8, kind: input, shape index: {}]
  %s9 = inlined_call_operand.hbm [shape: f32[1,512], index: 9, kind: input, shape index: {}]
  %s10 = inlined_call_operand.vmem [shape: f32[128,128], index: 10, kind: input, shape index: {}]
  %s11 = inlined_call_operand.vmem [shape: f32[1,128], index: 11, kind: input, shape index: {}, may-alias: {11,13}]
  %s12 = inlined_call_operand.vmem [shape: f32[128,128], index: 12, kind: input, shape index: {}]
  %s13 = inlined_call_operand.vmem [shape: f32[1,128], index: 13, kind: input, shape index: {}, may-alias: {11,13}]
  %s14 = inlined_call_operand.vmem [shape: f32[8,128], index: 14, kind: output, shape index: {0}]
  %s15 = inlined_call_operand.vmem [shape: f32[3,8,128], index: 15, kind: output, shape index: {1}]
  %16 = xla_tuple %s14, %s15
  %s17 = sld [smem:[#allocation0]]
  $region110: #{tclstm_forward.1} parent=0
    _
  %s19 = ssub.s32 1, %s17
  %s20 = scalar_select 0, %s19, %s17
  $region1: #{tclstm_forward.1} parent=0
    #allocation7 [shape = 'u8[16384]{0}', space=vmem, size = 0x4000, scoped, tag = 'input window, operand 1, single buffered']
    #allocation8 [shape = 's32[1]{0}', space=sflag, size = 0x4, scoped, tag = 'scoped memory for tclstm_forward.1']
    #allocation9 [shape = 'u8[262144]{0}', space=vmem, size = 0x40000, scoped, tag = 'input window, operand 2, single buffered']
    #allocation10 [shape = 's32[1]{0}', space=sflag, size = 0x4, scoped, tag = 'scoped memory for tclstm_forward.1']
    #allocation11 [shape = 'u8[2048]{0}', space=vmem, size = 0x800, scoped, tag = 'input window, operand 3, single buffered']
    #allocation12 [shape = 'u8[262144]{0}', space=vmem, size = 0x40000, scoped, tag = 'input window, operand 4, single buffered']
    #allocation13 [shape = 's32[1]{0}', space=sflag, size = 0x4, scoped, tag = 'scoped memory for tclstm_forward.1']
    #allocation14 [shape = 'u8[262144]{0}', space=vmem, size = 0x40000, scoped, tag = 'input window, operand 5, single buffered']
    #allocation15 [shape = 'u8[2048]{0}', space=vmem, size = 0x800, scoped, tag = 'input window, operand 6, single buffered']
    #allocation16 [shape = 's32[1]{0}', space=sflag, size = 0x4, scoped, tag = 'scoped memory for tclstm_forward.1']
    #allocation17 [shape = 'u8[262144]{0}', space=vmem, size = 0x40000, scoped, tag = 'input window, operand 7, single buffered']
    #allocation18 [shape = 'u8[262144]{0}', space=vmem, size = 0x40000, scoped, tag = 'input window, operand 8, single buffered']
    #allocation19 [shape = 's32[1]{0}', space=sflag, size = 0x4, scoped, tag = 'scoped memory for tclstm_forward.1']
    #allocation20 [shape = 'u8[2048]{0}', space=vmem, size = 0x800, scoped, tag = 'input window, operand 9, single buffered']
    %21 = vsyncpa [#allocation8], 0
    %22 = vsyncpa [#allocation10], 0
    %23 = vsyncpa [#allocation13], 0
    %24 = vsyncpa [#allocation16], 0
    %25 = vsyncpa [#allocation19], 0
    // Predicated region
    $region2: #{tclstm_forward.1} parent=1 // pred_check
      _
    $region3: #{tclstm_forward.1} parent=1 // pred_check_branch
      %27 = sbr.rel (0) target = $region5
    $region4: #{tclstm_forward.1} parent=1 // pred_region
      _
    $region5: #{tclstm_forward.1} parent=1 // pred_fallthru
      _
    // Predicated region
    $region6: #{tclstm_forward.1} parent=1 // pred_check
      _
    $region7: #{tclstm_forward.1} parent=1 // pred_check_branch
      %29 = sbr.rel (0) target = $region9
    $region8: #{tclstm_forward.1} parent=1 // pred_region
      %s31 = ssub.s32 512, 512
      %32 = vsyncadd [#allocation8], %s31
      %s34 = sshll.u32 [#allocation7], 4
      %s35 = int_to_ptr.vmem [resolvable:$true] %s34
      %37 = dma.hbm_to_vmem [thread:$0]  %s1, 512, %s35, [#allocation8]
    $region9: #{tclstm_forward.1} parent=1 // pred_fallthru
      _
    // Predicated region
    $region10: #{tclstm_forward.1} parent=1 // pred_check
      _
    $region11: #{tclstm_forward.1} parent=1 // pred_check_branch
      %39 = sbr.rel (0) target = $region13
    $region12: #{tclstm_forward.1} parent=1 // pred_region
      %s41 = ssub.s32 8192, 8192
      %42 = vsyncadd [#allocation10], %s41
      %s43 = sshll.u32 [#allocation9], 4
      %s44 = int_to_ptr.vmem [resolvable:$true] %s43
      %49 = dma.hbm_to_vmem [thread:$0]  %s2, 8192, %s44, [#allocation10], 512, 512, 32
    $region13: #{tclstm_forward.1} parent=1 // pred_fallthru
      _
    // Predicated region
    $region14: #{tclstm_forward.1} parent=1 // pred_check
      _
    $region15: #{tclstm_forward.1} parent=1 // pred_check_branch
      %51 = sbr.rel (0) target = $region17
    $region16: #{tclstm_forward.1} parent=1 // pred_region
      %s53 = ssub.s32 64, 64
      %54 = vsyncadd [#allocation10], %s53
      %s56 = sshll.u32 [#allocation11], 4
      %s57 = int_to_ptr.vmem [resolvable:$true] %s56
      %59 = dma.hbm_to_vmem [thread:$0]  %s3, 64, %s57, [#allocation10]
    $region17: #{tclstm_forward.1} parent=1 // pred_fallthru
      _
    // Predicated region
    $region18: #{tclstm_forward.1} parent=1 // pred_check
      _
    $region19: #{tclstm_forward.1} parent=1 // pred_check_branch
      %61 = sbr.rel (0) target = $region21
    $region20: #{tclstm_forward.1} parent=1 // pred_region
      %s63 = ssub.s32 8192, 8192
      %64 = vsyncadd [#allocation13], %s63
      %s65 = sshll.u32 [#allocation12], 4
      %s66 = int_to_ptr.vmem [resolvable:$true] %s65
      %71 = dma.hbm_to_vmem [thread:$0]  %s4, 8192, %s66, [#allocation13], 512, 512, 32
    $region21: #{tclstm_forward.1} parent=1 // pred_fallthru
      _
    // Predicated region
    $region22: #{tclstm_forward.1} parent=1 // pred_check
      _
    $region23: #{tclstm_forward.1} parent=1 // pred_check_branch
      %73 = sbr.rel (0) target = $region25
    $region24: #{tclstm_forward.1} parent=1 // pred_region
      %s75 = ssub.s32 8192, 8192
      %76 = vsyncadd [#allocation13], %s75
      %s77 = sshll.u32 [#allocation14], 4
      %s78 = int_to_ptr.vmem [resolvable:$true] %s77
      %83 = dma.hbm_to_vmem [thread:$0]  %s5, 8192, %s78, [#allocation13], 512, 512, 32
    $region25: #{tclstm_forward.1} parent=1 // pred_fallthru
      _
    // Predicated region
    $region26: #{tclstm_forward.1} parent=1 // pred_check
      _
    $region27: #{tclstm_forward.1} parent=1 // pred_check_branch
      %85 = sbr.rel (0) target = $region29
    $region28: #{tclstm_forward.1} parent=1 // pred_region
      %s87 = ssub.s32 64, 64
      %88 = vsyncadd [#allocation16], %s87
      %s90 = sshll.u32 [#allocation15], 4
      %s91 = int_to_ptr.vmem [resolvable:$true] %s90
      %93 = dma.hbm_to_vmem [thread:$0]  %s6, 64, %s91, [#allocation16]
    $region29: #{tclstm_forward.1} parent=1 // pred_fallthru
      _
    // Predicated region
    $region30: #{tclstm_forward.1} parent=1 // pred_check
      _
    $region31: #{tclstm_forward.1} parent=1 // pred_check_branch
      %95 = sbr.rel (0) target = $region33
    $region32: #{tclstm_forward.1} parent=1 // pred_region
      %s97 = ssub.s32 8192, 8192
      %98 = vsyncadd [#allocation16], %s97
      %s99 = sshll.u32 [#allocation17], 4
      %s100 = int_to_ptr.vmem [resolvable:$true] %s99
      %105 = dma.hbm_to_vmem [thread:$0]  %s7, 8192, %s100, [#allocation16], 512, 512, 32
    $region33: #{tclstm_forward.1} parent=1 // pred_fallthru
      _
    // Predicated region
    $region34: #{tclstm_forward.1} parent=1 // pred_check
      _
    $region35: #{tclstm_forward.1} parent=1 // pred_check_branch
      %107 = sbr.rel (0) target = $region37
    $region36: #{tclstm_forward.1} parent=1 // pred_region
      %s109 = ssub.s32 8192, 8192
      %110 = vsyncadd [#allocation19], %s109
      %s111 = sshll.u32 [#allocation18], 4
      %s112 = int_to_ptr.vmem [resolvable:$true] %s111
      %117 = dma.hbm_to_vmem [thread:$0]  %s8, 8192, %s112, [#allocation19], 512, 512, 32
    $region37: #{tclstm_forward.1} parent=1 // pred_fallthru
      _
    // Predicated region
    $region38: #{tclstm_forward.1} parent=1 // pred_check
      _
    $region39: #{tclstm_forward.1} parent=1 // pred_check_branch
      %119 = sbr.rel (0) target = $region41
    $region40: #{tclstm_forward.1} parent=1 // pred_region
      %s121 = ssub.s32 64, 64
      %122 = vsyncadd [#allocation19], %s121
      %s124 = sshll.u32 [#allocation20], 4
      %s125 = int_to_ptr.vmem [resolvable:$true] %s124
      %127 = dma.hbm_to_vmem [thread:$0]  %s9, 64, %s125, [#allocation19]
    $region41: #{tclstm_forward.1} parent=1 // pred_fallthru
      _
    // Predicated region
    $region42: #{tclstm_forward.1} parent=1 // pred_check
      _
    $region43: #{tclstm_forward.1} parent=1 // pred_check_branch
      %129 = sbr.rel (0) target = $region45
    $region44: #{tclstm_forward.1} parent=1 // pred_region
      _
    $region45: #{tclstm_forward.1} parent=1 // pred_fallthru
      _
    // Predicated region
    $region46: #{tclstm_forward.1} parent=1 // pred_check
      _
    $region47: #{tclstm_forward.1} parent=1 // pred_check_branch
      %131 = sbr.rel (0) target = $region49
    $region48: #{tclstm_forward.1} parent=1 // pred_region
      _
    $region49: #{tclstm_forward.1} parent=1 // pred_fallthru
      _
    // Predicated region
    $region50: #{tclstm_forward.1} parent=1 // pred_check
      _
    $region51: #{tclstm_forward.1} parent=1 // pred_check_branch
      %133 = sbr.rel (0) target = $region53
    $region52: #{tclstm_forward.1} parent=1 // pred_region
      _
    $region53: #{tclstm_forward.1} parent=1 // pred_fallthru
      _
    // Predicated region
    $region54: #{tclstm_forward.1} parent=1 // pred_check
      _
    $region55: #{tclstm_forward.1} parent=1 // pred_check_branch
      %135 = sbr.rel (0) target = $region57
    $region56: #{tclstm_forward.1} parent=1 // pred_region
      _
    $region57: #{tclstm_forward.1} parent=1 // pred_fallthru
      _
    // Predicated region
    $region58: #{tclstm_forward.1} parent=1 // pred_check
      _
    $region59: #{tclstm_forward.1} parent=1 // pred_check_branch
      %137 = sbr.rel (0) target = $region61
    $region60: #{tclstm_forward.1} parent=1 // pred_region
      %138 = dma.done [#allocation8], 512
    $region61: #{tclstm_forward.1} parent=1 // pred_fallthru
      _
    // Predicated region
    $region62: #{tclstm_forward.1} parent=1 // pred_check
      _
    $region63: #{tclstm_forward.1} parent=1 // pred_check_branch
      %140 = sbr.rel (0) target = $region65
    $region64: #{tclstm_forward.1} parent=1 // pred_region
      %141 = dma.done [#allocation10], 8192
    $region65: #{tclstm_forward.1} parent=1 // pred_fallthru
      _
    // Predicated region
    $region66: #{tclstm_forward.1} parent=1 // pred_check
      _
    $region67: #{tclstm_forward.1} parent=1 // pred_check_branch
      %143 = sbr.rel (0) target = $region69
    $region68: #{tclstm_forward.1} parent=1 // pred_region
      %144 = dma.done [#allocation10], 64
    $region69: #{tclstm_forward.1} parent=1 // pred_fallthru
      _
    // Predicated region
    $region70: #{tclstm_forward.1} parent=1 // pred_check
      _
    $region71: #{tclstm_forward.1} parent=1 // pred_check_branch
      %146 = sbr.rel (0) target = $region73
    $region72: #{tclstm_forward.1} parent=1 // pred_region
      %147 = dma.done [#allocation13], 8192
    $region73: #{tclstm_forward.1} parent=1 // pred_fallthru
      _
    // Predicated region
    $region74: #{tclstm_forward.1} parent=1 // pred_check
      _
    $region75: #{tclstm_forward.1} parent=1 // pred_check_branch
      %149 = sbr.rel (0) target = $region77
    $region76: #{tclstm_forward.1} parent=1 // pred_region
      %150 = dma.done [#allocation13], 8192
    $region77: #{tclstm_forward.1} parent=1 // pred_fallthru
      _
    // Predicated region
    $region78: #{tclstm_forward.1} parent=1 // pred_check
      _
    $region79: #{tclstm_forward.1} parent=1 // pred_check_branch
      %152 = sbr.rel (0) target = $region81
    $region80: #{tclstm_forward.1} parent=1 // pred_region
      %153 = dma.done [#allocation16], 64
    $region81: #{tclstm_forward.1} parent=1 // pred_fallthru
      _
    // Predicated region
    $region82: #{tclstm_forward.1} parent=1 // pred_check
      _
    $region83: #{tclstm_forward.1} parent=1 // pred_check_branch
      %155 = sbr.rel (0) target = $region85
    $region84: #{tclstm_forward.1} parent=1 // pred_region
      %156 = dma.done [#allocation16], 8192
    $region85: #{tclstm_forward.1} parent=1 // pred_fallthru
      _
    // Predicated region
    $region86: #{tclstm_forward.1} parent=1 // pred_check
      _
    $region87: #{tclstm_forward.1} parent=1 // pred_check_branch
      %158 = sbr.rel (0) target = $region89
    $region88: #{tclstm_forward.1} parent=1 // pred_region
      %159 = dma.done [#allocation19], 8192
    $region89: #{tclstm_forward.1} parent=1 // pred_fallthru
      _
    // Predicated region
    $region90: #{tclstm_forward.1} parent=1 // pred_check
      _
    $region91: #{tclstm_forward.1} parent=1 // pred_check_branch
      %161 = sbr.rel (0) target = $region93
    $region92: #{tclstm_forward.1} parent=1 // pred_region
      %162 = dma.done [#allocation19], 64
    $region93: #{tclstm_forward.1} parent=1 // pred_fallthru
      _
    %v163 = vld [vmem:[%s0] sm:$0xff]
    %v164 = vld [vmem:[%s0 + $0x8] sm:$0xff]
    %v165 = vld [vmem:[%s0 + $0x10] sm:$0xff]
    %v166 = vld [vmem:[%s0 + $0x18] sm:$0xff]
    %v167 = vld [vmem:[%s0 + $0x20] sm:$0xff]
    %v168 = vld [vmem:[%s0 + $0x28] sm:$0xff]
    %v169 = vld [vmem:[%s0 + $0x30] sm:$0xff]
    %v170 = vld [vmem:[%s0 + $0x38] sm:$0xff]
    %v171 = vld [vmem:[%s0 + $0x40] sm:$0xff]
    %v172 = vld [vmem:[%s0 + $0x48] sm:$0xff]
    %v173 = vld [vmem:[%s0 + $0x50] sm:$0xff]
    %v174 = vld [vmem:[%s0 + $0x58] sm:$0xff]
    %v175 = vld [vmem:[%s0 + $0x60] sm:$0xff]
    %v176 = vld [vmem:[%s0 + $0x68] sm:$0xff]
    %v177 = vld [vmem:[%s0 + $0x70] sm:$0xff]
    %v178 = vld [vmem:[%s0 + $0x78] sm:$0xff]
    %v179 = vld [vmem:[#allocation7] sm:$0x3f]
    %v180 = vld [vmem:[#allocation7 + $0x8] sm:$0x3f]
    %v181 = vld [vmem:[#allocation7 + $0x10] sm:$0x3f]
    %v182 = vld [vmem:[#allocation7 + $0x18] sm:$0x3f]
    %v183 = vld [vmem:[#allocation11] sm:$0xf]
    %v185 = vlaneseq
    %v186 = vshrl.u32 %v185, 7
    %v187 = vsub.s32 0, %v186
    %v188 = vrot.slane %v183, %v187
    %v189 = vlaneseq
    %v190 = vshrl.u32 %v189, 7
    %v191 = vsub.s32 1, %v190
    %v192 = vrot.slane %v183, %v191
    %v193 = vlaneseq
    %v194 = vshrl.u32 %v193, 7
    %v195 = vsub.s32 2, %v194
    %v196 = vrot.slane %v183, %v195
    %v197 = vlaneseq
    %v198 = vshrl.u32 %v197, 7
    %v199 = vsub.s32 3, %v198
    %v200 = vrot.slane %v183, %v199
    %vm205 = vcmask 48128
    %v207 = vsel %vm205, %v163, 0
    %v210 = vsel %vm205, %v164, 0
    %v213 = vsel %vm205, %v165, 0
    %v216 = vsel %vm205, %v166, 0
    %v219 = vsel %vm205, %v167, 0
    %v222 = vsel %vm205, %v168, 0
    %v225 = vsel %vm205, %v169, 0
    %v228 = vsel %vm205, %v170, 0
    %v231 = vsel %vm205, %v171, 0
    %v234 = vsel %vm205, %v172, 0
    %v237 = vsel %vm205, %v173, 0
    %v240 = vsel %vm205, %v174, 0
    %v243 = vsel %vm205, %v175, 0
    %v246 = vsel %vm205, %v176, 0
    %v249 = vsel %vm205, %v177, 0
    %v252 = vsel %vm205, %v178, 0
    %vm254 = vcmask 1045504
    %v256 = vsel %vm254, %v179, 0
    %v259 = vsel %vm254, %v180, 0
    %v262 = vsel %vm254, %v181, 0
    %v265 = vsel %vm254, %v182, 0
    %267 = vmatprep.subr.mxu0 %v259
    %268 = vmatpush1.msra.mxu0 %v256
    %269 = vmatprep.subr.mxu0 0.0
    %270 = vmatpush1.msra.mxu0 0.0
    %271 = vmatprep.subr.mxu0 0.0
    %272 = vmatpush1.msra.mxu0 0.0
    %273 = vmatprep.subr.mxu0 0.0
    %274 = vmatpush1.msra.mxu0 0.0
    %275 = vmatprep.subr.mxu0 0.0
    %276 = vmatpush1.msra.mxu0 0.0
    %277 = vmatprep.subr.mxu0 0.0
    %278 = vmatpush1.msra.mxu0 0.0
    %279 = vmatprep.subr.mxu0 0.0
    %280 = vmatpush1.msra.mxu0 0.0
    %281 = vmatprep.subr.mxu0 0.0
    %282 = vmatpush1.msra.mxu0 0.0
    %283 = vmatprep.subr.mxu0 0.0
    %284 = vmatpush1.msra.mxu0 0.0
    %285 = vmatprep.subr.mxu0 0.0
    %286 = vmatpush1.msra.mxu0 0.0
    %287 = vmatprep.subr.mxu0 0.0
    %288 = vmatpush1.msra.mxu0 0.0
    %289 = vmatprep.subr.mxu0 0.0
    %290 = vmatpush1.msra.mxu0 0.0
    %291 = vmatprep.subr.mxu0 0.0
    %292 = vmatpush1.msra.mxu0 0.0
    %293 = vmatprep.subr.mxu0 0.0
    %294 = vmatpush1.msra.mxu0 0.0
    %295 = vmatprep.subr.mxu0 0.0
    %296 = vmatpush1.msra.mxu0 0.0
    %297 = vmatprep.subr.mxu0 0.0
    %298 = vmatpush1.msra.mxu0 0.0
    %299 = vmatprep.subr.mxu0 0.0
    %300 = vmatpush1.msra.mxu0 0.0
    %301 = vmatprep.subr.mxu0 0.0
    %302 = vmatpush1.msra.mxu0 0.0
    %303 = vmatprep.subr.mxu0 0.0
    %304 = vmatpush1.msra.mxu0 0.0
    %305 = vmatprep.subr.mxu0 0.0
    %306 = vmatpush1.msra.mxu0 0.0
    %307 = vmatprep.subr.mxu0 0.0
    %308 = vmatpush1.msra.mxu0 0.0
    %309 = vmatprep.subr.mxu0 0.0
    %310 = vmatpush1.msra.mxu0 0.0
    %311 = vmatprep.subr.mxu0 0.0
    %312 = vmatpush1.msra.mxu0 0.0
    %313 = vmatprep.subr.mxu0 0.0
    %314 = vmatpush1.msra.mxu0 0.0
    %315 = vmatprep.subr.mxu0 0.0
    %316 = vmatpush1.msra.mxu0 0.0
    %317 = vmatprep.subr.mxu0 0.0
    %318 = vmatpush1.msra.mxu0 0.0
    %319 = vmatprep.subr.mxu0 0.0
    %320 = vmatpush1.msra.mxu0 0.0
    %321 = vmatprep.subr.mxu0 0.0
    %322 = vmatpush1.msra.mxu0 0.0
    %323 = vmatprep.subr.mxu0 0.0
    %324 = vmatpush1.msra.mxu0 0.0
    %325 = vmatprep.subr.mxu0 0.0
    %326 = vmatpush1.msra.mxu0 0.0
    %327 = vmatprep.subr.mxu0 0.0
    %328 = vmatpush1.msra.mxu0 0.0
    %329 = vmatprep.subr.mxu0 0.0
    %330 = vmatpush1.msra.mxu0 0.0
    %331 = vmatprep.mubr.f32.mxu0 0.0
    %332 = vmatmul.mubr.f32.gmra.mrb[0].mxu0 %v207
    %v333 = vpop.f32.mrb[0].mxu0
    %v334 = vadd.f32 %v188, %v333
    %v335 = vpop.f32.mrb[0].mxu0
    %v336 = vadd.f32 %v192, %v335
    %337 = vmatprep.mubr.f32.mxu0 0.0
    %338 = vmatmul.mubr.f32.gmra.mrb[0].mxu0 %v210
    %v339 = vpop.f32.mrb[0].mxu0
    %v340 = vadd.f32 %v188, %v339
    %v341 = vpop.f32.mrb[0].mxu0
    %v342 = vadd.f32 %v192, %v341
    %343 = vmatprep.mubr.f32.mxu0 0.0
    %344 = vmatmul.mubr.f32.gmra.mrb[0].mxu0 %v213
    %v345 = vpop.f32.mrb[0].mxu0
    %v346 = vadd.f32 %v188, %v345
    %v347 = vpop.f32.mrb[0].mxu0
    %v348 = vadd.f32 %v192, %v347
    %349 = vmatprep.mubr.f32.mxu0 0.0
    %350 = vmatmul.mubr.f32.gmra.mrb[0].mxu0 %v216
    %v351 = vpop.f32.mrb[0].mxu0
    %v352 = vadd.f32 %v188, %v351
    %v353 = vpop.f32.mrb[0].mxu0
    %v354 = vadd.f32 %v192, %v353
    %355 = vmatprep.mubr.f32.mxu0 0.0
    %356 = vmatmul.mubr.f32.gmra.mrb[0].mxu0 %v219
    %v357 = vpop.f32.mrb[0].mxu0
    %v358 = vadd.f32 %v188, %v357
    %v359 = vpop.f32.mrb[0].mxu0
    %v360 = vadd.f32 %v192, %v359
    %361 = vmatprep.mubr.f32.mxu0 0.0
    %362 = vmatmul.mubr.f32.gmra.mrb[0].mxu0 %v222
    %v363 = vpop.f32.mrb[0].mxu0
    %v364 = vadd.f32 %v188, %v363
    %v365 = vpop.f32.mrb[0].mxu0
    %v366 = vadd.f32 %v192, %v365
    %367 = vmatprep.mubr.f32.mxu0 0.0
    %368 = vmatmul.mubr.f32.gmra.mrb[0].mxu0 %v225
    %v369 = vpop.f32.mrb[0].mxu0
    %v370 = vadd.f32 %v188, %v369
    %v371 = vpop.f32.mrb[0].mxu0
    %v372 = vadd.f32 %v192, %v371
    %373 = vmatprep.mubr.f32.mxu0 0.0
    %374 = vmatmul.mubr.f32.gmra.mrb[0].mxu0 %v228
    %v375 = vpop.f32.mrb[0].mxu0
    %v376 = vadd.f32 %v188, %v375
    %v377 = vpop.f32.mrb[0].mxu0
    %v378 = vadd.f32 %v192, %v377
    %379 = vmatprep.mubr.f32.mxu0 0.0
    %380 = vmatmul.mubr.f32.gmra.mrb[0].mxu0 %v231
    %v381 = vpop.f32.mrb[0].mxu0
    %v382 = vadd.f32 %v188, %v381
    %v383 = vpop.f32.mrb[0].mxu0
    %v384 = vadd.f32 %v192, %v383
    %385 = vmatprep.mubr.f32.mxu0 0.0
    %386 = vmatmul.mubr.f32.gmra.mrb[0].mxu0 %v234
    %v387 = vpop.f32.mrb[0].mxu0
    %v388 = vadd.f32 %v188, %v387
    %v389 = vpop.f32.mrb[0].mxu0
    %v390 = vadd.f32 %v192, %v389
    %391 = vmatprep.mubr.f32.mxu0 0.0
    %392 = vmatmul.mubr.f32.gmra.mrb[0].mxu0 %v237
    %v393 = vpop.f32.mrb[0].mxu0
    %v394 = vadd.f32 %v188, %v393
    %v395 = vpop.f32.mrb[0].mxu0
    %v396 = vadd.f32 %v192, %v395
    %397 = vmatprep.mubr.f32.mxu0 0.0
    %398 = vmatmul.mubr.f32.gmra.mrb[0].mxu0 %v240
    %v399 = vpop.f32.mrb[0].mxu0
    %v400 = vadd.f32 %v188, %v399
    %v401 = vpop.f32.mrb[0].mxu0
    %v402 = vadd.f32 %v192, %v401
    %403 = vmatprep.mubr.f32.mxu0 0.0
    %404 = vmatmul.mubr.f32.gmra.mrb[0].mxu0 %v243
    %v405 = vpop.f32.mrb[0].mxu0
    %v406 = vadd.f32 %v188, %v405
    %v407 = vpop.f32.mrb[0].mxu0
    %v408 = vadd.f32 %v192, %v407
    %409 = vmatprep.mubr.f32.mxu0 0.0
    %410 = vmatmul.mubr.f32.gmra.mrb[0].mxu0 %v246
    %v411 = vpop.f32.mrb[0].mxu0
    %v412 = vadd.f32 %v188, %v411
    %v413 = vpop.f32.mrb[0].mxu0
    %v414 = vadd.f32 %v192, %v413
    %415 = vmatprep.mubr.f32.mxu0 0.0
    %416 = vmatmul.mubr.f32.gmra.mrb[0].mxu0 %v249
    %v417 = vpop.f32.mrb[0].mxu0
    %v418 = vadd.f32 %v188, %v417
    %v419 = vpop.f32.mrb[0].mxu0
    %v420 = vadd.f32 %v192, %v419
    %421 = vmatprep.mubr.f32.mxu0 0.0
    %422 = vmatmul.mubr.f32.gmra.mrb[0].mxu0 %v252
    %v423 = vpop.f32.mrb[0].mxu0
    %v424 = vadd.f32 %v188, %v423
    %v425 = vpop.f32.mrb[0].mxu0
    %v426 = vadd.f32 %v192, %v425
    %427 = vdwg.mxu0
    %428 = vmatprep.subr.mxu0 %v265
    %429 = vmatpush1.msra.mxu0 %v262
    %430 = vmatprep.subr.mxu0 0.0
    %431 = vmatpush1.msra.mxu0 0.0
    %432 = vmatprep.subr.mxu0 0.0
    %433 = vmatpush1.msra.mxu0 0.0
    %434 = vmatprep.subr.mxu0 0.0
    %435 = vmatpush1.msra.mxu0 0.0
    %436 = vmatprep.subr.mxu0 0.0
    %437 = vmatpush1.msra.mxu0 0.0
    %438 = vmatprep.subr.mxu0 0.0
    %439 = vmatpush1.msra.mxu0 0.0
    %440 = vmatprep.subr.mxu0 0.0
    %441 = vmatpush1.msra.mxu0 0.0
    %442 = vmatprep.subr.mxu0 0.0
    %443 = vmatpush1.msra.mxu0 0.0
    %444 = vmatprep.subr.mxu0 0.0
    %445 = vmatpush1.msra.mxu0 0.0
    %446 = vmatprep.subr.mxu0 0.0
    %447 = vmatpush1.msra.mxu0 0.0
    %448 = vmatprep.subr.mxu0 0.0
    %449 = vmatpush1.msra.mxu0 0.0
    %450 = vmatprep.subr.mxu0 0.0
    %451 = vmatpush1.msra.mxu0 0.0
    %452 = vmatprep.subr.mxu0 0.0
    %453 = vmatpush1.msra.mxu0 0.0
    %454 = vmatprep.subr.mxu0 0.0
    %455 = vmatpush1.msra.mxu0 0.0
    %456 = vmatprep.subr.mxu0 0.0
    %457 = vmatpush1.msra.mxu0 0.0
    %458 = vmatprep.subr.mxu0 0.0
    %459 = vmatpush1.msra.mxu0 0.0
    %460 = vmatprep.subr.mxu0 0.0
    %461 = vmatpush1.msra.mxu0 0.0
    %462 = vmatprep.subr.mxu0 0.0
    %463 = vmatpush1.msra.mxu0 0.0
    %464 = vmatprep.subr.mxu0 0.0
    %465 = vmatpush1.msra.mxu0 0.0
    %466 = vmatprep.subr.mxu0 0.0
    %467 = vmatpush1.msra.mxu0 0.0
    %468 = vmatprep.subr.mxu0 0.0
    %469 = vmatpush1.msra.mxu0 0.0
    %470 = vmatprep.subr.mxu0 0.0
    %471 = vmatpush1.msra.mxu0 0.0
    %472 = vmatprep.subr.mxu0 0.0
    %473 = vmatpush1.msra.mxu0 0.0
    %474 = vmatprep.subr.mxu0 0.0
    %475 = vmatpush1.msra.mxu0 0.0
    %476 = vmatprep.subr.mxu0 0.0
    %477 = vmatpush1.msra.mxu0 0.0
    %478 = vmatprep.subr.mxu0 0.0
    %479 = vmatpush1.msra.mxu0 0.0
    %480 = vmatprep.subr.mxu0 0.0
    %481 = vmatpush1.msra.mxu0 0.0
    %482 = vmatprep.subr.mxu0 0.0
    %483 = vmatpush1.msra.mxu0 0.0
    %484 = vmatprep.subr.mxu0 0.0
    %485 = vmatpush1.msra.mxu0 0.0
    %486 = vmatprep.subr.mxu0 0.0
    %487 = vmatpush1.msra.mxu0 0.0
    %488 = vmatprep.subr.mxu0 0.0
    %489 = vmatpush1.msra.mxu0 0.0
    %490 = vmatprep.subr.mxu0 0.0
    %491 = vmatpush1.msra.mxu0 0.0
    %492 = vmatprep.mubr.f32.mxu0 0.0
    %493 = vmatmul.mubr.f32.gmra.mrb[0].mxu0 %v207
    %v494 = vpop.f32.mrb[0].mxu0
    %v495 = vadd.f32 %v196, %v494
    %v496 = vpop.f32.mrb[0].mxu0
    %v497 = vadd.f32 %v200, %v496
    %498 = vmatprep.mubr.f32.mxu0 0.0
    %499 = vmatmul.mubr.f32.gmra.mrb[0].mxu0 %v210
    %v500 = vpop.f32.mrb[0].mxu0
    %v501 = vadd.f32 %v196, %v500
    %v502 = vpop.f32.mrb[0].mxu0
    %v503 = vadd.f32 %v200, %v502
    %504 = vmatprep.mubr.f32.mxu0 0.0
    %505 = vmatmul.mubr.f32.gmra.mrb[0].mxu0 %v213
    %v506 = vpop.f32.mrb[0].mxu0
    %v507 = vadd.f32 %v196, %v506
    %v508 = vpop.f32.mrb[0].mxu0
    %v509 = vadd.f32 %v200, %v508
    %510 = vmatprep.mubr.f32.mxu0 0.0
    %511 = vmatmul.mubr.f32.gmra.mrb[0].mxu0 %v216
    %v512 = vpop.f32.mrb[0].mxu0
    %v513 = vadd.f32 %v196, %v512
    %v514 = vpop.f32.mrb[0].mxu0
    %v515 = vadd.f32 %v200, %v514
    %516 = vmatprep.mubr.f32.mxu0 0.0
    %517 = vmatmul.mubr.f32.gmra.mrb[0].mxu0 %v219
    %v518 = vpop.f32.mrb[0].mxu0
    %v519 = vadd.f32 %v196, %v518
    %v520 = vpop.f32.mrb[0].mxu0
    %v521 = vadd.f32 %v200, %v520
    %522 = vmatprep.mubr.f32.mxu0 0.0
    %523 = vmatmul.mubr.f32.gmra.mrb[0].mxu0 %v222
    %v524 = vpop.f32.mrb[0].mxu0
    %v525 = vadd.f32 %v196, %v524
    %v526 = vpop.f32.mrb[0].mxu0
    %v527 = vadd.f32 %v200, %v526
    %528 = vmatprep.mubr.f32.mxu0 0.0
    %529 = vmatmul.mubr.f32.gmra.mrb[0].mxu0 %v225
    %v530 = vpop.f32.mrb[0].mxu0
    %v531 = vadd.f32 %v196, %v530
    %v532 = vpop.f32.mrb[0].mxu0
    %v533 = vadd.f32 %v200, %v532
    %534 = vmatprep.mubr.f32.mxu0 0.0
    %535 = vmatmul.mubr.f32.gmra.mrb[0].mxu0 %v228
    %v536 = vpop.f32.mrb[0].mxu0
    %v537 = vadd.f32 %v196, %v536
    %v538 = vpop.f32.mrb[0].mxu0
    %v539 = vadd.f32 %v200, %v538
    %540 = vmatprep.mubr.f32.mxu0 0.0
    %541 = vmatmul.mubr.f32.gmra.mrb[0].mxu0 %v231
    %v542 = vpop.f32.mrb[0].mxu0
    %v543 = vadd.f32 %v196, %v542
    %v544 = vpop.f32.mrb[0].mxu0
    %v545 = vadd.f32 %v200, %v544
    %546 = vmatprep.mubr.f32.mxu0 0.0
    %547 = vmatmul.mubr.f32.gmra.mrb[0].mxu0 %v234
    %v548 = vpop.f32.mrb[0].mxu0
    %v549 = vadd.f32 %v196, %v548
    %v550 = vpop.f32.mrb[0].mxu0
    %v551 = vadd.f32 %v200, %v550
    %552 = vmatprep.mubr.f32.mxu0 0.0
    %553 = vmatmul.mubr.f32.gmra.mrb[0].mxu0 %v237
    %v554 = vpop.f32.mrb[0].mxu0
    %v555 = vadd.f32 %v196, %v554
    %v556 = vpop.f32.mrb[0].mxu0
    %v557 = vadd.f32 %v200, %v556
    %558 = vmatprep.mubr.f32.mxu0 0.0
    %559 = vmatmul.mubr.f32.gmra.mrb[0].mxu0 %v240
    %v560 = vpop.f32.mrb[0].mxu0
    %v561 = vadd.f32 %v196, %v560
    %v562 = vpop.f32.mrb[0].mxu0
    %v563 = vadd.f32 %v200, %v562
    %564 = vmatprep.mubr.f32.mxu0 0.0
    %565 = vmatmul.mubr.f32.gmra.mrb[0].mxu0 %v243
    %v566 = vpop.f32.mrb[0].mxu0
    %v567 = vadd.f32 %v196, %v566
    %v568 = vpop.f32.mrb[0].mxu0
    %v569 = vadd.f32 %v200, %v568
    %570 = vmatprep.mubr.f32.mxu0 0.0
    %571 = vmatmul.mubr.f32.gmra.mrb[0].mxu0 %v246
    %v572 = vpop.f32.mrb[0].mxu0
    %v573 = vadd.f32 %v196, %v572
    %v574 = vpop.f32.mrb[0].mxu0
    %v575 = vadd.f32 %v200, %v574
    %576 = vmatprep.mubr.f32.mxu0 0.0
    %577 = vmatmul.mubr.f32.gmra.mrb[0].mxu0 %v249
    %v578 = vpop.f32.mrb[0].mxu0
    %v579 = vadd.f32 %v196, %v578
    %v580 = vpop.f32.mrb[0].mxu0
    %v581 = vadd.f32 %v200, %v580
    %582 = vmatprep.mubr.f32.mxu0 0.0
    %583 = vmatmul.mubr.f32.gmra.mrb[0].mxu0 %v252
    %v584 = vpop.f32.mrb[0].mxu0
    %v585 = vadd.f32 %v196, %v584
    %v586 = vpop.f32.mrb[0].mxu0
    %v587 = vadd.f32 %v200, %v586
    %588 = vdwg.mxu0
    %589 = vst [vmem:[#allocation2] sm:$0xff] %v334
    %590 = vst [vmem:[#allocation2 + $0x8] sm:$0xff] %v336
    %591 = vst [vmem:[#allocation2 + $0x10] sm:$0xff] %v495
    %592 = vst [vmem:[#allocation2 + $0x18] sm:$0xff] %v497
    %593 = vst [vmem:[#allocation2 + $0x20] sm:$0xff] %v340
    %594 = vst [vmem:[#allocation2 + $0x28] sm:$0xff] %v342
    %595 = vst [vmem:[#allocation2 + $0x30] sm:$0xff] %v501
    %596 = vst [vmem:[#allocation2 + $0x38] sm:$0xff] %v503
    %597 = vst [vmem:[#allocation2 + $0x40] sm:$0xff] %v346
    %598 = vst [vmem:[#allocation2 + $0x48] sm:$0xff] %v348
    %599 = vst [vmem:[#allocation2 + $0x50] sm:$0xff] %v507
    %600 = vst [vmem:[#allocation2 + $0x58] sm:$0xff] %v509
    %601 = vst [vmem:[#allocation2 + $0x60] sm:$0xff] %v352
    %602 = vst [vmem:[#allocation2 + $0x68] sm:$0xff] %v354
    %603 = vst [vmem:[#allocation2 + $0x70] sm:$0xff] %v513
    %604 = vst [vmem:[#allocation2 + $0x78] sm:$0xff] %v515
    %605 = vst [vmem:[#allocation2 + $0x80] sm:$0xff] %v358
    %606 = vst [vmem:[#allocation2 + $0x88] sm:$0xff] %v360
    %607 = vst [vmem:[#allocation2 + $0x90] sm:$0xff] %v519
    %608 = vst [vmem:[#allocation2 + $0x98] sm:$0xff] %v521
    %609 = vst [vmem:[#allocation2 + $0xa0] sm:$0xff] %v364
    %610 = vst [vmem:[#allocation2 + $0xa8] sm:$0xff] %v366
    %611 = vst [vmem:[#allocation2 + $0xb0] sm:$0xff] %v525
    %612 = vst [vmem:[#allocation2 + $0xb8] sm:$0xff] %v527
    %613 = vst [vmem:[#allocation2 + $0xc0] sm:$0xff] %v370
    %614 = vst [vmem:[#allocation2 + $0xc8] sm:$0xff] %v372
    %615 = vst [vmem:[#allocation2 + $0xd0] sm:$0xff] %v531
    %616 = vst [vmem:[#allocation2 + $0xd8] sm:$0xff] %v533
    %617 = vst [vmem:[#allocation2 + $0xe0] sm:$0xff] %v376
    %618 = vst [vmem:[#allocation2 + $0xe8] sm:$0xff] %v378
    %619 = vst [vmem:[#allocation2 + $0xf0] sm:$0xff] %v537
    %620 = vst [vmem:[#allocation2 + $0xf8] sm:$0xff] %v539
    %621 = vst [vmem:[#allocation2 + $0x100] sm:$0xff] %v382
    %622 = vst [vmem:[#allocation2 + $0x108] sm:$0xff] %v384
    %623 = vst [vmem:[#allocation2 + $0x110] sm:$0xff] %v543
    %624 = vst [vmem:[#allocation2 + $0x118] sm:$0xff] %v545
    %625 = vst [vmem:[#allocation2 + $0x120] sm:$0xff] %v388
    %626 = vst [vmem:[#allocation2 + $0x128] sm:$0xff] %v390
    %627 = vst [vmem:[#allocation2 + $0x130] sm:$0xff] %v549
    %628 = vst [vmem:[#allocation2 + $0x138] sm:$0xff] %v551
    %629 = vst [vmem:[#allocation2 + $0x140] sm:$0xff] %v394
    %630 = vst [vmem:[#allocation2 + $0x148] sm:$0xff] %v396
    %631 = vst [vmem:[#allocation2 + $0x150] sm:$0xff] %v555
    %632 = vst [vmem:[#allocation2 + $0x158] sm:$0xff] %v557
    %633 = vst [vmem:[#allocation2 + $0x160] sm:$0xff] %v400
    %634 = vst [vmem:[#allocation2 + $0x168] sm:$0xff] %v402
    %635 = vst [vmem:[#allocation2 + $0x170] sm:$0xff] %v561
    %636 = vst [vmem:[#allocation2 + $0x178] sm:$0xff] %v563
    %637 = vst [vmem:[#allocation2 + $0x180] sm:$0xff] %v406
    %638 = vst [vmem:[#allocation2 + $0x188] sm:$0xff] %v408
    %639 = vst [vmem:[#allocation2 + $0x190] sm:$0xff] %v567
    %640 = vst [vmem:[#allocation2 + $0x198] sm:$0xff] %v569
    %641 = vst [vmem:[#allocation2 + $0x1a0] sm:$0xff] %v412
    %642 = vst [vmem:[#allocation2 + $0x1a8] sm:$0xff] %v414
    %643 = vst [vmem:[#allocation2 + $0x1b0] sm:$0xff] %v573
    %644 = vst [vmem:[#allocation2 + $0x1b8] sm:$0xff] %v575
    %645 = vst [vmem:[#allocation2 + $0x1c0] sm:$0xff] %v418
    %646 = vst [vmem:[#allocation2 + $0x1c8] sm:$0xff] %v420
    %647 = vst [vmem:[#allocation2 + $0x1d0] sm:$0xff] %v579
    %648 = vst [vmem:[#allocation2 + $0x1d8] sm:$0xff] %v581
    %649 = vst [vmem:[#allocation2 + $0x1e0] sm:$0xff] %v424
    %650 = vst [vmem:[#allocation2 + $0x1e8] sm:$0xff] %v426
    %651 = vst [vmem:[#allocation2 + $0x1f0] sm:$0xff] %v585
    %652 = vst [vmem:[#allocation2 + $0x1f8] sm:$0xff] %v587
    %v653 = vld [vmem:[#allocation9] sm:$0xff]
    %v654 = vld [vmem:[#allocation9 + $0x8] sm:$0xff]
    %v655 = vld [vmem:[#allocation9 + $0x10] sm:$0xff]
    %v656 = vld [vmem:[#allocation9 + $0x18] sm:$0xff]
    %v657 = vld [vmem:[#allocation9 + $0x20] sm:$0xff]
    %v658 = vld [vmem:[#allocation9 + $0x28] sm:$0xff]
    %v659 = vld [vmem:[#allocation9 + $0x30] sm:$0xff]
    %v660 = vld [vmem:[#allocation9 + $0x38] sm:$0xff]
    %v661 = vld [vmem:[#allocation9 + $0x40] sm:$0xff]
    %v662 = vld [vmem:[#allocation9 + $0x48] sm:$0xff]
    %v663 = vld [vmem:[#allocation9 + $0x50] sm:$0xff]
    %v664 = vld [vmem:[#allocation9 + $0x58] sm:$0xff]
    %v665 = vld [vmem:[#allocation9 + $0x60] sm:$0xff]
    %v666 = vld [vmem:[#allocation9 + $0x68] sm:$0xff]
    %v667 = vld [vmem:[#allocation9 + $0x70] sm:$0xff]
    %v668 = vld [vmem:[#allocation9 + $0x78] sm:$0xff]
    %v669 = vld [vmem:[#allocation9 + $0x80] sm:$0xff]
    %v670 = vld [vmem:[#allocation9 + $0x88] sm:$0xff]
    %v671 = vld [vmem:[#allocation9 + $0x90] sm:$0xff]
    %v672 = vld [vmem:[#allocation9 + $0x98] sm:$0xff]
    %v673 = vld [vmem:[#allocation9 + $0xa0] sm:$0xff]
    %v674 = vld [vmem:[#allocation9 + $0xa8] sm:$0xff]
    %v675 = vld [vmem:[#allocation9 + $0xb0] sm:$0xff]
    %v676 = vld [vmem:[#allocation9 + $0xb8] sm:$0xff]
    %v677 = vld [vmem:[#allocation9 + $0xc0] sm:$0xff]
    %v678 = vld [vmem:[#allocation9 + $0xc8] sm:$0xff]
    %v679 = vld [vmem:[#allocation9 + $0xd0] sm:$0xff]
    %v680 = vld [vmem:[#allocation9 + $0xd8] sm:$0xff]
    %v681 = vld [vmem:[#allocation9 + $0xe0] sm:$0xff]
    %v682 = vld [vmem:[#allocation9 + $0xe8] sm:$0xff]
    %v683 = vld [vmem:[#allocation9 + $0xf0] sm:$0xff]
    %v684 = vld [vmem:[#allocation9 + $0xf8] sm:$0xff]
    %v685 = vld [vmem:[#allocation9 + $0x100] sm:$0xff]
    %v686 = vld [vmem:[#allocation9 + $0x108] sm:$0xff]
    %v687 = vld [vmem:[#allocation9 + $0x110] sm:$0xff]
    %v688 = vld [vmem:[#allocation9 + $0x118] sm:$0xff]
    %v689 = vld [vmem:[#allocation9 + $0x120] sm:$0xff]
    %v690 = vld [vmem:[#allocation9 + $0x128] sm:$0xff]
    %v691 = vld [vmem:[#allocation9 + $0x130] sm:$0xff]
    %v692 = vld [vmem:[#allocation9 + $0x138] sm:$0xff]
    %v693 = vld [vmem:[#allocation9 + $0x140] sm:$0xff]
    %v694 = vld [vmem:[#allocation9 + $0x148] sm:$0xff]
    %v695 = vld [vmem:[#allocation9 + $0x150] sm:$0xff]
    %v696 = vld [vmem:[#allocation9 + $0x158] sm:$0xff]
    %v697 = vld [vmem:[#allocation9 + $0x160] sm:$0xff]
    %v698 = vld [vmem:[#allocation9 + $0x168] sm:$0xff]
    %v699 = vld [vmem:[#allocation9 + $0x170] sm:$0xff]
    %v700 = vld [vmem:[#allocation9 + $0x178] sm:$0xff]
    %v701 = vld [vmem:[#allocation9 + $0x180] sm:$0xff]
    %v702 = vld [vmem:[#allocation9 + $0x188] sm:$0xff]
    %v703 = vld [vmem:[#allocation9 + $0x190] sm:$0xff]
    %v704 = vld [vmem:[#allocation9 + $0x198] sm:$0xff]
    %v705 = vld [vmem:[#allocation9 + $0x1a0] sm:$0xff]
    %v706 = vld [vmem:[#allocation9 + $0x1a8] sm:$0xff]
    %v707 = vld [vmem:[#allocation9 + $0x1b0] sm:$0xff]
    %v708 = vld [vmem:[#allocation9 + $0x1b8] sm:$0xff]
    %v709 = vld [vmem:[#allocation9 + $0x1c0] sm:$0xff]
    %v710 = vld [vmem:[#allocation9 + $0x1c8] sm:$0xff]
    %v711 = vld [vmem:[#allocation9 + $0x1d0] sm:$0xff]
    %v712 = vld [vmem:[#allocation9 + $0x1d8] sm:$0xff]
    %v713 = vld [vmem:[#allocation9 + $0x1e0] sm:$0xff]
    %v714 = vld [vmem:[#allocation9 + $0x1e8] sm:$0xff]
    %v715 = vld [vmem:[#allocation9 + $0x1f0] sm:$0xff]
    %v716 = vld [vmem:[#allocation9 + $0x1f8] sm:$0xff]
    %v717 = vld [vmem:[#allocation2] sm:$0xff]
    %v718 = vld [vmem:[#allocation2 + $0x8] sm:$0xff]
    %v719 = vld [vmem:[#allocation2 + $0x10] sm:$0xff]
    %v720 = vld [vmem:[#allocation2 + $0x18] sm:$0xff]
    %721 = vmatprep.subr.mxu0 %v654
    %722 = vmatpush1.msra.mxu0 %v653
    %723 = vmatprep.subr.mxu0 %v658
    %724 = vmatpush1.msra.mxu0 %v657
    %725 = vmatprep.subr.mxu0 %v662
    %726 = vmatpush1.msra.mxu0 %v661
    %727 = vmatprep.subr.mxu0 %v666
    %728 = vmatpush1.msra.mxu0 %v665
    %729 = vmatprep.subr.mxu0 %v670
    %730 = vmatpush1.msra.mxu0 %v669
    %731 = vmatprep.subr.mxu0 %v674
    %732 = vmatpush1.msra.mxu0 %v673
    %733 = vmatprep.subr.mxu0 %v678
    %734 = vmatpush1.msra.mxu0 %v677
    %735 = vmatprep.subr.mxu0 %v682
    %736 = vmatpush1.msra.mxu0 %v681
    %737 = vmatprep.subr.mxu0 %v686
    %738 = vmatpush1.msra.mxu0 %v685
    %739 = vmatprep.subr.mxu0 %v690
    %740 = vmatpush1.msra.mxu0 %v689
    %741 = vmatprep.subr.mxu0 %v694
    %742 = vmatpush1.msra.mxu0 %v693
    %743 = vmatprep.subr.mxu0 %v698
    %744 = vmatpush1.msra.mxu0 %v697
    %745 = vmatprep.subr.mxu0 %v702
    %746 = vmatpush1.msra.mxu0 %v701
    %747 = vmatprep.subr.mxu0 %v706
    %748 = vmatpush1.msra.mxu0 %v705
    %749 = vmatprep.subr.mxu0 %v710
    %750 = vmatpush1.msra.mxu0 %v709
    %751 = vmatprep.subr.mxu0 %v714
    %752 = vmatpush1.msra.mxu0 %v713
    %753 = vmatprep.subr.mxu0 0.0
    %754 = vmatpush1.msra.mxu0 0.0
    %755 = vmatprep.subr.mxu0 0.0
    %756 = vmatpush1.msra.mxu0 0.0
    %757 = vmatprep.subr.mxu0 0.0
    %758 = vmatpush1.msra.mxu0 0.0
    %759 = vmatprep.subr.mxu0 0.0
    %760 = vmatpush1.msra.mxu0 0.0
    %761 = vmatprep.subr.mxu0 0.0
    %762 = vmatpush1.msra.mxu0 0.0
    %763 = vmatprep.subr.mxu0 0.0
    %764 = vmatpush1.msra.mxu0 0.0
    %765 = vmatprep.subr.mxu0 0.0
    %766 = vmatpush1.msra.mxu0 0.0
    %767 = vmatprep.subr.mxu0 0.0
    %768 = vmatpush1.msra.mxu0 0.0
    %769 = vmatprep.subr.mxu0 0.0
    %770 = vmatpush1.msra.mxu0 0.0
    %771 = vmatprep.subr.mxu0 0.0
    %772 = vmatpush1.msra.mxu0 0.0
    %773 = vmatprep.subr.mxu0 0.0
    %774 = vmatpush1.msra.mxu0 0.0
    %775 = vmatprep.subr.mxu0 0.0
    %776 = vmatpush1.msra.mxu0 0.0
    %777 = vmatprep.subr.mxu0 0.0
    %778 = vmatpush1.msra.mxu0 0.0
    %779 = vmatprep.subr.mxu0 0.0
    %780 = vmatpush1.msra.mxu0 0.0
    %781 = vmatprep.subr.mxu0 0.0
    %782 = vmatpush1.msra.mxu0 0.0
    %783 = vmatprep.subr.mxu0 0.0
    %784 = vmatpush1.msra.mxu0 0.0
    %785 = vmatprep.mubr.f32.mxu0 0.0
    %786 = vmatmul.mubr.f32.gmra.mrb[0].mxu0 0.0
    %v787 = vpop.f32.mrb[0].mxu0
    %v788 = vadd.f32 0.0, %v787
    %v789 = vpop.f32.mrb[0].mxu0
    %v790 = vadd.f32 0.0, %v789
    %791 = vdwg.mxu0
    %792 = vmatprep.subr.mxu0 %v656
    %793 = vmatpush1.msra.mxu0 %v655
    %794 = vmatprep.subr.mxu0 %v660
    %795 = vmatpush1.msra.mxu0 %v659
    %796 = vmatprep.subr.mxu0 %v664
    %797 = vmatpush1.msra.mxu0 %v663
    %798 = vmatprep.subr.mxu0 %v668
    %799 = vmatpush1.msra.mxu0 %v667
    %800 = vmatprep.subr.mxu0 %v672
    %801 = vmatpush1.msra.mxu0 %v671
    %802 = vmatprep.subr.mxu0 %v676
    %803 = vmatpush1.msra.mxu0 %v675
    %804 = vmatprep.subr.mxu0 %v680
    %805 = vmatpush1.msra.mxu0 %v679
    %806 = vmatprep.subr.mxu0 %v684
    %807 = vmatpush1.msra.mxu0 %v683
    %808 = vmatprep.subr.mxu0 %v688
    %809 = vmatpush1.msra.mxu0 %v687
    %810 = vmatprep.subr.mxu0 %v692
    %811 = vmatpush1.msra.mxu0 %v691
    %812 = vmatprep.subr.mxu0 %v696
    %813 = vmatpush1.msra.mxu0 %v695
    %814 = vmatprep.subr.mxu0 %v700
    %815 = vmatpush1.msra.mxu0 %v699
    %816 = vmatprep.subr.mxu0 %v704
    %817 = vmatpush1.msra.mxu0 %v703
    %818 = vmatprep.subr.mxu0 %v708
    %819 = vmatpush1.msra.mxu0 %v707
    %820 = vmatprep.subr.mxu0 %v712
    %821 = vmatpush1.msra.mxu0 %v711
    %822 = vmatprep.subr.mxu0 %v716
    %823 = vmatpush1.msra.mxu0 %v715
    %824 = vmatprep.subr.mxu0 0.0
    %825 = vmatpush1.msra.mxu0 0.0
    %826 = vmatprep.subr.mxu0 0.0
    %827 = vmatpush1.msra.mxu0 0.0
    %828 = vmatprep.subr.mxu0 0.0
    %829 = vmatpush1.msra.mxu0 0.0
    %830 = vmatprep.subr.mxu0 0.0
    %831 = vmatpush1.msra.mxu0 0.0
    %832 = vmatprep.subr.mxu0 0.0
    %833 = vmatpush1.msra.mxu0 0.0
    %834 = vmatprep.subr.mxu0 0.0
    %835 = vmatpush1.msra.mxu0 0.0
    %836 = vmatprep.subr.mxu0 0.0
    %837 = vmatpush1.msra.mxu0 0.0
    %838 = vmatprep.subr.mxu0 0.0
    %839 = vmatpush1.msra.mxu0 0.0
    %840 = vmatprep.subr.mxu0 0.0
    %841 = vmatpush1.msra.mxu0 0.0
    %842 = vmatprep.subr.mxu0 0.0
    %843 = vmatpush1.msra.mxu0 0.0
    %844 = vmatprep.subr.mxu0 0.0
    %845 = vmatpush1.msra.mxu0 0.0
    %846 = vmatprep.subr.mxu0 0.0
    %847 = vmatpush1.msra.mxu0 0.0
    %848 = vmatprep.subr.mxu0 0.0
    %849 = vmatpush1.msra.mxu0 0.0
    %850 = vmatprep.subr.mxu0 0.0
    %851 = vmatpush1.msra.mxu0 0.0
    %852 = vmatprep.subr.mxu0 0.0
    %853 = vmatpush1.msra.mxu0 0.0
    %854 = vmatprep.subr.mxu0 0.0
    %855 = vmatpush1.msra.mxu0 0.0
    %856 = vmatprep.mubr.f32.mxu0 0.0
    %857 = vmatmul.mubr.f32.gmra.mrb[0].mxu0 0.0
    %v858 = vpop.f32.mrb[0].mxu0
    %v859 = vadd.f32 0.0, %v858
    %v860 = vpop.f32.mrb[0].mxu0
    %v861 = vadd.f32 0.0, %v860
    %862 = vdwg.mxu0
    %v863 = vadd.f32 %v717, %v788
    %v864 = vadd.f32 %v718, %v790
    %v865 = vadd.f32 %v719, %v859
    %v866 = vadd.f32 %v720, %v861
    %v867 = vxor.u32 %v863, 2147483648
    %v868 = vmul.f32 %v867, 1.442695
    %v869 = vpow.pop %v868
    %v870 = vadd.f32 %v869, 1.0
    %v871 = vrcp.pop %v870
    %v872 = vmul.f32 1.0, %v871
    %v873 = vxor.u32 %v864, 2147483648
    %v874 = vmul.f32 %v873, 1.442695
    %v875 = vpow.pop %v874
    %v876 = vadd.f32 %v875, 1.0
    %v877 = vrcp.pop %v876
    %v878 = vmul.f32 1.0, %v877
    %v879 = vtanh.pop %v865
    %v880 = vxor.u32 %v866, 2147483648
    %v881 = vmul.f32 %v880, 1.442695
    %v882 = vpow.pop %v881
    %v883 = vadd.f32 %v882, 1.0
    %v884 = vrcp.pop %v883
    %v885 = vmul.f32 1.0, %v884
    %v886 = vmul.f32 %v878, 0.0
    %v887 = vmul.f32 %v872, %v879
    %v888 = vadd.f32 %v886, %v887
    %v889 = vtanh.pop %v888
    %v890 = vmul.f32 %v885, %v889
    %v891 = vld [vmem:[#allocation2 + $0x20] sm:$0xff]
    %v892 = vld [vmem:[#allocation2 + $0x28] sm:$0xff]
    %v893 = vld [vmem:[#allocation2 + $0x30] sm:$0xff]
    %v894 = vld [vmem:[#allocation2 + $0x38] sm:$0xff]
    %895 = vmatprep.subr.mxu0 %v654
    %896 = vmatpush1.msra.mxu0 %v653
    %897 = vmatprep.subr.mxu0 %v658
    %898 = vmatpush1.msra.mxu0 %v657
    %899 = vmatprep.subr.mxu0 %v662
    %900 = vmatpush1.msra.mxu0 %v661
    %901 = vmatprep.subr.mxu0 %v666
    %902 = vmatpush1.msra.mxu0 %v665
    %903 = vmatprep.subr.mxu0 %v670
    %904 = vmatpush1.msra.mxu0 %v669
    %905 = vmatprep.subr.mxu0 %v674
    %906 = vmatpush1.msra.mxu0 %v673
    %907 = vmatprep.subr.mxu0 %v678
    %908 = vmatpush1.msra.mxu0 %v677
    %909 = vmatprep.subr.mxu0 %v682
    %910 = vmatpush1.msra.mxu0 %v681
    %911 = vmatprep.subr.mxu0 %v686
    %912 = vmatpush1.msra.mxu0 %v685
    %913 = vmatprep.subr.mxu0 %v690
    %914 = vmatpush1.msra.mxu0 %v689
    %915 = vmatprep.subr.mxu0 %v694
    %916 = vmatpush1.msra.mxu0 %v693
    %917 = vmatprep.subr.mxu0 %v698
    %918 = vmatpush1.msra.mxu0 %v697
    %919 = vmatprep.subr.mxu0 %v702
    %920 = vmatpush1.msra.mxu0 %v701
    %921 = vmatprep.subr.mxu0 %v706
    %922 = vmatpush1.msra.mxu0 %v705
    %923 = vmatprep.subr.mxu0 %v710
    %924 = vmatpush1.msra.mxu0 %v709
    %925 = vmatprep.subr.mxu0 %v714
    %926 = vmatpush1.msra.mxu0 %v713
    %927 = vmatprep.subr.mxu0 0.0
    %928 = vmatpush1.msra.mxu0 0.0
    %929 = vmatprep.subr.mxu0 0.0
    %930 = vmatpush1.msra.mxu0 0.0
    %931 = vmatprep.subr.mxu0 0.0
    %932 = vmatpush1.msra.mxu0 0.0
    %933 = vmatprep.subr.mxu0 0.0
    %934 = vmatpush1.msra.mxu0 0.0
    %935 = vmatprep.subr.mxu0 0.0
    %936 = vmatpush1.msra.mxu0 0.0
    %937 = vmatprep.subr.mxu0 0.0
    %938 = vmatpush1.msra.mxu0 0.0
    %939 = vmatprep.subr.mxu0 0.0
    %940 = vmatpush1.msra.mxu0 0.0
    %941 = vmatprep.subr.mxu0 0.0
    %942 = vmatpush1.msra.mxu0 0.0
    %943 = vmatprep.subr.mxu0 0.0
    %944 = vmatpush1.msra.mxu0 0.0
    %945 = vmatprep.subr.mxu0 0.0
    %946 = vmatpush1.msra.mxu0 0.0
    %947 = vmatprep.subr.mxu0 0.0
    %948 = vmatpush1.msra.mxu0 0.0
    %949 = vmatprep.subr.mxu0 0.0
    %950 = vmatpush1.msra.mxu0 0.0
    %951 = vmatprep.subr.mxu0 0.0
    %952 = vmatpush1.msra.mxu0 0.0
    %953 = vmatprep.subr.mxu0 0.0
    %954 = vmatpush1.msra.mxu0 0.0
    %955 = vmatprep.subr.mxu0 0.0
    %956 = vmatpush1.msra.mxu0 0.0
    %957 = vmatprep.subr.mxu0 0.0
    %958 = vmatpush1.msra.mxu0 0.0
    %959 = vmatprep.mubr.f32.mxu0 0.0
    %960 = vmatmul.mubr.f32.gmra.mrb[0].mxu0 %v890
    %v961 = vpop.f32.mrb[0].mxu0
    %v962 = vadd.f32 0.0, %v961
    %v963 = vpop.f32.mrb[0].mxu0
    %v964 = vadd.f32 0.0, %v963
    %965 = vdwg.mxu0
    %966 = vmatprep.subr.mxu0 %v656
    %967 = vmatpush1.msra.mxu0 %v655
    %968 = vmatprep.subr.mxu0 %v660
    %969 = vmatpush1.msra.mxu0 %v659
    %970 = vmatprep.subr.mxu0 %v664
    %971 = vmatpush1.msra.mxu0 %v663
    %972 = vmatprep.subr.mxu0 %v668
    %973 = vmatpush1.msra.mxu0 %v667
    %974 = vmatprep.subr.mxu0 %v672
    %975 = vmatpush1.msra.mxu0 %v671
    %976 = vmatprep.subr.mxu0 %v676
    %977 = vmatpush1.msra.mxu0 %v675
    %978 = vmatprep.subr.mxu0 %v680
    %979 = vmatpush1.msra.mxu0 %v679
    %980 = vmatprep.subr.mxu0 %v684
    %981 = vmatpush1.msra.mxu0 %v683
    %982 = vmatprep.subr.mxu0 %v688
    %983 = vmatpush1.msra.mxu0 %v687
    %984 = vmatprep.subr.mxu0 %v692
    %985 = vmatpush1.msra.mxu0 %v691
    %986 = vmatprep.subr.mxu0 %v696
    %987 = vmatpush1.msra.mxu0 %v695
    %988 = vmatprep.subr.mxu0 %v700
    %989 = vmatpush1.msra.mxu0 %v699
    %990 = vmatprep.subr.mxu0 %v704
    %991 = vmatpush1.msra.mxu0 %v703
    %992 = vmatprep.subr.mxu0 %v708
    %993 = vmatpush1.msra.mxu0 %v707
    %994 = vmatprep.subr.mxu0 %v712
    %995 = vmatpush1.msra.mxu0 %v711
    %996 = vmatprep.subr.mxu0 %v716
    %997 = vmatpush1.msra.mxu0 %v715
    %998 = vmatprep.subr.mxu0 0.0
    %999 = vmatpush1.msra.mxu0 0.0
    %1000 = vmatprep.subr.mxu0 0.0
    %1001 = vmatpush1.msra.mxu0 0.0
    %1002 = vmatprep.subr.mxu0 0.0
    %1003 = vmatpush1.msra.mxu0 0.0
    %1004 = vmatprep.subr.mxu0 0.0
    %1005 = vmatpush1.msra.mxu0 0.0
    %1006 = vmatprep.subr.mxu0 0.0
    %1007 = vmatpush1.msra.mxu0 0.0
    %1008 = vmatprep.subr.mxu0 0.0
    %1009 = vmatpush1.msra.mxu0 0.0
    %1010 = vmatprep.subr.mxu0 0.0
    %1011 = vmatpush1.msra.mxu0 0.0
    %1012 = vmatprep.subr.mxu0 0.0
    %1013 = vmatpush1.msra.mxu0 0.0
    %1014 = vmatprep.subr.mxu0 0.0
    %1015 = vmatpush1.msra.mxu0 0.0
    %1016 = vmatprep.subr.mxu0 0.0
    %1017 = vmatpush1.msra.mxu0 0.0
    %1018 = vmatprep.subr.mxu0 0.0
    %1019 = vmatpush1.msra.mxu0 0.0
    %1020 = vmatprep.subr.mxu0 0.0
    %1021 = vmatpush1.msra.mxu0 0.0
    %1022 = vmatprep.subr.mxu0 0.0
    %1023 = vmatpush1.msra.mxu0 0.0
    %1024 = vmatprep.subr.mxu0 0.0
    %1025 = vmatpush1.msra.mxu0 0.0
    %1026 = vmatprep.subr.mxu0 0.0
    %1027 = vmatpush1.msra.mxu0 0.0
    %1028 = vmatprep.subr.mxu0 0.0
    %1029 = vmatpush1.msra.mxu0 0.0
    %1030 = vmatprep.mubr.f32.mxu0 0.0
    %1031 = vmatmul.mubr.f32.gmra.mrb[0].mxu0 %v890
    %v1032 = vpop.f32.mrb[0].mxu0
    %v1033 = vadd.f32 0.0, %v1032
    %v1034 = vpop.f32.mrb[0].mxu0
    %v1035 = vadd.f32 0.0, %v1034
    %1036 = vdwg.mxu0
    %v1037 = vadd.f32 %v891, %v962
    %v1038 = vadd.f32 %v892, %v964
    %v1039 = vadd.f32 %v893, %v1033
    %v1040 = vadd.f32 %v894, %v1035
    %v1041 = vxor.u32 %v1037, 2147483648
    %v1042 = vmul.f32 %v1041, 1.442695
    %v1043 = vpow.pop %v1042
    %v1044 = vadd.f32 %v1043, 1.0
    %v1045 = vrcp.pop %v1044
    %v1046 = vmul.f32 1.0, %v1045
    %v1047 = vxor.u32 %v1038, 2147483648
    %v1048 = vmul.f32 %v1047, 1.442695
    %v1049 = vpow.pop %v1048
    %v1050 = vadd.f32 %v1049, 1.0
    %v1051 = vrcp.pop %v1050
    %v1052 = vmul.f32 1.0, %v1051
    %v1053 = vtanh.pop %v1039
    %v1054 = vxor.u32 %v1040, 2147483648
    %v1055 = vmul.f32 %v1054, 1.442695
    %v1056 = vpow.pop %v1055
    %v1057 = vadd.f32 %v1056, 1.0
    %v1058 = vrcp.pop %v1057
    %v1059 = vmul.f32 1.0, %v1058
    %v1060 = vmul.f32 %v1052, %v888
    %v1061 = vmul.f32 %v1046, %v1053
    %v1062 = vadd.f32 %v1060, %v1061
    %v1063 = vtanh.pop %v1062
    %v1064 = vmul.f32 %v1059, %v1063
    %v1065 = vld [vmem:[#allocation2 + $0x40] sm:$0xff]
    %v1066 = vld [vmem:[#allocation2 + $0x48] sm:$0xff]
    %v1067 = vld [vmem:[#allocation2 + $0x50] sm:$0xff]
    %v1068 = vld [vmem:[#allocation2 + $0x58] sm:$0xff]
    %1069 = vmatprep.subr.mxu0 %v654
    %1070 = vmatpush1.msra.mxu0 %v653
    %1071 = vmatprep.subr.mxu0 %v658
    %1072 = vmatpush1.msra.mxu0 %v657
    %1073 = vmatprep.subr.mxu0 %v662
    %1074 = vmatpush1.msra.mxu0 %v661
    %1075 = vmatprep.subr.mxu0 %v666
    %1076 = vmatpush1.msra.mxu0 %v665
    %1077 = vmatprep.subr.mxu0 %v670
    %1078 = vmatpush1.msra.mxu0 %v669
    %1079 = vmatprep.subr.mxu0 %v674
    %1080 = vmatpush1.msra.mxu0 %v673
    %1081 = vmatprep.subr.mxu0 %v678
    %1082 = vmatpush1.msra.mxu0 %v677
    %1083 = vmatprep.subr.mxu0 %v682
    %1084 = vmatpush1.msra.mxu0 %v681
    %1085 = vmatprep.subr.mxu0 %v686
    %1086 = vmatpush1.msra.mxu0 %v685
    %1087 = vmatprep.subr.mxu0 %v690
    %1088 = vmatpush1.msra.mxu0 %v689
    %1089 = vmatprep.subr.mxu0 %v694
    %1090 = vmatpush1.msra.mxu0 %v693
    %1091 = vmatprep.subr.mxu0 %v698
    %1092 = vmatpush1.msra.mxu0 %v697
    %1093 = vmatprep.subr.mxu0 %v702
    %1094 = vmatpush1.msra.mxu0 %v701
    %1095 = vmatprep.subr.mxu0 %v706
    %1096 = vmatpush1.msra.mxu0 %v705
    %1097 = vmatprep.subr.mxu0 %v710
    %1098 = vmatpush1.msra.mxu0 %v709
    %1099 = vmatprep.subr.mxu0 %v714
    %1100 = vmatpush1.msra.mxu0 %v713
    %1101 = vmatprep.subr.mxu0 0.0
    %1102 = vmatpush1.msra.mxu0 0.0
    %1103 = vmatprep.subr.mxu0 0.0
    %1104 = vmatpush1.msra.mxu0 0.0
    %1105 = vmatprep.subr.mxu0 0.0
    %1106 = vmatpush1.msra.mxu0 0.0
    %1107 = vmatprep.subr.mxu0 0.0
    %1108 = vmatpush1.msra.mxu0 0.0
    %1109 = vmatprep.subr.mxu0 0.0
    %1110 = vmatpush1.msra.mxu0 0.0
    %1111 = vmatprep.subr.mxu0 0.0
    %1112 = vmatpush1.msra.mxu0 0.0
    %1113 = vmatprep.subr.mxu0 0.0
    %1114 = vmatpush1.msra.mxu0 0.0
    %1115 = vmatprep.subr.mxu0 0.0
    %1116 = vmatpush1.msra.mxu0 0.0
    %1117 = vmatprep.subr.mxu0 0.0
    %1118 = vmatpush1.msra.mxu0 0.0
    %1119 = vmatprep.subr.mxu0 0.0
    %1120 = vmatpush1.msra.mxu0 0.0
    %1121 = vmatprep.subr.mxu0 0.0
    %1122 = vmatpush1.msra.mxu0 0.0
    %1123 = vmatprep.subr.mxu0 0.0
    %1124 = vmatpush1.msra.mxu0 0.0
    %1125 = vmatprep.subr.mxu0 0.0
    %1126 = vmatpush1.msra.mxu0 0.0
    %1127 = vmatprep.subr.mxu0 0.0
    %1128 = vmatpush1.msra.mxu0 0.0
    %1129 = vmatprep.subr.mxu0 0.0
    %1130 = vmatpush1.msra.mxu0 0.0
    %1131 = vmatprep.subr.mxu0 0.0
    %1132 = vmatpush1.msra.mxu0 0.0
    %1133 = vmatprep.mubr.f32.mxu0 0.0
    %1134 = vmatmul.mubr.f32.gmra.mrb[0].mxu0 %v1064
    %v1135 = vpop.f32.mrb[0].mxu0
    %v1136 = vadd.f32 0.0, %v1135
    %v1137 = vpop.f32.mrb[0].mxu0
    %v1138 = vadd.f32 0.0, %v1137
    %1139 = vdwg.mxu0
    %1140 = vmatprep.subr.mxu0 %v656
    %1141 = vmatpush1.msra.mxu0 %v655
    %1142 = vmatprep.subr.mxu0 %v660
    %1143 = vmatpush1.msra.mxu0 %v659
    %1144 = vmatprep.subr.mxu0 %v664
    %1145 = vmatpush1.msra.mxu0 %v663
    %1146 = vmatprep.subr.mxu0 %v668
    %1147 = vmatpush1.msra.mxu0 %v667
    %1148 = vmatprep.subr.mxu0 %v672
    %1149 = vmatpush1.msra.mxu0 %v671
    %1150 = vmatprep.subr.mxu0 %v676
    %1151 = vmatpush1.msra.mxu0 %v675
    %1152 = vmatprep.subr.mxu0 %v680
    %1153 = vmatpush1.msra.mxu0 %v679
    %1154 = vmatprep.subr.mxu0 %v684
    %1155 = vmatpush1.msra.mxu0 %v683
    %1156 = vmatprep.subr.mxu0 %v688
    %1157 = vmatpush1.msra.mxu0 %v687
    %1158 = vmatprep.subr.mxu0 %v692
    %1159 = vmatpush1.msra.mxu0 %v691
    %1160 = vmatprep.subr.mxu0 %v696
    %1161 = vmatpush1.msra.mxu0 %v695
    %1162 = vmatprep.subr.mxu0 %v700
    %1163 = vmatpush1.msra.mxu0 %v699
    %1164 = vmatprep.subr.mxu0 %v704
    %1165 = vmatpush1.msra.mxu0 %v703
    %1166 = vmatprep.subr.mxu0 %v708
    %1167 = vmatpush1.msra.mxu0 %v707
    %1168 = vmatprep.subr.mxu0 %v712
    %1169 = vmatpush1.msra.mxu0 %v711
    %1170 = vmatprep.subr.mxu0 %v716
    %1171 = vmatpush1.msra.mxu0 %v715
    %1172 = vmatprep.subr.mxu0 0.0
    %1173 = vmatpush1.msra.mxu0 0.0
    %1174 = vmatprep.subr.mxu0 0.0
    %1175 = vmatpush1.msra.mxu0 0.0
    %1176 = vmatprep.subr.mxu0 0.0
    %1177 = vmatpush1.msra.mxu0 0.0
    %1178 = vmatprep.subr.mxu0 0.0
    %1179 = vmatpush1.msra.mxu0 0.0
    %1180 = vmatprep.subr.mxu0 0.0
    %1181 = vmatpush1.msra.mxu0 0.0
    %1182 = vmatprep.subr.mxu0 0.0
    %1183 = vmatpush1.msra.mxu0 0.0
    %1184 = vmatprep.subr.mxu0 0.0
    %1185 = vmatpush1.msra.mxu0 0.0
    %1186 = vmatprep.subr.mxu0 0.0
    %1187 = vmatpush1.msra.mxu0 0.0
    %1188 = vmatprep.subr.mxu0 0.0
    %1189 = vmatpush1.msra.mxu0 0.0
    %1190 = vmatprep.subr.mxu0 0.0
    %1191 = vmatpush1.msra.mxu0 0.0
    %1192 = vmatprep.subr.mxu0 0.0
    %1193 = vmatpush1.msra.mxu0 0.0
    %1194 = vmatprep.subr.mxu0 0.0
    %1195 = vmatpush1.msra.mxu0 0.0
    %1196 = vmatprep.subr.mxu0 0.0
    %1197 = vmatpush1.msra.mxu0 0.0
    %1198 = vmatprep.subr.mxu0 0.0
    %1199 = vmatpush1.msra.mxu0 0.0
    %1200 = vmatprep.subr.mxu0 0.0
    %1201 = vmatpush1.msra.mxu0 0.0
    %1202 = vmatprep.subr.mxu0 0.0
    %1203 = vmatpush1.msra.mxu0 0.0
    %1204 = vmatprep.mubr.f32.mxu0 0.0
    %1205 = vmatmul.mubr.f32.gmra.mrb[0].mxu0 %v1064
    %v1206 = vpop.f32.mrb[0].mxu0
    %v1207 = vadd.f32 0.0, %v1206
    %v1208 = vpop.f32.mrb[0].mxu0
    %v1209 = vadd.f32 0.0, %v1208
    %1210 = vdwg.mxu0
    %v1211 = vadd.f32 %v1065, %v1136
    %v1212 = vadd.f32 %v1066, %v1138
    %v1213 = vadd.f32 %v1067, %v1207
    %v1214 = vadd.f32 %v1068, %v1209
    %v1215 = vxor.u32 %v1211, 2147483648
    %v1216 = vmul.f32 %v1215, 1.442695
    %v1217 = vpow.pop %v1216
    %v1218 = vadd.f32 %v1217, 1.0
    %v1219 = vrcp.pop %v1218
    %v1220 = vmul.f32 1.0, %v1219
    %v1221 = vxor.u32 %v1212, 2147483648
    %v1222 = vmul.f32 %v1221, 1.442695
    %v1223 = vpow.pop %v1222
    %v1224 = vadd.f32 %v1223, 1.0
    %v1225 = vrcp.pop %v1224
    %v1226 = vmul.f32 1.0, %v1225
    %v1227 = vtanh.pop %v1213
    %v1228 = vxor.u32 %v1214, 2147483648
    %v1229 = vmul.f32 %v1228, 1.442695
    %v1230 = vpow.pop %v1229
    %v1231 = vadd.f32 %v1230, 1.0
    %v1232 = vrcp.pop %v1231
    %v1233 = vmul.f32 1.0, %v1232
    %v1234 = vmul.f32 %v1226, %v1062
    %v1235 = vmul.f32 %v1220, %v1227
    %v1236 = vadd.f32 %v1234, %v1235
    %v1237 = vtanh.pop %v1236
    %v1238 = vmul.f32 %v1233, %v1237
    %v1239 = vld [vmem:[#allocation2 + $0x60] sm:$0xff]
    %v1240 = vld [vmem:[#allocation2 + $0x68] sm:$0xff]
    %v1241 = vld [vmem:[#allocation2 + $0x70] sm:$0xff]
    %v1242 = vld [vmem:[#allocation2 + $0x78] sm:$0xff]
    %1243 = vmatprep.subr.mxu0 %v654
    %1244 = vmatpush1.msra.mxu0 %v653
    %1245 = vmatprep.subr.mxu0 %v658
    %1246 = vmatpush1.msra.mxu0 %v657
    %1247 = vmatprep.subr.mxu0 %v662
    %1248 = vmatpush1.msra.mxu0 %v661
    %1249 = vmatprep.subr.mxu0 %v666
    %1250 = vmatpush1.msra.mxu0 %v665
    %1251 = vmatprep.subr.mxu0 %v670
    %1252 = vmatpush1.msra.mxu0 %v669
    %1253 = vmatprep.subr.mxu0 %v674
    %1254 = vmatpush1.msra.mxu0 %v673
    %1255 = vmatprep.subr.mxu0 %v678
    %1256 = vmatpush1.msra.mxu0 %v677
    %1257 = vmatprep.subr.mxu0 %v682
    %1258 = vmatpush1.msra.mxu0 %v681
    %1259 = vmatprep.subr.mxu0 %v686
    %1260 = vmatpush1.msra.mxu0 %v685
    %1261 = vmatprep.subr.mxu0 %v690
    %1262 = vmatpush1.msra.mxu0 %v689
    %1263 = vmatprep.subr.mxu0 %v694
    %1264 = vmatpush1.msra.mxu0 %v693
    %1265 = vmatprep.subr.mxu0 %v698
    %1266 = vmatpush1.msra.mxu0 %v697
    %1267 = vmatprep.subr.mxu0 %v702
    %1268 = vmatpush1.msra.mxu0 %v701
    %1269 = vmatprep.subr.mxu0 %v706
    %1270 = vmatpush1.msra.mxu0 %v705
    %1271 = vmatprep.subr.mxu0 %v710
    %1272 = vmatpush1.msra.mxu0 %v709
    %1273 = vmatprep.subr.mxu0 %v714
    %1274 = vmatpush1.msra.mxu0 %v713
    %1275 = vmatprep.subr.mxu0 0.0
    %1276 = vmatpush1.msra.mxu0 0.0
    %1277 = vmatprep.subr.mxu0 0.0
    %1278 = vmatpush1.msra.mxu0 0.0
    %1279 = vmatprep.subr.mxu0 0.0
    %1280 = vmatpush1.msra.mxu0 0.0
    %1281 = vmatprep.subr.mxu0 0.0
    %1282 = vmatpush1.msra.mxu0 0.0
    %1283 = vmatprep.subr.mxu0 0.0
    %1284 = vmatpush1.msra.mxu0 0.0
    %1285 = vmatprep.subr.mxu0 0.0
    %1286 = vmatpush1.msra.mxu0 0.0
    %1287 = vmatprep.subr.mxu0 0.0
    %1288 = vmatpush1.msra.mxu0 0.0
    %1289 = vmatprep.subr.mxu0 0.0
    %1290 = vmatpush1.msra.mxu0 0.0
    %1291 = vmatprep.subr.mxu0 0.0
    %1292 = vmatpush1.msra.mxu0 0.0
    %1293 = vmatprep.subr.mxu0 0.0
    %1294 = vmatpush1.msra.mxu0 0.0
    %1295 = vmatprep.subr.mxu0 0.0
    %1296 = vmatpush1.msra.mxu0 0.0
    %1297 = vmatprep.subr.mxu0 0.0
    %1298 = vmatpush1.msra.mxu0 0.0
    %1299 = vmatprep.subr.mxu0 0.0
    %1300 = vmatpush1.msra.mxu0 0.0
    %1301 = vmatprep.subr.mxu0 0.0
    %1302 = vmatpush1.msra.mxu0 0.0
    %1303 = vmatprep.subr.mxu0 0.0
    %1304 = vmatpush1.msra.mxu0 0.0
    %1305 = vmatprep.subr.mxu0 0.0
    %1306 = vmatpush1.msra.mxu0 0.0
    %1307 = vmatprep.mubr.f32.mxu0 0.0
    %1308 = vmatmul.mubr.f32.gmra.mrb[0].mxu0 %v1238
    %v1309 = vpop.f32.mrb[0].mxu0
    %v1310 = vadd.f32 0.0, %v1309
    %v1311 = vpop.f32.mrb[0].mxu0
    %v1312 = vadd.f32 0.0, %v1311
    %1313 = vdwg.mxu0
    %1314 = vmatprep.subr.mxu0 %v656
    %1315 = vmatpush1.msra.mxu0 %v655
    %1316 = vmatprep.subr.mxu0 %v660
    %1317 = vmatpush1.msra.mxu0 %v659
    %1318 = vmatprep.subr.mxu0 %v664
    %1319 = vmatpush1.msra.mxu0 %v663
    %1320 = vmatprep.subr.mxu0 %v668
    %1321 = vmatpush1.msra.mxu0 %v667
    %1322 = vmatprep.subr.mxu0 %v672
    %1323 = vmatpush1.msra.mxu0 %v671
    %1324 = vmatprep.subr.mxu0 %v676
    %1325 = vmatpush1.msra.mxu0 %v675
    %1326 = vmatprep.subr.mxu0 %v680
    %1327 = vmatpush1.msra.mxu0 %v679
    %1328 = vmatprep.subr.mxu0 %v684
    %1329 = vmatpush1.msra.mxu0 %v683
    %1330 = vmatprep.subr.mxu0 %v688
    %1331 = vmatpush1.msra.mxu0 %v687
    %1332 = vmatprep.subr.mxu0 %v692
    %1333 = vmatpush1.msra.mxu0 %v691
    %1334 = vmatprep.subr.mxu0 %v696
    %1335 = vmatpush1.msra.mxu0 %v695
    %1336 = vmatprep.subr.mxu0 %v700
    %1337 = vmatpush1.msra.mxu0 %v699
    %1338 = vmatprep.subr.mxu0 %v704
    %1339 = vmatpush1.msra.mxu0 %v703
    %1340 = vmatprep.subr.mxu0 %v708
    %1341 = vmatpush1.msra.mxu0 %v707
    %1342 = vmatprep.subr.mxu0 %v712
    %1343 = vmatpush1.msra.mxu0 %v711
    %1344 = vmatprep.subr.mxu0 %v716
    %1345 = vmatpush1.msra.mxu0 %v715
    %1346 = vmatprep.subr.mxu0 0.0
    %1347 = vmatpush1.msra.mxu0 0.0
    %1348 = vmatprep.subr.mxu0 0.0
    %1349 = vmatpush1.msra.mxu0 0.0
    %1350 = vmatprep.subr.mxu0 0.0
    %1351 = vmatpush1.msra.mxu0 0.0
    %1352 = vmatprep.subr.mxu0 0.0
    %1353 = vmatpush1.msra.mxu0 0.0
    %1354 = vmatprep.subr.mxu0 0.0
    %1355 = vmatpush1.msra.mxu0 0.0
    %1356 = vmatprep.subr.mxu0 0.0
    %1357 = vmatpush1.msra.mxu0 0.0
    %1358 = vmatprep.subr.mxu0 0.0
    %1359 = vmatpush1.msra.mxu0 0.0
    %1360 = vmatprep.subr.mxu0 0.0
    %1361 = vmatpush1.msra.mxu0 0.0
    %1362 = vmatprep.subr.mxu0 0.0
    %1363 = vmatpush1.msra.mxu0 0.0
    %1364 = vmatprep.subr.mxu0 0.0
    %1365 = vmatpush1.msra.mxu0 0.0
    %1366 = vmatprep.subr.mxu0 0.0
    %1367 = vmatpush1.msra.mxu0 0.0
    %1368 = vmatprep.subr.mxu0 0.0
    %1369 = vmatpush1.msra.mxu0 0.0
    %1370 = vmatprep.subr.mxu0 0.0
    %1371 = vmatpush1.msra.mxu0 0.0
    %1372 = vmatprep.subr.mxu0 0.0
    %1373 = vmatpush1.msra.mxu0 0.0
    %1374 = vmatprep.subr.mxu0 0.0
    %1375 = vmatpush1.msra.mxu0 0.0
    %1376 = vmatprep.subr.mxu0 0.0
    %1377 = vmatpush1.msra.mxu0 0.0
    %1378 = vmatprep.mubr.f32.mxu0 0.0
    %1379 = vmatmul.mubr.f32.gmra.mrb[0].mxu0 %v1238
    %v1380 = vpop.f32.mrb[0].mxu0
    %v1381 = vadd.f32 0.0, %v1380
    %v1382 = vpop.f32.mrb[0].mxu0
    %v1383 = vadd.f32 0.0, %v1382
    %1384 = vdwg.mxu0
    %v1385 = vadd.f32 %v1239, %v1310
    %v1386 = vadd.f32 %v1240, %v1312
    %v1387 = vadd.f32 %v1241, %v1381
    %v1388 = vadd.f32 %v1242, %v1383
    %v1389 = vxor.u32 %v1385, 2147483648
    %v1390 = vmul.f32 %v1389, 1.442695
    %v1391 = vpow.pop %v1390
    %v1392 = vadd.f32 %v1391, 1.0
    %v1393 = vrcp.pop %v1392
    %v1394 = vmul.f32 1.0, %v1393
    %v1395 = vxor.u32 %v1386, 2147483648
    %v1396 = vmul.f32 %v1395, 1.442695
    %v1397 = vpow.pop %v1396
    %v1398 = vadd.f32 %v1397, 1.0
    %v1399 = vrcp.pop %v1398
    %v1400 = vmul.f32 1.0, %v1399
    %v1401 = vtanh.pop %v1387
    %v1402 = vxor.u32 %v1388, 2147483648
    %v1403 = vmul.f32 %v1402, 1.442695
    %v1404 = vpow.pop %v1403
    %v1405 = vadd.f32 %v1404, 1.0
    %v1406 = vrcp.pop %v1405
    %v1407 = vmul.f32 1.0, %v1406
    %v1408 = vmul.f32 %v1400, %v1236
    %v1409 = vmul.f32 %v1394, %v1401
    %v1410 = vadd.f32 %v1408, %v1409
    %v1411 = vtanh.pop %v1410
    %v1412 = vmul.f32 %v1407, %v1411
    %v1413 = vld [vmem:[#allocation2 + $0x80] sm:$0xff]
    %v1414 = vld [vmem:[#allocation2 + $0x88] sm:$0xff]
    %v1415 = vld [vmem:[#allocation2 + $0x90] sm:$0xff]
    %v1416 = vld [vmem:[#allocation2 + $0x98] sm:$0xff]
    %1417 = vmatprep.subr.mxu0 %v654
    %1418 = vmatpush1.msra.mxu0 %v653
    %1419 = vmatprep.subr.mxu0 %v658
    %1420 = vmatpush1.msra.mxu0 %v657
    %1421 = vmatprep.subr.mxu0 %v662
    %1422 = vmatpush1.msra.mxu0 %v661
    %1423 = vmatprep.subr.mxu0 %v666
    %1424 = vmatpush1.msra.mxu0 %v665
    %1425 = vmatprep.subr.mxu0 %v670
    %1426 = vmatpush1.msra.mxu0 %v669
    %1427 = vmatprep.subr.mxu0 %v674
    %1428 = vmatpush1.msra.mxu0 %v673
    %1429 = vmatprep.subr.mxu0 %v678
    %1430 = vmatpush1.msra.mxu0 %v677
    %1431 = vmatprep.subr.mxu0 %v682
    %1432 = vmatpush1.msra.mxu0 %v681
    %1433 = vmatprep.subr.mxu0 %v686
    %1434 = vmatpush1.msra.mxu0 %v685
    %1435 = vmatprep.subr.mxu0 %v690
    %1436 = vmatpush1.msra.mxu0 %v689
    %1437 = vmatprep.subr.mxu0 %v694
    %1438 = vmatpush1.msra.mxu0 %v693
    %1439 = vmatprep.subr.mxu0 %v698
    %1440 = vmatpush1.msra.mxu0 %v697
    %1441 = vmatprep.subr.mxu0 %v702
    %1442 = vmatpush1.msra.mxu0 %v701
    %1443 = vmatprep.subr.mxu0 %v706
    %1444 = vmatpush1.msra.mxu0 %v705
    %1445 = vmatprep.subr.mxu0 %v710
    %1446 = vmatpush1.msra.mxu0 %v709
    %1447 = vmatprep.subr.mxu0 %v714
    %1448 = vmatpush1.msra.mxu0 %v713
    %1449 = vmatprep.subr.mxu0 0.0
    %1450 = vmatpush1.msra.mxu0 0.0
    %1451 = vmatprep.subr.mxu0 0.0
    %1452 = vmatpush1.msra.mxu0 0.0
    %1453 = vmatprep.subr.mxu0 0.0
    %1454 = vmatpush1.msra.mxu0 0.0
    %1455 = vmatprep.subr.mxu0 0.0
    %1456 = vmatpush1.msra.mxu0 0.0
    %1457 = vmatprep.subr.mxu0 0.0
    %1458 = vmatpush1.msra.mxu0 0.0
    %1459 = vmatprep.subr.mxu0 0.0
    %1460 = vmatpush1.msra.mxu0 0.0
    %1461 = vmatprep.subr.mxu0 0.0
    %1462 = vmatpush1.msra.mxu0 0.0
    %1463 = vmatprep.subr.mxu0 0.0
    %1464 = vmatpush1.msra.mxu0 0.0
    %1465 = vmatprep.subr.mxu0 0.0
    %1466 = vmatpush1.msra.mxu0 0.0
    %1467 = vmatprep.subr.mxu0 0.0
    %1468 = vmatpush1.msra.mxu0 0.0
    %1469 = vmatprep.subr.mxu0 0.0
    %1470 = vmatpush1.msra.mxu0 0.0
    %1471 = vmatprep.subr.mxu0 0.0
    %1472 = vmatpush1.msra.mxu0 0.0
    %1473 = vmatprep.subr.mxu0 0.0
    %1474 = vmatpush1.msra.mxu0 0.0
    %1475 = vmatprep.subr.mxu0 0.0
    %1476 = vmatpush1.msra.mxu0 0.0
    %1477 = vmatprep.subr.mxu0 0.0
    %1478 = vmatpush1.msra.mxu0 0.0
    %1479 = vmatprep.subr.mxu0 0.0
    %1480 = vmatpush1.msra.mxu0 0.0
    %1481 = vmatprep.mubr.f32.mxu0 0.0
    %1482 = vmatmul.mubr.f32.gmra.mrb[0].mxu0 %v1412
    %v1483 = vpop.f32.mrb[0].mxu0
    %v1484 = vadd.f32 0.0, %v1483
    %v1485 = vpop.f32.mrb[0].mxu0
    %v1486 = vadd.f32 0.0, %v1485
    %1487 = vdwg.mxu0
    %1488 = vmatprep.subr.mxu0 %v656
    %1489 = vmatpush1.msra.mxu0 %v655
    %1490 = vmatprep.subr.mxu0 %v660
    %1491 = vmatpush1.msra.mxu0 %v659
    %1492 = vmatprep.subr.mxu0 %v664
    %1493 = vmatpush1.msra.mxu0 %v663
    %1494 = vmatprep.subr.mxu0 %v668
    %1495 = vmatpush1.msra.mxu0 %v667
    %1496 = vmatprep.subr.mxu0 %v672
    %1497 = vmatpush1.msra.mxu0 %v671
    %1498 = vmatprep.subr.mxu0 %v676
    %1499 = vmatpush1.msra.mxu0 %v675
    %1500 = vmatprep.subr.mxu0 %v680
    %1501 = vmatpush1.msra.mxu0 %v679
    %1502 = vmatprep.subr.mxu0 %v684
    %1503 = vmatpush1.msra.mxu0 %v683
    %1504 = vmatprep.subr.mxu0 %v688
    %1505 = vmatpush1.msra.mxu0 %v687
    %1506 = vmatprep.subr.mxu0 %v692
    %1507 = vmatpush1.msra.mxu0 %v691
    %1508 = vmatprep.subr.mxu0 %v696
    %1509 = vmatpush1.msra.mxu0 %v695
    %1510 = vmatprep.subr.mxu0 %v700
    %1511 = vmatpush1.msra.mxu0 %v699
    %1512 = vmatprep.subr.mxu0 %v704
    %1513 = vmatpush1.msra.mxu0 %v703
    %1514 = vmatprep.subr.mxu0 %v708
    %1515 = vmatpush1.msra.mxu0 %v707
    %1516 = vmatprep.subr.mxu0 %v712
    %1517 = vmatpush1.msra.mxu0 %v711
    %1518 = vmatprep.subr.mxu0 %v716
    %1519 = vmatpush1.msra.mxu0 %v715
    %1520 = vmatprep.subr.mxu0 0.0
    %1521 = vmatpush1.msra.mxu0 0.0
    %1522 = vmatprep.subr.mxu0 0.0
    %1523 = vmatpush1.msra.mxu0 0.0
    %1524 = vmatprep.subr.mxu0 0.0
    %1525 = vmatpush1.msra.mxu0 0.0
    %1526 = vmatprep.subr.mxu0 0.0
    %1527 = vmatpush1.msra.mxu0 0.0
    %1528 = vmatprep.subr.mxu0 0.0
    %1529 = vmatpush1.msra.mxu0 0.0
    %1530 = vmatprep.subr.mxu0 0.0
    %1531 = vmatpush1.msra.mxu0 0.0
    %1532 = vmatprep.subr.mxu0 0.0
    %1533 = vmatpush1.msra.mxu0 0.0
    %1534 = vmatprep.subr.mxu0 0.0
    %1535 = vmatpush1.msra.mxu0 0.0
    %1536 = vmatprep.subr.mxu0 0.0
    %1537 = vmatpush1.msra.mxu0 0.0
    %1538 = vmatprep.subr.mxu0 0.0
    %1539 = vmatpush1.msra.mxu0 0.0
    %1540 = vmatprep.subr.mxu0 0.0
    %1541 = vmatpush1.msra.mxu0 0.0
    %1542 = vmatprep.subr.mxu0 0.0
    %1543 = vmatpush1.msra.mxu0 0.0
    %1544 = vmatprep.subr.mxu0 0.0
    %1545 = vmatpush1.msra.mxu0 0.0
    %1546 = vmatprep.subr.mxu0 0.0
    %1547 = vmatpush1.msra.mxu0 0.0
    %1548 = vmatprep.subr.mxu0 0.0
    %1549 = vmatpush1.msra.mxu0 0.0
    %1550 = vmatprep.subr.mxu0 0.0
    %1551 = vmatpush1.msra.mxu0 0.0
    %1552 = vmatprep.mubr.f32.mxu0 0.0
    %1553 = vmatmul.mubr.f32.gmra.mrb[0].mxu0 %v1412
    %v1554 = vpop.f32.mrb[0].mxu0
    %v1555 = vadd.f32 0.0, %v1554
    %v1556 = vpop.f32.mrb[0].mxu0
    %v1557 = vadd.f32 0.0, %v1556
    %1558 = vdwg.mxu0
    %v1559 = vadd.f32 %v1413, %v1484
    %v1560 = vadd.f32 %v1414, %v1486
    %v1561 = vadd.f32 %v1415, %v1555
    %v1562 = vadd.f32 %v1416, %v1557
    %v1563 = vxor.u32 %v1559, 2147483648
    %v1564 = vmul.f32 %v1563, 1.442695
    %v1565 = vpow.pop %v1564
    %v1566 = vadd.f32 %v1565, 1.0
    %v1567 = vrcp.pop %v1566
    %v1568 = vmul.f32 1.0, %v1567
    %v1569 = vxor.u32 %v1560, 2147483648
    %v1570 = vmul.f32 %v1569, 1.442695
    %v1571 = vpow.pop %v1570
    %v1572 = vadd.f32 %v1571, 1.0
    %v1573 = vrcp.pop %v1572
    %v1574 = vmul.f32 1.0, %v1573
    %v1575 = vtanh.pop %v1561
    %v1576 = vxor.u32 %v1562, 2147483648
    %v1577 = vmul.f32 %v1576, 1.442695
    %v1578 = vpow.pop %v1577
    %v1579 = vadd.f32 %v1578, 1.0
    %v1580 = vrcp.pop %v1579
    %v1581 = vmul.f32 1.0, %v1580
    %v1582 = vmul.f32 %v1574, %v1410
    %v1583 = vmul.f32 %v1568, %v1575
    %v1584 = vadd.f32 %v1582, %v1583
    %v1585 = vtanh.pop %v1584
    %v1586 = vmul.f32 %v1581, %v1585
    %v1587 = vld [vmem:[#allocation2 + $0xa0] sm:$0xff]
    %v1588 = vld [vmem:[#allocation2 + $0xa8] sm:$0xff]
    %v1589 = vld [vmem:[#allocation2 + $0xb0] sm:$0xff]
    %v1590 = vld [vmem:[#allocation2 + $0xb8] sm:$0xff]
    %1591 = vmatprep.subr.mxu0 %v654
    %1592 = vmatpush1.msra.mxu0 %v653
    %1593 = vmatprep.subr.mxu0 %v658
    %1594 = vmatpush1.msra.mxu0 %v657
    %1595 = vmatprep.subr.mxu0 %v662
    %1596 = vmatpush1.msra.mxu0 %v661
    %1597 = vmatprep.subr.mxu0 %v666
    %1598 = vmatpush1.msra.mxu0 %v665
    %1599 = vmatprep.subr.mxu0 %v670
    %1600 = vmatpush1.msra.mxu0 %v669
    %1601 = vmatprep.subr.mxu0 %v674
    %1602 = vmatpush1.msra.mxu0 %v673
    %1603 = vmatprep.subr.mxu0 %v678
    %1604 = vmatpush1.msra.mxu0 %v677
    %1605 = vmatprep.subr.mxu0 %v682
    %1606 = vmatpush1.msra.mxu0 %v681
    %1607 = vmatprep.subr.mxu0 %v686
    %1608 = vmatpush1.msra.mxu0 %v685
    %1609 = vmatprep.subr.mxu0 %v690
    %1610 = vmatpush1.msra.mxu0 %v689
    %1611 = vmatprep.subr.mxu0 %v694
    %1612 = vmatpush1.msra.mxu0 %v693
    %1613 = vmatprep.subr.mxu0 %v698
    %1614 = vmatpush1.msra.mxu0 %v697
    %1615 = vmatprep.subr.mxu0 %v702
    %1616 = vmatpush1.msra.mxu0 %v701
    %1617 = vmatprep.subr.mxu0 %v706
    %1618 = vmatpush1.msra.mxu0 %v705
    %1619 = vmatprep.subr.mxu0 %v710
    %1620 = vmatpush1.msra.mxu0 %v709
    %1621 = vmatprep.subr.mxu0 %v714
    %1622 = vmatpush1.msra.mxu0 %v713
    %1623 = vmatprep.subr.mxu0 0.0
    %1624 = vmatpush1.msra.mxu0 0.0
    %1625 = vmatprep.subr.mxu0 0.0
    %1626 = vmatpush1.msra.mxu0 0.0
    %1627 = vmatprep.subr.mxu0 0.0
    %1628 = vmatpush1.msra.mxu0 0.0
    %1629 = vmatprep.subr.mxu0 0.0
    %1630 = vmatpush1.msra.mxu0 0.0
    %1631 = vmatprep.subr.mxu0 0.0
    %1632 = vmatpush1.msra.mxu0 0.0
    %1633 = vmatprep.subr.mxu0 0.0
    %1634 = vmatpush1.msra.mxu0 0.0
    %1635 = vmatprep.subr.mxu0 0.0
    %1636 = vmatpush1.msra.mxu0 0.0
    %1637 = vmatprep.subr.mxu0 0.0
    %1638 = vmatpush1.msra.mxu0 0.0
    %1639 = vmatprep.subr.mxu0 0.0
    %1640 = vmatpush1.msra.mxu0 0.0
    %1641 = vmatprep.subr.mxu0 0.0
    %1642 = vmatpush1.msra.mxu0 0.0
    %1643 = vmatprep.subr.mxu0 0.0
    %1644 = vmatpush1.msra.mxu0 0.0
    %1645 = vmatprep.subr.mxu0 0.0
    %1646 = vmatpush1.msra.mxu0 0.0
    %1647 = vmatprep.subr.mxu0 0.0
    %1648 = vmatpush1.msra.mxu0 0.0
    %1649 = vmatprep.subr.mxu0 0.0
    %1650 = vmatpush1.msra.mxu0 0.0
    %1651 = vmatprep.subr.mxu0 0.0
    %1652 = vmatpush1.msra.mxu0 0.0
    %1653 = vmatprep.subr.mxu0 0.0
    %1654 = vmatpush1.msra.mxu0 0.0
    %1655 = vmatprep.mubr.f32.mxu0 0.0
    %1656 = vmatmul.mubr.f32.gmra.mrb[0].mxu0 %v1586
    %v1657 = vpop.f32.mrb[0].mxu0
    %v1658 = vadd.f32 0.0, %v1657
    %v1659 = vpop.f32.mrb[0].mxu0
    %v1660 = vadd.f32 0.0, %v1659
    %1661 = vdwg.mxu0
    %1662 = vmatprep.subr.mxu0 %v656
    %1663 = vmatpush1.msra.mxu0 %v655
    %1664 = vmatprep.subr.mxu0 %v660
    %1665 = vmatpush1.msra.mxu0 %v659
    %1666 = vmatprep.subr.mxu0 %v664
    %1667 = vmatpush1.msra.mxu0 %v663
    %1668 = vmatprep.subr.mxu0 %v668
    %1669 = vmatpush1.msra.mxu0 %v667
    %1670 = vmatprep.subr.mxu0 %v672
    %1671 = vmatpush1.msra.mxu0 %v671
    %1672 = vmatprep.subr.mxu0 %v676
    %1673 = vmatpush1.msra.mxu0 %v675
    %1674 = vmatprep.subr.mxu0 %v680
    %1675 = vmatpush1.msra.mxu0 %v679
    %1676 = vmatprep.subr.mxu0 %v684
    %1677 = vmatpush1.msra.mxu0 %v683
    %1678 = vmatprep.subr.mxu0 %v688
    %1679 = vmatpush1.msra.mxu0 %v687
    %1680 = vmatprep.subr.mxu0 %v692
    %1681 = vmatpush1.msra.mxu0 %v691
    %1682 = vmatprep.subr.mxu0 %v696
    %1683 = vmatpush1.msra.mxu0 %v695
    %1684 = vmatprep.subr.mxu0 %v700
    %1685 = vmatpush1.msra.mxu0 %v699
    %1686 = vmatprep.subr.mxu0 %v704
    %1687 = vmatpush1.msra.mxu0 %v703
    %1688 = vmatprep.subr.mxu0 %v708
    %1689 = vmatpush1.msra.mxu0 %v707
    %1690 = vmatprep.subr.mxu0 %v712
    %1691 = vmatpush1.msra.mxu0 %v711
    %1692 = vmatprep.subr.mxu0 %v716
    %1693 = vmatpush1.msra.mxu0 %v715
    %1694 = vmatprep.subr.mxu0 0.0
    %1695 = vmatpush1.msra.mxu0 0.0
    %1696 = vmatprep.subr.mxu0 0.0
    %1697 = vmatpush1.msra.mxu0 0.0
    %1698 = vmatprep.subr.mxu0 0.0
    %1699 = vmatpush1.msra.mxu0 0.0
    %1700 = vmatprep.subr.mxu0 0.0
    %1701 = vmatpush1.msra.mxu0 0.0
    %1702 = vmatprep.subr.mxu0 0.0
    %1703 = vmatpush1.msra.mxu0 0.0
    %1704 = vmatprep.subr.mxu0 0.0
    %1705 = vmatpush1.msra.mxu0 0.0
    %1706 = vmatprep.subr.mxu0 0.0
    %1707 = vmatpush1.msra.mxu0 0.0
    %1708 = vmatprep.subr.mxu0 0.0
    %1709 = vmatpush1.msra.mxu0 0.0
    %1710 = vmatprep.subr.mxu0 0.0
    %1711 = vmatpush1.msra.mxu0 0.0
    %1712 = vmatprep.subr.mxu0 0.0
    %1713 = vmatpush1.msra.mxu0 0.0
    %1714 = vmatprep.subr.mxu0 0.0
    %1715 = vmatpush1.msra.mxu0 0.0
    %1716 = vmatprep.subr.mxu0 0.0
    %1717 = vmatpush1.msra.mxu0 0.0
    %1718 = vmatprep.subr.mxu0 0.0
    %1719 = vmatpush1.msra.mxu0 0.0
    %1720 = vmatprep.subr.mxu0 0.0
    %1721 = vmatpush1.msra.mxu0 0.0
    %1722 = vmatprep.subr.mxu0 0.0
    %1723 = vmatpush1.msra.mxu0 0.0
    %1724 = vmatprep.subr.mxu0 0.0
    %1725 = vmatpush1.msra.mxu0 0.0
    %1726 = vmatprep.mubr.f32.mxu0 0.0
    %1727 = vmatmul.mubr.f32.gmra.mrb[0].mxu0 %v1586
    %v1728 = vpop.f32.mrb[0].mxu0
    %v1729 = vadd.f32 0.0, %v1728
    %v1730 = vpop.f32.mrb[0].mxu0
    %v1731 = vadd.f32 0.0, %v1730
    %1732 = vdwg.mxu0
    %v1733 = vadd.f32 %v1587, %v1658
    %v1734 = vadd.f32 %v1588, %v1660
    %v1735 = vadd.f32 %v1589, %v1729
    %v1736 = vadd.f32 %v1590, %v1731
    %v1737 = vxor.u32 %v1733, 2147483648
    %v1738 = vmul.f32 %v1737, 1.442695
    %v1739 = vpow.pop %v1738
    %v1740 = vadd.f32 %v1739, 1.0
    %v1741 = vrcp.pop %v1740
    %v1742 = vmul.f32 1.0, %v1741
    %v1743 = vxor.u32 %v1734, 2147483648
    %v1744 = vmul.f32 %v1743, 1.442695
    %v1745 = vpow.pop %v1744
    %v1746 = vadd.f32 %v1745, 1.0
    %v1747 = vrcp.pop %v1746
    %v1748 = vmul.f32 1.0, %v1747
    %v1749 = vtanh.pop %v1735
    %v1750 = vxor.u32 %v1736, 2147483648
    %v1751 = vmul.f32 %v1750, 1.442695
    %v1752 = vpow.pop %v1751
    %v1753 = vadd.f32 %v1752, 1.0
    %v1754 = vrcp.pop %v1753
    %v1755 = vmul.f32 1.0, %v1754
    %v1756 = vmul.f32 %v1748, %v1584
    %v1757 = vmul.f32 %v1742, %v1749
    %v1758 = vadd.f32 %v1756, %v1757
    %v1759 = vtanh.pop %v1758
    %v1760 = vmul.f32 %v1755, %v1759
    %v1761 = vld [vmem:[#allocation2 + $0xc0] sm:$0xff]
    %v1762 = vld [vmem:[#allocation2 + $0xc8] sm:$0xff]
    %v1763 = vld [vmem:[#allocation2 + $0xd0] sm:$0xff]
    %v1764 = vld [vmem:[#allocation2 + $0xd8] sm:$0xff]
    %1765 = vmatprep.subr.mxu0 %v654
    %1766 = vmatpush1.msra.mxu0 %v653
    %1767 = vmatprep.subr.mxu0 %v658
    %1768 = vmatpush1.msra.mxu0 %v657
    %1769 = vmatprep.subr.mxu0 %v662
    %1770 = vmatpush1.msra.mxu0 %v661
    %1771 = vmatprep.subr.mxu0 %v666
    %1772 = vmatpush1.msra.mxu0 %v665
    %1773 = vmatprep.subr.mxu0 %v670
    %1774 = vmatpush1.msra.mxu0 %v669
    %1775 = vmatprep.subr.mxu0 %v674
    %1776 = vmatpush1.msra.mxu0 %v673
    %1777 = vmatprep.subr.mxu0 %v678
    %1778 = vmatpush1.msra.mxu0 %v677
    %1779 = vmatprep.subr.mxu0 %v682
    %1780 = vmatpush1.msra.mxu0 %v681
    %1781 = vmatprep.subr.mxu0 %v686
    %1782 = vmatpush1.msra.mxu0 %v685
    %1783 = vmatprep.subr.mxu0 %v690
    %1784 = vmatpush1.msra.mxu0 %v689
    %1785 = vmatprep.subr.mxu0 %v694
    %1786 = vmatpush1.msra.mxu0 %v693
    %1787 = vmatprep.subr.mxu0 %v698
    %1788 = vmatpush1.msra.mxu0 %v697
    %1789 = vmatprep.subr.mxu0 %v702
    %1790 = vmatpush1.msra.mxu0 %v701
    %1791 = vmatprep.subr.mxu0 %v706
    %1792 = vmatpush1.msra.mxu0 %v705
    %1793 = vmatprep.subr.mxu0 %v710
    %1794 = vmatpush1.msra.mxu0 %v709
    %1795 = vmatprep.subr.mxu0 %v714
    %1796 = vmatpush1.msra.mxu0 %v713
    %1797 = vmatprep.subr.mxu0 0.0
    %1798 = vmatpush1.msra.mxu0 0.0
    %1799 = vmatprep.subr.mxu0 0.0
    %1800 = vmatpush1.msra.mxu0 0.0
    %1801 = vmatprep.subr.mxu0 0.0
    %1802 = vmatpush1.msra.mxu0 0.0
    %1803 = vmatprep.subr.mxu0 0.0
    %1804 = vmatpush1.msra.mxu0 0.0
    %1805 = vmatprep.subr.mxu0 0.0
    %1806 = vmatpush1.msra.mxu0 0.0
    %1807 = vmatprep.subr.mxu0 0.0
    %1808 = vmatpush1.msra.mxu0 0.0
    %1809 = vmatprep.subr.mxu0 0.0
    %1810 = vmatpush1.msra.mxu0 0.0
    %1811 = vmatprep.subr.mxu0 0.0
    %1812 = vmatpush1.msra.mxu0 0.0
    %1813 = vmatprep.subr.mxu0 0.0
    %1814 = vmatpush1.msra.mxu0 0.0
    %1815 = vmatprep.subr.mxu0 0.0
    %1816 = vmatpush1.msra.mxu0 0.0
    %1817 = vmatprep.subr.mxu0 0.0
    %1818 = vmatpush1.msra.mxu0 0.0
    %1819 = vmatprep.subr.mxu0 0.0
    %1820 = vmatpush1.msra.mxu0 0.0
    %1821 = vmatprep.subr.mxu0 0.0
    %1822 = vmatpush1.msra.mxu0 0.0
    %1823 = vmatprep.subr.mxu0 0.0
    %1824 = vmatpush1.msra.mxu0 0.0
    %1825 = vmatprep.subr.mxu0 0.0
    %1826 = vmatpush1.msra.mxu0 0.0
    %1827 = vmatprep.subr.mxu0 0.0
    %1828 = vmatpush1.msra.mxu0 0.0
    %1829 = vmatprep.mubr.f32.mxu0 0.0
    %1830 = vmatmul.mubr.f32.gmra.mrb[0].mxu0 %v1760
    %v1831 = vpop.f32.mrb[0].mxu0
    %v1832 = vadd.f32 0.0, %v1831
    %v1833 = vpop.f32.mrb[0].mxu0
    %v1834 = vadd.f32 0.0, %v1833
    %1835 = vdwg.mxu0
    %1836 = vmatprep.subr.mxu0 %v656
    %1837 = vmatpush1.msra.mxu0 %v655
    %1838 = vmatprep.subr.mxu0 %v660
    %1839 = vmatpush1.msra.mxu0 %v659
    %1840 = vmatprep.subr.mxu0 %v664
    %1841 = vmatpush1.msra.mxu0 %v663
    %1842 = vmatprep.subr.mxu0 %v668
    %1843 = vmatpush1.msra.mxu0 %v667
    %1844 = vmatprep.subr.mxu0 %v672
    %1845 = vmatpush1.msra.mxu0 %v671
    %1846 = vmatprep.subr.mxu0 %v676
    %1847 = vmatpush1.msra.mxu0 %v675
    %1848 = vmatprep.subr.mxu0 %v680
    %1849 = vmatpush1.msra.mxu0 %v679
    %1850 = vmatprep.subr.mxu0 %v684
    %1851 = vmatpush1.msra.mxu0 %v683
    %1852 = vmatprep.subr.mxu0 %v688
    %1853 = vmatpush1.msra.mxu0 %v687
    %1854 = vmatprep.subr.mxu0 %v692
    %1855 = vmatpush1.msra.mxu0 %v691
    %1856 = vmatprep.subr.mxu0 %v696
    %1857 = vmatpush1.msra.mxu0 %v695
    %1858 = vmatprep.subr.mxu0 %v700
    %1859 = vmatpush1.msra.mxu0 %v699
    %1860 = vmatprep.subr.mxu0 %v704
    %1861 = vmatpush1.msra.mxu0 %v703
    %1862 = vmatprep.subr.mxu0 %v708
    %1863 = vmatpush1.msra.mxu0 %v707
    %1864 = vmatprep.subr.mxu0 %v712
    %1865 = vmatpush1.msra.mxu0 %v711
    %1866 = vmatprep.subr.mxu0 %v716
    %1867 = vmatpush1.msra.mxu0 %v715
    %1868 = vmatprep.subr.mxu0 0.0
    %1869 = vmatpush1.msra.mxu0 0.0
    %1870 = vmatprep.subr.mxu0 0.0
    %1871 = vmatpush1.msra.mxu0 0.0
    %1872 = vmatprep.subr.mxu0 0.0
    %1873 = vmatpush1.msra.mxu0 0.0
    %1874 = vmatprep.subr.mxu0 0.0
    %1875 = vmatpush1.msra.mxu0 0.0
    %1876 = vmatprep.subr.mxu0 0.0
    %1877 = vmatpush1.msra.mxu0 0.0
    %1878 = vmatprep.subr.mxu0 0.0
    %1879 = vmatpush1.msra.mxu0 0.0
    %1880 = vmatprep.subr.mxu0 0.0
    %1881 = vmatpush1.msra.mxu0 0.0
    %1882 = vmatprep.subr.mxu0 0.0
    %1883 = vmatpush1.msra.mxu0 0.0
    %1884 = vmatprep.subr.mxu0 0.0
    %1885 = vmatpush1.msra.mxu0 0.0
    %1886 = vmatprep.subr.mxu0 0.0
    %1887 = vmatpush1.msra.mxu0 0.0
    %1888 = vmatprep.subr.mxu0 0.0
    %1889 = vmatpush1.msra.mxu0 0.0
    %1890 = vmatprep.subr.mxu0 0.0
    %1891 = vmatpush1.msra.mxu0 0.0
    %1892 = vmatprep.subr.mxu0 0.0
    %1893 = vmatpush1.msra.mxu0 0.0
    %1894 = vmatprep.subr.mxu0 0.0
    %1895 = vmatpush1.msra.mxu0 0.0
    %1896 = vmatprep.subr.mxu0 0.0
    %1897 = vmatpush1.msra.mxu0 0.0
    %1898 = vmatprep.subr.mxu0 0.0
    %1899 = vmatpush1.msra.mxu0 0.0
    %1900 = vmatprep.mubr.f32.mxu0 0.0
    %1901 = vmatmul.mubr.f32.gmra.mrb[0].mxu0 %v1760
    %v1902 = vpop.f32.mrb[0].mxu0
    %v1903 = vadd.f32 0.0, %v1902
    %v1904 = vpop.f32.mrb[0].mxu0
    %v1905 = vadd.f32 0.0, %v1904
    %1906 = vdwg.mxu0
    %v1907 = vadd.f32 %v1761, %v1832
    %v1908 = vadd.f32 %v1762, %v1834
    %v1909 = vadd.f32 %v1763, %v1903
    %v1910 = vadd.f32 %v1764, %v1905
    %v1911 = vxor.u32 %v1907, 2147483648
    %v1912 = vmul.f32 %v1911, 1.442695
    %v1913 = vpow.pop %v1912
    %v1914 = vadd.f32 %v1913, 1.0
    %v1915 = vrcp.pop %v1914
    %v1916 = vmul.f32 1.0, %v1915
    %v1917 = vxor.u32 %v1908, 2147483648
    %v1918 = vmul.f32 %v1917, 1.442695
    %v1919 = vpow.pop %v1918
    %v1920 = vadd.f32 %v1919, 1.0
    %v1921 = vrcp.pop %v1920
    %v1922 = vmul.f32 1.0, %v1921
    %v1923 = vtanh.pop %v1909
    %v1924 = vxor.u32 %v1910, 2147483648
    %v1925 = vmul.f32 %v1924, 1.442695
    %v1926 = vpow.pop %v1925
    %v1927 = vadd.f32 %v1926, 1.0
    %v1928 = vrcp.pop %v1927
    %v1929 = vmul.f32 1.0, %v1928
    %v1930 = vmul.f32 %v1922, %v1758
    %v1931 = vmul.f32 %v1916, %v1923
    %v1932 = vadd.f32 %v1930, %v1931
    %v1933 = vtanh.pop %v1932
    %v1934 = vmul.f32 %v1929, %v1933
    %v1935 = vld [vmem:[#allocation2 + $0xe0] sm:$0xff]
    %v1936 = vld [vmem:[#allocation2 + $0xe8] sm:$0xff]
    %v1937 = vld [vmem:[#allocation2 + $0xf0] sm:$0xff]
    %v1938 = vld [vmem:[#allocation2 + $0xf8] sm:$0xff]
    %1939 = vmatprep.subr.mxu0 %v654
    %1940 = vmatpush1.msra.mxu0 %v653
    %1941 = vmatprep.subr.mxu0 %v658
    %1942 = vmatpush1.msra.mxu0 %v657
    %1943 = vmatprep.subr.mxu0 %v662
    %1944 = vmatpush1.msra.mxu0 %v661
    %1945 = vmatprep.subr.mxu0 %v666
    %1946 = vmatpush1.msra.mxu0 %v665
    %1947 = vmatprep.subr.mxu0 %v670
    %1948 = vmatpush1.msra.mxu0 %v669
    %1949 = vmatprep.subr.mxu0 %v674
    %1950 = vmatpush1.msra.mxu0 %v673
    %1951 = vmatprep.subr.mxu0 %v678
    %1952 = vmatpush1.msra.mxu0 %v677
    %1953 = vmatprep.subr.mxu0 %v682
    %1954 = vmatpush1.msra.mxu0 %v681
    %1955 = vmatprep.subr.mxu0 %v686
    %1956 = vmatpush1.msra.mxu0 %v685
    %1957 = vmatprep.subr.mxu0 %v690
    %1958 = vmatpush1.msra.mxu0 %v689
    %1959 = vmatprep.subr.mxu0 %v694
    %1960 = vmatpush1.msra.mxu0 %v693
    %1961 = vmatprep.subr.mxu0 %v698
    %1962 = vmatpush1.msra.mxu0 %v697
    %1963 = vmatprep.subr.mxu0 %v702
    %1964 = vmatpush1.msra.mxu0 %v701
    %1965 = vmatprep.subr.mxu0 %v706
    %1966 = vmatpush1.msra.mxu0 %v705
    %1967 = vmatprep.subr.mxu0 %v710
    %1968 = vmatpush1.msra.mxu0 %v709
    %1969 = vmatprep.subr.mxu0 %v714
    %1970 = vmatpush1.msra.mxu0 %v713
    %1971 = vmatprep.subr.mxu0 0.0
    %1972 = vmatpush1.msra.mxu0 0.0
    %1973 = vmatprep.subr.mxu0 0.0
    %1974 = vmatpush1.msra.mxu0 0.0
    %1975 = vmatprep.subr.mxu0 0.0
    %1976 = vmatpush1.msra.mxu0 0.0
    %1977 = vmatprep.subr.mxu0 0.0
    %1978 = vmatpush1.msra.mxu0 0.0
    %1979 = vmatprep.subr.mxu0 0.0
    %1980 = vmatpush1.msra.mxu0 0.0
    %1981 = vmatprep.subr.mxu0 0.0
    %1982 = vmatpush1.msra.mxu0 0.0
    %1983 = vmatprep.subr.mxu0 0.0
    %1984 = vmatpush1.msra.mxu0 0.0
    %1985 = vmatprep.subr.mxu0 0.0
    %1986 = vmatpush1.msra.mxu0 0.0
    %1987 = vmatprep.subr.mxu0 0.0
    %1988 = vmatpush1.msra.mxu0 0.0
    %1989 = vmatprep.subr.mxu0 0.0
    %1990 = vmatpush1.msra.mxu0 0.0
    %1991 = vmatprep.subr.mxu0 0.0
    %1992 = vmatpush1.msra.mxu0 0.0
    %1993 = vmatprep.subr.mxu0 0.0
    %1994 = vmatpush1.msra.mxu0 0.0
    %1995 = vmatprep.subr.mxu0 0.0
    %1996 = vmatpush1.msra.mxu0 0.0
    %1997 = vmatprep.subr.mxu0 0.0
    %1998 = vmatpush1.msra.mxu0 0.0
    %1999 = vmatprep.subr.mxu0 0.0
    %2000 = vmatpush1.msra.mxu0 0.0
    %2001 = vmatprep.subr.mxu0 0.0
    %2002 = vmatpush1.msra.mxu0 0.0
    %2003 = vmatprep.mubr.f32.mxu0 0.0
    %2004 = vmatmul.mubr.f32.gmra.mrb[0].mxu0 %v1934
    %v2005 = vpop.f32.mrb[0].mxu0
    %v2006 = vadd.f32 0.0, %v2005
    %v2007 = vpop.f32.mrb[0].mxu0
    %v2008 = vadd.f32 0.0, %v2007
    %2009 = vdwg.mxu0
    %2010 = vmatprep.subr.mxu0 %v656
    %2011 = vmatpush1.msra.mxu0 %v655
    %2012 = vmatprep.subr.mxu0 %v660
    %2013 = vmatpush1.msra.mxu0 %v659
    %2014 = vmatprep.subr.mxu0 %v664
    %2015 = vmatpush1.msra.mxu0 %v663
    %2016 = vmatprep.subr.mxu0 %v668
    %2017 = vmatpush1.msra.mxu0 %v667
    %2018 = vmatprep.subr.mxu0 %v672
    %2019 = vmatpush1.msra.mxu0 %v671
    %2020 = vmatprep.subr.mxu0 %v676
    %2021 = vmatpush1.msra.mxu0 %v675
    %2022 = vmatprep.subr.mxu0 %v680
    %2023 = vmatpush1.msra.mxu0 %v679
    %2024 = vmatprep.subr.mxu0 %v684
    %2025 = vmatpush1.msra.mxu0 %v683
    %2026 = vmatprep.subr.mxu0 %v688
    %2027 = vmatpush1.msra.mxu0 %v687
    %2028 = vmatprep.subr.mxu0 %v692
    %2029 = vmatpush1.msra.mxu0 %v691
    %2030 = vmatprep.subr.mxu0 %v696
    %2031 = vmatpush1.msra.mxu0 %v695
    %2032 = vmatprep.subr.mxu0 %v700
    %2033 = vmatpush1.msra.mxu0 %v699
    %2034 = vmatprep.subr.mxu0 %v704
    %2035 = vmatpush1.msra.mxu0 %v703
    %2036 = vmatprep.subr.mxu0 %v708
    %2037 = vmatpush1.msra.mxu0 %v707
    %2038 = vmatprep.subr.mxu0 %v712
    %2039 = vmatpush1.msra.mxu0 %v711
    %2040 = vmatprep.subr.mxu0 %v716
    %2041 = vmatpush1.msra.mxu0 %v715
    %2042 = vmatprep.subr.mxu0 0.0
    %2043 = vmatpush1.msra.mxu0 0.0
    %2044 = vmatprep.subr.mxu0 0.0
    %2045 = vmatpush1.msra.mxu0 0.0
    %2046 = vmatprep.subr.mxu0 0.0
    %2047 = vmatpush1.msra.mxu0 0.0
    %2048 = vmatprep.subr.mxu0 0.0
    %2049 = vmatpush1.msra.mxu0 0.0
    %2050 = vmatprep.subr.mxu0 0.0
    %2051 = vmatpush1.msra.mxu0 0.0
    %2052 = vmatprep.subr.mxu0 0.0
    %2053 = vmatpush1.msra.mxu0 0.0
    %2054 = vmatprep.subr.mxu0 0.0
    %2055 = vmatpush1.msra.mxu0 0.0
    %2056 = vmatprep.subr.mxu0 0.0
    %2057 = vmatpush1.msra.mxu0 0.0
    %2058 = vmatprep.subr.mxu0 0.0
    %2059 = vmatpush1.msra.mxu0 0.0
    %2060 = vmatprep.subr.mxu0 0.0
    %2061 = vmatpush1.msra.mxu0 0.0
    %2062 = vmatprep.subr.mxu0 0.0
    %2063 = vmatpush1.msra.mxu0 0.0
    %2064 = vmatprep.subr.mxu0 0.0
    %2065 = vmatpush1.msra.mxu0 0.0
    %2066 = vmatprep.subr.mxu0 0.0
    %2067 = vmatpush1.msra.mxu0 0.0
    %2068 = vmatprep.subr.mxu0 0.0
    %2069 = vmatpush1.msra.mxu0 0.0
    %2070 = vmatprep.subr.mxu0 0.0
    %2071 = vmatpush1.msra.mxu0 0.0
    %2072 = vmatprep.subr.mxu0 0.0
    %2073 = vmatpush1.msra.mxu0 0.0
    %2074 = vmatprep.mubr.f32.mxu0 0.0
    %2075 = vmatmul.mubr.f32.gmra.mrb[0].mxu0 %v1934
    %v2076 = vpop.f32.mrb[0].mxu0
    %v2077 = vadd.f32 0.0, %v2076
    %v2078 = vpop.f32.mrb[0].mxu0
    %v2079 = vadd.f32 0.0, %v2078
    %2080 = vdwg.mxu0
    %v2081 = vadd.f32 %v1935, %v2006
    %v2082 = vadd.f32 %v1936, %v2008
    %v2083 = vadd.f32 %v1937, %v2077
    %v2084 = vadd.f32 %v1938, %v2079
    %v2085 = vxor.u32 %v2081, 2147483648
    %v2086 = vmul.f32 %v2085, 1.442695
    %v2087 = vpow.pop %v2086
    %v2088 = vadd.f32 %v2087, 1.0
    %v2089 = vrcp.pop %v2088
    %v2090 = vmul.f32 1.0, %v2089
    %v2091 = vxor.u32 %v2082, 2147483648
    %v2092 = vmul.f32 %v2091, 1.442695
    %v2093 = vpow.pop %v2092
    %v2094 = vadd.f32 %v2093, 1.0
    %v2095 = vrcp.pop %v2094
    %v2096 = vmul.f32 1.0, %v2095
    %v2097 = vtanh.pop %v2083
    %v2098 = vxor.u32 %v2084, 2147483648
    %v2099 = vmul.f32 %v2098, 1.442695
    %v2100 = vpow.pop %v2099
    %v2101 = vadd.f32 %v2100, 1.0
    %v2102 = vrcp.pop %v2101
    %v2103 = vmul.f32 1.0, %v2102
    %v2104 = vmul.f32 %v2096, %v1932
    %v2105 = vmul.f32 %v2090, %v2097
    %v2106 = vadd.f32 %v2104, %v2105
    %v2107 = vtanh.pop %v2106
    %v2108 = vmul.f32 %v2103, %v2107
    %v2109 = vld [vmem:[#allocation2 + $0x100] sm:$0xff]
    %v2110 = vld [vmem:[#allocation2 + $0x108] sm:$0xff]
    %v2111 = vld [vmem:[#allocation2 + $0x110] sm:$0xff]
    %v2112 = vld [vmem:[#allocation2 + $0x118] sm:$0xff]
    %2113 = vmatprep.subr.mxu0 %v654
    %2114 = vmatpush1.msra.mxu0 %v653
    %2115 = vmatprep.subr.mxu0 %v658
    %2116 = vmatpush1.msra.mxu0 %v657
    %2117 = vmatprep.subr.mxu0 %v662
    %2118 = vmatpush1.msra.mxu0 %v661
    %2119 = vmatprep.subr.mxu0 %v666
    %2120 = vmatpush1.msra.mxu0 %v665
    %2121 = vmatprep.subr.mxu0 %v670
    %2122 = vmatpush1.msra.mxu0 %v669
    %2123 = vmatprep.subr.mxu0 %v674
    %2124 = vmatpush1.msra.mxu0 %v673
    %2125 = vmatprep.subr.mxu0 %v678
    %2126 = vmatpush1.msra.mxu0 %v677
    %2127 = vmatprep.subr.mxu0 %v682
    %2128 = vmatpush1.msra.mxu0 %v681
    %2129 = vmatprep.subr.mxu0 %v686
    %2130 = vmatpush1.msra.mxu0 %v685
    %2131 = vmatprep.subr.mxu0 %v690
    %2132 = vmatpush1.msra.mxu0 %v689
    %2133 = vmatprep.subr.mxu0 %v694
    %2134 = vmatpush1.msra.mxu0 %v693
    %2135 = vmatprep.subr.mxu0 %v698
    %2136 = vmatpush1.msra.mxu0 %v697
    %2137 = vmatprep.subr.mxu0 %v702
    %2138 = vmatpush1.msra.mxu0 %v701
    %2139 = vmatprep.subr.mxu0 %v706
    %2140 = vmatpush1.msra.mxu0 %v705
    %2141 = vmatprep.subr.mxu0 %v710
    %2142 = vmatpush1.msra.mxu0 %v709
    %2143 = vmatprep.subr.mxu0 %v714
    %2144 = vmatpush1.msra.mxu0 %v713
    %2145 = vmatprep.subr.mxu0 0.0
    %2146 = vmatpush1.msra.mxu0 0.0
    %2147 = vmatprep.subr.mxu0 0.0
    %2148 = vmatpush1.msra.mxu0 0.0
    %2149 = vmatprep.subr.mxu0 0.0
    %2150 = vmatpush1.msra.mxu0 0.0
    %2151 = vmatprep.subr.mxu0 0.0
    %2152 = vmatpush1.msra.mxu0 0.0
    %2153 = vmatprep.subr.mxu0 0.0
    %2154 = vmatpush1.msra.mxu0 0.0
    %2155 = vmatprep.subr.mxu0 0.0
    %2156 = vmatpush1.msra.mxu0 0.0
    %2157 = vmatprep.subr.mxu0 0.0
    %2158 = vmatpush1.msra.mxu0 0.0
    %2159 = vmatprep.subr.mxu0 0.0
    %2160 = vmatpush1.msra.mxu0 0.0
    %2161 = vmatprep.subr.mxu0 0.0
    %2162 = vmatpush1.msra.mxu0 0.0
    %2163 = vmatprep.subr.mxu0 0.0
    %2164 = vmatpush1.msra.mxu0 0.0
    %2165 = vmatprep.subr.mxu0 0.0
    %2166 = vmatpush1.msra.mxu0 0.0
    %2167 = vmatprep.subr.mxu0 0.0
    %2168 = vmatpush1.msra.mxu0 0.0
    %2169 = vmatprep.subr.mxu0 0.0
    %2170 = vmatpush1.msra.mxu0 0.0
    %2171 = vmatprep.subr.mxu0 0.0
    %2172 = vmatpush1.msra.mxu0 0.0
    %2173 = vmatprep.subr.mxu0 0.0
    %2174 = vmatpush1.msra.mxu0 0.0
    %2175 = vmatprep.subr.mxu0 0.0
    %2176 = vmatpush1.msra.mxu0 0.0
    %2177 = vmatprep.mubr.f32.mxu0 0.0
    %2178 = vmatmul.mubr.f32.gmra.mrb[0].mxu0 %v2108
    %v2179 = vpop.f32.mrb[0].mxu0
    %v2180 = vadd.f32 0.0, %v2179
    %v2181 = vpop.f32.mrb[0].mxu0
    %v2182 = vadd.f32 0.0, %v2181
    %2183 = vdwg.mxu0
    %2184 = vmatprep.subr.mxu0 %v656
    %2185 = vmatpush1.msra.mxu0 %v655
    %2186 = vmatprep.subr.mxu0 %v660
    %2187 = vmatpush1.msra.mxu0 %v659
    %2188 = vmatprep.subr.mxu0 %v664
    %2189 = vmatpush1.msra.mxu0 %v663
    %2190 = vmatprep.subr.mxu0 %v668
    %2191 = vmatpush1.msra.mxu0 %v667
    %2192 = vmatprep.subr.mxu0 %v672
    %2193 = vmatpush1.msra.mxu0 %v671
    %2194 = vmatprep.subr.mxu0 %v676
    %2195 = vmatpush1.msra.mxu0 %v675
    %2196 = vmatprep.subr.mxu0 %v680
    %2197 = vmatpush1.msra.mxu0 %v679
    %2198 = vmatprep.subr.mxu0 %v684
    %2199 = vmatpush1.msra.mxu0 %v683
    %2200 = vmatprep.subr.mxu0 %v688
    %2201 = vmatpush1.msra.mxu0 %v687
    %2202 = vmatprep.subr.mxu0 %v692
    %2203 = vmatpush1.msra.mxu0 %v691
    %2204 = vmatprep.subr.mxu0 %v696
    %2205 = vmatpush1.msra.mxu0 %v695
    %2206 = vmatprep.subr.mxu0 %v700
    %2207 = vmatpush1.msra.mxu0 %v699
    %2208 = vmatprep.subr.mxu0 %v704
    %2209 = vmatpush1.msra.mxu0 %v703
    %2210 = vmatprep.subr.mxu0 %v708
    %2211 = vmatpush1.msra.mxu0 %v707
    %2212 = vmatprep.subr.mxu0 %v712
    %2213 = vmatpush1.msra.mxu0 %v711
    %2214 = vmatprep.subr.mxu0 %v716
    %2215 = vmatpush1.msra.mxu0 %v715
    %2216 = vmatprep.subr.mxu0 0.0
    %2217 = vmatpush1.msra.mxu0 0.0
    %2218 = vmatprep.subr.mxu0 0.0
    %2219 = vmatpush1.msra.mxu0 0.0
    %2220 = vmatprep.subr.mxu0 0.0
    %2221 = vmatpush1.msra.mxu0 0.0
    %2222 = vmatprep.subr.mxu0 0.0
    %2223 = vmatpush1.msra.mxu0 0.0
    %2224 = vmatprep.subr.mxu0 0.0
    %2225 = vmatpush1.msra.mxu0 0.0
    %2226 = vmatprep.subr.mxu0 0.0
    %2227 = vmatpush1.msra.mxu0 0.0
    %2228 = vmatprep.subr.mxu0 0.0
    %2229 = vmatpush1.msra.mxu0 0.0
    %2230 = vmatprep.subr.mxu0 0.0
    %2231 = vmatpush1.msra.mxu0 0.0
    %2232 = vmatprep.subr.mxu0 0.0
    %2233 = vmatpush1.msra.mxu0 0.0
    %2234 = vmatprep.subr.mxu0 0.0
    %2235 = vmatpush1.msra.mxu0 0.0
    %2236 = vmatprep.subr.mxu0 0.0
    %2237 = vmatpush1.msra.mxu0 0.0
    %2238 = vmatprep.subr.mxu0 0.0
    %2239 = vmatpush1.msra.mxu0 0.0
    %2240 = vmatprep.subr.mxu0 0.0
    %2241 = vmatpush1.msra.mxu0 0.0
    %2242 = vmatprep.subr.mxu0 0.0
    %2243 = vmatpush1.msra.mxu0 0.0
    %2244 = vmatprep.subr.mxu0 0.0
    %2245 = vmatpush1.msra.mxu0 0.0
    %2246 = vmatprep.subr.mxu0 0.0
    %2247 = vmatpush1.msra.mxu0 0.0
    %2248 = vmatprep.mubr.f32.mxu0 0.0
    %2249 = vmatmul.mubr.f32.gmra.mrb[0].mxu0 %v2108
    %v2250 = vpop.f32.mrb[0].mxu0
    %v2251 = vadd.f32 0.0, %v2250
    %v2252 = vpop.f32.mrb[0].mxu0
    %v2253 = vadd.f32 0.0, %v2252
    %2254 = vdwg.mxu0
    %v2255 = vadd.f32 %v2109, %v2180
    %v2256 = vadd.f32 %v2110, %v2182
    %v2257 = vadd.f32 %v2111, %v2251
    %v2258 = vadd.f32 %v2112, %v2253
    %v2259 = vxor.u32 %v2255, 2147483648
    %v2260 = vmul.f32 %v2259, 1.442695
    %v2261 = vpow.pop %v2260
    %v2262 = vadd.f32 %v2261, 1.0
    %v2263 = vrcp.pop %v2262
    %v2264 = vmul.f32 1.0, %v2263
    %v2265 = vxor.u32 %v2256, 2147483648
    %v2266 = vmul.f32 %v2265, 1.442695
    %v2267 = vpow.pop %v2266
    %v2268 = vadd.f32 %v2267, 1.0
    %v2269 = vrcp.pop %v2268
    %v2270 = vmul.f32 1.0, %v2269
    %v2271 = vtanh.pop %v2257
    %v2272 = vxor.u32 %v2258, 2147483648
    %v2273 = vmul.f32 %v2272, 1.442695
    %v2274 = vpow.pop %v2273
    %v2275 = vadd.f32 %v2274, 1.0
    %v2276 = vrcp.pop %v2275
    %v2277 = vmul.f32 1.0, %v2276
    %v2278 = vmul.f32 %v2270, %v2106
    %v2279 = vmul.f32 %v2264, %v2271
    %v2280 = vadd.f32 %v2278, %v2279
    %v2281 = vtanh.pop %v2280
    %v2282 = vmul.f32 %v2277, %v2281
    %2283 = vst [vmem:[#allocation5] sm:$0xff] %v2282
    %v2284 = vld [vmem:[#allocation2 + $0x120] sm:$0xff]
    %v2285 = vld [vmem:[#allocation2 + $0x128] sm:$0xff]
    %v2286 = vld [vmem:[#allocation2 + $0x130] sm:$0xff]
    %v2287 = vld [vmem:[#allocation2 + $0x138] sm:$0xff]
    %2288 = vmatprep.subr.mxu0 %v654
    %2289 = vmatpush1.msra.mxu0 %v653
    %2290 = vmatprep.subr.mxu0 %v658
    %2291 = vmatpush1.msra.mxu0 %v657
    %2292 = vmatprep.subr.mxu0 %v662
    %2293 = vmatpush1.msra.mxu0 %v661
    %2294 = vmatprep.subr.mxu0 %v666
    %2295 = vmatpush1.msra.mxu0 %v665
    %2296 = vmatprep.subr.mxu0 %v670
    %2297 = vmatpush1.msra.mxu0 %v669
    %2298 = vmatprep.subr.mxu0 %v674
    %2299 = vmatpush1.msra.mxu0 %v673
    %2300 = vmatprep.subr.mxu0 %v678
    %2301 = vmatpush1.msra.mxu0 %v677
    %2302 = vmatprep.subr.mxu0 %v682
    %2303 = vmatpush1.msra.mxu0 %v681
    %2304 = vmatprep.subr.mxu0 %v686
    %2305 = vmatpush1.msra.mxu0 %v685
    %2306 = vmatprep.subr.mxu0 %v690
    %2307 = vmatpush1.msra.mxu0 %v689
    %2308 = vmatprep.subr.mxu0 %v694
    %2309 = vmatpush1.msra.mxu0 %v693
    %2310 = vmatprep.subr.mxu0 %v698
    %2311 = vmatpush1.msra.mxu0 %v697
    %2312 = vmatprep.subr.mxu0 %v702
    %2313 = vmatpush1.msra.mxu0 %v701
    %2314 = vmatprep.subr.mxu0 %v706
    %2315 = vmatpush1.msra.mxu0 %v705
    %2316 = vmatprep.subr.mxu0 %v710
    %2317 = vmatpush1.msra.mxu0 %v709
    %2318 = vmatprep.subr.mxu0 %v714
    %2319 = vmatpush1.msra.mxu0 %v713
    %2320 = vmatprep.subr.mxu0 0.0
    %2321 = vmatpush1.msra.mxu0 0.0
    %2322 = vmatprep.subr.mxu0 0.0
    %2323 = vmatpush1.msra.mxu0 0.0
    %2324 = vmatprep.subr.mxu0 0.0
    %2325 = vmatpush1.msra.mxu0 0.0
    %2326 = vmatprep.subr.mxu0 0.0
    %2327 = vmatpush1.msra.mxu0 0.0
    %2328 = vmatprep.subr.mxu0 0.0
    %2329 = vmatpush1.msra.mxu0 0.0
    %2330 = vmatprep.subr.mxu0 0.0
    %2331 = vmatpush1.msra.mxu0 0.0
    %2332 = vmatprep.subr.mxu0 0.0
    %2333 = vmatpush1.msra.mxu0 0.0
    %2334 = vmatprep.subr.mxu0 0.0
    %2335 = vmatpush1.msra.mxu0 0.0
    %2336 = vmatprep.subr.mxu0 0.0
    %2337 = vmatpush1.msra.mxu0 0.0
    %2338 = vmatprep.subr.mxu0 0.0
    %2339 = vmatpush1.msra.mxu0 0.0
    %2340 = vmatprep.subr.mxu0 0.0
    %2341 = vmatpush1.msra.mxu0 0.0
    %2342 = vmatprep.subr.mxu0 0.0
    %2343 = vmatpush1.msra.mxu0 0.0
    %2344 = vmatprep.subr.mxu0 0.0
    %2345 = vmatpush1.msra.mxu0 0.0
    %2346 = vmatprep.subr.mxu0 0.0
    %2347 = vmatpush1.msra.mxu0 0.0
    %2348 = vmatprep.subr.mxu0 0.0
    %2349 = vmatpush1.msra.mxu0 0.0
    %2350 = vmatprep.subr.mxu0 0.0
    %2351 = vmatpush1.msra.mxu0 0.0
    %2352 = vmatprep.mubr.f32.mxu0 0.0
    %2353 = vmatmul.mubr.f32.gmra.mrb[0].mxu0 %v2282
    %v2354 = vpop.f32.mrb[0].mxu0
    %v2355 = vadd.f32 0.0, %v2354
    %v2356 = vpop.f32.mrb[0].mxu0
    %v2357 = vadd.f32 0.0, %v2356
    %2358 = vdwg.mxu0
    %2359 = vmatprep.subr.mxu0 %v656
    %2360 = vmatpush1.msra.mxu0 %v655
    %2361 = vmatprep.subr.mxu0 %v660
    %2362 = vmatpush1.msra.mxu0 %v659
    %2363 = vmatprep.subr.mxu0 %v664
    %2364 = vmatpush1.msra.mxu0 %v663
    %2365 = vmatprep.subr.mxu0 %v668
    %2366 = vmatpush1.msra.mxu0 %v667
    %2367 = vmatprep.subr.mxu0 %v672
    %2368 = vmatpush1.msra.mxu0 %v671
    %2369 = vmatprep.subr.mxu0 %v676
    %2370 = vmatpush1.msra.mxu0 %v675
    %2371 = vmatprep.subr.mxu0 %v680
    %2372 = vmatpush1.msra.mxu0 %v679
    %2373 = vmatprep.subr.mxu0 %v684
    %2374 = vmatpush1.msra.mxu0 %v683
    %2375 = vmatprep.subr.mxu0 %v688
    %2376 = vmatpush1.msra.mxu0 %v687
    %2377 = vmatprep.subr.mxu0 %v692
    %2378 = vmatpush1.msra.mxu0 %v691
    %2379 = vmatprep.subr.mxu0 %v696
    %2380 = vmatpush1.msra.mxu0 %v695
    %2381 = vmatprep.subr.mxu0 %v700
    %2382 = vmatpush1.msra.mxu0 %v699
    %2383 = vmatprep.subr.mxu0 %v704
    %2384 = vmatpush1.msra.mxu0 %v703
    %2385 = vmatprep.subr.mxu0 %v708
    %2386 = vmatpush1.msra.mxu0 %v707
    %2387 = vmatprep.subr.mxu0 %v712
    %2388 = vmatpush1.msra.mxu0 %v711
    %2389 = vmatprep.subr.mxu0 %v716
    %2390 = vmatpush1.msra.mxu0 %v715
    %2391 = vmatprep.subr.mxu0 0.0
    %2392 = vmatpush1.msra.mxu0 0.0
    %2393 = vmatprep.subr.mxu0 0.0
    %2394 = vmatpush1.msra.mxu0 0.0
    %2395 = vmatprep.subr.mxu0 0.0
    %2396 = vmatpush1.msra.mxu0 0.0
    %2397 = vmatprep.subr.mxu0 0.0
    %2398 = vmatpush1.msra.mxu0 0.0
    %2399 = vmatprep.subr.mxu0 0.0
    %2400 = vmatpush1.msra.mxu0 0.0
    %2401 = vmatprep.subr.mxu0 0.0
    %2402 = vmatpush1.msra.mxu0 0.0
    %2403 = vmatprep.subr.mxu0 0.0
    %2404 = vmatpush1.msra.mxu0 0.0
    %2405 = vmatprep.subr.mxu0 0.0
    %2406 = vmatpush1.msra.mxu0 0.0
    %2407 = vmatprep.subr.mxu0 0.0
    %2408 = vmatpush1.msra.mxu0 0.0
    %2409 = vmatprep.subr.mxu0 0.0
    %2410 = vmatpush1.msra.mxu0 0.0
    %2411 = vmatprep.subr.mxu0 0.0
    %2412 = vmatpush1.msra.mxu0 0.0
    %2413 = vmatprep.subr.mxu0 0.0
    %2414 = vmatpush1.msra.mxu0 0.0
    %2415 = vmatprep.subr.mxu0 0.0
    %2416 = vmatpush1.msra.mxu0 0.0
    %2417 = vmatprep.subr.mxu0 0.0
    %2418 = vmatpush1.msra.mxu0 0.0
    %2419 = vmatprep.subr.mxu0 0.0
    %2420 = vmatpush1.msra.mxu0 0.0
    %2421 = vmatprep.subr.mxu0 0.0
    %2422 = vmatpush1.msra.mxu0 0.0
    %2423 = vmatprep.mubr.f32.mxu0 0.0
    %2424 = vmatmul.mubr.f32.gmra.mrb[0].mxu0 %v2282
    %v2425 = vpop.f32.mrb[0].mxu0
    %v2426 = vadd.f32 0.0, %v2425
    %v2427 = vpop.f32.mrb[0].mxu0
    %v2428 = vadd.f32 0.0, %v2427
    %2429 = vdwg.mxu0
    %v2430 = vadd.f32 %v2284, %v2355
    %v2431 = vadd.f32 %v2285, %v2357
    %v2432 = vadd.f32 %v2286, %v2426
    %v2433 = vadd.f32 %v2287, %v2428
    %v2434 = vxor.u32 %v2430, 2147483648
    %v2435 = vmul.f32 %v2434, 1.442695
    %v2436 = vpow.pop %v2435
    %v2437 = vadd.f32 %v2436, 1.0
    %v2438 = vrcp.pop %v2437
    %v2439 = vmul.f32 1.0, %v2438
    %v2440 = vxor.u32 %v2431, 2147483648
    %v2441 = vmul.f32 %v2440, 1.442695
    %v2442 = vpow.pop %v2441
    %v2443 = vadd.f32 %v2442, 1.0
    %v2444 = vrcp.pop %v2443
    %v2445 = vmul.f32 1.0, %v2444
    %v2446 = vtanh.pop %v2432
    %v2447 = vxor.u32 %v2433, 2147483648
    %v2448 = vmul.f32 %v2447, 1.442695
    %v2449 = vpow.pop %v2448
    %v2450 = vadd.f32 %v2449, 1.0
    %v2451 = vrcp.pop %v2450
    %v2452 = vmul.f32 1.0, %v2451
    %v2453 = vmul.f32 %v2445, %v2280
    %v2454 = vmul.f32 %v2439, %v2446
    %v2455 = vadd.f32 %v2453, %v2454
    %v2456 = vtanh.pop %v2455
    %v2457 = vmul.f32 %v2452, %v2456
    %2458 = vst [vmem:[#allocation5 + $0x8] sm:$0xff] %v2457
    %v2459 = vld [vmem:[#allocation2 + $0x140] sm:$0xff]
    %v2460 = vld [vmem:[#allocation2 + $0x148] sm:$0xff]
    %v2461 = vld [vmem:[#allocation2 + $0x150] sm:$0xff]
    %v2462 = vld [vmem:[#allocation2 + $0x158] sm:$0xff]
    %2463 = vmatprep.subr.mxu0 %v654
    %2464 = vmatpush1.msra.mxu0 %v653
    %2465 = vmatprep.subr.mxu0 %v658
    %2466 = vmatpush1.msra.mxu0 %v657
    %2467 = vmatprep.subr.mxu0 %v662
    %2468 = vmatpush1.msra.mxu0 %v661
    %2469 = vmatprep.subr.mxu0 %v666
    %2470 = vmatpush1.msra.mxu0 %v665
    %2471 = vmatprep.subr.mxu0 %v670
    %2472 = vmatpush1.msra.mxu0 %v669
    %2473 = vmatprep.subr.mxu0 %v674
    %2474 = vmatpush1.msra.mxu0 %v673
    %2475 = vmatprep.subr.mxu0 %v678
    %2476 = vmatpush1.msra.mxu0 %v677
    %2477 = vmatprep.subr.mxu0 %v682
    %2478 = vmatpush1.msra.mxu0 %v681
    %2479 = vmatprep.subr.mxu0 %v686
    %2480 = vmatpush1.msra.mxu0 %v685
    %2481 = vmatprep.subr.mxu0 %v690
    %2482 = vmatpush1.msra.mxu0 %v689
    %2483 = vmatprep.subr.mxu0 %v694
    %2484 = vmatpush1.msra.mxu0 %v693
    %2485 = vmatprep.subr.mxu0 %v698
    %2486 = vmatpush1.msra.mxu0 %v697
    %2487 = vmatprep.subr.mxu0 %v702
    %2488 = vmatpush1.msra.mxu0 %v701
    %2489 = vmatprep.subr.mxu0 %v706
    %2490 = vmatpush1.msra.mxu0 %v705
    %2491 = vmatprep.subr.mxu0 %v710
    %2492 = vmatpush1.msra.mxu0 %v709
    %2493 = vmatprep.subr.mxu0 %v714
    %2494 = vmatpush1.msra.mxu0 %v713
    %2495 = vmatprep.subr.mxu0 0.0
    %2496 = vmatpush1.msra.mxu0 0.0
    %2497 = vmatprep.subr.mxu0 0.0
    %2498 = vmatpush1.msra.mxu0 0.0
    %2499 = vmatprep.subr.mxu0 0.0
    %2500 = vmatpush1.msra.mxu0 0.0
    %2501 = vmatprep.subr.mxu0 0.0
    %2502 = vmatpush1.msra.mxu0 0.0
    %2503 = vmatprep.subr.mxu0 0.0
    %2504 = vmatpush1.msra.mxu0 0.0
    %2505 = vmatprep.subr.mxu0 0.0
    %2506 = vmatpush1.msra.mxu0 0.0
    %2507 = vmatprep.subr.mxu0 0.0
    %2508 = vmatpush1.msra.mxu0 0.0
    %2509 = vmatprep.subr.mxu0 0.0
    %2510 = vmatpush1.msra.mxu0 0.0
    %2511 = vmatprep.subr.mxu0 0.0
    %2512 = vmatpush1.msra.mxu0 0.0
    %2513 = vmatprep.subr.mxu0 0.0
    %2514 = vmatpush1.msra.mxu0 0.0
    %2515 = vmatprep.subr.mxu0 0.0
    %2516 = vmatpush1.msra.mxu0 0.0
    %2517 = vmatprep.subr.mxu0 0.0
    %2518 = vmatpush1.msra.mxu0 0.0
    %2519 = vmatprep.subr.mxu0 0.0
    %2520 = vmatpush1.msra.mxu0 0.0
    %2521 = vmatprep.subr.mxu0 0.0
    %2522 = vmatpush1.msra.mxu0 0.0
    %2523 = vmatprep.subr.mxu0 0.0
    %2524 = vmatpush1.msra.mxu0 0.0
    %2525 = vmatprep.subr.mxu0 0.0
    %2526 = vmatpush1.msra.mxu0 0.0
    %2527 = vmatprep.mubr.f32.mxu0 0.0
    %2528 = vmatmul.mubr.f32.gmra.mrb[0].mxu0 %v2457
    %v2529 = vpop.f32.mrb[0].mxu0
    %v2530 = vadd.f32 0.0, %v2529
    %v2531 = vpop.f32.mrb[0].mxu0
    %v2532 = vadd.f32 0.0, %v2531
    %2533 = vdwg.mxu0
    %2534 = vmatprep.subr.mxu0 %v656
    %2535 = vmatpush1.msra.mxu0 %v655
    %2536 = vmatprep.subr.mxu0 %v660
    %2537 = vmatpush1.msra.mxu0 %v659
    %2538 = vmatprep.subr.mxu0 %v664
    %2539 = vmatpush1.msra.mxu0 %v663
    %2540 = vmatprep.subr.mxu0 %v668
    %2541 = vmatpush1.msra.mxu0 %v667
    %2542 = vmatprep.subr.mxu0 %v672
    %2543 = vmatpush1.msra.mxu0 %v671
    %2544 = vmatprep.subr.mxu0 %v676
    %2545 = vmatpush1.msra.mxu0 %v675
    %2546 = vmatprep.subr.mxu0 %v680
    %2547 = vmatpush1.msra.mxu0 %v679
    %2548 = vmatprep.subr.mxu0 %v684
    %2549 = vmatpush1.msra.mxu0 %v683
    %2550 = vmatprep.subr.mxu0 %v688
    %2551 = vmatpush1.msra.mxu0 %v687
    %2552 = vmatprep.subr.mxu0 %v692
    %2553 = vmatpush1.msra.mxu0 %v691
    %2554 = vmatprep.subr.mxu0 %v696
    %2555 = vmatpush1.msra.mxu0 %v695
    %2556 = vmatprep.subr.mxu0 %v700
    %2557 = vmatpush1.msra.mxu0 %v699
    %2558 = vmatprep.subr.mxu0 %v704
    %2559 = vmatpush1.msra.mxu0 %v703
    %2560 = vmatprep.subr.mxu0 %v708
    %2561 = vmatpush1.msra.mxu0 %v707
    %2562 = vmatprep.subr.mxu0 %v712
    %2563 = vmatpush1.msra.mxu0 %v711
    %2564 = vmatprep.subr.mxu0 %v716
    %2565 = vmatpush1.msra.mxu0 %v715
    %2566 = vmatprep.subr.mxu0 0.0
    %2567 = vmatpush1.msra.mxu0 0.0
    %2568 = vmatprep.subr.mxu0 0.0
    %2569 = vmatpush1.msra.mxu0 0.0
    %2570 = vmatprep.subr.mxu0 0.0
    %2571 = vmatpush1.msra.mxu0 0.0
    %2572 = vmatprep.subr.mxu0 0.0
    %2573 = vmatpush1.msra.mxu0 0.0
    %2574 = vmatprep.subr.mxu0 0.0
    %2575 = vmatpush1.msra.mxu0 0.0
    %2576 = vmatprep.subr.mxu0 0.0
    %2577 = vmatpush1.msra.mxu0 0.0
    %2578 = vmatprep.subr.mxu0 0.0
    %2579 = vmatpush1.msra.mxu0 0.0
    %2580 = vmatprep.subr.mxu0 0.0
    %2581 = vmatpush1.msra.mxu0 0.0
    %2582 = vmatprep.subr.mxu0 0.0
    %2583 = vmatpush1.msra.mxu0 0.0
    %2584 = vmatprep.subr.mxu0 0.0
    %2585 = vmatpush1.msra.mxu0 0.0
    %2586 = vmatprep.subr.mxu0 0.0
    %2587 = vmatpush1.msra.mxu0 0.0
    %2588 = vmatprep.subr.mxu0 0.0
    %2589 = vmatpush1.msra.mxu0 0.0
    %2590 = vmatprep.subr.mxu0 0.0
    %2591 = vmatpush1.msra.mxu0 0.0
    %2592 = vmatprep.subr.mxu0 0.0
    %2593 = vmatpush1.msra.mxu0 0.0
    %2594 = vmatprep.subr.mxu0 0.0
    %2595 = vmatpush1.msra.mxu0 0.0
    %2596 = vmatprep.subr.mxu0 0.0
    %2597 = vmatpush1.msra.mxu0 0.0
    %2598 = vmatprep.mubr.f32.mxu0 0.0
    %2599 = vmatmul.mubr.f32.gmra.mrb[0].mxu0 %v2457
    %v2600 = vpop.f32.mrb[0].mxu0
    %v2601 = vadd.f32 0.0, %v2600
    %v2602 = vpop.f32.mrb[0].mxu0
    %v2603 = vadd.f32 0.0, %v2602
    %2604 = vdwg.mxu0
    %v2605 = vadd.f32 %v2459, %v2530
    %v2606 = vadd.f32 %v2460, %v2532
    %v2607 = vadd.f32 %v2461, %v2601
    %v2608 = vadd.f32 %v2462, %v2603
    %v2609 = vxor.u32 %v2605, 2147483648
    %v2610 = vmul.f32 %v2609, 1.442695
    %v2611 = vpow.pop %v2610
    %v2612 = vadd.f32 %v2611, 1.0
    %v2613 = vrcp.pop %v2612
    %v2614 = vmul.f32 1.0, %v2613
    %v2615 = vxor.u32 %v2606, 2147483648
    %v2616 = vmul.f32 %v2615, 1.442695
    %v2617 = vpow.pop %v2616
    %v2618 = vadd.f32 %v2617, 1.0
    %v2619 = vrcp.pop %v2618
    %v2620 = vmul.f32 1.0, %v2619
    %v2621 = vtanh.pop %v2607
    %v2622 = vxor.u32 %v2608, 2147483648
    %v2623 = vmul.f32 %v2622, 1.442695
    %v2624 = vpow.pop %v2623
    %v2625 = vadd.f32 %v2624, 1.0
    %v2626 = vrcp.pop %v2625
    %v2627 = vmul.f32 1.0, %v2626
    %v2628 = vmul.f32 %v2620, %v2455
    %v2629 = vmul.f32 %v2614, %v2621
    %v2630 = vadd.f32 %v2628, %v2629
    %v2631 = vtanh.pop %v2630
    %v2632 = vmul.f32 %v2627, %v2631
    %2633 = vst [vmem:[#allocation5 + $0x10] sm:$0xff] %v2632
    %v2634 = vld [vmem:[#allocation2 + $0x160] sm:$0xff]
    %v2635 = vld [vmem:[#allocation2 + $0x168] sm:$0xff]
    %v2636 = vld [vmem:[#allocation2 + $0x170] sm:$0xff]
    %v2637 = vld [vmem:[#allocation2 + $0x178] sm:$0xff]
    %2638 = vmatprep.subr.mxu0 %v654
    %2639 = vmatpush1.msra.mxu0 %v653
    %2640 = vmatprep.subr.mxu0 %v658
    %2641 = vmatpush1.msra.mxu0 %v657
    %2642 = vmatprep.subr.mxu0 %v662
    %2643 = vmatpush1.msra.mxu0 %v661
    %2644 = vmatprep.subr.mxu0 %v666
    %2645 = vmatpush1.msra.mxu0 %v665
    %2646 = vmatprep.subr.mxu0 %v670
    %2647 = vmatpush1.msra.mxu0 %v669
    %2648 = vmatprep.subr.mxu0 %v674
    %2649 = vmatpush1.msra.mxu0 %v673
    %2650 = vmatprep.subr.mxu0 %v678
    %2651 = vmatpush1.msra.mxu0 %v677
    %2652 = vmatprep.subr.mxu0 %v682
    %2653 = vmatpush1.msra.mxu0 %v681
    %2654 = vmatprep.subr.mxu0 %v686
    %2655 = vmatpush1.msra.mxu0 %v685
    %2656 = vmatprep.subr.mxu0 %v690
    %2657 = vmatpush1.msra.mxu0 %v689
    %2658 = vmatprep.subr.mxu0 %v694
    %2659 = vmatpush1.msra.mxu0 %v693
    %2660 = vmatprep.subr.mxu0 %v698
    %2661 = vmatpush1.msra.mxu0 %v697
    %2662 = vmatprep.subr.mxu0 %v702
    %2663 = vmatpush1.msra.mxu0 %v701
    %2664 = vmatprep.subr.mxu0 %v706
    %2665 = vmatpush1.msra.mxu0 %v705
    %2666 = vmatprep.subr.mxu0 %v710
    %2667 = vmatpush1.msra.mxu0 %v709
    %2668 = vmatprep.subr.mxu0 %v714
    %2669 = vmatpush1.msra.mxu0 %v713
    %2670 = vmatprep.subr.mxu0 0.0
    %2671 = vmatpush1.msra.mxu0 0.0
    %2672 = vmatprep.subr.mxu0 0.0
    %2673 = vmatpush1.msra.mxu0 0.0
    %2674 = vmatprep.subr.mxu0 0.0
    %2675 = vmatpush1.msra.mxu0 0.0
    %2676 = vmatprep.subr.mxu0 0.0
    %2677 = vmatpush1.msra.mxu0 0.0
    %2678 = vmatprep.subr.mxu0 0.0
    %2679 = vmatpush1.msra.mxu0 0.0
    %2680 = vmatprep.subr.mxu0 0.0
    %2681 = vmatpush1.msra.mxu0 0.0
    %2682 = vmatprep.subr.mxu0 0.0
    %2683 = vmatpush1.msra.mxu0 0.0
    %2684 = vmatprep.subr.mxu0 0.0
    %2685 = vmatpush1.msra.mxu0 0.0
    %2686 = vmatprep.subr.mxu0 0.0
    %2687 = vmatpush1.msra.mxu0 0.0
    %2688 = vmatprep.subr.mxu0 0.0
    %2689 = vmatpush1.msra.mxu0 0.0
    %2690 = vmatprep.subr.mxu0 0.0
    %2691 = vmatpush1.msra.mxu0 0.0
    %2692 = vmatprep.subr.mxu0 0.0
    %2693 = vmatpush1.msra.mxu0 0.0
    %2694 = vmatprep.subr.mxu0 0.0
    %2695 = vmatpush1.msra.mxu0 0.0
    %2696 = vmatprep.subr.mxu0 0.0
    %2697 = vmatpush1.msra.mxu0 0.0
    %2698 = vmatprep.subr.mxu0 0.0
    %2699 = vmatpush1.msra.mxu0 0.0
    %2700 = vmatprep.subr.mxu0 0.0
    %2701 = vmatpush1.msra.mxu0 0.0
    %2702 = vmatprep.mubr.f32.mxu0 0.0
    %2703 = vmatmul.mubr.f32.gmra.mrb[0].mxu0 %v2632
    %v2704 = vpop.f32.mrb[0].mxu0
    %v2705 = vadd.f32 0.0, %v2704
    %v2706 = vpop.f32.mrb[0].mxu0
    %v2707 = vadd.f32 0.0, %v2706
    %2708 = vdwg.mxu0
    %2709 = vmatprep.subr.mxu0 %v656
    %2710 = vmatpush1.msra.mxu0 %v655
    %2711 = vmatprep.subr.mxu0 %v660
    %2712 = vmatpush1.msra.mxu0 %v659
    %2713 = vmatprep.subr.mxu0 %v664
    %2714 = vmatpush1.msra.mxu0 %v663
    %2715 = vmatprep.subr.mxu0 %v668
    %2716 = vmatpush1.msra.mxu0 %v667
    %2717 = vmatprep.subr.mxu0 %v672
    %2718 = vmatpush1.msra.mxu0 %v671
    %2719 = vmatprep.subr.mxu0 %v676
    %2720 = vmatpush1.msra.mxu0 %v675
    %2721 = vmatprep.subr.mxu0 %v680
    %2722 = vmatpush1.msra.mxu0 %v679
    %2723 = vmatprep.subr.mxu0 %v684
    %2724 = vmatpush1.msra.mxu0 %v683
    %2725 = vmatprep.subr.mxu0 %v688
    %2726 = vmatpush1.msra.mxu0 %v687
    %2727 = vmatprep.subr.mxu0 %v692
    %2728 = vmatpush1.msra.mxu0 %v691
    %2729 = vmatprep.subr.mxu0 %v696
    %2730 = vmatpush1.msra.mxu0 %v695
    %2731 = vmatprep.subr.mxu0 %v700
    %2732 = vmatpush1.msra.mxu0 %v699
    %2733 = vmatprep.subr.mxu0 %v704
    %2734 = vmatpush1.msra.mxu0 %v703
    %2735 = vmatprep.subr.mxu0 %v708
    %2736 = vmatpush1.msra.mxu0 %v707
    %2737 = vmatprep.subr.mxu0 %v712
    %2738 = vmatpush1.msra.mxu0 %v711
    %2739 = vmatprep.subr.mxu0 %v716
    %2740 = vmatpush1.msra.mxu0 %v715
    %2741 = vmatprep.subr.mxu0 0.0
    %2742 = vmatpush1.msra.mxu0 0.0
    %2743 = vmatprep.subr.mxu0 0.0
    %2744 = vmatpush1.msra.mxu0 0.0
    %2745 = vmatprep.subr.mxu0 0.0
    %2746 = vmatpush1.msra.mxu0 0.0
    %2747 = vmatprep.subr.mxu0 0.0
    %2748 = vmatpush1.msra.mxu0 0.0
    %2749 = vmatprep.subr.mxu0 0.0
    %2750 = vmatpush1.msra.mxu0 0.0
    %2751 = vmatprep.subr.mxu0 0.0
    %2752 = vmatpush1.msra.mxu0 0.0
    %2753 = vmatprep.subr.mxu0 0.0
    %2754 = vmatpush1.msra.mxu0 0.0
    %2755 = vmatprep.subr.mxu0 0.0
    %2756 = vmatpush1.msra.mxu0 0.0
    %2757 = vmatprep.subr.mxu0 0.0
    %2758 = vmatpush1.msra.mxu0 0.0
    %2759 = vmatprep.subr.mxu0 0.0
    %2760 = vmatpush1.msra.mxu0 0.0
    %2761 = vmatprep.subr.mxu0 0.0
    %2762 = vmatpush1.msra.mxu0 0.0
    %2763 = vmatprep.subr.mxu0 0.0
    %2764 = vmatpush1.msra.mxu0 0.0
    %2765 = vmatprep.subr.mxu0 0.0
    %2766 = vmatpush1.msra.mxu0 0.0
    %2767 = vmatprep.subr.mxu0 0.0
    %2768 = vmatpush1.msra.mxu0 0.0
    %2769 = vmatprep.subr.mxu0 0.0
    %2770 = vmatpush1.msra.mxu0 0.0
    %2771 = vmatprep.subr.mxu0 0.0
    %2772 = vmatpush1.msra.mxu0 0.0
    %2773 = vmatprep.mubr.f32.mxu0 0.0
    %2774 = vmatmul.mubr.f32.gmra.mrb[0].mxu0 %v2632
    %v2775 = vpop.f32.mrb[0].mxu0
    %v2776 = vadd.f32 0.0, %v2775
    %v2777 = vpop.f32.mrb[0].mxu0
    %v2778 = vadd.f32 0.0, %v2777
    %2779 = vdwg.mxu0
    %v2780 = vadd.f32 %v2634, %v2705
    %v2781 = vadd.f32 %v2635, %v2707
    %v2782 = vadd.f32 %v2636, %v2776
    %v2783 = vadd.f32 %v2637, %v2778
    %v2784 = vxor.u32 %v2780, 2147483648
    %v2785 = vmul.f32 %v2784, 1.442695
    %v2786 = vpow.pop %v2785
    %v2787 = vadd.f32 %v2786, 1.0
    %v2788 = vrcp.pop %v2787
    %v2789 = vmul.f32 1.0, %v2788
    %v2790 = vxor.u32 %v2781, 2147483648
    %v2791 = vmul.f32 %v2790, 1.442695
    %v2792 = vpow.pop %v2791
    %v2793 = vadd.f32 %v2792, 1.0
    %v2794 = vrcp.pop %v2793
    %v2795 = vmul.f32 1.0, %v2794
    %v2796 = vtanh.pop %v2782
    %v2797 = vxor.u32 %v2783, 2147483648
    %v2798 = vmul.f32 %v2797, 1.442695
    %v2799 = vpow.pop %v2798
    %v2800 = vadd.f32 %v2799, 1.0
    %v2801 = vrcp.pop %v2800
    %v2802 = vmul.f32 1.0, %v2801
    %v2803 = vmul.f32 %v2795, %v2630
    %v2804 = vmul.f32 %v2789, %v2796
    %v2805 = vadd.f32 %v2803, %v2804
    %v2806 = vtanh.pop %v2805
    %v2807 = vmul.f32 %v2802, %v2806
    %2808 = vst [vmem:[#allocation5 + $0x18] sm:$0xff] %v2807
    %v2809 = vld [vmem:[#allocation2 + $0x180] sm:$0xff]
    %v2810 = vld [vmem:[#allocation2 + $0x188] sm:$0xff]
    %v2811 = vld [vmem:[#allocation2 + $0x190] sm:$0xff]
    %v2812 = vld [vmem:[#allocation2 + $0x198] sm:$0xff]
    %2813 = vmatprep.subr.mxu0 %v654
    %2814 = vmatpush1.msra.mxu0 %v653
    %2815 = vmatprep.subr.mxu0 %v658
    %2816 = vmatpush1.msra.mxu0 %v657
    %2817 = vmatprep.subr.mxu0 %v662
    %2818 = vmatpush1.msra.mxu0 %v661
    %2819 = vmatprep.subr.mxu0 %v666
    %2820 = vmatpush1.msra.mxu0 %v665
    %2821 = vmatprep.subr.mxu0 %v670
    %2822 = vmatpush1.msra.mxu0 %v669
    %2823 = vmatprep.subr.mxu0 %v674
    %2824 = vmatpush1.msra.mxu0 %v673
    %2825 = vmatprep.subr.mxu0 %v678
    %2826 = vmatpush1.msra.mxu0 %v677
    %2827 = vmatprep.subr.mxu0 %v682
    %2828 = vmatpush1.msra.mxu0 %v681
    %2829 = vmatprep.subr.mxu0 %v686
    %2830 = vmatpush1.msra.mxu0 %v685
    %2831 = vmatprep.subr.mxu0 %v690
    %2832 = vmatpush1.msra.mxu0 %v689
    %2833 = vmatprep.subr.mxu0 %v694
    %2834 = vmatpush1.msra.mxu0 %v693
    %2835 = vmatprep.subr.mxu0 %v698
    %2836 = vmatpush1.msra.mxu0 %v697
    %2837 = vmatprep.subr.mxu0 %v702
    %2838 = vmatpush1.msra.mxu0 %v701
    %2839 = vmatprep.subr.mxu0 %v706
    %2840 = vmatpush1.msra.mxu0 %v705
    %2841 = vmatprep.subr.mxu0 %v710
    %2842 = vmatpush1.msra.mxu0 %v709
    %2843 = vmatprep.subr.mxu0 %v714
    %2844 = vmatpush1.msra.mxu0 %v713
    %2845 = vmatprep.subr.mxu0 0.0
    %2846 = vmatpush1.msra.mxu0 0.0
    %2847 = vmatprep.subr.mxu0 0.0
    %2848 = vmatpush1.msra.mxu0 0.0
    %2849 = vmatprep.subr.mxu0 0.0
    %2850 = vmatpush1.msra.mxu0 0.0
    %2851 = vmatprep.subr.mxu0 0.0
    %2852 = vmatpush1.msra.mxu0 0.0
    %2853 = vmatprep.subr.mxu0 0.0
    %2854 = vmatpush1.msra.mxu0 0.0
    %2855 = vmatprep.subr.mxu0 0.0
    %2856 = vmatpush1.msra.mxu0 0.0
    %2857 = vmatprep.subr.mxu0 0.0
    %2858 = vmatpush1.msra.mxu0 0.0
    %2859 = vmatprep.subr.mxu0 0.0
    %2860 = vmatpush1.msra.mxu0 0.0
    %2861 = vmatprep.subr.mxu0 0.0
    %2862 = vmatpush1.msra.mxu0 0.0
    %2863 = vmatprep.subr.mxu0 0.0
    %2864 = vmatpush1.msra.mxu0 0.0
    %2865 = vmatprep.subr.mxu0 0.0
    %2866 = vmatpush1.msra.mxu0 0.0
    %2867 = vmatprep.subr.mxu0 0.0
    %2868 = vmatpush1.msra.mxu0 0.0
    %2869 = vmatprep.subr.mxu0 0.0
    %2870 = vmatpush1.msra.mxu0 0.0
    %2871 = vmatprep.subr.mxu0 0.0
    %2872 = vmatpush1.msra.mxu0 0.0
    %2873 = vmatprep.subr.mxu0 0.0
    %2874 = vmatpush1.msra.mxu0 0.0
    %2875 = vmatprep.subr.mxu0 0.0
    %2876 = vmatpush1.msra.mxu0 0.0
    %2877 = vmatprep.mubr.f32.mxu0 0.0
    %2878 = vmatmul.mubr.f32.gmra.mrb[0].mxu0 %v2807
    %v2879 = vpop.f32.mrb[0].mxu0
    %v2880 = vadd.f32 0.0, %v2879
    %v2881 = vpop.f32.mrb[0].mxu0
    %v2882 = vadd.f32 0.0, %v2881
    %2883 = vdwg.mxu0
    %2884 = vmatprep.subr.mxu0 %v656
    %2885 = vmatpush1.msra.mxu0 %v655
    %2886 = vmatprep.subr.mxu0 %v660
    %2887 = vmatpush1.msra.mxu0 %v659
    %2888 = vmatprep.subr.mxu0 %v664
    %2889 = vmatpush1.msra.mxu0 %v663
    %2890 = vmatprep.subr.mxu0 %v668
    %2891 = vmatpush1.msra.mxu0 %v667
    %2892 = vmatprep.subr.mxu0 %v672
    %2893 = vmatpush1.msra.mxu0 %v671
    %2894 = vmatprep.subr.mxu0 %v676
    %2895 = vmatpush1.msra.mxu0 %v675
    %2896 = vmatprep.subr.mxu0 %v680
    %2897 = vmatpush1.msra.mxu0 %v679
    %2898 = vmatprep.subr.mxu0 %v684
    %2899 = vmatpush1.msra.mxu0 %v683
    %2900 = vmatprep.subr.mxu0 %v688
    %2901 = vmatpush1.msra.mxu0 %v687
    %2902 = vmatprep.subr.mxu0 %v692
    %2903 = vmatpush1.msra.mxu0 %v691
    %2904 = vmatprep.subr.mxu0 %v696
    %2905 = vmatpush1.msra.mxu0 %v695
    %2906 = vmatprep.subr.mxu0 %v700
    %2907 = vmatpush1.msra.mxu0 %v699
    %2908 = vmatprep.subr.mxu0 %v704
    %2909 = vmatpush1.msra.mxu0 %v703
    %2910 = vmatprep.subr.mxu0 %v708
    %2911 = vmatpush1.msra.mxu0 %v707
    %2912 = vmatprep.subr.mxu0 %v712
    %2913 = vmatpush1.msra.mxu0 %v711
    %2914 = vmatprep.subr.mxu0 %v716
    %2915 = vmatpush1.msra.mxu0 %v715
    %2916 = vmatprep.subr.mxu0 0.0
    %2917 = vmatpush1.msra.mxu0 0.0
    %2918 = vmatprep.subr.mxu0 0.0
    %2919 = vmatpush1.msra.mxu0 0.0
    %2920 = vmatprep.subr.mxu0 0.0
    %2921 = vmatpush1.msra.mxu0 0.0
    %2922 = vmatprep.subr.mxu0 0.0
    %2923 = vmatpush1.msra.mxu0 0.0
    %2924 = vmatprep.subr.mxu0 0.0
    %2925 = vmatpush1.msra.mxu0 0.0
    %2926 = vmatprep.subr.mxu0 0.0
    %2927 = vmatpush1.msra.mxu0 0.0
    %2928 = vmatprep.subr.mxu0 0.0
    %2929 = vmatpush1.msra.mxu0 0.0
    %2930 = vmatprep.subr.mxu0 0.0
    %2931 = vmatpush1.msra.mxu0 0.0
    %2932 = vmatprep.subr.mxu0 0.0
    %2933 = vmatpush1.msra.mxu0 0.0
    %2934 = vmatprep.subr.mxu0 0.0
    %2935 = vmatpush1.msra.mxu0 0.0
    %2936 = vmatprep.subr.mxu0 0.0
    %2937 = vmatpush1.msra.mxu0 0.0
    %2938 = vmatprep.subr.mxu0 0.0
    %2939 = vmatpush1.msra.mxu0 0.0
    %2940 = vmatprep.subr.mxu0 0.0
    %2941 = vmatpush1.msra.mxu0 0.0
    %2942 = vmatprep.subr.mxu0 0.0
    %2943 = vmatpush1.msra.mxu0 0.0
    %2944 = vmatprep.subr.mxu0 0.0
    %2945 = vmatpush1.msra.mxu0 0.0
    %2946 = vmatprep.subr.mxu0 0.0
    %2947 = vmatpush1.msra.mxu0 0.0
    %2948 = vmatprep.mubr.f32.mxu0 0.0
    %2949 = vmatmul.mubr.f32.gmra.mrb[0].mxu0 %v2807
    %v2950 = vpop.f32.mrb[0].mxu0
    %v2951 = vadd.f32 0.0, %v2950
    %v2952 = vpop.f32.mrb[0].mxu0
    %v2953 = vadd.f32 0.0, %v2952
    %2954 = vdwg.mxu0
    %v2955 = vadd.f32 %v2809, %v2880
    %v2956 = vadd.f32 %v2810, %v2882
    %v2957 = vadd.f32 %v2811, %v2951
    %v2958 = vadd.f32 %v2812, %v2953
    %v2959 = vxor.u32 %v2955, 2147483648
    %v2960 = vmul.f32 %v2959, 1.442695
    %v2961 = vpow.pop %v2960
    %v2962 = vadd.f32 %v2961, 1.0
    %v2963 = vrcp.pop %v2962
    %v2964 = vmul.f32 1.0, %v2963
    %v2965 = vxor.u32 %v2956, 2147483648
    %v2966 = vmul.f32 %v2965, 1.442695
    %v2967 = vpow.pop %v2966
    %v2968 = vadd.f32 %v2967, 1.0
    %v2969 = vrcp.pop %v2968
    %v2970 = vmul.f32 1.0, %v2969
    %v2971 = vtanh.pop %v2957
    %v2972 = vxor.u32 %v2958, 2147483648
    %v2973 = vmul.f32 %v2972, 1.442695
    %v2974 = vpow.pop %v2973
    %v2975 = vadd.f32 %v2974, 1.0
    %v2976 = vrcp.pop %v2975
    %v2977 = vmul.f32 1.0, %v2976
    %v2978 = vmul.f32 %v2970, %v2805
    %v2979 = vmul.f32 %v2964, %v2971
    %v2980 = vadd.f32 %v2978, %v2979
    %v2981 = vtanh.pop %v2980
    %v2982 = vmul.f32 %v2977, %v2981
    %2983 = vst [vmem:[#allocation5 + $0x20] sm:$0xff] %v2982
    %v2984 = vld [vmem:[#allocation2 + $0x1a0] sm:$0xff]
    %v2985 = vld [vmem:[#allocation2 + $0x1a8] sm:$0xff]
    %v2986 = vld [vmem:[#allocation2 + $0x1b0] sm:$0xff]
    %v2987 = vld [vmem:[#allocation2 + $0x1b8] sm:$0xff]
    %2988 = vmatprep.subr.mxu0 %v654
    %2989 = vmatpush1.msra.mxu0 %v653
    %2990 = vmatprep.subr.mxu0 %v658
    %2991 = vmatpush1.msra.mxu0 %v657
    %2992 = vmatprep.subr.mxu0 %v662
    %2993 = vmatpush1.msra.mxu0 %v661
    %2994 = vmatprep.subr.mxu0 %v666
    %2995 = vmatpush1.msra.mxu0 %v665
    %2996 = vmatprep.subr.mxu0 %v670
    %2997 = vmatpush1.msra.mxu0 %v669
    %2998 = vmatprep.subr.mxu0 %v674
    %2999 = vmatpush1.msra.mxu0 %v673
    %3000 = vmatprep.subr.mxu0 %v678
    %3001 = vmatpush1.msra.mxu0 %v677
    %3002 = vmatprep.subr.mxu0 %v682
    %3003 = vmatpush1.msra.mxu0 %v681
    %3004 = vmatprep.subr.mxu0 %v686
    %3005 = vmatpush1.msra.mxu0 %v685
    %3006 = vmatprep.subr.mxu0 %v690
    %3007 = vmatpush1.msra.mxu0 %v689
    %3008 = vmatprep.subr.mxu0 %v694
    %3009 = vmatpush1.msra.mxu0 %v693
    %3010 = vmatprep.subr.mxu0 %v698
    %3011 = vmatpush1.msra.mxu0 %v697
    %3012 = vmatprep.subr.mxu0 %v702
    %3013 = vmatpush1.msra.mxu0 %v701
    %3014 = vmatprep.subr.mxu0 %v706
    %3015 = vmatpush1.msra.mxu0 %v705
    %3016 = vmatprep.subr.mxu0 %v710
    %3017 = vmatpush1.msra.mxu0 %v709
    %3018 = vmatprep.subr.mxu0 %v714
    %3019 = vmatpush1.msra.mxu0 %v713
    %3020 = vmatprep.subr.mxu0 0.0
    %3021 = vmatpush1.msra.mxu0 0.0
    %3022 = vmatprep.subr.mxu0 0.0
    %3023 = vmatpush1.msra.mxu0 0.0
    %3024 = vmatprep.subr.mxu0 0.0
    %3025 = vmatpush1.msra.mxu0 0.0
    %3026 = vmatprep.subr.mxu0 0.0
    %3027 = vmatpush1.msra.mxu0 0.0
    %3028 = vmatprep.subr.mxu0 0.0
    %3029 = vmatpush1.msra.mxu0 0.0
    %3030 = vmatprep.subr.mxu0 0.0
    %3031 = vmatpush1.msra.mxu0 0.0
    %3032 = vmatprep.subr.mxu0 0.0
    %3033 = vmatpush1.msra.mxu0 0.0
    %3034 = vmatprep.subr.mxu0 0.0
    %3035 = vmatpush1.msra.mxu0 0.0
    %3036 = vmatprep.subr.mxu0 0.0
    %3037 = vmatpush1.msra.mxu0 0.0
    %3038 = vmatprep.subr.mxu0 0.0
    %3039 = vmatpush1.msra.mxu0 0.0
    %3040 = vmatprep.subr.mxu0 0.0
    %3041 = vmatpush1.msra.mxu0 0.0
    %3042 = vmatprep.subr.mxu0 0.0
    %3043 = vmatpush1.msra.mxu0 0.0
    %3044 = vmatprep.subr.mxu0 0.0
    %3045 = vmatpush1.msra.mxu0 0.0
    %3046 = vmatprep.subr.mxu0 0.0
    %3047 = vmatpush1.msra.mxu0 0.0
    %3048 = vmatprep.subr.mxu0 0.0
    %3049 = vmatpush1.msra.mxu0 0.0
    %3050 = vmatprep.subr.mxu0 0.0
    %3051 = vmatpush1.msra.mxu0 0.0
    %3052 = vmatprep.mubr.f32.mxu0 0.0
    %3053 = vmatmul.mubr.f32.gmra.mrb[0].mxu0 %v2982
    %v3054 = vpop.f32.mrb[0].mxu0
    %v3055 = vadd.f32 0.0, %v3054
    %v3056 = vpop.f32.mrb[0].mxu0
    %v3057 = vadd.f32 0.0, %v3056
    %3058 = vdwg.mxu0
    %3059 = vmatprep.subr.mxu0 %v656
    %3060 = vmatpush1.msra.mxu0 %v655
    %3061 = vmatprep.subr.mxu0 %v660
    %3062 = vmatpush1.msra.mxu0 %v659
    %3063 = vmatprep.subr.mxu0 %v664
    %3064 = vmatpush1.msra.mxu0 %v663
    %3065 = vmatprep.subr.mxu0 %v668
    %3066 = vmatpush1.msra.mxu0 %v667
    %3067 = vmatprep.subr.mxu0 %v672
    %3068 = vmatpush1.msra.mxu0 %v671
    %3069 = vmatprep.subr.mxu0 %v676
    %3070 = vmatpush1.msra.mxu0 %v675
    %3071 = vmatprep.subr.mxu0 %v680
    %3072 = vmatpush1.msra.mxu0 %v679
    %3073 = vmatprep.subr.mxu0 %v684
    %3074 = vmatpush1.msra.mxu0 %v683
    %3075 = vmatprep.subr.mxu0 %v688
    %3076 = vmatpush1.msra.mxu0 %v687
    %3077 = vmatprep.subr.mxu0 %v692
    %3078 = vmatpush1.msra.mxu0 %v691
    %3079 = vmatprep.subr.mxu0 %v696
    %3080 = vmatpush1.msra.mxu0 %v695
    %3081 = vmatprep.subr.mxu0 %v700
    %3082 = vmatpush1.msra.mxu0 %v699
    %3083 = vmatprep.subr.mxu0 %v704
    %3084 = vmatpush1.msra.mxu0 %v703
    %3085 = vmatprep.subr.mxu0 %v708
    %3086 = vmatpush1.msra.mxu0 %v707
    %3087 = vmatprep.subr.mxu0 %v712
    %3088 = vmatpush1.msra.mxu0 %v711
    %3089 = vmatprep.subr.mxu0 %v716
    %3090 = vmatpush1.msra.mxu0 %v715
    %3091 = vmatprep.subr.mxu0 0.0
    %3092 = vmatpush1.msra.mxu0 0.0
    %3093 = vmatprep.subr.mxu0 0.0
    %3094 = vmatpush1.msra.mxu0 0.0
    %3095 = vmatprep.subr.mxu0 0.0
    %3096 = vmatpush1.msra.mxu0 0.0
    %3097 = vmatprep.subr.mxu0 0.0
    %3098 = vmatpush1.msra.mxu0 0.0
    %3099 = vmatprep.subr.mxu0 0.0
    %3100 = vmatpush1.msra.mxu0 0.0
    %3101 = vmatprep.subr.mxu0 0.0
    %3102 = vmatpush1.msra.mxu0 0.0
    %3103 = vmatprep.subr.mxu0 0.0
    %3104 = vmatpush1.msra.mxu0 0.0
    %3105 = vmatprep.subr.mxu0 0.0
    %3106 = vmatpush1.msra.mxu0 0.0
    %3107 = vmatprep.subr.mxu0 0.0
    %3108 = vmatpush1.msra.mxu0 0.0
    %3109 = vmatprep.subr.mxu0 0.0
    %3110 = vmatpush1.msra.mxu0 0.0
    %3111 = vmatprep.subr.mxu0 0.0
    %3112 = vmatpush1.msra.mxu0 0.0
    %3113 = vmatprep.subr.mxu0 0.0
    %3114 = vmatpush1.msra.mxu0 0.0
    %3115 = vmatprep.subr.mxu0 0.0
    %3116 = vmatpush1.msra.mxu0 0.0
    %3117 = vmatprep.subr.mxu0 0.0
    %3118 = vmatpush1.msra.mxu0 0.0
    %3119 = vmatprep.subr.mxu0 0.0
    %3120 = vmatpush1.msra.mxu0 0.0
    %3121 = vmatprep.subr.mxu0 0.0
    %3122 = vmatpush1.msra.mxu0 0.0
    %3123 = vmatprep.mubr.f32.mxu0 0.0
    %3124 = vmatmul.mubr.f32.gmra.mrb[0].mxu0 %v2982
    %v3125 = vpop.f32.mrb[0].mxu0
    %v3126 = vadd.f32 0.0, %v3125
    %v3127 = vpop.f32.mrb[0].mxu0
    %v3128 = vadd.f32 0.0, %v3127
    %3129 = vdwg.mxu0
    %v3130 = vadd.f32 %v2984, %v3055
    %v3131 = vadd.f32 %v2985, %v3057
    %v3132 = vadd.f32 %v2986, %v3126
    %v3133 = vadd.f32 %v2987, %v3128
    %v3134 = vxor.u32 %v3130, 2147483648
    %v3135 = vmul.f32 %v3134, 1.442695
    %v3136 = vpow.pop %v3135
    %v3137 = vadd.f32 %v3136, 1.0
    %v3138 = vrcp.pop %v3137
    %v3139 = vmul.f32 1.0, %v3138
    %v3140 = vxor.u32 %v3131, 2147483648
    %v3141 = vmul.f32 %v3140, 1.442695
    %v3142 = vpow.pop %v3141
    %v3143 = vadd.f32 %v3142, 1.0
    %v3144 = vrcp.pop %v3143
    %v3145 = vmul.f32 1.0, %v3144
    %v3146 = vtanh.pop %v3132
    %v3147 = vxor.u32 %v3133, 2147483648
    %v3148 = vmul.f32 %v3147, 1.442695
    %v3149 = vpow.pop %v3148
    %v3150 = vadd.f32 %v3149, 1.0
    %v3151 = vrcp.pop %v3150
    %v3152 = vmul.f32 1.0, %v3151
    %v3153 = vmul.f32 %v3145, %v2980
    %v3154 = vmul.f32 %v3139, %v3146
    %v3155 = vadd.f32 %v3153, %v3154
    %v3156 = vtanh.pop %v3155
    %v3157 = vmul.f32 %v3152, %v3156
    %3158 = vst [vmem:[#allocation5 + $0x28] sm:$0xff] %v3157
    %v3159 = vld [vmem:[#allocation2 + $0x1c0] sm:$0xff]
    %v3160 = vld [vmem:[#allocation2 + $0x1c8] sm:$0xff]
    %v3161 = vld [vmem:[#allocation2 + $0x1d0] sm:$0xff]
    %v3162 = vld [vmem:[#allocation2 + $0x1d8] sm:$0xff]
    %3163 = vmatprep.subr.mxu0 %v654
    %3164 = vmatpush1.msra.mxu0 %v653
    %3165 = vmatprep.subr.mxu0 %v658
    %3166 = vmatpush1.msra.mxu0 %v657
    %3167 = vmatprep.subr.mxu0 %v662
    %3168 = vmatpush1.msra.mxu0 %v661
    %3169 = vmatprep.subr.mxu0 %v666
    %3170 = vmatpush1.msra.mxu0 %v665
    %3171 = vmatprep.subr.mxu0 %v670
    %3172 = vmatpush1.msra.mxu0 %v669
    %3173 = vmatprep.subr.mxu0 %v674
    %3174 = vmatpush1.msra.mxu0 %v673
    %3175 = vmatprep.subr.mxu0 %v678
    %3176 = vmatpush1.msra.mxu0 %v677
    %3177 = vmatprep.subr.mxu0 %v682
    %3178 = vmatpush1.msra.mxu0 %v681
    %3179 = vmatprep.subr.mxu0 %v686
    %3180 = vmatpush1.msra.mxu0 %v685
    %3181 = vmatprep.subr.mxu0 %v690
    %3182 = vmatpush1.msra.mxu0 %v689
    %3183 = vmatprep.subr.mxu0 %v694
    %3184 = vmatpush1.msra.mxu0 %v693
    %3185 = vmatprep.subr.mxu0 %v698
    %3186 = vmatpush1.msra.mxu0 %v697
    %3187 = vmatprep.subr.mxu0 %v702
    %3188 = vmatpush1.msra.mxu0 %v701
    %3189 = vmatprep.subr.mxu0 %v706
    %3190 = vmatpush1.msra.mxu0 %v705
    %3191 = vmatprep.subr.mxu0 %v710
    %3192 = vmatpush1.msra.mxu0 %v709
    %3193 = vmatprep.subr.mxu0 %v714
    %3194 = vmatpush1.msra.mxu0 %v713
    %3195 = vmatprep.subr.mxu0 0.0
    %3196 = vmatpush1.msra.mxu0 0.0
    %3197 = vmatprep.subr.mxu0 0.0
    %3198 = vmatpush1.msra.mxu0 0.0
    %3199 = vmatprep.subr.mxu0 0.0
    %3200 = vmatpush1.msra.mxu0 0.0
    %3201 = vmatprep.subr.mxu0 0.0
    %3202 = vmatpush1.msra.mxu0 0.0
    %3203 = vmatprep.subr.mxu0 0.0
    %3204 = vmatpush1.msra.mxu0 0.0
    %3205 = vmatprep.subr.mxu0 0.0
    %3206 = vmatpush1.msra.mxu0 0.0
    %3207 = vmatprep.subr.mxu0 0.0
    %3208 = vmatpush1.msra.mxu0 0.0
    %3209 = vmatprep.subr.mxu0 0.0
    %3210 = vmatpush1.msra.mxu0 0.0
    %3211 = vmatprep.subr.mxu0 0.0
    %3212 = vmatpush1.msra.mxu0 0.0
    %3213 = vmatprep.subr.mxu0 0.0
    %3214 = vmatpush1.msra.mxu0 0.0
    %3215 = vmatprep.subr.mxu0 0.0
    %3216 = vmatpush1.msra.mxu0 0.0
    %3217 = vmatprep.subr.mxu0 0.0
    %3218 = vmatpush1.msra.mxu0 0.0
    %3219 = vmatprep.subr.mxu0 0.0
    %3220 = vmatpush1.msra.mxu0 0.0
    %3221 = vmatprep.subr.mxu0 0.0
    %3222 = vmatpush1.msra.mxu0 0.0
    %3223 = vmatprep.subr.mxu0 0.0
    %3224 = vmatpush1.msra.mxu0 0.0
    %3225 = vmatprep.subr.mxu0 0.0
    %3226 = vmatpush1.msra.mxu0 0.0
    %3227 = vmatprep.mubr.f32.mxu0 0.0
    %3228 = vmatmul.mubr.f32.gmra.mrb[0].mxu0 %v3157
    %v3229 = vpop.f32.mrb[0].mxu0
    %v3230 = vadd.f32 0.0, %v3229
    %v3231 = vpop.f32.mrb[0].mxu0
    %v3232 = vadd.f32 0.0, %v3231
    %3233 = vdwg.mxu0
    %3234 = vmatprep.subr.mxu0 %v656
    %3235 = vmatpush1.msra.mxu0 %v655
    %3236 = vmatprep.subr.mxu0 %v660
    %3237 = vmatpush1.msra.mxu0 %v659
    %3238 = vmatprep.subr.mxu0 %v664
    %3239 = vmatpush1.msra.mxu0 %v663
    %3240 = vmatprep.subr.mxu0 %v668
    %3241 = vmatpush1.msra.mxu0 %v667
    %3242 = vmatprep.subr.mxu0 %v672
    %3243 = vmatpush1.msra.mxu0 %v671
    %3244 = vmatprep.subr.mxu0 %v676
    %3245 = vmatpush1.msra.mxu0 %v675
    %3246 = vmatprep.subr.mxu0 %v680
    %3247 = vmatpush1.msra.mxu0 %v679
    %3248 = vmatprep.subr.mxu0 %v684
    %3249 = vmatpush1.msra.mxu0 %v683
    %3250 = vmatprep.subr.mxu0 %v688
    %3251 = vmatpush1.msra.mxu0 %v687
    %3252 = vmatprep.subr.mxu0 %v692
    %3253 = vmatpush1.msra.mxu0 %v691
    %3254 = vmatprep.subr.mxu0 %v696
    %3255 = vmatpush1.msra.mxu0 %v695
    %3256 = vmatprep.subr.mxu0 %v700
    %3257 = vmatpush1.msra.mxu0 %v699
    %3258 = vmatprep.subr.mxu0 %v704
    %3259 = vmatpush1.msra.mxu0 %v703
    %3260 = vmatprep.subr.mxu0 %v708
    %3261 = vmatpush1.msra.mxu0 %v707
    %3262 = vmatprep.subr.mxu0 %v712
    %3263 = vmatpush1.msra.mxu0 %v711
    %3264 = vmatprep.subr.mxu0 %v716
    %3265 = vmatpush1.msra.mxu0 %v715
    %3266 = vmatprep.subr.mxu0 0.0
    %3267 = vmatpush1.msra.mxu0 0.0
    %3268 = vmatprep.subr.mxu0 0.0
    %3269 = vmatpush1.msra.mxu0 0.0
    %3270 = vmatprep.subr.mxu0 0.0
    %3271 = vmatpush1.msra.mxu0 0.0
    %3272 = vmatprep.subr.mxu0 0.0
    %3273 = vmatpush1.msra.mxu0 0.0
    %3274 = vmatprep.subr.mxu0 0.0
    %3275 = vmatpush1.msra.mxu0 0.0
    %3276 = vmatprep.subr.mxu0 0.0
    %3277 = vmatpush1.msra.mxu0 0.0
    %3278 = vmatprep.subr.mxu0 0.0
    %3279 = vmatpush1.msra.mxu0 0.0
    %3280 = vmatprep.subr.mxu0 0.0
    %3281 = vmatpush1.msra.mxu0 0.0
    %3282 = vmatprep.subr.mxu0 0.0
    %3283 = vmatpush1.msra.mxu0 0.0
    %3284 = vmatprep.subr.mxu0 0.0
    %3285 = vmatpush1.msra.mxu0 0.0
    %3286 = vmatprep.subr.mxu0 0.0
    %3287 = vmatpush1.msra.mxu0 0.0
    %3288 = vmatprep.subr.mxu0 0.0
    %3289 = vmatpush1.msra.mxu0 0.0
    %3290 = vmatprep.subr.mxu0 0.0
    %3291 = vmatpush1.msra.mxu0 0.0
    %3292 = vmatprep.subr.mxu0 0.0
    %3293 = vmatpush1.msra.mxu0 0.0
    %3294 = vmatprep.subr.mxu0 0.0
    %3295 = vmatpush1.msra.mxu0 0.0
    %3296 = vmatprep.subr.mxu0 0.0
    %3297 = vmatpush1.msra.mxu0 0.0
    %3298 = vmatprep.mubr.f32.mxu0 0.0
    %3299 = vmatmul.mubr.f32.gmra.mrb[0].mxu0 %v3157
    %v3300 = vpop.f32.mrb[0].mxu0
    %v3301 = vadd.f32 0.0, %v3300
    %v3302 = vpop.f32.mrb[0].mxu0
    %v3303 = vadd.f32 0.0, %v3302
    %3304 = vdwg.mxu0
    %v3305 = vadd.f32 %v3159, %v3230
    %v3306 = vadd.f32 %v3160, %v3232
    %v3307 = vadd.f32 %v3161, %v3301
    %v3308 = vadd.f32 %v3162, %v3303
    %v3309 = vxor.u32 %v3305, 2147483648
    %v3310 = vmul.f32 %v3309, 1.442695
    %v3311 = vpow.pop %v3310
    %v3312 = vadd.f32 %v3311, 1.0
    %v3313 = vrcp.pop %v3312
    %v3314 = vmul.f32 1.0, %v3313
    %v3315 = vxor.u32 %v3306, 2147483648
    %v3316 = vmul.f32 %v3315, 1.442695
    %v3317 = vpow.pop %v3316
    %v3318 = vadd.f32 %v3317, 1.0
    %v3319 = vrcp.pop %v3318
    %v3320 = vmul.f32 1.0, %v3319
    %v3321 = vtanh.pop %v3307
    %v3322 = vxor.u32 %v3308, 2147483648
    %v3323 = vmul.f32 %v3322, 1.442695
    %v3324 = vpow.pop %v3323
    %v3325 = vadd.f32 %v3324, 1.0
    %v3326 = vrcp.pop %v3325
    %v3327 = vmul.f32 1.0, %v3326
    %v3328 = vmul.f32 %v3320, %v3155
    %v3329 = vmul.f32 %v3314, %v3321
    %v3330 = vadd.f32 %v3328, %v3329
    %v3331 = vtanh.pop %v3330
    %v3332 = vmul.f32 %v3327, %v3331
    %3333 = vst [vmem:[#allocation5 + $0x30] sm:$0xff] %v3332
    %v3334 = vld [vmem:[#allocation2 + $0x1e0] sm:$0xff]
    %v3335 = vld [vmem:[#allocation2 + $0x1e8] sm:$0xff]
    %v3336 = vld [vmem:[#allocation2 + $0x1f0] sm:$0xff]
    %v3337 = vld [vmem:[#allocation2 + $0x1f8] sm:$0xff]
    %3338 = vmatprep.subr.mxu0 %v654
    %3339 = vmatpush1.msra.mxu0 %v653
    %3340 = vmatprep.subr.mxu0 %v658
    %3341 = vmatpush1.msra.mxu0 %v657
    %3342 = vmatprep.subr.mxu0 %v662
    %3343 = vmatpush1.msra.mxu0 %v661
    %3344 = vmatprep.subr.mxu0 %v666
    %3345 = vmatpush1.msra.mxu0 %v665
    %3346 = vmatprep.subr.mxu0 %v670
    %3347 = vmatpush1.msra.mxu0 %v669
    %3348 = vmatprep.subr.mxu0 %v674
    %3349 = vmatpush1.msra.mxu0 %v673
    %3350 = vmatprep.subr.mxu0 %v678
    %3351 = vmatpush1.msra.mxu0 %v677
    %3352 = vmatprep.subr.mxu0 %v682
    %3353 = vmatpush1.msra.mxu0 %v681
    %3354 = vmatprep.subr.mxu0 %v686
    %3355 = vmatpush1.msra.mxu0 %v685
    %3356 = vmatprep.subr.mxu0 %v690
    %3357 = vmatpush1.msra.mxu0 %v689
    %3358 = vmatprep.subr.mxu0 %v694
    %3359 = vmatpush1.msra.mxu0 %v693
    %3360 = vmatprep.subr.mxu0 %v698
    %3361 = vmatpush1.msra.mxu0 %v697
    %3362 = vmatprep.subr.mxu0 %v702
    %3363 = vmatpush1.msra.mxu0 %v701
    %3364 = vmatprep.subr.mxu0 %v706
    %3365 = vmatpush1.msra.mxu0 %v705
    %3366 = vmatprep.subr.mxu0 %v710
    %3367 = vmatpush1.msra.mxu0 %v709
    %3368 = vmatprep.subr.mxu0 %v714
    %3369 = vmatpush1.msra.mxu0 %v713
    %3370 = vmatprep.subr.mxu0 0.0
    %3371 = vmatpush1.msra.mxu0 0.0
    %3372 = vmatprep.subr.mxu0 0.0
    %3373 = vmatpush1.msra.mxu0 0.0
    %3374 = vmatprep.subr.mxu0 0.0
    %3375 = vmatpush1.msra.mxu0 0.0
    %3376 = vmatprep.subr.mxu0 0.0
    %3377 = vmatpush1.msra.mxu0 0.0
    %3378 = vmatprep.subr.mxu0 0.0
    %3379 = vmatpush1.msra.mxu0 0.0
    %3380 = vmatprep.subr.mxu0 0.0
    %3381 = vmatpush1.msra.mxu0 0.0
    %3382 = vmatprep.subr.mxu0 0.0
    %3383 = vmatpush1.msra.mxu0 0.0
    %3384 = vmatprep.subr.mxu0 0.0
    %3385 = vmatpush1.msra.mxu0 0.0
    %3386 = vmatprep.subr.mxu0 0.0
    %3387 = vmatpush1.msra.mxu0 0.0
    %3388 = vmatprep.subr.mxu0 0.0
    %3389 = vmatpush1.msra.mxu0 0.0
    %3390 = vmatprep.subr.mxu0 0.0
    %3391 = vmatpush1.msra.mxu0 0.0
    %3392 = vmatprep.subr.mxu0 0.0
    %3393 = vmatpush1.msra.mxu0 0.0
    %3394 = vmatprep.subr.mxu0 0.0
    %3395 = vmatpush1.msra.mxu0 0.0
    %3396 = vmatprep.subr.mxu0 0.0
    %3397 = vmatpush1.msra.mxu0 0.0
    %3398 = vmatprep.subr.mxu0 0.0
    %3399 = vmatpush1.msra.mxu0 0.0
    %3400 = vmatprep.subr.mxu0 0.0
    %3401 = vmatpush1.msra.mxu0 0.0
    %3402 = vmatprep.mubr.f32.mxu0 0.0
    %3403 = vmatmul.mubr.f32.gmra.mrb[0].mxu0 %v3332
    %v3404 = vpop.f32.mrb[0].mxu0
    %v3405 = vadd.f32 0.0, %v3404
    %v3406 = vpop.f32.mrb[0].mxu0
    %v3407 = vadd.f32 0.0, %v3406
    %3408 = vdwg.mxu0
    %3409 = vmatprep.subr.mxu0 %v656
    %3410 = vmatpush1.msra.mxu0 %v655
    %3411 = vmatprep.subr.mxu0 %v660
    %3412 = vmatpush1.msra.mxu0 %v659
    %3413 = vmatprep.subr.mxu0 %v664
    %3414 = vmatpush1.msra.mxu0 %v663
    %3415 = vmatprep.subr.mxu0 %v668
    %3416 = vmatpush1.msra.mxu0 %v667
    %3417 = vmatprep.subr.mxu0 %v672
    %3418 = vmatpush1.msra.mxu0 %v671
    %3419 = vmatprep.subr.mxu0 %v676
    %3420 = vmatpush1.msra.mxu0 %v675
    %3421 = vmatprep.subr.mxu0 %v680
    %3422 = vmatpush1.msra.mxu0 %v679
    %3423 = vmatprep.subr.mxu0 %v684
    %3424 = vmatpush1.msra.mxu0 %v683
    %3425 = vmatprep.subr.mxu0 %v688
    %3426 = vmatpush1.msra.mxu0 %v687
    %3427 = vmatprep.subr.mxu0 %v692
    %3428 = vmatpush1.msra.mxu0 %v691
    %3429 = vmatprep.subr.mxu0 %v696
    %3430 = vmatpush1.msra.mxu0 %v695
    %3431 = vmatprep.subr.mxu0 %v700
    %3432 = vmatpush1.msra.mxu0 %v699
    %3433 = vmatprep.subr.mxu0 %v704
    %3434 = vmatpush1.msra.mxu0 %v703
    %3435 = vmatprep.subr.mxu0 %v708
    %3436 = vmatpush1.msra.mxu0 %v707
    %3437 = vmatprep.subr.mxu0 %v712
    %3438 = vmatpush1.msra.mxu0 %v711
    %3439 = vmatprep.subr.mxu0 %v716
    %3440 = vmatpush1.msra.mxu0 %v715
    %3441 = vmatprep.subr.mxu0 0.0
    %3442 = vmatpush1.msra.mxu0 0.0
    %3443 = vmatprep.subr.mxu0 0.0
    %3444 = vmatpush1.msra.mxu0 0.0
    %3445 = vmatprep.subr.mxu0 0.0
    %3446 = vmatpush1.msra.mxu0 0.0
    %3447 = vmatprep.subr.mxu0 0.0
    %3448 = vmatpush1.msra.mxu0 0.0
    %3449 = vmatprep.subr.mxu0 0.0
    %3450 = vmatpush1.msra.mxu0 0.0
    %3451 = vmatprep.subr.mxu0 0.0
    %3452 = vmatpush1.msra.mxu0 0.0
    %3453 = vmatprep.subr.mxu0 0.0
    %3454 = vmatpush1.msra.mxu0 0.0
    %3455 = vmatprep.subr.mxu0 0.0
    %3456 = vmatpush1.msra.mxu0 0.0
    %3457 = vmatprep.subr.mxu0 0.0
    %3458 = vmatpush1.msra.mxu0 0.0
    %3459 = vmatprep.subr.mxu0 0.0
    %3460 = vmatpush1.msra.mxu0 0.0
    %3461 = vmatprep.subr.mxu0 0.0
    %3462 = vmatpush1.msra.mxu0 0.0
    %3463 = vmatprep.subr.mxu0 0.0
    %3464 = vmatpush1.msra.mxu0 0.0
    %3465 = vmatprep.subr.mxu0 0.0
    %3466 = vmatpush1.msra.mxu0 0.0
    %3467 = vmatprep.subr.mxu0 0.0
    %3468 = vmatpush1.msra.mxu0 0.0
    %3469 = vmatprep.subr.mxu0 0.0
    %3470 = vmatpush1.msra.mxu0 0.0
    %3471 = vmatprep.subr.mxu0 0.0
    %3472 = vmatpush1.msra.mxu0 0.0
    %3473 = vmatprep.mubr.f32.mxu0 0.0
    %3474 = vmatmul.mubr.f32.gmra.mrb[0].mxu0 %v3332
    %v3475 = vpop.f32.mrb[0].mxu0
    %v3476 = vadd.f32 0.0, %v3475
    %v3477 = vpop.f32.mrb[0].mxu0
    %v3478 = vadd.f32 0.0, %v3477
    %3479 = vdwg.mxu0
    %v3480 = vadd.f32 %v3334, %v3405
    %v3481 = vadd.f32 %v3335, %v3407
    %v3482 = vadd.f32 %v3336, %v3476
    %v3483 = vadd.f32 %v3337, %v3478
    %v3484 = vxor.u32 %v3480, 2147483648
    %v3485 = vmul.f32 %v3484, 1.442695
    %v3486 = vpow.pop %v3485
    %v3487 = vadd.f32 %v3486, 1.0
    %v3488 = vrcp.pop %v3487
    %v3489 = vmul.f32 1.0, %v3488
    %v3490 = vxor.u32 %v3481, 2147483648
    %v3491 = vmul.f32 %v3490, 1.442695
    %v3492 = vpow.pop %v3491
    %v3493 = vadd.f32 %v3492, 1.0
    %v3494 = vrcp.pop %v3493
    %v3495 = vmul.f32 1.0, %v3494
    %v3496 = vtanh.pop %v3482
    %v3497 = vxor.u32 %v3483, 2147483648
    %v3498 = vmul.f32 %v3497, 1.442695
    %v3499 = vpow.pop %v3498
    %v3500 = vadd.f32 %v3499, 1.0
    %v3501 = vrcp.pop %v3500
    %v3502 = vmul.f32 1.0, %v3501
    %v3503 = vmul.f32 %v3495, %v3330
    %v3504 = vmul.f32 %v3489, %v3496
    %v3505 = vadd.f32 %v3503, %v3504
    %v3506 = vtanh.pop %v3505
    %v3507 = vmul.f32 %v3502, %v3506
    %3508 = vst [vmem:[#allocation5 + $0x38] sm:$0xff] %v3507
    %v3509 = vld [vmem:[#allocation5] sm:$0xff]
    %v3510 = vld [vmem:[#allocation5 + $0x8] sm:$0xff]
    %v3511 = vld [vmem:[#allocation5 + $0x10] sm:$0xff]
    %v3512 = vld [vmem:[#allocation5 + $0x18] sm:$0xff]
    %v3513 = vld [vmem:[#allocation5 + $0x20] sm:$0xff]
    %v3514 = vld [vmem:[#allocation5 + $0x28] sm:$0xff]
    %v3515 = vld [vmem:[#allocation5 + $0x30] sm:$0xff]
    %v3516 = vld [vmem:[#allocation5 + $0x38] sm:$0xff]
    %v3517 = vld [vmem:[#allocation12] sm:$0xff]
    %v3518 = vld [vmem:[#allocation12 + $0x8] sm:$0xff]
    %v3519 = vld [vmem:[#allocation12 + $0x10] sm:$0xff]
    %v3520 = vld [vmem:[#allocation12 + $0x18] sm:$0xff]
    %v3521 = vld [vmem:[#allocation12 + $0x20] sm:$0xff]
    %v3522 = vld [vmem:[#allocation12 + $0x28] sm:$0xff]
    %v3523 = vld [vmem:[#allocation12 + $0x30] sm:$0xff]
    %v3524 = vld [vmem:[#allocation12 + $0x38] sm:$0xff]
    %v3525 = vld [vmem:[#allocation12 + $0x40] sm:$0xff]
    %v3526 = vld [vmem:[#allocation12 + $0x48] sm:$0xff]
    %v3527 = vld [vmem:[#allocation12 + $0x50] sm:$0xff]
    %v3528 = vld [vmem:[#allocation12 + $0x58] sm:$0xff]
    %v3529 = vld [vmem:[#allocation12 + $0x60] sm:$0xff]
    %v3530 = vld [vmem:[#allocation12 + $0x68] sm:$0xff]
    %v3531 = vld [vmem:[#allocation12 + $0x70] sm:$0xff]
    %v3532 = vld [vmem:[#allocation12 + $0x78] sm:$0xff]
    %v3533 = vld [vmem:[#allocation12 + $0x80] sm:$0xff]
    %v3534 = vld [vmem:[#allocation12 + $0x88] sm:$0xff]
    %v3535 = vld [vmem:[#allocation12 + $0x90] sm:$0xff]
    %v3536 = vld [vmem:[#allocation12 + $0x98] sm:$0xff]
    %v3537 = vld [vmem:[#allocation12 + $0xa0] sm:$0xff]
    %v3538 = vld [vmem:[#allocation12 + $0xa8] sm:$0xff]
    %v3539 = vld [vmem:[#allocation12 + $0xb0] sm:$0xff]
    %v3540 = vld [vmem:[#allocation12 + $0xb8] sm:$0xff]
    %v3541 = vld [vmem:[#allocation12 + $0xc0] sm:$0xff]
    %v3542 = vld [vmem:[#allocation12 + $0xc8] sm:$0xff]
    %v3543 = vld [vmem:[#allocation12 + $0xd0] sm:$0xff]
    %v3544 = vld [vmem:[#allocation12 + $0xd8] sm:$0xff]
    %v3545 = vld [vmem:[#allocation12 + $0xe0] sm:$0xff]
    %v3546 = vld [vmem:[#allocation12 + $0xe8] sm:$0xff]
    %v3547 = vld [vmem:[#allocation12 + $0xf0] sm:$0xff]
    %v3548 = vld [vmem:[#allocation12 + $0xf8] sm:$0xff]
    %v3549 = vld [vmem:[#allocation12 + $0x100] sm:$0xff]
    %v3550 = vld [vmem:[#allocation12 + $0x108] sm:$0xff]
    %v3551 = vld [vmem:[#allocation12 + $0x110] sm:$0xff]
    %v3552 = vld [vmem:[#allocation12 + $0x118] sm:$0xff]
    %v3553 = vld [vmem:[#allocation12 + $0x120] sm:$0xff]
    %v3554 = vld [vmem:[#allocation12 + $0x128] sm:$0xff]
    %v3555 = vld [vmem:[#allocation12 + $0x130] sm:$0xff]
    %v3556 = vld [vmem:[#allocation12 + $0x138] sm:$0xff]
    %v3557 = vld [vmem:[#allocation12 + $0x140] sm:$0xff]
    %v3558 = vld [vmem:[#allocation12 + $0x148] sm:$0xff]
    %v3559 = vld [vmem:[#allocation12 + $0x150] sm:$0xff]
    %v3560 = vld [vmem:[#allocation12 + $0x158] sm:$0xff]
    %v3561 = vld [vmem:[#allocation12 + $0x160] sm:$0xff]
    %v3562 = vld [vmem:[#allocation12 + $0x168] sm:$0xff]
    %v3563 = vld [vmem:[#allocation12 + $0x170] sm:$0xff]
    %v3564 = vld [vmem:[#allocation12 + $0x178] sm:$0xff]
    %v3565 = vld [vmem:[#allocation12 + $0x180] sm:$0xff]
    %v3566 = vld [vmem:[#allocation12 + $0x188] sm:$0xff]
    %v3567 = vld [vmem:[#allocation12 + $0x190] sm:$0xff]
    %v3568 = vld [vmem:[#allocation12 + $0x198] sm:$0xff]
    %v3569 = vld [vmem:[#allocation12 + $0x1a0] sm:$0xff]
    %v3570 = vld [vmem:[#allocation12 + $0x1a8] sm:$0xff]
    %v3571 = vld [vmem:[#allocation12 + $0x1b0] sm:$0xff]
    %v3572 = vld [vmem:[#allocation12 + $0x1b8] sm:$0xff]
    %v3573 = vld [vmem:[#allocation12 + $0x1c0] sm:$0xff]
    %v3574 = vld [vmem:[#allocation12 + $0x1c8] sm:$0xff]
    %v3575 = vld [vmem:[#allocation12 + $0x1d0] sm:$0xff]
    %v3576 = vld [vmem:[#allocation12 + $0x1d8] sm:$0xff]
    %v3577 = vld [vmem:[#allocation12 + $0x1e0] sm:$0xff]
    %v3578 = vld [vmem:[#allocation12 + $0x1e8] sm:$0xff]
    %v3579 = vld [vmem:[#allocation12 + $0x1f0] sm:$0xff]
    %v3580 = vld [vmem:[#allocation12 + $0x1f8] sm:$0xff]
    %v3581 = vld [vmem:[#allocation15] sm:$0xf]
    %v3583 = vlaneseq
    %v3584 = vshrl.u32 %v3583, 7
    %v3585 = vsub.s32 0, %v3584
    %v3586 = vrot.slane %v3581, %v3585
    %v3587 = vlaneseq
    %v3588 = vshrl.u32 %v3587, 7
    %v3589 = vsub.s32 1, %v3588
    %v3590 = vrot.slane %v3581, %v3589
    %v3591 = vlaneseq
    %v3592 = vshrl.u32 %v3591, 7
    %v3593 = vsub.s32 2, %v3592
    %v3594 = vrot.slane %v3581, %v3593
    %v3595 = vlaneseq
    %v3596 = vshrl.u32 %v3595, 7
    %v3597 = vsub.s32 3, %v3596
    %v3598 = vrot.slane %v3581, %v3597
    %3603 = vmatprep.subr.mxu0 %v3518
    %3604 = vmatpush1.msra.mxu0 %v3517
    %3605 = vmatprep.subr.mxu0 %v3522
    %3606 = vmatpush1.msra.mxu0 %v3521
    %3607 = vmatprep.subr.mxu0 %v3526
    %3608 = vmatpush1.msra.mxu0 %v3525
    %3609 = vmatprep.subr.mxu0 %v3530
    %3610 = vmatpush1.msra.mxu0 %v3529
    %3611 = vmatprep.subr.mxu0 %v3534
    %3612 = vmatpush1.msra.mxu0 %v3533
    %3613 = vmatprep.subr.mxu0 %v3538
    %3614 = vmatpush1.msra.mxu0 %v3537
    %3615 = vmatprep.subr.mxu0 %v3542
    %3616 = vmatpush1.msra.mxu0 %v3541
    %3617 = vmatprep.subr.mxu0 %v3546
    %3618 = vmatpush1.msra.mxu0 %v3545
    %3619 = vmatprep.subr.mxu0 %v3550
    %3620 = vmatpush1.msra.mxu0 %v3549
    %3621 = vmatprep.subr.mxu0 %v3554
    %3622 = vmatpush1.msra.mxu0 %v3553
    %3623 = vmatprep.subr.mxu0 %v3558
    %3624 = vmatpush1.msra.mxu0 %v3557
    %3625 = vmatprep.subr.mxu0 %v3562
    %3626 = vmatpush1.msra.mxu0 %v3561
    %3627 = vmatprep.subr.mxu0 %v3566
    %3628 = vmatpush1.msra.mxu0 %v3565
    %3629 = vmatprep.subr.mxu0 %v3570
    %3630 = vmatpush1.msra.mxu0 %v3569
    %3631 = vmatprep.subr.mxu0 %v3574
    %3632 = vmatpush1.msra.mxu0 %v3573
    %3633 = vmatprep.subr.mxu0 %v3578
    %3634 = vmatpush1.msra.mxu0 %v3577
    %3635 = vmatprep.subr.mxu0 0.0
    %3636 = vmatpush1.msra.mxu0 0.0
    %3637 = vmatprep.subr.mxu0 0.0
    %3638 = vmatpush1.msra.mxu0 0.0
    %3639 = vmatprep.subr.mxu0 0.0
    %3640 = vmatpush1.msra.mxu0 0.0
    %3641 = vmatprep.subr.mxu0 0.0
    %3642 = vmatpush1.msra.mxu0 0.0
    %3643 = vmatprep.subr.mxu0 0.0
    %3644 = vmatpush1.msra.mxu0 0.0
    %3645 = vmatprep.subr.mxu0 0.0
    %3646 = vmatpush1.msra.mxu0 0.0
    %3647 = vmatprep.subr.mxu0 0.0
    %3648 = vmatpush1.msra.mxu0 0.0
    %3649 = vmatprep.subr.mxu0 0.0
    %3650 = vmatpush1.msra.mxu0 0.0
    %3651 = vmatprep.subr.mxu0 0.0
    %3652 = vmatpush1.msra.mxu0 0.0
    %3653 = vmatprep.subr.mxu0 0.0
    %3654 = vmatpush1.msra.mxu0 0.0
    %3655 = vmatprep.subr.mxu0 0.0
    %3656 = vmatpush1.msra.mxu0 0.0
    %3657 = vmatprep.subr.mxu0 0.0
    %3658 = vmatpush1.msra.mxu0 0.0
    %3659 = vmatprep.subr.mxu0 0.0
    %3660 = vmatpush1.msra.mxu0 0.0
    %3661 = vmatprep.subr.mxu0 0.0
    %3662 = vmatpush1.msra.mxu0 0.0
    %3663 = vmatprep.subr.mxu0 0.0
    %3664 = vmatpush1.msra.mxu0 0.0
    %3665 = vmatprep.subr.mxu0 0.0
    %3666 = vmatpush1.msra.mxu0 0.0
    %3667 = vmatprep.mubr.f32.mxu0 0.0
    %3668 = vmatmul.mubr.f32.gmra.mrb[0].mxu0 %v3509
    %v3669 = vpop.f32.mrb[0].mxu0
    %v3670 = vadd.f32 %v3586, %v3669
    %v3671 = vpop.f32.mrb[0].mxu0
    %v3672 = vadd.f32 %v3590, %v3671
    %3673 = vmatprep.mubr.f32.mxu0 0.0
    %3674 = vmatmul.mubr.f32.gmra.mrb[0].mxu0 %v3510
    %v3675 = vpop.f32.mrb[0].mxu0
    %v3676 = vadd.f32 %v3586, %v3675
    %v3677 = vpop.f32.mrb[0].mxu0
    %v3678 = vadd.f32 %v3590, %v3677
    %3679 = vmatprep.mubr.f32.mxu0 0.0
    %3680 = vmatmul.mubr.f32.gmra.mrb[0].mxu0 %v3511
    %v3681 = vpop.f32.mrb[0].mxu0
    %v3682 = vadd.f32 %v3586, %v3681
    %v3683 = vpop.f32.mrb[0].mxu0
    %v3684 = vadd.f32 %v3590, %v3683
    %3685 = vmatprep.mubr.f32.mxu0 0.0
    %3686 = vmatmul.mubr.f32.gmra.mrb[0].mxu0 %v3512
    %v3687 = vpop.f32.mrb[0].mxu0
    %v3688 = vadd.f32 %v3586, %v3687
    %v3689 = vpop.f32.mrb[0].mxu0
    %v3690 = vadd.f32 %v3590, %v3689
    %3691 = vmatprep.mubr.f32.mxu0 0.0
    %3692 = vmatmul.mubr.f32.gmra.mrb[0].mxu0 %v3513
    %v3693 = vpop.f32.mrb[0].mxu0
    %v3694 = vadd.f32 %v3586, %v3693
    %v3695 = vpop.f32.mrb[0].mxu0
    %v3696 = vadd.f32 %v3590, %v3695
    %3697 = vmatprep.mubr.f32.mxu0 0.0
    %3698 = vmatmul.mubr.f32.gmra.mrb[0].mxu0 %v3514
    %v3699 = vpop.f32.mrb[0].mxu0
    %v3700 = vadd.f32 %v3586, %v3699
    %v3701 = vpop.f32.mrb[0].mxu0
    %v3702 = vadd.f32 %v3590, %v3701
    %3703 = vmatprep.mubr.f32.mxu0 0.0
    %3704 = vmatmul.mubr.f32.gmra.mrb[0].mxu0 %v3515
    %v3705 = vpop.f32.mrb[0].mxu0
    %v3706 = vadd.f32 %v3586, %v3705
    %v3707 = vpop.f32.mrb[0].mxu0
    %v3708 = vadd.f32 %v3590, %v3707
    %3709 = vmatprep.mubr.f32.mxu0 0.0
    %3710 = vmatmul.mubr.f32.gmra.mrb[0].mxu0 %v3516
    %v3711 = vpop.f32.mrb[0].mxu0
    %v3712 = vadd.f32 %v3586, %v3711
    %v3713 = vpop.f32.mrb[0].mxu0
    %v3714 = vadd.f32 %v3590, %v3713
    %3715 = vdwg.mxu0
    %3716 = vmatprep.subr.mxu0 %v3520
    %3717 = vmatpush1.msra.mxu0 %v3519
    %3718 = vmatprep.subr.mxu0 %v3524
    %3719 = vmatpush1.msra.mxu0 %v3523
    %3720 = vmatprep.subr.mxu0 %v3528
    %3721 = vmatpush1.msra.mxu0 %v3527
    %3722 = vmatprep.subr.mxu0 %v3532
    %3723 = vmatpush1.msra.mxu0 %v3531
    %3724 = vmatprep.subr.mxu0 %v3536
    %3725 = vmatpush1.msra.mxu0 %v3535
    %3726 = vmatprep.subr.mxu0 %v3540
    %3727 = vmatpush1.msra.mxu0 %v3539
    %3728 = vmatprep.subr.mxu0 %v3544
    %3729 = vmatpush1.msra.mxu0 %v3543
    %3730 = vmatprep.subr.mxu0 %v3548
    %3731 = vmatpush1.msra.mxu0 %v3547
    %3732 = vmatprep.subr.mxu0 %v3552
    %3733 = vmatpush1.msra.mxu0 %v3551
    %3734 = vmatprep.subr.mxu0 %v3556
    %3735 = vmatpush1.msra.mxu0 %v3555
    %3736 = vmatprep.subr.mxu0 %v3560
    %3737 = vmatpush1.msra.mxu0 %v3559
    %3738 = vmatprep.subr.mxu0 %v3564
    %3739 = vmatpush1.msra.mxu0 %v3563
    %3740 = vmatprep.subr.mxu0 %v3568
    %3741 = vmatpush1.msra.mxu0 %v3567
    %3742 = vmatprep.subr.mxu0 %v3572
    %3743 = vmatpush1.msra.mxu0 %v3571
    %3744 = vmatprep.subr.mxu0 %v3576
    %3745 = vmatpush1.msra.mxu0 %v3575
    %3746 = vmatprep.subr.mxu0 %v3580
    %3747 = vmatpush1.msra.mxu0 %v3579
    %3748 = vmatprep.subr.mxu0 0.0
    %3749 = vmatpush1.msra.mxu0 0.0
    %3750 = vmatprep.subr.mxu0 0.0
    %3751 = vmatpush1.msra.mxu0 0.0
    %3752 = vmatprep.subr.mxu0 0.0
    %3753 = vmatpush1.msra.mxu0 0.0
    %3754 = vmatprep.subr.mxu0 0.0
    %3755 = vmatpush1.msra.mxu0 0.0
    %3756 = vmatprep.subr.mxu0 0.0
    %3757 = vmatpush1.msra.mxu0 0.0
    %3758 = vmatprep.subr.mxu0 0.0
    %3759 = vmatpush1.msra.mxu0 0.0
    %3760 = vmatprep.subr.mxu0 0.0
    %3761 = vmatpush1.msra.mxu0 0.0
    %3762 = vmatprep.subr.mxu0 0.0
    %3763 = vmatpush1.msra.mxu0 0.0
    %3764 = vmatprep.subr.mxu0 0.0
    %3765 = vmatpush1.msra.mxu0 0.0
    %3766 = vmatprep.subr.mxu0 0.0
    %3767 = vmatpush1.msra.mxu0 0.0
    %3768 = vmatprep.subr.mxu0 0.0
    %3769 = vmatpush1.msra.mxu0 0.0
    %3770 = vmatprep.subr.mxu0 0.0
    %3771 = vmatpush1.msra.mxu0 0.0
    %3772 = vmatprep.subr.mxu0 0.0
    %3773 = vmatpush1.msra.mxu0 0.0
    %3774 = vmatprep.subr.mxu0 0.0
    %3775 = vmatpush1.msra.mxu0 0.0
    %3776 = vmatprep.subr.mxu0 0.0
    %3777 = vmatpush1.msra.mxu0 0.0
    %3778 = vmatprep.subr.mxu0 0.0
    %3779 = vmatpush1.msra.mxu0 0.0
    %3780 = vmatprep.mubr.f32.mxu0 0.0
    %3781 = vmatmul.mubr.f32.gmra.mrb[0].mxu0 %v3509
    %v3782 = vpop.f32.mrb[0].mxu0
    %v3783 = vadd.f32 %v3594, %v3782
    %v3784 = vpop.f32.mrb[0].mxu0
    %v3785 = vadd.f32 %v3598, %v3784
    %3786 = vmatprep.mubr.f32.mxu0 0.0
    %3787 = vmatmul.mubr.f32.gmra.mrb[0].mxu0 %v3510
    %v3788 = vpop.f32.mrb[0].mxu0
    %v3789 = vadd.f32 %v3594, %v3788
    %v3790 = vpop.f32.mrb[0].mxu0
    %v3791 = vadd.f32 %v3598, %v3790
    %3792 = vmatprep.mubr.f32.mxu0 0.0
    %3793 = vmatmul.mubr.f32.gmra.mrb[0].mxu0 %v3511
    %v3794 = vpop.f32.mrb[0].mxu0
    %v3795 = vadd.f32 %v3594, %v3794
    %v3796 = vpop.f32.mrb[0].mxu0
    %v3797 = vadd.f32 %v3598, %v3796
    %3798 = vmatprep.mubr.f32.mxu0 0.0
    %3799 = vmatmul.mubr.f32.gmra.mrb[0].mxu0 %v3512
    %v3800 = vpop.f32.mrb[0].mxu0
    %v3801 = vadd.f32 %v3594, %v3800
    %v3802 = vpop.f32.mrb[0].mxu0
    %v3803 = vadd.f32 %v3598, %v3802
    %3804 = vmatprep.mubr.f32.mxu0 0.0
    %3805 = vmatmul.mubr.f32.gmra.mrb[0].mxu0 %v3513
    %v3806 = vpop.f32.mrb[0].mxu0
    %v3807 = vadd.f32 %v3594, %v3806
    %v3808 = vpop.f32.mrb[0].mxu0
    %v3809 = vadd.f32 %v3598, %v3808
    %3810 = vmatprep.mubr.f32.mxu0 0.0
    %3811 = vmatmul.mubr.f32.gmra.mrb[0].mxu0 %v3514
    %v3812 = vpop.f32.mrb[0].mxu0
    %v3813 = vadd.f32 %v3594, %v3812
    %v3814 = vpop.f32.mrb[0].mxu0
    %v3815 = vadd.f32 %v3598, %v3814
    %3816 = vmatprep.mubr.f32.mxu0 0.0
    %3817 = vmatmul.mubr.f32.gmra.mrb[0].mxu0 %v3515
    %v3818 = vpop.f32.mrb[0].mxu0
    %v3819 = vadd.f32 %v3594, %v3818
    %v3820 = vpop.f32.mrb[0].mxu0
    %v3821 = vadd.f32 %v3598, %v3820
    %3822 = vmatprep.mubr.f32.mxu0 0.0
    %3823 = vmatmul.mubr.f32.gmra.mrb[0].mxu0 %v3516
    %v3824 = vpop.f32.mrb[0].mxu0
    %v3825 = vadd.f32 %v3594, %v3824
    %v3826 = vpop.f32.mrb[0].mxu0
    %v3827 = vadd.f32 %v3598, %v3826
    %3828 = vdwg.mxu0
    %3829 = vst [vmem:[#allocation3] sm:$0xff] %v3670
    %3830 = vst [vmem:[#allocation3 + $0x8] sm:$0xff] %v3672
    %3831 = vst [vmem:[#allocation3 + $0x10] sm:$0xff] %v3783
    %3832 = vst [vmem:[#allocation3 + $0x18] sm:$0xff] %v3785
    %3833 = vst [vmem:[#allocation3 + $0x20] sm:$0xff] %v3676
    %3834 = vst [vmem:[#allocation3 + $0x28] sm:$0xff] %v3678
    %3835 = vst [vmem:[#allocation3 + $0x30] sm:$0xff] %v3789
    %3836 = vst [vmem:[#allocation3 + $0x38] sm:$0xff] %v3791
    %3837 = vst [vmem:[#allocation3 + $0x40] sm:$0xff] %v3682
    %3838 = vst [vmem:[#allocation3 + $0x48] sm:$0xff] %v3684
    %3839 = vst [vmem:[#allocation3 + $0x50] sm:$0xff] %v3795
    %3840 = vst [vmem:[#allocation3 + $0x58] sm:$0xff] %v3797
    %3841 = vst [vmem:[#allocation3 + $0x60] sm:$0xff] %v3688
    %3842 = vst [vmem:[#allocation3 + $0x68] sm:$0xff] %v3690
    %3843 = vst [vmem:[#allocation3 + $0x70] sm:$0xff] %v3801
    %3844 = vst [vmem:[#allocation3 + $0x78] sm:$0xff] %v3803
    %3845 = vst [vmem:[#allocation3 + $0x80] sm:$0xff] %v3694
    %3846 = vst [vmem:[#allocation3 + $0x88] sm:$0xff] %v3696
    %3847 = vst [vmem:[#allocation3 + $0x90] sm:$0xff] %v3807
    %3848 = vst [vmem:[#allocation3 + $0x98] sm:$0xff] %v3809
    %3849 = vst [vmem:[#allocation3 + $0xa0] sm:$0xff] %v3700
    %3850 = vst [vmem:[#allocation3 + $0xa8] sm:$0xff] %v3702
    %3851 = vst [vmem:[#allocation3 + $0xb0] sm:$0xff] %v3813
    %3852 = vst [vmem:[#allocation3 + $0xb8] sm:$0xff] %v3815
    %3853 = vst [vmem:[#allocation3 + $0xc0] sm:$0xff] %v3706
    %3854 = vst [vmem:[#allocation3 + $0xc8] sm:$0xff] %v3708
    %3855 = vst [vmem:[#allocation3 + $0xd0] sm:$0xff] %v3819
    %3856 = vst [vmem:[#allocation3 + $0xd8] sm:$0xff] %v3821
    %3857 = vst [vmem:[#allocation3 + $0xe0] sm:$0xff] %v3712
    %3858 = vst [vmem:[#allocation3 + $0xe8] sm:$0xff] %v3714
    %3859 = vst [vmem:[#allocation3 + $0xf0] sm:$0xff] %v3825
    %3860 = vst [vmem:[#allocation3 + $0xf8] sm:$0xff] %v3827
    %v3861 = vld [vmem:[#allocation14] sm:$0xff]
    %v3862 = vld [vmem:[#allocation14 + $0x8] sm:$0xff]
    %v3863 = vld [vmem:[#allocation14 + $0x10] sm:$0xff]
    %v3864 = vld [vmem:[#allocation14 + $0x18] sm:$0xff]
    %v3865 = vld [vmem:[#allocation14 + $0x20] sm:$0xff]
    %v3866 = vld [vmem:[#allocation14 + $0x28] sm:$0xff]
    %v3867 = vld [vmem:[#allocation14 + $0x30] sm:$0xff]
    %v3868 = vld [vmem:[#allocation14 + $0x38] sm:$0xff]
    %v3869 = vld [vmem:[#allocation14 + $0x40] sm:$0xff]
    %v3870 = vld [vmem:[#allocation14 + $0x48] sm:$0xff]
    %v3871 = vld [vmem:[#allocation14 + $0x50] sm:$0xff]
    %v3872 = vld [vmem:[#allocation14 + $0x58] sm:$0xff]
    %v3873 = vld [vmem:[#allocation14 + $0x60] sm:$0xff]
    %v3874 = vld [vmem:[#allocation14 + $0x68] sm:$0xff]
    %v3875 = vld [vmem:[#allocation14 + $0x70] sm:$0xff]
    %v3876 = vld [vmem:[#allocation14 + $0x78] sm:$0xff]
    %v3877 = vld [vmem:[#allocation14 + $0x80] sm:$0xff]
    %v3878 = vld [vmem:[#allocation14 + $0x88] sm:$0xff]
    %v3879 = vld [vmem:[#allocation14 + $0x90] sm:$0xff]
    %v3880 = vld [vmem:[#allocation14 + $0x98] sm:$0xff]
    %v3881 = vld [vmem:[#allocation14 + $0xa0] sm:$0xff]
    %v3882 = vld [vmem:[#allocation14 + $0xa8] sm:$0xff]
    %v3883 = vld [vmem:[#allocation14 + $0xb0] sm:$0xff]
    %v3884 = vld [vmem:[#allocation14 + $0xb8] sm:$0xff]
    %v3885 = vld [vmem:[#allocation14 + $0xc0] sm:$0xff]
    %v3886 = vld [vmem:[#allocation14 + $0xc8] sm:$0xff]
    %v3887 = vld [vmem:[#allocation14 + $0xd0] sm:$0xff]
    %v3888 = vld [vmem:[#allocation14 + $0xd8] sm:$0xff]
    %v3889 = vld [vmem:[#allocation14 + $0xe0] sm:$0xff]
    %v3890 = vld [vmem:[#allocation14 + $0xe8] sm:$0xff]
    %v3891 = vld [vmem:[#allocation14 + $0xf0] sm:$0xff]
    %v3892 = vld [vmem:[#allocation14 + $0xf8] sm:$0xff]
    %v3893 = vld [vmem:[#allocation14 + $0x100] sm:$0xff]
    %v3894 = vld [vmem:[#allocation14 + $0x108] sm:$0xff]
    %v3895 = vld [vmem:[#allocation14 + $0x110] sm:$0xff]
    %v3896 = vld [vmem:[#allocation14 + $0x118] sm:$0xff]
    %v3897 = vld [vmem:[#allocation14 + $0x120] sm:$0xff]
    %v3898 = vld [vmem:[#allocation14 + $0x128] sm:$0xff]
    %v3899 = vld [vmem:[#allocation14 + $0x130] sm:$0xff]
    %v3900 = vld [vmem:[#allocation14 + $0x138] sm:$0xff]
    %v3901 = vld [vmem:[#allocation14 + $0x140] sm:$0xff]
    %v3902 = vld [vmem:[#allocation14 + $0x148] sm:$0xff]
    %v3903 = vld [vmem:[#allocation14 + $0x150] sm:$0xff]
    %v3904 = vld [vmem:[#allocation14 + $0x158] sm:$0xff]
    %v3905 = vld [vmem:[#allocation14 + $0x160] sm:$0xff]
    %v3906 = vld [vmem:[#allocation14 + $0x168] sm:$0xff]
    %v3907 = vld [vmem:[#allocation14 + $0x170] sm:$0xff]
    %v3908 = vld [vmem:[#allocation14 + $0x178] sm:$0xff]
    %v3909 = vld [vmem:[#allocation14 + $0x180] sm:$0xff]
    %v3910 = vld [vmem:[#allocation14 + $0x188] sm:$0xff]
    %v3911 = vld [vmem:[#allocation14 + $0x190] sm:$0xff]
    %v3912 = vld [vmem:[#allocation14 + $0x198] sm:$0xff]
    %v3913 = vld [vmem:[#allocation14 + $0x1a0] sm:$0xff]
    %v3914 = vld [vmem:[#allocation14 + $0x1a8] sm:$0xff]
    %v3915 = vld [vmem:[#allocation14 + $0x1b0] sm:$0xff]
    %v3916 = vld [vmem:[#allocation14 + $0x1b8] sm:$0xff]
    %v3917 = vld [vmem:[#allocation14 + $0x1c0] sm:$0xff]
    %v3918 = vld [vmem:[#allocation14 + $0x1c8] sm:$0xff]
    %v3919 = vld [vmem:[#allocation14 + $0x1d0] sm:$0xff]
    %v3920 = vld [vmem:[#allocation14 + $0x1d8] sm:$0xff]
    %v3921 = vld [vmem:[#allocation14 + $0x1e0] sm:$0xff]
    %v3922 = vld [vmem:[#allocation14 + $0x1e8] sm:$0xff]
    %v3923 = vld [vmem:[#allocation14 + $0x1f0] sm:$0xff]
    %v3924 = vld [vmem:[#allocation14 + $0x1f8] sm:$0xff]
    %v3925 = vld [vmem:[#allocation3] sm:$0xff]
    %v3926 = vld [vmem:[#allocation3 + $0x8] sm:$0xff]
    %v3927 = vld [vmem:[#allocation3 + $0x10] sm:$0xff]
    %v3928 = vld [vmem:[#allocation3 + $0x18] sm:$0xff]
    %3929 = vmatprep.subr.mxu0 %v3862
    %3930 = vmatpush1.msra.mxu0 %v3861
    %3931 = vmatprep.subr.mxu0 %v3866
    %3932 = vmatpush1.msra.mxu0 %v3865
    %3933 = vmatprep.subr.mxu0 %v3870
    %3934 = vmatpush1.msra.mxu0 %v3869
    %3935 = vmatprep.subr.mxu0 %v3874
    %3936 = vmatpush1.msra.mxu0 %v3873
    %3937 = vmatprep.subr.mxu0 %v3878
    %3938 = vmatpush1.msra.mxu0 %v3877
    %3939 = vmatprep.subr.mxu0 %v3882
    %3940 = vmatpush1.msra.mxu0 %v3881
    %3941 = vmatprep.subr.mxu0 %v3886
    %3942 = vmatpush1.msra.mxu0 %v3885
    %3943 = vmatprep.subr.mxu0 %v3890
    %3944 = vmatpush1.msra.mxu0 %v3889
    %3945 = vmatprep.subr.mxu0 %v3894
    %3946 = vmatpush1.msra.mxu0 %v3893
    %3947 = vmatprep.subr.mxu0 %v3898
    %3948 = vmatpush1.msra.mxu0 %v3897
    %3949 = vmatprep.subr.mxu0 %v3902
    %3950 = vmatpush1.msra.mxu0 %v3901
    %3951 = vmatprep.subr.mxu0 %v3906
    %3952 = vmatpush1.msra.mxu0 %v3905
    %3953 = vmatprep.subr.mxu0 %v3910
    %3954 = vmatpush1.msra.mxu0 %v3909
    %3955 = vmatprep.subr.mxu0 %v3914
    %3956 = vmatpush1.msra.mxu0 %v3913
    %3957 = vmatprep.subr.mxu0 %v3918
    %3958 = vmatpush1.msra.mxu0 %v3917
    %3959 = vmatprep.subr.mxu0 %v3922
    %3960 = vmatpush1.msra.mxu0 %v3921
    %3961 = vmatprep.subr.mxu0 0.0
    %3962 = vmatpush1.msra.mxu0 0.0
    %3963 = vmatprep.subr.mxu0 0.0
    %3964 = vmatpush1.msra.mxu0 0.0
    %3965 = vmatprep.subr.mxu0 0.0
    %3966 = vmatpush1.msra.mxu0 0.0
    %3967 = vmatprep.subr.mxu0 0.0
    %3968 = vmatpush1.msra.mxu0 0.0
    %3969 = vmatprep.subr.mxu0 0.0
    %3970 = vmatpush1.msra.mxu0 0.0
    %3971 = vmatprep.subr.mxu0 0.0
    %3972 = vmatpush1.msra.mxu0 0.0
    %3973 = vmatprep.subr.mxu0 0.0
    %3974 = vmatpush1.msra.mxu0 0.0
    %3975 = vmatprep.subr.mxu0 0.0
    %3976 = vmatpush1.msra.mxu0 0.0
    %3977 = vmatprep.subr.mxu0 0.0
    %3978 = vmatpush1.msra.mxu0 0.0
    %3979 = vmatprep.subr.mxu0 0.0
    %3980 = vmatpush1.msra.mxu0 0.0
    %3981 = vmatprep.subr.mxu0 0.0
    %3982 = vmatpush1.msra.mxu0 0.0
    %3983 = vmatprep.subr.mxu0 0.0
    %3984 = vmatpush1.msra.mxu0 0.0
    %3985 = vmatprep.subr.mxu0 0.0
    %3986 = vmatpush1.msra.mxu0 0.0
    %3987 = vmatprep.subr.mxu0 0.0
    %3988 = vmatpush1.msra.mxu0 0.0
    %3989 = vmatprep.subr.mxu0 0.0
    %3990 = vmatpush1.msra.mxu0 0.0
    %3991 = vmatprep.subr.mxu0 0.0
    %3992 = vmatpush1.msra.mxu0 0.0
    %3993 = vmatprep.mubr.f32.mxu0 0.0
    %3994 = vmatmul.mubr.f32.gmra.mrb[0].mxu0 0.0
    %v3995 = vpop.f32.mrb[0].mxu0
    %v3996 = vadd.f32 0.0, %v3995
    %v3997 = vpop.f32.mrb[0].mxu0
    %v3998 = vadd.f32 0.0, %v3997
    %3999 = vdwg.mxu0
    %4000 = vmatprep.subr.mxu0 %v3864
    %4001 = vmatpush1.msra.mxu0 %v3863
    %4002 = vmatprep.subr.mxu0 %v3868
    %4003 = vmatpush1.msra.mxu0 %v3867
    %4004 = vmatprep.subr.mxu0 %v3872
    %4005 = vmatpush1.msra.mxu0 %v3871
    %4006 = vmatprep.subr.mxu0 %v3876
    %4007 = vmatpush1.msra.mxu0 %v3875
    %4008 = vmatprep.subr.mxu0 %v3880
    %4009 = vmatpush1.msra.mxu0 %v3879
    %4010 = vmatprep.subr.mxu0 %v3884
    %4011 = vmatpush1.msra.mxu0 %v3883
    %4012 = vmatprep.subr.mxu0 %v3888
    %4013 = vmatpush1.msra.mxu0 %v3887
    %4014 = vmatprep.subr.mxu0 %v3892
    %4015 = vmatpush1.msra.mxu0 %v3891
    %4016 = vmatprep.subr.mxu0 %v3896
    %4017 = vmatpush1.msra.mxu0 %v3895
    %4018 = vmatprep.subr.mxu0 %v3900
    %4019 = vmatpush1.msra.mxu0 %v3899
    %4020 = vmatprep.subr.mxu0 %v3904
    %4021 = vmatpush1.msra.mxu0 %v3903
    %4022 = vmatprep.subr.mxu0 %v3908
    %4023 = vmatpush1.msra.mxu0 %v3907
    %4024 = vmatprep.subr.mxu0 %v3912
    %4025 = vmatpush1.msra.mxu0 %v3911
    %4026 = vmatprep.subr.mxu0 %v3916
    %4027 = vmatpush1.msra.mxu0 %v3915
    %4028 = vmatprep.subr.mxu0 %v3920
    %4029 = vmatpush1.msra.mxu0 %v3919
    %4030 = vmatprep.subr.mxu0 %v3924
    %4031 = vmatpush1.msra.mxu0 %v3923
    %4032 = vmatprep.subr.mxu0 0.0
    %4033 = vmatpush1.msra.mxu0 0.0
    %4034 = vmatprep.subr.mxu0 0.0
    %4035 = vmatpush1.msra.mxu0 0.0
    %4036 = vmatprep.subr.mxu0 0.0
    %4037 = vmatpush1.msra.mxu0 0.0
    %4038 = vmatprep.subr.mxu0 0.0
    %4039 = vmatpush1.msra.mxu0 0.0
    %4040 = vmatprep.subr.mxu0 0.0
    %4041 = vmatpush1.msra.mxu0 0.0
    %4042 = vmatprep.subr.mxu0 0.0
    %4043 = vmatpush1.msra.mxu0 0.0
    %4044 = vmatprep.subr.mxu0 0.0
    %4045 = vmatpush1.msra.mxu0 0.0
    %4046 = vmatprep.subr.mxu0 0.0
    %4047 = vmatpush1.msra.mxu0 0.0
    %4048 = vmatprep.subr.mxu0 0.0
    %4049 = vmatpush1.msra.mxu0 0.0
    %4050 = vmatprep.subr.mxu0 0.0
    %4051 = vmatpush1.msra.mxu0 0.0
    %4052 = vmatprep.subr.mxu0 0.0
    %4053 = vmatpush1.msra.mxu0 0.0
    %4054 = vmatprep.subr.mxu0 0.0
    %4055 = vmatpush1.msra.mxu0 0.0
    %4056 = vmatprep.subr.mxu0 0.0
    %4057 = vmatpush1.msra.mxu0 0.0
    %4058 = vmatprep.subr.mxu0 0.0
    %4059 = vmatpush1.msra.mxu0 0.0
    %4060 = vmatprep.subr.mxu0 0.0
    %4061 = vmatpush1.msra.mxu0 0.0
    %4062 = vmatprep.subr.mxu0 0.0
    %4063 = vmatpush1.msra.mxu0 0.0
    %4064 = vmatprep.mubr.f32.mxu0 0.0
    %4065 = vmatmul.mubr.f32.gmra.mrb[0].mxu0 0.0
    %v4066 = vpop.f32.mrb[0].mxu0
    %v4067 = vadd.f32 0.0, %v4066
    %v4068 = vpop.f32.mrb[0].mxu0
    %v4069 = vadd.f32 0.0, %v4068
    %4070 = vdwg.mxu0
    %v4071 = vadd.f32 %v3925, %v3996
    %v4072 = vadd.f32 %v3926, %v3998
    %v4073 = vadd.f32 %v3927, %v4067
    %v4074 = vadd.f32 %v3928, %v4069
    %v4075 = vxor.u32 %v4071, 2147483648
    %v4076 = vmul.f32 %v4075, 1.442695
    %v4077 = vpow.pop %v4076
    %v4078 = vadd.f32 %v4077, 1.0
    %v4079 = vrcp.pop %v4078
    %v4080 = vmul.f32 1.0, %v4079
    %v4081 = vxor.u32 %v4072, 2147483648
    %v4082 = vmul.f32 %v4081, 1.442695
    %v4083 = vpow.pop %v4082
    %v4084 = vadd.f32 %v4083, 1.0
    %v4085 = vrcp.pop %v4084
    %v4086 = vmul.f32 1.0, %v4085
    %v4087 = vtanh.pop %v4073
    %v4088 = vxor.u32 %v4074, 2147483648
    %v4089 = vmul.f32 %v4088, 1.442695
    %v4090 = vpow.pop %v4089
    %v4091 = vadd.f32 %v4090, 1.0
    %v4092 = vrcp.pop %v4091
    %v4093 = vmul.f32 1.0, %v4092
    %v4094 = vmul.f32 %v4086, 0.0
    %v4095 = vmul.f32 %v4080, %v4087
    %v4096 = vadd.f32 %v4094, %v4095
    %v4097 = vtanh.pop %v4096
    %v4098 = vmul.f32 %v4093, %v4097
    %v4099 = vld [vmem:[#allocation3 + $0x20] sm:$0xff]
    %v4100 = vld [vmem:[#allocation3 + $0x28] sm:$0xff]
    %v4101 = vld [vmem:[#allocation3 + $0x30] sm:$0xff]
    %v4102 = vld [vmem:[#allocation3 + $0x38] sm:$0xff]
    %4103 = vmatprep.subr.mxu0 %v3862
    %4104 = vmatpush1.msra.mxu0 %v3861
    %4105 = vmatprep.subr.mxu0 %v3866
    %4106 = vmatpush1.msra.mxu0 %v3865
    %4107 = vmatprep.subr.mxu0 %v3870
    %4108 = vmatpush1.msra.mxu0 %v3869
    %4109 = vmatprep.subr.mxu0 %v3874
    %4110 = vmatpush1.msra.mxu0 %v3873
    %4111 = vmatprep.subr.mxu0 %v3878
    %4112 = vmatpush1.msra.mxu0 %v3877
    %4113 = vmatprep.subr.mxu0 %v3882
    %4114 = vmatpush1.msra.mxu0 %v3881
    %4115 = vmatprep.subr.mxu0 %v3886
    %4116 = vmatpush1.msra.mxu0 %v3885
    %4117 = vmatprep.subr.mxu0 %v3890
    %4118 = vmatpush1.msra.mxu0 %v3889
    %4119 = vmatprep.subr.mxu0 %v3894
    %4120 = vmatpush1.msra.mxu0 %v3893
    %4121 = vmatprep.subr.mxu0 %v3898
    %4122 = vmatpush1.msra.mxu0 %v3897
    %4123 = vmatprep.subr.mxu0 %v3902
    %4124 = vmatpush1.msra.mxu0 %v3901
    %4125 = vmatprep.subr.mxu0 %v3906
    %4126 = vmatpush1.msra.mxu0 %v3905
    %4127 = vmatprep.subr.mxu0 %v3910
    %4128 = vmatpush1.msra.mxu0 %v3909
    %4129 = vmatprep.subr.mxu0 %v3914
    %4130 = vmatpush1.msra.mxu0 %v3913
    %4131 = vmatprep.subr.mxu0 %v3918
    %4132 = vmatpush1.msra.mxu0 %v3917
    %4133 = vmatprep.subr.mxu0 %v3922
    %4134 = vmatpush1.msra.mxu0 %v3921
    %4135 = vmatprep.subr.mxu0 0.0
    %4136 = vmatpush1.msra.mxu0 0.0
    %4137 = vmatprep.subr.mxu0 0.0
    %4138 = vmatpush1.msra.mxu0 0.0
    %4139 = vmatprep.subr.mxu0 0.0
    %4140 = vmatpush1.msra.mxu0 0.0
    %4141 = vmatprep.subr.mxu0 0.0
    %4142 = vmatpush1.msra.mxu0 0.0
    %4143 = vmatprep.subr.mxu0 0.0
    %4144 = vmatpush1.msra.mxu0 0.0
    %4145 = vmatprep.subr.mxu0 0.0
    %4146 = vmatpush1.msra.mxu0 0.0
    %4147 = vmatprep.subr.mxu0 0.0
    %4148 = vmatpush1.msra.mxu0 0.0
    %4149 = vmatprep.subr.mxu0 0.0
    %4150 = vmatpush1.msra.mxu0 0.0
    %4151 = vmatprep.subr.mxu0 0.0
    %4152 = vmatpush1.msra.mxu0 0.0
    %4153 = vmatprep.subr.mxu0 0.0
    %4154 = vmatpush1.msra.mxu0 0.0
    %4155 = vmatprep.subr.mxu0 0.0
    %4156 = vmatpush1.msra.mxu0 0.0
    %4157 = vmatprep.subr.mxu0 0.0
    %4158 = vmatpush1.msra.mxu0 0.0
    %4159 = vmatprep.subr.mxu0 0.0
    %4160 = vmatpush1.msra.mxu0 0.0
    %4161 = vmatprep.subr.mxu0 0.0
    %4162 = vmatpush1.msra.mxu0 0.0
    %4163 = vmatprep.subr.mxu0 0.0
    %4164 = vmatpush1.msra.mxu0 0.0
    %4165 = vmatprep.subr.mxu0 0.0
    %4166 = vmatpush1.msra.mxu0 0.0
    %4167 = vmatprep.mubr.f32.mxu0 0.0
    %4168 = vmatmul.mubr.f32.gmra.mrb[0].mxu0 %v4098
    %v4169 = vpop.f32.mrb[0].mxu0
    %v4170 = vadd.f32 0.0, %v4169
    %v4171 = vpop.f32.mrb[0].mxu0
    %v4172 = vadd.f32 0.0, %v4171
    %4173 = vdwg.mxu0
    %4174 = vmatprep.subr.mxu0 %v3864
    %4175 = vmatpush1.msra.mxu0 %v3863
    %4176 = vmatprep.subr.mxu0 %v3868
    %4177 = vmatpush1.msra.mxu0 %v3867
    %4178 = vmatprep.subr.mxu0 %v3872
    %4179 = vmatpush1.msra.mxu0 %v3871
    %4180 = vmatprep.subr.mxu0 %v3876
    %4181 = vmatpush1.msra.mxu0 %v3875
    %4182 = vmatprep.subr.mxu0 %v3880
    %4183 = vmatpush1.msra.mxu0 %v3879
    %4184 = vmatprep.subr.mxu0 %v3884
    %4185 = vmatpush1.msra.mxu0 %v3883
    %4186 = vmatprep.subr.mxu0 %v3888
    %4187 = vmatpush1.msra.mxu0 %v3887
    %4188 = vmatprep.subr.mxu0 %v3892
    %4189 = vmatpush1.msra.mxu0 %v3891
    %4190 = vmatprep.subr.mxu0 %v3896
    %4191 = vmatpush1.msra.mxu0 %v3895
    %4192 = vmatprep.subr.mxu0 %v3900
    %4193 = vmatpush1.msra.mxu0 %v3899
    %4194 = vmatprep.subr.mxu0 %v3904
    %4195 = vmatpush1.msra.mxu0 %v3903
    %4196 = vmatprep.subr.mxu0 %v3908
    %4197 = vmatpush1.msra.mxu0 %v3907
    %4198 = vmatprep.subr.mxu0 %v3912
    %4199 = vmatpush1.msra.mxu0 %v3911
    %4200 = vmatprep.subr.mxu0 %v3916
    %4201 = vmatpush1.msra.mxu0 %v3915
    %4202 = vmatprep.subr.mxu0 %v3920
    %4203 = vmatpush1.msra.mxu0 %v3919
    %4204 = vmatprep.subr.mxu0 %v3924
    %4205 = vmatpush1.msra.mxu0 %v3923
    %4206 = vmatprep.subr.mxu0 0.0
    %4207 = vmatpush1.msra.mxu0 0.0
    %4208 = vmatprep.subr.mxu0 0.0
    %4209 = vmatpush1.msra.mxu0 0.0
    %4210 = vmatprep.subr.mxu0 0.0
    %4211 = vmatpush1.msra.mxu0 0.0
    %4212 = vmatprep.subr.mxu0 0.0
    %4213 = vmatpush1.msra.mxu0 0.0
    %4214 = vmatprep.subr.mxu0 0.0
    %4215 = vmatpush1.msra.mxu0 0.0
    %4216 = vmatprep.subr.mxu0 0.0
    %4217 = vmatpush1.msra.mxu0 0.0
    %4218 = vmatprep.subr.mxu0 0.0
    %4219 = vmatpush1.msra.mxu0 0.0
    %4220 = vmatprep.subr.mxu0 0.0
    %4221 = vmatpush1.msra.mxu0 0.0
    %4222 = vmatprep.subr.mxu0 0.0
    %4223 = vmatpush1.msra.mxu0 0.0
    %4224 = vmatprep.subr.mxu0 0.0
    %4225 = vmatpush1.msra.mxu0 0.0
    %4226 = vmatprep.subr.mxu0 0.0
    %4227 = vmatpush1.msra.mxu0 0.0
    %4228 = vmatprep.subr.mxu0 0.0
    %4229 = vmatpush1.msra.mxu0 0.0
    %4230 = vmatprep.subr.mxu0 0.0
    %4231 = vmatpush1.msra.mxu0 0.0
    %4232 = vmatprep.subr.mxu0 0.0
    %4233 = vmatpush1.msra.mxu0 0.0
    %4234 = vmatprep.subr.mxu0 0.0
    %4235 = vmatpush1.msra.mxu0 0.0
    %4236 = vmatprep.subr.mxu0 0.0
    %4237 = vmatpush1.msra.mxu0 0.0
    %4238 = vmatprep.mubr.f32.mxu0 0.0
    %4239 = vmatmul.mubr.f32.gmra.mrb[0].mxu0 %v4098
    %v4240 = vpop.f32.mrb[0].mxu0
    %v4241 = vadd.f32 0.0, %v4240
    %v4242 = vpop.f32.mrb[0].mxu0
    %v4243 = vadd.f32 0.0, %v4242
    %4244 = vdwg.mxu0
    %v4245 = vadd.f32 %v4099, %v4170
    %v4246 = vadd.f32 %v4100, %v4172
    %v4247 = vadd.f32 %v4101, %v4241
    %v4248 = vadd.f32 %v4102, %v4243
    %v4249 = vxor.u32 %v4245, 2147483648
    %v4250 = vmul.f32 %v4249, 1.442695
    %v4251 = vpow.pop %v4250
    %v4252 = vadd.f32 %v4251, 1.0
    %v4253 = vrcp.pop %v4252
    %v4254 = vmul.f32 1.0, %v4253
    %v4255 = vxor.u32 %v4246, 2147483648
    %v4256 = vmul.f32 %v4255, 1.442695
    %v4257 = vpow.pop %v4256
    %v4258 = vadd.f32 %v4257, 1.0
    %v4259 = vrcp.pop %v4258
    %v4260 = vmul.f32 1.0, %v4259
    %v4261 = vtanh.pop %v4247
    %v4262 = vxor.u32 %v4248, 2147483648
    %v4263 = vmul.f32 %v4262, 1.442695
    %v4264 = vpow.pop %v4263
    %v4265 = vadd.f32 %v4264, 1.0
    %v4266 = vrcp.pop %v4265
    %v4267 = vmul.f32 1.0, %v4266
    %v4268 = vmul.f32 %v4260, %v4096
    %v4269 = vmul.f32 %v4254, %v4261
    %v4270 = vadd.f32 %v4268, %v4269
    %v4271 = vtanh.pop %v4270
    %v4272 = vmul.f32 %v4267, %v4271
    %v4273 = vld [vmem:[#allocation3 + $0x40] sm:$0xff]
    %v4274 = vld [vmem:[#allocation3 + $0x48] sm:$0xff]
    %v4275 = vld [vmem:[#allocation3 + $0x50] sm:$0xff]
    %v4276 = vld [vmem:[#allocation3 + $0x58] sm:$0xff]
    %4277 = vmatprep.subr.mxu0 %v3862
    %4278 = vmatpush1.msra.mxu0 %v3861
    %4279 = vmatprep.subr.mxu0 %v3866
    %4280 = vmatpush1.msra.mxu0 %v3865
    %4281 = vmatprep.subr.mxu0 %v3870
    %4282 = vmatpush1.msra.mxu0 %v3869
    %4283 = vmatprep.subr.mxu0 %v3874
    %4284 = vmatpush1.msra.mxu0 %v3873
    %4285 = vmatprep.subr.mxu0 %v3878
    %4286 = vmatpush1.msra.mxu0 %v3877
    %4287 = vmatprep.subr.mxu0 %v3882
    %4288 = vmatpush1.msra.mxu0 %v3881
    %4289 = vmatprep.subr.mxu0 %v3886
    %4290 = vmatpush1.msra.mxu0 %v3885
    %4291 = vmatprep.subr.mxu0 %v3890
    %4292 = vmatpush1.msra.mxu0 %v3889
    %4293 = vmatprep.subr.mxu0 %v3894
    %4294 = vmatpush1.msra.mxu0 %v3893
    %4295 = vmatprep.subr.mxu0 %v3898
    %4296 = vmatpush1.msra.mxu0 %v3897
    %4297 = vmatprep.subr.mxu0 %v3902
    %4298 = vmatpush1.msra.mxu0 %v3901
    %4299 = vmatprep.subr.mxu0 %v3906
    %4300 = vmatpush1.msra.mxu0 %v3905
    %4301 = vmatprep.subr.mxu0 %v3910
    %4302 = vmatpush1.msra.mxu0 %v3909
    %4303 = vmatprep.subr.mxu0 %v3914
    %4304 = vmatpush1.msra.mxu0 %v3913
    %4305 = vmatprep.subr.mxu0 %v3918
    %4306 = vmatpush1.msra.mxu0 %v3917
    %4307 = vmatprep.subr.mxu0 %v3922
    %4308 = vmatpush1.msra.mxu0 %v3921
    %4309 = vmatprep.subr.mxu0 0.0
    %4310 = vmatpush1.msra.mxu0 0.0
    %4311 = vmatprep.subr.mxu0 0.0
    %4312 = vmatpush1.msra.mxu0 0.0
    %4313 = vmatprep.subr.mxu0 0.0
    %4314 = vmatpush1.msra.mxu0 0.0
    %4315 = vmatprep.subr.mxu0 0.0
    %4316 = vmatpush1.msra.mxu0 0.0
    %4317 = vmatprep.subr.mxu0 0.0
    %4318 = vmatpush1.msra.mxu0 0.0
    %4319 = vmatprep.subr.mxu0 0.0
    %4320 = vmatpush1.msra.mxu0 0.0
    %4321 = vmatprep.subr.mxu0 0.0
    %4322 = vmatpush1.msra.mxu0 0.0
    %4323 = vmatprep.subr.mxu0 0.0
    %4324 = vmatpush1.msra.mxu0 0.0
    %4325 = vmatprep.subr.mxu0 0.0
    %4326 = vmatpush1.msra.mxu0 0.0
    %4327 = vmatprep.subr.mxu0 0.0
    %4328 = vmatpush1.msra.mxu0 0.0
    %4329 = vmatprep.subr.mxu0 0.0
    %4330 = vmatpush1.msra.mxu0 0.0
    %4331 = vmatprep.subr.mxu0 0.0
    %4332 = vmatpush1.msra.mxu0 0.0
    %4333 = vmatprep.subr.mxu0 0.0
    %4334 = vmatpush1.msra.mxu0 0.0
    %4335 = vmatprep.subr.mxu0 0.0
    %4336 = vmatpush1.msra.mxu0 0.0
    %4337 = vmatprep.subr.mxu0 0.0
    %4338 = vmatpush1.msra.mxu0 0.0
    %4339 = vmatprep.subr.mxu0 0.0
    %4340 = vmatpush1.msra.mxu0 0.0
    %4341 = vmatprep.mubr.f32.mxu0 0.0
    %4342 = vmatmul.mubr.f32.gmra.mrb[0].mxu0 %v4272
    %v4343 = vpop.f32.mrb[0].mxu0
    %v4344 = vadd.f32 0.0, %v4343
    %v4345 = vpop.f32.mrb[0].mxu0
    %v4346 = vadd.f32 0.0, %v4345
    %4347 = vdwg.mxu0
    %4348 = vmatprep.subr.mxu0 %v3864
    %4349 = vmatpush1.msra.mxu0 %v3863
    %4350 = vmatprep.subr.mxu0 %v3868
    %4351 = vmatpush1.msra.mxu0 %v3867
    %4352 = vmatprep.subr.mxu0 %v3872
    %4353 = vmatpush1.msra.mxu0 %v3871
    %4354 = vmatprep.subr.mxu0 %v3876
    %4355 = vmatpush1.msra.mxu0 %v3875
    %4356 = vmatprep.subr.mxu0 %v3880
    %4357 = vmatpush1.msra.mxu0 %v3879
    %4358 = vmatprep.subr.mxu0 %v3884
    %4359 = vmatpush1.msra.mxu0 %v3883
    %4360 = vmatprep.subr.mxu0 %v3888
    %4361 = vmatpush1.msra.mxu0 %v3887
    %4362 = vmatprep.subr.mxu0 %v3892
    %4363 = vmatpush1.msra.mxu0 %v3891
    %4364 = vmatprep.subr.mxu0 %v3896
    %4365 = vmatpush1.msra.mxu0 %v3895
    %4366 = vmatprep.subr.mxu0 %v3900
    %4367 = vmatpush1.msra.mxu0 %v3899
    %4368 = vmatprep.subr.mxu0 %v3904
    %4369 = vmatpush1.msra.mxu0 %v3903
    %4370 = vmatprep.subr.mxu0 %v3908
    %4371 = vmatpush1.msra.mxu0 %v3907
    %4372 = vmatprep.subr.mxu0 %v3912
    %4373 = vmatpush1.msra.mxu0 %v3911
    %4374 = vmatprep.subr.mxu0 %v3916
    %4375 = vmatpush1.msra.mxu0 %v3915
    %4376 = vmatprep.subr.mxu0 %v3920
    %4377 = vmatpush1.msra.mxu0 %v3919
    %4378 = vmatprep.subr.mxu0 %v3924
    %4379 = vmatpush1.msra.mxu0 %v3923
    %4380 = vmatprep.subr.mxu0 0.0
    %4381 = vmatpush1.msra.mxu0 0.0
    %4382 = vmatprep.subr.mxu0 0.0
    %4383 = vmatpush1.msra.mxu0 0.0
    %4384 = vmatprep.subr.mxu0 0.0
    %4385 = vmatpush1.msra.mxu0 0.0
    %4386 = vmatprep.subr.mxu0 0.0
    %4387 = vmatpush1.msra.mxu0 0.0
    %4388 = vmatprep.subr.mxu0 0.0
    %4389 = vmatpush1.msra.mxu0 0.0
    %4390 = vmatprep.subr.mxu0 0.0
    %4391 = vmatpush1.msra.mxu0 0.0
    %4392 = vmatprep.subr.mxu0 0.0
    %4393 = vmatpush1.msra.mxu0 0.0
    %4394 = vmatprep.subr.mxu0 0.0
    %4395 = vmatpush1.msra.mxu0 0.0
    %4396 = vmatprep.subr.mxu0 0.0
    %4397 = vmatpush1.msra.mxu0 0.0
    %4398 = vmatprep.subr.mxu0 0.0
    %4399 = vmatpush1.msra.mxu0 0.0
    %4400 = vmatprep.subr.mxu0 0.0
    %4401 = vmatpush1.msra.mxu0 0.0
    %4402 = vmatprep.subr.mxu0 0.0
    %4403 = vmatpush1.msra.mxu0 0.0
    %4404 = vmatprep.subr.mxu0 0.0
    %4405 = vmatpush1.msra.mxu0 0.0
    %4406 = vmatprep.subr.mxu0 0.0
    %4407 = vmatpush1.msra.mxu0 0.0
    %4408 = vmatprep.subr.mxu0 0.0
    %4409 = vmatpush1.msra.mxu0 0.0
    %4410 = vmatprep.subr.mxu0 0.0
    %4411 = vmatpush1.msra.mxu0 0.0
    %4412 = vmatprep.mubr.f32.mxu0 0.0
    %4413 = vmatmul.mubr.f32.gmra.mrb[0].mxu0 %v4272
    %v4414 = vpop.f32.mrb[0].mxu0
    %v4415 = vadd.f32 0.0, %v4414
    %v4416 = vpop.f32.mrb[0].mxu0
    %v4417 = vadd.f32 0.0, %v4416
    %4418 = vdwg.mxu0
    %v4419 = vadd.f32 %v4273, %v4344
    %v4420 = vadd.f32 %v4274, %v4346
    %v4421 = vadd.f32 %v4275, %v4415
    %v4422 = vadd.f32 %v4276, %v4417
    %v4423 = vxor.u32 %v4419, 2147483648
    %v4424 = vmul.f32 %v4423, 1.442695
    %v4425 = vpow.pop %v4424
    %v4426 = vadd.f32 %v4425, 1.0
    %v4427 = vrcp.pop %v4426
    %v4428 = vmul.f32 1.0, %v4427
    %v4429 = vxor.u32 %v4420, 2147483648
    %v4430 = vmul.f32 %v4429, 1.442695
    %v4431 = vpow.pop %v4430
    %v4432 = vadd.f32 %v4431, 1.0
    %v4433 = vrcp.pop %v4432
    %v4434 = vmul.f32 1.0, %v4433
    %v4435 = vtanh.pop %v4421
    %v4436 = vxor.u32 %v4422, 2147483648
    %v4437 = vmul.f32 %v4436, 1.442695
    %v4438 = vpow.pop %v4437
    %v4439 = vadd.f32 %v4438, 1.0
    %v4440 = vrcp.pop %v4439
    %v4441 = vmul.f32 1.0, %v4440
    %v4442 = vmul.f32 %v4434, %v4270
    %v4443 = vmul.f32 %v4428, %v4435
    %v4444 = vadd.f32 %v4442, %v4443
    %v4445 = vtanh.pop %v4444
    %v4446 = vmul.f32 %v4441, %v4445
    %v4447 = vld [vmem:[#allocation3 + $0x60] sm:$0xff]
    %v4448 = vld [vmem:[#allocation3 + $0x68] sm:$0xff]
    %v4449 = vld [vmem:[#allocation3 + $0x70] sm:$0xff]
    %v4450 = vld [vmem:[#allocation3 + $0x78] sm:$0xff]
    %4451 = vmatprep.subr.mxu0 %v3862
    %4452 = vmatpush1.msra.mxu0 %v3861
    %4453 = vmatprep.subr.mxu0 %v3866
    %4454 = vmatpush1.msra.mxu0 %v3865
    %4455 = vmatprep.subr.mxu0 %v3870
    %4456 = vmatpush1.msra.mxu0 %v3869
    %4457 = vmatprep.subr.mxu0 %v3874
    %4458 = vmatpush1.msra.mxu0 %v3873
    %4459 = vmatprep.subr.mxu0 %v3878
    %4460 = vmatpush1.msra.mxu0 %v3877
    %4461 = vmatprep.subr.mxu0 %v3882
    %4462 = vmatpush1.msra.mxu0 %v3881
    %4463 = vmatprep.subr.mxu0 %v3886
    %4464 = vmatpush1.msra.mxu0 %v3885
    %4465 = vmatprep.subr.mxu0 %v3890
    %4466 = vmatpush1.msra.mxu0 %v3889
    %4467 = vmatprep.subr.mxu0 %v3894
    %4468 = vmatpush1.msra.mxu0 %v3893
    %4469 = vmatprep.subr.mxu0 %v3898
    %4470 = vmatpush1.msra.mxu0 %v3897
    %4471 = vmatprep.subr.mxu0 %v3902
    %4472 = vmatpush1.msra.mxu0 %v3901
    %4473 = vmatprep.subr.mxu0 %v3906
    %4474 = vmatpush1.msra.mxu0 %v3905
    %4475 = vmatprep.subr.mxu0 %v3910
    %4476 = vmatpush1.msra.mxu0 %v3909
    %4477 = vmatprep.subr.mxu0 %v3914
    %4478 = vmatpush1.msra.mxu0 %v3913
    %4479 = vmatprep.subr.mxu0 %v3918
    %4480 = vmatpush1.msra.mxu0 %v3917
    %4481 = vmatprep.subr.mxu0 %v3922
    %4482 = vmatpush1.msra.mxu0 %v3921
    %4483 = vmatprep.subr.mxu0 0.0
    %4484 = vmatpush1.msra.mxu0 0.0
    %4485 = vmatprep.subr.mxu0 0.0
    %4486 = vmatpush1.msra.mxu0 0.0
    %4487 = vmatprep.subr.mxu0 0.0
    %4488 = vmatpush1.msra.mxu0 0.0
    %4489 = vmatprep.subr.mxu0 0.0
    %4490 = vmatpush1.msra.mxu0 0.0
    %4491 = vmatprep.subr.mxu0 0.0
    %4492 = vmatpush1.msra.mxu0 0.0
    %4493 = vmatprep.subr.mxu0 0.0
    %4494 = vmatpush1.msra.mxu0 0.0
    %4495 = vmatprep.subr.mxu0 0.0
    %4496 = vmatpush1.msra.mxu0 0.0
    %4497 = vmatprep.subr.mxu0 0.0
    %4498 = vmatpush1.msra.mxu0 0.0
    %4499 = vmatprep.subr.mxu0 0.0
    %4500 = vmatpush1.msra.mxu0 0.0
    %4501 = vmatprep.subr.mxu0 0.0
    %4502 = vmatpush1.msra.mxu0 0.0
    %4503 = vmatprep.subr.mxu0 0.0
    %4504 = vmatpush1.msra.mxu0 0.0
    %4505 = vmatprep.subr.mxu0 0.0
    %4506 = vmatpush1.msra.mxu0 0.0
    %4507 = vmatprep.subr.mxu0 0.0
    %4508 = vmatpush1.msra.mxu0 0.0
    %4509 = vmatprep.subr.mxu0 0.0
    %4510 = vmatpush1.msra.mxu0 0.0
    %4511 = vmatprep.subr.mxu0 0.0
    %4512 = vmatpush1.msra.mxu0 0.0
    %4513 = vmatprep.subr.mxu0 0.0
    %4514 = vmatpush1.msra.mxu0 0.0
    %4515 = vmatprep.mubr.f32.mxu0 0.0
    %4516 = vmatmul.mubr.f32.gmra.mrb[0].mxu0 %v4446
    %v4517 = vpop.f32.mrb[0].mxu0
    %v4518 = vadd.f32 0.0, %v4517
    %v4519 = vpop.f32.mrb[0].mxu0
    %v4520 = vadd.f32 0.0, %v4519
    %4521 = vdwg.mxu0
    %4522 = vmatprep.subr.mxu0 %v3864
    %4523 = vmatpush1.msra.mxu0 %v3863
    %4524 = vmatprep.subr.mxu0 %v3868
    %4525 = vmatpush1.msra.mxu0 %v3867
    %4526 = vmatprep.subr.mxu0 %v3872
    %4527 = vmatpush1.msra.mxu0 %v3871
    %4528 = vmatprep.subr.mxu0 %v3876
    %4529 = vmatpush1.msra.mxu0 %v3875
    %4530 = vmatprep.subr.mxu0 %v3880
    %4531 = vmatpush1.msra.mxu0 %v3879
    %4532 = vmatprep.subr.mxu0 %v3884
    %4533 = vmatpush1.msra.mxu0 %v3883
    %4534 = vmatprep.subr.mxu0 %v3888
    %4535 = vmatpush1.msra.mxu0 %v3887
    %4536 = vmatprep.subr.mxu0 %v3892
    %4537 = vmatpush1.msra.mxu0 %v3891
    %4538 = vmatprep.subr.mxu0 %v3896
    %4539 = vmatpush1.msra.mxu0 %v3895
    %4540 = vmatprep.subr.mxu0 %v3900
    %4541 = vmatpush1.msra.mxu0 %v3899
    %4542 = vmatprep.subr.mxu0 %v3904
    %4543 = vmatpush1.msra.mxu0 %v3903
    %4544 = vmatprep.subr.mxu0 %v3908
    %4545 = vmatpush1.msra.mxu0 %v3907
    %4546 = vmatprep.subr.mxu0 %v3912
    %4547 = vmatpush1.msra.mxu0 %v3911
    %4548 = vmatprep.subr.mxu0 %v3916
    %4549 = vmatpush1.msra.mxu0 %v3915
    %4550 = vmatprep.subr.mxu0 %v3920
    %4551 = vmatpush1.msra.mxu0 %v3919
    %4552 = vmatprep.subr.mxu0 %v3924
    %4553 = vmatpush1.msra.mxu0 %v3923
    %4554 = vmatprep.subr.mxu0 0.0
    %4555 = vmatpush1.msra.mxu0 0.0
    %4556 = vmatprep.subr.mxu0 0.0
    %4557 = vmatpush1.msra.mxu0 0.0
    %4558 = vmatprep.subr.mxu0 0.0
    %4559 = vmatpush1.msra.mxu0 0.0
    %4560 = vmatprep.subr.mxu0 0.0
    %4561 = vmatpush1.msra.mxu0 0.0
    %4562 = vmatprep.subr.mxu0 0.0
    %4563 = vmatpush1.msra.mxu0 0.0
    %4564 = vmatprep.subr.mxu0 0.0
    %4565 = vmatpush1.msra.mxu0 0.0
    %4566 = vmatprep.subr.mxu0 0.0
    %4567 = vmatpush1.msra.mxu0 0.0
    %4568 = vmatprep.subr.mxu0 0.0
    %4569 = vmatpush1.msra.mxu0 0.0
    %4570 = vmatprep.subr.mxu0 0.0
    %4571 = vmatpush1.msra.mxu0 0.0
    %4572 = vmatprep.subr.mxu0 0.0
    %4573 = vmatpush1.msra.mxu0 0.0
    %4574 = vmatprep.subr.mxu0 0.0
    %4575 = vmatpush1.msra.mxu0 0.0
    %4576 = vmatprep.subr.mxu0 0.0
    %4577 = vmatpush1.msra.mxu0 0.0
    %4578 = vmatprep.subr.mxu0 0.0
    %4579 = vmatpush1.msra.mxu0 0.0
    %4580 = vmatprep.subr.mxu0 0.0
    %4581 = vmatpush1.msra.mxu0 0.0
    %4582 = vmatprep.subr.mxu0 0.0
    %4583 = vmatpush1.msra.mxu0 0.0
    %4584 = vmatprep.subr.mxu0 0.0
    %4585 = vmatpush1.msra.mxu0 0.0
    %4586 = vmatprep.mubr.f32.mxu0 0.0
    %4587 = vmatmul.mubr.f32.gmra.mrb[0].mxu0 %v4446
    %v4588 = vpop.f32.mrb[0].mxu0
    %v4589 = vadd.f32 0.0, %v4588
    %v4590 = vpop.f32.mrb[0].mxu0
    %v4591 = vadd.f32 0.0, %v4590
    %4592 = vdwg.mxu0
    %v4593 = vadd.f32 %v4447, %v4518
    %v4594 = vadd.f32 %v4448, %v4520
    %v4595 = vadd.f32 %v4449, %v4589
    %v4596 = vadd.f32 %v4450, %v4591
    %v4597 = vxor.u32 %v4593, 2147483648
    %v4598 = vmul.f32 %v4597, 1.442695
    %v4599 = vpow.pop %v4598
    %v4600 = vadd.f32 %v4599, 1.0
    %v4601 = vrcp.pop %v4600
    %v4602 = vmul.f32 1.0, %v4601
    %v4603 = vxor.u32 %v4594, 2147483648
    %v4604 = vmul.f32 %v4603, 1.442695
    %v4605 = vpow.pop %v4604
    %v4606 = vadd.f32 %v4605, 1.0
    %v4607 = vrcp.pop %v4606
    %v4608 = vmul.f32 1.0, %v4607
    %v4609 = vtanh.pop %v4595
    %v4610 = vxor.u32 %v4596, 2147483648
    %v4611 = vmul.f32 %v4610, 1.442695
    %v4612 = vpow.pop %v4611
    %v4613 = vadd.f32 %v4612, 1.0
    %v4614 = vrcp.pop %v4613
    %v4615 = vmul.f32 1.0, %v4614
    %v4616 = vmul.f32 %v4608, %v4444
    %v4617 = vmul.f32 %v4602, %v4609
    %v4618 = vadd.f32 %v4616, %v4617
    %v4619 = vtanh.pop %v4618
    %v4620 = vmul.f32 %v4615, %v4619
    %v4621 = vld [vmem:[#allocation3 + $0x80] sm:$0xff]
    %v4622 = vld [vmem:[#allocation3 + $0x88] sm:$0xff]
    %v4623 = vld [vmem:[#allocation3 + $0x90] sm:$0xff]
    %v4624 = vld [vmem:[#allocation3 + $0x98] sm:$0xff]
    %4625 = vmatprep.subr.mxu0 %v3862
    %4626 = vmatpush1.msra.mxu0 %v3861
    %4627 = vmatprep.subr.mxu0 %v3866
    %4628 = vmatpush1.msra.mxu0 %v3865
    %4629 = vmatprep.subr.mxu0 %v3870
    %4630 = vmatpush1.msra.mxu0 %v3869
    %4631 = vmatprep.subr.mxu0 %v3874
    %4632 = vmatpush1.msra.mxu0 %v3873
    %4633 = vmatprep.subr.mxu0 %v3878
    %4634 = vmatpush1.msra.mxu0 %v3877
    %4635 = vmatprep.subr.mxu0 %v3882
    %4636 = vmatpush1.msra.mxu0 %v3881
    %4637 = vmatprep.subr.mxu0 %v3886
    %4638 = vmatpush1.msra.mxu0 %v3885
    %4639 = vmatprep.subr.mxu0 %v3890
    %4640 = vmatpush1.msra.mxu0 %v3889
    %4641 = vmatprep.subr.mxu0 %v3894
    %4642 = vmatpush1.msra.mxu0 %v3893
    %4643 = vmatprep.subr.mxu0 %v3898
    %4644 = vmatpush1.msra.mxu0 %v3897
    %4645 = vmatprep.subr.mxu0 %v3902
    %4646 = vmatpush1.msra.mxu0 %v3901
    %4647 = vmatprep.subr.mxu0 %v3906
    %4648 = vmatpush1.msra.mxu0 %v3905
    %4649 = vmatprep.subr.mxu0 %v3910
    %4650 = vmatpush1.msra.mxu0 %v3909
    %4651 = vmatprep.subr.mxu0 %v3914
    %4652 = vmatpush1.msra.mxu0 %v3913
    %4653 = vmatprep.subr.mxu0 %v3918
    %4654 = vmatpush1.msra.mxu0 %v3917
    %4655 = vmatprep.subr.mxu0 %v3922
    %4656 = vmatpush1.msra.mxu0 %v3921
    %4657 = vmatprep.subr.mxu0 0.0
    %4658 = vmatpush1.msra.mxu0 0.0
    %4659 = vmatprep.subr.mxu0 0.0
    %4660 = vmatpush1.msra.mxu0 0.0
    %4661 = vmatprep.subr.mxu0 0.0
    %4662 = vmatpush1.msra.mxu0 0.0
    %4663 = vmatprep.subr.mxu0 0.0
    %4664 = vmatpush1.msra.mxu0 0.0
    %4665 = vmatprep.subr.mxu0 0.0
    %4666 = vmatpush1.msra.mxu0 0.0
    %4667 = vmatprep.subr.mxu0 0.0
    %4668 = vmatpush1.msra.mxu0 0.0
    %4669 = vmatprep.subr.mxu0 0.0
    %4670 = vmatpush1.msra.mxu0 0.0
    %4671 = vmatprep.subr.mxu0 0.0
    %4672 = vmatpush1.msra.mxu0 0.0
    %4673 = vmatprep.subr.mxu0 0.0
    %4674 = vmatpush1.msra.mxu0 0.0
    %4675 = vmatprep.subr.mxu0 0.0
    %4676 = vmatpush1.msra.mxu0 0.0
    %4677 = vmatprep.subr.mxu0 0.0
    %4678 = vmatpush1.msra.mxu0 0.0
    %4679 = vmatprep.subr.mxu0 0.0
    %4680 = vmatpush1.msra.mxu0 0.0
    %4681 = vmatprep.subr.mxu0 0.0
    %4682 = vmatpush1.msra.mxu0 0.0
    %4683 = vmatprep.subr.mxu0 0.0
    %4684 = vmatpush1.msra.mxu0 0.0
    %4685 = vmatprep.subr.mxu0 0.0
    %4686 = vmatpush1.msra.mxu0 0.0
    %4687 = vmatprep.subr.mxu0 0.0
    %4688 = vmatpush1.msra.mxu0 0.0
    %4689 = vmatprep.mubr.f32.mxu0 0.0
    %4690 = vmatmul.mubr.f32.gmra.mrb[0].mxu0 %v4620
    %v4691 = vpop.f32.mrb[0].mxu0
    %v4692 = vadd.f32 0.0, %v4691
    %v4693 = vpop.f32.mrb[0].mxu0
    %v4694 = vadd.f32 0.0, %v4693
    %4695 = vdwg.mxu0
    %4696 = vmatprep.subr.mxu0 %v3864
    %4697 = vmatpush1.msra.mxu0 %v3863
    %4698 = vmatprep.subr.mxu0 %v3868
    %4699 = vmatpush1.msra.mxu0 %v3867
    %4700 = vmatprep.subr.mxu0 %v3872
    %4701 = vmatpush1.msra.mxu0 %v3871
    %4702 = vmatprep.subr.mxu0 %v3876
    %4703 = vmatpush1.msra.mxu0 %v3875
    %4704 = vmatprep.subr.mxu0 %v3880
    %4705 = vmatpush1.msra.mxu0 %v3879
    %4706 = vmatprep.subr.mxu0 %v3884
    %4707 = vmatpush1.msra.mxu0 %v3883
    %4708 = vmatprep.subr.mxu0 %v3888
    %4709 = vmatpush1.msra.mxu0 %v3887
    %4710 = vmatprep.subr.mxu0 %v3892
    %4711 = vmatpush1.msra.mxu0 %v3891
    %4712 = vmatprep.subr.mxu0 %v3896
    %4713 = vmatpush1.msra.mxu0 %v3895
    %4714 = vmatprep.subr.mxu0 %v3900
    %4715 = vmatpush1.msra.mxu0 %v3899
    %4716 = vmatprep.subr.mxu0 %v3904
    %4717 = vmatpush1.msra.mxu0 %v3903
    %4718 = vmatprep.subr.mxu0 %v3908
    %4719 = vmatpush1.msra.mxu0 %v3907
    %4720 = vmatprep.subr.mxu0 %v3912
    %4721 = vmatpush1.msra.mxu0 %v3911
    %4722 = vmatprep.subr.mxu0 %v3916
    %4723 = vmatpush1.msra.mxu0 %v3915
    %4724 = vmatprep.subr.mxu0 %v3920
    %4725 = vmatpush1.msra.mxu0 %v3919
    %4726 = vmatprep.subr.mxu0 %v3924
    %4727 = vmatpush1.msra.mxu0 %v3923
    %4728 = vmatprep.subr.mxu0 0.0
    %4729 = vmatpush1.msra.mxu0 0.0
    %4730 = vmatprep.subr.mxu0 0.0
    %4731 = vmatpush1.msra.mxu0 0.0
    %4732 = vmatprep.subr.mxu0 0.0
    %4733 = vmatpush1.msra.mxu0 0.0
    %4734 = vmatprep.subr.mxu0 0.0
    %4735 = vmatpush1.msra.mxu0 0.0
    %4736 = vmatprep.subr.mxu0 0.0
    %4737 = vmatpush1.msra.mxu0 0.0
    %4738 = vmatprep.subr.mxu0 0.0
    %4739 = vmatpush1.msra.mxu0 0.0
    %4740 = vmatprep.subr.mxu0 0.0
    %4741 = vmatpush1.msra.mxu0 0.0
    %4742 = vmatprep.subr.mxu0 0.0
    %4743 = vmatpush1.msra.mxu0 0.0
    %4744 = vmatprep.subr.mxu0 0.0
    %4745 = vmatpush1.msra.mxu0 0.0
    %4746 = vmatprep.subr.mxu0 0.0
    %4747 = vmatpush1.msra.mxu0 0.0
    %4748 = vmatprep.subr.mxu0 0.0
    %4749 = vmatpush1.msra.mxu0 0.0
    %4750 = vmatprep.subr.mxu0 0.0
    %4751 = vmatpush1.msra.mxu0 0.0
    %4752 = vmatprep.subr.mxu0 0.0
    %4753 = vmatpush1.msra.mxu0 0.0
    %4754 = vmatprep.subr.mxu0 0.0
    %4755 = vmatpush1.msra.mxu0 0.0
    %4756 = vmatprep.subr.mxu0 0.0
    %4757 = vmatpush1.msra.mxu0 0.0
    %4758 = vmatprep.subr.mxu0 0.0
    %4759 = vmatpush1.msra.mxu0 0.0
    %4760 = vmatprep.mubr.f32.mxu0 0.0
    %4761 = vmatmul.mubr.f32.gmra.mrb[0].mxu0 %v4620
    %v4762 = vpop.f32.mrb[0].mxu0
    %v4763 = vadd.f32 0.0, %v4762
    %v4764 = vpop.f32.mrb[0].mxu0
    %v4765 = vadd.f32 0.0, %v4764
    %4766 = vdwg.mxu0
    %v4767 = vadd.f32 %v4621, %v4692
    %v4768 = vadd.f32 %v4622, %v4694
    %v4769 = vadd.f32 %v4623, %v4763
    %v4770 = vadd.f32 %v4624, %v4765
    %v4771 = vxor.u32 %v4767, 2147483648
    %v4772 = vmul.f32 %v4771, 1.442695
    %v4773 = vpow.pop %v4772
    %v4774 = vadd.f32 %v4773, 1.0
    %v4775 = vrcp.pop %v4774
    %v4776 = vmul.f32 1.0, %v4775
    %v4777 = vxor.u32 %v4768, 2147483648
    %v4778 = vmul.f32 %v4777, 1.442695
    %v4779 = vpow.pop %v4778
    %v4780 = vadd.f32 %v4779, 1.0
    %v4781 = vrcp.pop %v4780
    %v4782 = vmul.f32 1.0, %v4781
    %v4783 = vtanh.pop %v4769
    %v4784 = vxor.u32 %v4770, 2147483648
    %v4785 = vmul.f32 %v4784, 1.442695
    %v4786 = vpow.pop %v4785
    %v4787 = vadd.f32 %v4786, 1.0
    %v4788 = vrcp.pop %v4787
    %v4789 = vmul.f32 1.0, %v4788
    %v4790 = vmul.f32 %v4782, %v4618
    %v4791 = vmul.f32 %v4776, %v4783
    %v4792 = vadd.f32 %v4790, %v4791
    %v4793 = vtanh.pop %v4792
    %v4794 = vmul.f32 %v4789, %v4793
    %v4795 = vld [vmem:[#allocation3 + $0xa0] sm:$0xff]
    %v4796 = vld [vmem:[#allocation3 + $0xa8] sm:$0xff]
    %v4797 = vld [vmem:[#allocation3 + $0xb0] sm:$0xff]
    %v4798 = vld [vmem:[#allocation3 + $0xb8] sm:$0xff]
    %4799 = vmatprep.subr.mxu0 %v3862
    %4800 = vmatpush1.msra.mxu0 %v3861
    %4801 = vmatprep.subr.mxu0 %v3866
    %4802 = vmatpush1.msra.mxu0 %v3865
    %4803 = vmatprep.subr.mxu0 %v3870
    %4804 = vmatpush1.msra.mxu0 %v3869
    %4805 = vmatprep.subr.mxu0 %v3874
    %4806 = vmatpush1.msra.mxu0 %v3873
    %4807 = vmatprep.subr.mxu0 %v3878
    %4808 = vmatpush1.msra.mxu0 %v3877
    %4809 = vmatprep.subr.mxu0 %v3882
    %4810 = vmatpush1.msra.mxu0 %v3881
    %4811 = vmatprep.subr.mxu0 %v3886
    %4812 = vmatpush1.msra.mxu0 %v3885
    %4813 = vmatprep.subr.mxu0 %v3890
    %4814 = vmatpush1.msra.mxu0 %v3889
    %4815 = vmatprep.subr.mxu0 %v3894
    %4816 = vmatpush1.msra.mxu0 %v3893
    %4817 = vmatprep.subr.mxu0 %v3898
    %4818 = vmatpush1.msra.mxu0 %v3897
    %4819 = vmatprep.subr.mxu0 %v3902
    %4820 = vmatpush1.msra.mxu0 %v3901
    %4821 = vmatprep.subr.mxu0 %v3906
    %4822 = vmatpush1.msra.mxu0 %v3905
    %4823 = vmatprep.subr.mxu0 %v3910
    %4824 = vmatpush1.msra.mxu0 %v3909
    %4825 = vmatprep.subr.mxu0 %v3914
    %4826 = vmatpush1.msra.mxu0 %v3913
    %4827 = vmatprep.subr.mxu0 %v3918
    %4828 = vmatpush1.msra.mxu0 %v3917
    %4829 = vmatprep.subr.mxu0 %v3922
    %4830 = vmatpush1.msra.mxu0 %v3921
    %4831 = vmatprep.subr.mxu0 0.0
    %4832 = vmatpush1.msra.mxu0 0.0
    %4833 = vmatprep.subr.mxu0 0.0
    %4834 = vmatpush1.msra.mxu0 0.0
    %4835 = vmatprep.subr.mxu0 0.0
    %4836 = vmatpush1.msra.mxu0 0.0
    %4837 = vmatprep.subr.mxu0 0.0
    %4838 = vmatpush1.msra.mxu0 0.0
    %4839 = vmatprep.subr.mxu0 0.0
    %4840 = vmatpush1.msra.mxu0 0.0
    %4841 = vmatprep.subr.mxu0 0.0
    %4842 = vmatpush1.msra.mxu0 0.0
    %4843 = vmatprep.subr.mxu0 0.0
    %4844 = vmatpush1.msra.mxu0 0.0
    %4845 = vmatprep.subr.mxu0 0.0
    %4846 = vmatpush1.msra.mxu0 0.0
    %4847 = vmatprep.subr.mxu0 0.0
    %4848 = vmatpush1.msra.mxu0 0.0
    %4849 = vmatprep.subr.mxu0 0.0
    %4850 = vmatpush1.msra.mxu0 0.0
    %4851 = vmatprep.subr.mxu0 0.0
    %4852 = vmatpush1.msra.mxu0 0.0
    %4853 = vmatprep.subr.mxu0 0.0
    %4854 = vmatpush1.msra.mxu0 0.0
    %4855 = vmatprep.subr.mxu0 0.0
    %4856 = vmatpush1.msra.mxu0 0.0
    %4857 = vmatprep.subr.mxu0 0.0
    %4858 = vmatpush1.msra.mxu0 0.0
    %4859 = vmatprep.subr.mxu0 0.0
    %4860 = vmatpush1.msra.mxu0 0.0
    %4861 = vmatprep.subr.mxu0 0.0
    %4862 = vmatpush1.msra.mxu0 0.0
    %4863 = vmatprep.mubr.f32.mxu0 0.0
    %4864 = vmatmul.mubr.f32.gmra.mrb[0].mxu0 %v4794
    %v4865 = vpop.f32.mrb[0].mxu0
    %v4866 = vadd.f32 0.0, %v4865
    %v4867 = vpop.f32.mrb[0].mxu0
    %v4868 = vadd.f32 0.0, %v4867
    %4869 = vdwg.mxu0
    %4870 = vmatprep.subr.mxu0 %v3864
    %4871 = vmatpush1.msra.mxu0 %v3863
    %4872 = vmatprep.subr.mxu0 %v3868
    %4873 = vmatpush1.msra.mxu0 %v3867
    %4874 = vmatprep.subr.mxu0 %v3872
    %4875 = vmatpush1.msra.mxu0 %v3871
    %4876 = vmatprep.subr.mxu0 %v3876
    %4877 = vmatpush1.msra.mxu0 %v3875
    %4878 = vmatprep.subr.mxu0 %v3880
    %4879 = vmatpush1.msra.mxu0 %v3879
    %4880 = vmatprep.subr.mxu0 %v3884
    %4881 = vmatpush1.msra.mxu0 %v3883
    %4882 = vmatprep.subr.mxu0 %v3888
    %4883 = vmatpush1.msra.mxu0 %v3887
    %4884 = vmatprep.subr.mxu0 %v3892
    %4885 = vmatpush1.msra.mxu0 %v3891
    %4886 = vmatprep.subr.mxu0 %v3896
    %4887 = vmatpush1.msra.mxu0 %v3895
    %4888 = vmatprep.subr.mxu0 %v3900
    %4889 = vmatpush1.msra.mxu0 %v3899
    %4890 = vmatprep.subr.mxu0 %v3904
    %4891 = vmatpush1.msra.mxu0 %v3903
    %4892 = vmatprep.subr.mxu0 %v3908
    %4893 = vmatpush1.msra.mxu0 %v3907
    %4894 = vmatprep.subr.mxu0 %v3912
    %4895 = vmatpush1.msra.mxu0 %v3911
    %4896 = vmatprep.subr.mxu0 %v3916
    %4897 = vmatpush1.msra.mxu0 %v3915
    %4898 = vmatprep.subr.mxu0 %v3920
    %4899 = vmatpush1.msra.mxu0 %v3919
    %4900 = vmatprep.subr.mxu0 %v3924
    %4901 = vmatpush1.msra.mxu0 %v3923
    %4902 = vmatprep.subr.mxu0 0.0
    %4903 = vmatpush1.msra.mxu0 0.0
    %4904 = vmatprep.subr.mxu0 0.0
    %4905 = vmatpush1.msra.mxu0 0.0
    %4906 = vmatprep.subr.mxu0 0.0
    %4907 = vmatpush1.msra.mxu0 0.0
    %4908 = vmatprep.subr.mxu0 0.0
    %4909 = vmatpush1.msra.mxu0 0.0
    %4910 = vmatprep.subr.mxu0 0.0
    %4911 = vmatpush1.msra.mxu0 0.0
    %4912 = vmatprep.subr.mxu0 0.0
    %4913 = vmatpush1.msra.mxu0 0.0
    %4914 = vmatprep.subr.mxu0 0.0
    %4915 = vmatpush1.msra.mxu0 0.0
    %4916 = vmatprep.subr.mxu0 0.0
    %4917 = vmatpush1.msra.mxu0 0.0
    %4918 = vmatprep.subr.mxu0 0.0
    %4919 = vmatpush1.msra.mxu0 0.0
    %4920 = vmatprep.subr.mxu0 0.0
    %4921 = vmatpush1.msra.mxu0 0.0
    %4922 = vmatprep.subr.mxu0 0.0
    %4923 = vmatpush1.msra.mxu0 0.0
    %4924 = vmatprep.subr.mxu0 0.0
    %4925 = vmatpush1.msra.mxu0 0.0
    %4926 = vmatprep.subr.mxu0 0.0
    %4927 = vmatpush1.msra.mxu0 0.0
    %4928 = vmatprep.subr.mxu0 0.0
    %4929 = vmatpush1.msra.mxu0 0.0
    %4930 = vmatprep.subr.mxu0 0.0
    %4931 = vmatpush1.msra.mxu0 0.0
    %4932 = vmatprep.subr.mxu0 0.0
    %4933 = vmatpush1.msra.mxu0 0.0
    %4934 = vmatprep.mubr.f32.mxu0 0.0
    %4935 = vmatmul.mubr.f32.gmra.mrb[0].mxu0 %v4794
    %v4936 = vpop.f32.mrb[0].mxu0
    %v4937 = vadd.f32 0.0, %v4936
    %v4938 = vpop.f32.mrb[0].mxu0
    %v4939 = vadd.f32 0.0, %v4938
    %4940 = vdwg.mxu0
    %v4941 = vadd.f32 %v4795, %v4866
    %v4942 = vadd.f32 %v4796, %v4868
    %v4943 = vadd.f32 %v4797, %v4937
    %v4944 = vadd.f32 %v4798, %v4939
    %v4945 = vxor.u32 %v4941, 2147483648
    %v4946 = vmul.f32 %v4945, 1.442695
    %v4947 = vpow.pop %v4946
    %v4948 = vadd.f32 %v4947, 1.0
    %v4949 = vrcp.pop %v4948
    %v4950 = vmul.f32 1.0, %v4949
    %v4951 = vxor.u32 %v4942, 2147483648
    %v4952 = vmul.f32 %v4951, 1.442695
    %v4953 = vpow.pop %v4952
    %v4954 = vadd.f32 %v4953, 1.0
    %v4955 = vrcp.pop %v4954
    %v4956 = vmul.f32 1.0, %v4955
    %v4957 = vtanh.pop %v4943
    %v4958 = vxor.u32 %v4944, 2147483648
    %v4959 = vmul.f32 %v4958, 1.442695
    %v4960 = vpow.pop %v4959
    %v4961 = vadd.f32 %v4960, 1.0
    %v4962 = vrcp.pop %v4961
    %v4963 = vmul.f32 1.0, %v4962
    %v4964 = vmul.f32 %v4956, %v4792
    %v4965 = vmul.f32 %v4950, %v4957
    %v4966 = vadd.f32 %v4964, %v4965
    %v4967 = vtanh.pop %v4966
    %v4968 = vmul.f32 %v4963, %v4967
    %4969 = vst [vmem:[#allocation6] sm:$0xff] %v4968
    %v4970 = vld [vmem:[#allocation3 + $0xc0] sm:$0xff]
    %v4971 = vld [vmem:[#allocation3 + $0xc8] sm:$0xff]
    %v4972 = vld [vmem:[#allocation3 + $0xd0] sm:$0xff]
    %v4973 = vld [vmem:[#allocation3 + $0xd8] sm:$0xff]
    %4974 = vmatprep.subr.mxu0 %v3862
    %4975 = vmatpush1.msra.mxu0 %v3861
    %4976 = vmatprep.subr.mxu0 %v3866
    %4977 = vmatpush1.msra.mxu0 %v3865
    %4978 = vmatprep.subr.mxu0 %v3870
    %4979 = vmatpush1.msra.mxu0 %v3869
    %4980 = vmatprep.subr.mxu0 %v3874
    %4981 = vmatpush1.msra.mxu0 %v3873
    %4982 = vmatprep.subr.mxu0 %v3878
    %4983 = vmatpush1.msra.mxu0 %v3877
    %4984 = vmatprep.subr.mxu0 %v3882
    %4985 = vmatpush1.msra.mxu0 %v3881
    %4986 = vmatprep.subr.mxu0 %v3886
    %4987 = vmatpush1.msra.mxu0 %v3885
    %4988 = vmatprep.subr.mxu0 %v3890
    %4989 = vmatpush1.msra.mxu0 %v3889
    %4990 = vmatprep.subr.mxu0 %v3894
    %4991 = vmatpush1.msra.mxu0 %v3893
    %4992 = vmatprep.subr.mxu0 %v3898
    %4993 = vmatpush1.msra.mxu0 %v3897
    %4994 = vmatprep.subr.mxu0 %v3902
    %4995 = vmatpush1.msra.mxu0 %v3901
    %4996 = vmatprep.subr.mxu0 %v3906
    %4997 = vmatpush1.msra.mxu0 %v3905
    %4998 = vmatprep.subr.mxu0 %v3910
    %4999 = vmatpush1.msra.mxu0 %v3909
    %5000 = vmatprep.subr.mxu0 %v3914
    %5001 = vmatpush1.msra.mxu0 %v3913
    %5002 = vmatprep.subr.mxu0 %v3918
    %5003 = vmatpush1.msra.mxu0 %v3917
    %5004 = vmatprep.subr.mxu0 %v3922
    %5005 = vmatpush1.msra.mxu0 %v3921
    %5006 = vmatprep.subr.mxu0 0.0
    %5007 = vmatpush1.msra.mxu0 0.0
    %5008 = vmatprep.subr.mxu0 0.0
    %5009 = vmatpush1.msra.mxu0 0.0
    %5010 = vmatprep.subr.mxu0 0.0
    %5011 = vmatpush1.msra.mxu0 0.0
    %5012 = vmatprep.subr.mxu0 0.0
    %5013 = vmatpush1.msra.mxu0 0.0
    %5014 = vmatprep.subr.mxu0 0.0
    %5015 = vmatpush1.msra.mxu0 0.0
    %5016 = vmatprep.subr.mxu0 0.0
    %5017 = vmatpush1.msra.mxu0 0.0
    %5018 = vmatprep.subr.mxu0 0.0
    %5019 = vmatpush1.msra.mxu0 0.0
    %5020 = vmatprep.subr.mxu0 0.0
    %5021 = vmatpush1.msra.mxu0 0.0
    %5022 = vmatprep.subr.mxu0 0.0
    %5023 = vmatpush1.msra.mxu0 0.0
    %5024 = vmatprep.subr.mxu0 0.0
    %5025 = vmatpush1.msra.mxu0 0.0
    %5026 = vmatprep.subr.mxu0 0.0
    %5027 = vmatpush1.msra.mxu0 0.0
    %5028 = vmatprep.subr.mxu0 0.0
    %5029 = vmatpush1.msra.mxu0 0.0
    %5030 = vmatprep.subr.mxu0 0.0
    %5031 = vmatpush1.msra.mxu0 0.0
    %5032 = vmatprep.subr.mxu0 0.0
    %5033 = vmatpush1.msra.mxu0 0.0
    %5034 = vmatprep.subr.mxu0 0.0
    %5035 = vmatpush1.msra.mxu0 0.0
    %5036 = vmatprep.subr.mxu0 0.0
    %5037 = vmatpush1.msra.mxu0 0.0
    %5038 = vmatprep.mubr.f32.mxu0 0.0
    %5039 = vmatmul.mubr.f32.gmra.mrb[0].mxu0 %v4968
    %v5040 = vpop.f32.mrb[0].mxu0
    %v5041 = vadd.f32 0.0, %v5040
    %v5042 = vpop.f32.mrb[0].mxu0
    %v5043 = vadd.f32 0.0, %v5042
    %5044 = vdwg.mxu0
    %5045 = vmatprep.subr.mxu0 %v3864
    %5046 = vmatpush1.msra.mxu0 %v3863
    %5047 = vmatprep.subr.mxu0 %v3868
    %5048 = vmatpush1.msra.mxu0 %v3867
    %5049 = vmatprep.subr.mxu0 %v3872
    %5050 = vmatpush1.msra.mxu0 %v3871
    %5051 = vmatprep.subr.mxu0 %v3876
    %5052 = vmatpush1.msra.mxu0 %v3875
    %5053 = vmatprep.subr.mxu0 %v3880
    %5054 = vmatpush1.msra.mxu0 %v3879
    %5055 = vmatprep.subr.mxu0 %v3884
    %5056 = vmatpush1.msra.mxu0 %v3883
    %5057 = vmatprep.subr.mxu0 %v3888
    %5058 = vmatpush1.msra.mxu0 %v3887
    %5059 = vmatprep.subr.mxu0 %v3892
    %5060 = vmatpush1.msra.mxu0 %v3891
    %5061 = vmatprep.subr.mxu0 %v3896
    %5062 = vmatpush1.msra.mxu0 %v3895
    %5063 = vmatprep.subr.mxu0 %v3900
    %5064 = vmatpush1.msra.mxu0 %v3899
    %5065 = vmatprep.subr.mxu0 %v3904
    %5066 = vmatpush1.msra.mxu0 %v3903
    %5067 = vmatprep.subr.mxu0 %v3908
    %5068 = vmatpush1.msra.mxu0 %v3907
    %5069 = vmatprep.subr.mxu0 %v3912
    %5070 = vmatpush1.msra.mxu0 %v3911
    %5071 = vmatprep.subr.mxu0 %v3916
    %5072 = vmatpush1.msra.mxu0 %v3915
    %5073 = vmatprep.subr.mxu0 %v3920
    %5074 = vmatpush1.msra.mxu0 %v3919
    %5075 = vmatprep.subr.mxu0 %v3924
    %5076 = vmatpush1.msra.mxu0 %v3923
    %5077 = vmatprep.subr.mxu0 0.0
    %5078 = vmatpush1.msra.mxu0 0.0
    %5079 = vmatprep.subr.mxu0 0.0
    %5080 = vmatpush1.msra.mxu0 0.0
    %5081 = vmatprep.subr.mxu0 0.0
    %5082 = vmatpush1.msra.mxu0 0.0
    %5083 = vmatprep.subr.mxu0 0.0
    %5084 = vmatpush1.msra.mxu0 0.0
    %5085 = vmatprep.subr.mxu0 0.0
    %5086 = vmatpush1.msra.mxu0 0.0
    %5087 = vmatprep.subr.mxu0 0.0
    %5088 = vmatpush1.msra.mxu0 0.0
    %5089 = vmatprep.subr.mxu0 0.0
    %5090 = vmatpush1.msra.mxu0 0.0
    %5091 = vmatprep.subr.mxu0 0.0
    %5092 = vmatpush1.msra.mxu0 0.0
    %5093 = vmatprep.subr.mxu0 0.0
    %5094 = vmatpush1.msra.mxu0 0.0
    %5095 = vmatprep.subr.mxu0 0.0
    %5096 = vmatpush1.msra.mxu0 0.0
    %5097 = vmatprep.subr.mxu0 0.0
    %5098 = vmatpush1.msra.mxu0 0.0
    %5099 = vmatprep.subr.mxu0 0.0
    %5100 = vmatpush1.msra.mxu0 0.0
    %5101 = vmatprep.subr.mxu0 0.0
    %5102 = vmatpush1.msra.mxu0 0.0
    %5103 = vmatprep.subr.mxu0 0.0
    %5104 = vmatpush1.msra.mxu0 0.0
    %5105 = vmatprep.subr.mxu0 0.0
    %5106 = vmatpush1.msra.mxu0 0.0
    %5107 = vmatprep.subr.mxu0 0.0
    %5108 = vmatpush1.msra.mxu0 0.0
    %5109 = vmatprep.mubr.f32.mxu0 0.0
    %5110 = vmatmul.mubr.f32.gmra.mrb[0].mxu0 %v4968
    %v5111 = vpop.f32.mrb[0].mxu0
    %v5112 = vadd.f32 0.0, %v5111
    %v5113 = vpop.f32.mrb[0].mxu0
    %v5114 = vadd.f32 0.0, %v5113
    %5115 = vdwg.mxu0
    %v5116 = vadd.f32 %v4970, %v5041
    %v5117 = vadd.f32 %v4971, %v5043
    %v5118 = vadd.f32 %v4972, %v5112
    %v5119 = vadd.f32 %v4973, %v5114
    %v5120 = vxor.u32 %v5116, 2147483648
    %v5121 = vmul.f32 %v5120, 1.442695
    %v5122 = vpow.pop %v5121
    %v5123 = vadd.f32 %v5122, 1.0
    %v5124 = vrcp.pop %v5123
    %v5125 = vmul.f32 1.0, %v5124
    %v5126 = vxor.u32 %v5117, 2147483648
    %v5127 = vmul.f32 %v5126, 1.442695
    %v5128 = vpow.pop %v5127
    %v5129 = vadd.f32 %v5128, 1.0
    %v5130 = vrcp.pop %v5129
    %v5131 = vmul.f32 1.0, %v5130
    %v5132 = vtanh.pop %v5118
    %v5133 = vxor.u32 %v5119, 2147483648
    %v5134 = vmul.f32 %v5133, 1.442695
    %v5135 = vpow.pop %v5134
    %v5136 = vadd.f32 %v5135, 1.0
    %v5137 = vrcp.pop %v5136
    %v5138 = vmul.f32 1.0, %v5137
    %v5139 = vmul.f32 %v5131, %v4966
    %v5140 = vmul.f32 %v5125, %v5132
    %v5141 = vadd.f32 %v5139, %v5140
    %v5142 = vtanh.pop %v5141
    %v5143 = vmul.f32 %v5138, %v5142
    %5144 = vst [vmem:[#allocation6 + $0x8] sm:$0xff] %v5143
    %v5145 = vld [vmem:[#allocation3 + $0xe0] sm:$0xff]
    %v5146 = vld [vmem:[#allocation3 + $0xe8] sm:$0xff]
    %v5147 = vld [vmem:[#allocation3 + $0xf0] sm:$0xff]
    %v5148 = vld [vmem:[#allocation3 + $0xf8] sm:$0xff]
    %5149 = vmatprep.subr.mxu0 %v3862
    %5150 = vmatpush1.msra.mxu0 %v3861
    %5151 = vmatprep.subr.mxu0 %v3866
    %5152 = vmatpush1.msra.mxu0 %v3865
    %5153 = vmatprep.subr.mxu0 %v3870
    %5154 = vmatpush1.msra.mxu0 %v3869
    %5155 = vmatprep.subr.mxu0 %v3874
    %5156 = vmatpush1.msra.mxu0 %v3873
    %5157 = vmatprep.subr.mxu0 %v3878
    %5158 = vmatpush1.msra.mxu0 %v3877
    %5159 = vmatprep.subr.mxu0 %v3882
    %5160 = vmatpush1.msra.mxu0 %v3881
    %5161 = vmatprep.subr.mxu0 %v3886
    %5162 = vmatpush1.msra.mxu0 %v3885
    %5163 = vmatprep.subr.mxu0 %v3890
    %5164 = vmatpush1.msra.mxu0 %v3889
    %5165 = vmatprep.subr.mxu0 %v3894
    %5166 = vmatpush1.msra.mxu0 %v3893
    %5167 = vmatprep.subr.mxu0 %v3898
    %5168 = vmatpush1.msra.mxu0 %v3897
    %5169 = vmatprep.subr.mxu0 %v3902
    %5170 = vmatpush1.msra.mxu0 %v3901
    %5171 = vmatprep.subr.mxu0 %v3906
    %5172 = vmatpush1.msra.mxu0 %v3905
    %5173 = vmatprep.subr.mxu0 %v3910
    %5174 = vmatpush1.msra.mxu0 %v3909
    %5175 = vmatprep.subr.mxu0 %v3914
    %5176 = vmatpush1.msra.mxu0 %v3913
    %5177 = vmatprep.subr.mxu0 %v3918
    %5178 = vmatpush1.msra.mxu0 %v3917
    %5179 = vmatprep.subr.mxu0 %v3922
    %5180 = vmatpush1.msra.mxu0 %v3921
    %5181 = vmatprep.subr.mxu0 0.0
    %5182 = vmatpush1.msra.mxu0 0.0
    %5183 = vmatprep.subr.mxu0 0.0
    %5184 = vmatpush1.msra.mxu0 0.0
    %5185 = vmatprep.subr.mxu0 0.0
    %5186 = vmatpush1.msra.mxu0 0.0
    %5187 = vmatprep.subr.mxu0 0.0
    %5188 = vmatpush1.msra.mxu0 0.0
    %5189 = vmatprep.subr.mxu0 0.0
    %5190 = vmatpush1.msra.mxu0 0.0
    %5191 = vmatprep.subr.mxu0 0.0
    %5192 = vmatpush1.msra.mxu0 0.0
    %5193 = vmatprep.subr.mxu0 0.0
    %5194 = vmatpush1.msra.mxu0 0.0
    %5195 = vmatprep.subr.mxu0 0.0
    %5196 = vmatpush1.msra.mxu0 0.0
    %5197 = vmatprep.subr.mxu0 0.0
    %5198 = vmatpush1.msra.mxu0 0.0
    %5199 = vmatprep.subr.mxu0 0.0
    %5200 = vmatpush1.msra.mxu0 0.0
    %5201 = vmatprep.subr.mxu0 0.0
    %5202 = vmatpush1.msra.mxu0 0.0
    %5203 = vmatprep.subr.mxu0 0.0
    %5204 = vmatpush1.msra.mxu0 0.0
    %5205 = vmatprep.subr.mxu0 0.0
    %5206 = vmatpush1.msra.mxu0 0.0
    %5207 = vmatprep.subr.mxu0 0.0
    %5208 = vmatpush1.msra.mxu0 0.0
    %5209 = vmatprep.subr.mxu0 0.0
    %5210 = vmatpush1.msra.mxu0 0.0
    %5211 = vmatprep.subr.mxu0 0.0
    %5212 = vmatpush1.msra.mxu0 0.0
    %5213 = vmatprep.mubr.f32.mxu0 0.0
    %5214 = vmatmul.mubr.f32.gmra.mrb[0].mxu0 %v5143
    %v5215 = vpop.f32.mrb[0].mxu0
    %v5216 = vadd.f32 0.0, %v5215
    %v5217 = vpop.f32.mrb[0].mxu0
    %v5218 = vadd.f32 0.0, %v5217
    %5219 = vdwg.mxu0
    %5220 = vmatprep.subr.mxu0 %v3864
    %5221 = vmatpush1.msra.mxu0 %v3863
    %5222 = vmatprep.subr.mxu0 %v3868
    %5223 = vmatpush1.msra.mxu0 %v3867
    %5224 = vmatprep.subr.mxu0 %v3872
    %5225 = vmatpush1.msra.mxu0 %v3871
    %5226 = vmatprep.subr.mxu0 %v3876
    %5227 = vmatpush1.msra.mxu0 %v3875
    %5228 = vmatprep.subr.mxu0 %v3880
    %5229 = vmatpush1.msra.mxu0 %v3879
    %5230 = vmatprep.subr.mxu0 %v3884
    %5231 = vmatpush1.msra.mxu0 %v3883
    %5232 = vmatprep.subr.mxu0 %v3888
    %5233 = vmatpush1.msra.mxu0 %v3887
    %5234 = vmatprep.subr.mxu0 %v3892
    %5235 = vmatpush1.msra.mxu0 %v3891
    %5236 = vmatprep.subr.mxu0 %v3896
    %5237 = vmatpush1.msra.mxu0 %v3895
    %5238 = vmatprep.subr.mxu0 %v3900
    %5239 = vmatpush1.msra.mxu0 %v3899
    %5240 = vmatprep.subr.mxu0 %v3904
    %5241 = vmatpush1.msra.mxu0 %v3903
    %5242 = vmatprep.subr.mxu0 %v3908
    %5243 = vmatpush1.msra.mxu0 %v3907
    %5244 = vmatprep.subr.mxu0 %v3912
    %5245 = vmatpush1.msra.mxu0 %v3911
    %5246 = vmatprep.subr.mxu0 %v3916
    %5247 = vmatpush1.msra.mxu0 %v3915
    %5248 = vmatprep.subr.mxu0 %v3920
    %5249 = vmatpush1.msra.mxu0 %v3919
    %5250 = vmatprep.subr.mxu0 %v3924
    %5251 = vmatpush1.msra.mxu0 %v3923
    %5252 = vmatprep.subr.mxu0 0.0
    %5253 = vmatpush1.msra.mxu0 0.0
    %5254 = vmatprep.subr.mxu0 0.0
    %5255 = vmatpush1.msra.mxu0 0.0
    %5256 = vmatprep.subr.mxu0 0.0
    %5257 = vmatpush1.msra.mxu0 0.0
    %5258 = vmatprep.subr.mxu0 0.0
    %5259 = vmatpush1.msra.mxu0 0.0
    %5260 = vmatprep.subr.mxu0 0.0
    %5261 = vmatpush1.msra.mxu0 0.0
    %5262 = vmatprep.subr.mxu0 0.0
    %5263 = vmatpush1.msra.mxu0 0.0
    %5264 = vmatprep.subr.mxu0 0.0
    %5265 = vmatpush1.msra.mxu0 0.0
    %5266 = vmatprep.subr.mxu0 0.0
    %5267 = vmatpush1.msra.mxu0 0.0
    %5268 = vmatprep.subr.mxu0 0.0
    %5269 = vmatpush1.msra.mxu0 0.0
    %5270 = vmatprep.subr.mxu0 0.0
    %5271 = vmatpush1.msra.mxu0 0.0
    %5272 = vmatprep.subr.mxu0 0.0
    %5273 = vmatpush1.msra.mxu0 0.0
    %5274 = vmatprep.subr.mxu0 0.0
    %5275 = vmatpush1.msra.mxu0 0.0
    %5276 = vmatprep.subr.mxu0 0.0
    %5277 = vmatpush1.msra.mxu0 0.0
    %5278 = vmatprep.subr.mxu0 0.0
    %5279 = vmatpush1.msra.mxu0 0.0
    %5280 = vmatprep.subr.mxu0 0.0
    %5281 = vmatpush1.msra.mxu0 0.0
    %5282 = vmatprep.subr.mxu0 0.0
    %5283 = vmatpush1.msra.mxu0 0.0
    %5284 = vmatprep.mubr.f32.mxu0 0.0
    %5285 = vmatmul.mubr.f32.gmra.mrb[0].mxu0 %v5143
    %v5286 = vpop.f32.mrb[0].mxu0
    %v5287 = vadd.f32 0.0, %v5286
    %v5288 = vpop.f32.mrb[0].mxu0
    %v5289 = vadd.f32 0.0, %v5288
    %5290 = vdwg.mxu0
    %v5291 = vadd.f32 %v5145, %v5216
    %v5292 = vadd.f32 %v5146, %v5218
    %v5293 = vadd.f32 %v5147, %v5287
    %v5294 = vadd.f32 %v5148, %v5289
    %v5295 = vxor.u32 %v5291, 2147483648
    %v5296 = vmul.f32 %v5295, 1.442695
    %v5297 = vpow.pop %v5296
    %v5298 = vadd.f32 %v5297, 1.0
    %v5299 = vrcp.pop %v5298
    %v5300 = vmul.f32 1.0, %v5299
    %v5301 = vxor.u32 %v5292, 2147483648
    %v5302 = vmul.f32 %v5301, 1.442695
    %v5303 = vpow.pop %v5302
    %v5304 = vadd.f32 %v5303, 1.0
    %v5305 = vrcp.pop %v5304
    %v5306 = vmul.f32 1.0, %v5305
    %v5307 = vtanh.pop %v5293
    %v5308 = vxor.u32 %v5294, 2147483648
    %v5309 = vmul.f32 %v5308, 1.442695
    %v5310 = vpow.pop %v5309
    %v5311 = vadd.f32 %v5310, 1.0
    %v5312 = vrcp.pop %v5311
    %v5313 = vmul.f32 1.0, %v5312
    %v5314 = vmul.f32 %v5306, %v5141
    %v5315 = vmul.f32 %v5300, %v5307
    %v5316 = vadd.f32 %v5314, %v5315
    %v5317 = vtanh.pop %v5316
    %v5318 = vmul.f32 %v5313, %v5317
    %5319 = vst [vmem:[#allocation6 + $0x10] sm:$0xff] %v5318
    %v5320 = vld [vmem:[#allocation6] sm:$0xff]
    %v5321 = vld [vmem:[#allocation6 + $0x8] sm:$0xff]
    %v5322 = vld [vmem:[#allocation6 + $0x10] sm:$0xff]
    %v5323 = vld [vmem:[#allocation17] sm:$0xff]
    %v5324 = vld [vmem:[#allocation17 + $0x8] sm:$0xff]
    %v5325 = vld [vmem:[#allocation17 + $0x10] sm:$0xff]
    %v5326 = vld [vmem:[#allocation17 + $0x18] sm:$0xff]
    %v5327 = vld [vmem:[#allocation17 + $0x20] sm:$0xff]
    %v5328 = vld [vmem:[#allocation17 + $0x28] sm:$0xff]
    %v5329 = vld [vmem:[#allocation17 + $0x30] sm:$0xff]
    %v5330 = vld [vmem:[#allocation17 + $0x38] sm:$0xff]
    %v5331 = vld [vmem:[#allocation17 + $0x40] sm:$0xff]
    %v5332 = vld [vmem:[#allocation17 + $0x48] sm:$0xff]
    %v5333 = vld [vmem:[#allocation17 + $0x50] sm:$0xff]
    %v5334 = vld [vmem:[#allocation17 + $0x58] sm:$0xff]
    %v5335 = vld [vmem:[#allocation17 + $0x60] sm:$0xff]
    %v5336 = vld [vmem:[#allocation17 + $0x68] sm:$0xff]
    %v5337 = vld [vmem:[#allocation17 + $0x70] sm:$0xff]
    %v5338 = vld [vmem:[#allocation17 + $0x78] sm:$0xff]
    %v5339 = vld [vmem:[#allocation17 + $0x80] sm:$0xff]
    %v5340 = vld [vmem:[#allocation17 + $0x88] sm:$0xff]
    %v5341 = vld [vmem:[#allocation17 + $0x90] sm:$0xff]
    %v5342 = vld [vmem:[#allocation17 + $0x98] sm:$0xff]
    %v5343 = vld [vmem:[#allocation17 + $0xa0] sm:$0xff]
    %v5344 = vld [vmem:[#allocation17 + $0xa8] sm:$0xff]
    %v5345 = vld [vmem:[#allocation17 + $0xb0] sm:$0xff]
    %v5346 = vld [vmem:[#allocation17 + $0xb8] sm:$0xff]
    %v5347 = vld [vmem:[#allocation17 + $0xc0] sm:$0xff]
    %v5348 = vld [vmem:[#allocation17 + $0xc8] sm:$0xff]
    %v5349 = vld [vmem:[#allocation17 + $0xd0] sm:$0xff]
    %v5350 = vld [vmem:[#allocation17 + $0xd8] sm:$0xff]
    %v5351 = vld [vmem:[#allocation17 + $0xe0] sm:$0xff]
    %v5352 = vld [vmem:[#allocation17 + $0xe8] sm:$0xff]
    %v5353 = vld [vmem:[#allocation17 + $0xf0] sm:$0xff]
    %v5354 = vld [vmem:[#allocation17 + $0xf8] sm:$0xff]
    %v5355 = vld [vmem:[#allocation17 + $0x100] sm:$0xff]
    %v5356 = vld [vmem:[#allocation17 + $0x108] sm:$0xff]
    %v5357 = vld [vmem:[#allocation17 + $0x110] sm:$0xff]
    %v5358 = vld [vmem:[#allocation17 + $0x118] sm:$0xff]
    %v5359 = vld [vmem:[#allocation17 + $0x120] sm:$0xff]
    %v5360 = vld [vmem:[#allocation17 + $0x128] sm:$0xff]
    %v5361 = vld [vmem:[#allocation17 + $0x130] sm:$0xff]
    %v5362 = vld [vmem:[#allocation17 + $0x138] sm:$0xff]
    %v5363 = vld [vmem:[#allocation17 + $0x140] sm:$0xff]
    %v5364 = vld [vmem:[#allocation17 + $0x148] sm:$0xff]
    %v5365 = vld [vmem:[#allocation17 + $0x150] sm:$0xff]
    %v5366 = vld [vmem:[#allocation17 + $0x158] sm:$0xff]
    %v5367 = vld [vmem:[#allocation17 + $0x160] sm:$0xff]
    %v5368 = vld [vmem:[#allocation17 + $0x168] sm:$0xff]
    %v5369 = vld [vmem:[#allocation17 + $0x170] sm:$0xff]
    %v5370 = vld [vmem:[#allocation17 + $0x178] sm:$0xff]
    %v5371 = vld [vmem:[#allocation17 + $0x180] sm:$0xff]
    %v5372 = vld [vmem:[#allocation17 + $0x188] sm:$0xff]
    %v5373 = vld [vmem:[#allocation17 + $0x190] sm:$0xff]
    %v5374 = vld [vmem:[#allocation17 + $0x198] sm:$0xff]
    %v5375 = vld [vmem:[#allocation17 + $0x1a0] sm:$0xff]
    %v5376 = vld [vmem:[#allocation17 + $0x1a8] sm:$0xff]
    %v5377 = vld [vmem:[#allocation17 + $0x1b0] sm:$0xff]
    %v5378 = vld [vmem:[#allocation17 + $0x1b8] sm:$0xff]
    %v5379 = vld [vmem:[#allocation17 + $0x1c0] sm:$0xff]
    %v5380 = vld [vmem:[#allocation17 + $0x1c8] sm:$0xff]
    %v5381 = vld [vmem:[#allocation17 + $0x1d0] sm:$0xff]
    %v5382 = vld [vmem:[#allocation17 + $0x1d8] sm:$0xff]
    %v5383 = vld [vmem:[#allocation17 + $0x1e0] sm:$0xff]
    %v5384 = vld [vmem:[#allocation17 + $0x1e8] sm:$0xff]
    %v5385 = vld [vmem:[#allocation17 + $0x1f0] sm:$0xff]
    %v5386 = vld [vmem:[#allocation17 + $0x1f8] sm:$0xff]
    %v5387 = vld [vmem:[#allocation20] sm:$0xf]
    %v5389 = vlaneseq
    %v5390 = vshrl.u32 %v5389, 7
    %v5391 = vsub.s32 0, %v5390
    %v5392 = vrot.slane %v5387, %v5391
    %v5393 = vlaneseq
    %v5394 = vshrl.u32 %v5393, 7
    %v5395 = vsub.s32 1, %v5394
    %v5396 = vrot.slane %v5387, %v5395
    %v5397 = vlaneseq
    %v5398 = vshrl.u32 %v5397, 7
    %v5399 = vsub.s32 2, %v5398
    %v5400 = vrot.slane %v5387, %v5399
    %v5401 = vlaneseq
    %v5402 = vshrl.u32 %v5401, 7
    %v5403 = vsub.s32 3, %v5402
    %v5404 = vrot.slane %v5387, %v5403
    %5409 = vmatprep.subr.mxu0 %v5324
    %5410 = vmatpush1.msra.mxu0 %v5323
    %5411 = vmatprep.subr.mxu0 %v5328
    %5412 = vmatpush1.msra.mxu0 %v5327
    %5413 = vmatprep.subr.mxu0 %v5332
    %5414 = vmatpush1.msra.mxu0 %v5331
    %5415 = vmatprep.subr.mxu0 %v5336
    %5416 = vmatpush1.msra.mxu0 %v5335
    %5417 = vmatprep.subr.mxu0 %v5340
    %5418 = vmatpush1.msra.mxu0 %v5339
    %5419 = vmatprep.subr.mxu0 %v5344
    %5420 = vmatpush1.msra.mxu0 %v5343
    %5421 = vmatprep.subr.mxu0 %v5348
    %5422 = vmatpush1.msra.mxu0 %v5347
    %5423 = vmatprep.subr.mxu0 %v5352
    %5424 = vmatpush1.msra.mxu0 %v5351
    %5425 = vmatprep.subr.mxu0 %v5356
    %5426 = vmatpush1.msra.mxu0 %v5355
    %5427 = vmatprep.subr.mxu0 %v5360
    %5428 = vmatpush1.msra.mxu0 %v5359
    %5429 = vmatprep.subr.mxu0 %v5364
    %5430 = vmatpush1.msra.mxu0 %v5363
    %5431 = vmatprep.subr.mxu0 %v5368
    %5432 = vmatpush1.msra.mxu0 %v5367
    %5433 = vmatprep.subr.mxu0 %v5372
    %5434 = vmatpush1.msra.mxu0 %v5371
    %5435 = vmatprep.subr.mxu0 %v5376
    %5436 = vmatpush1.msra.mxu0 %v5375
    %5437 = vmatprep.subr.mxu0 %v5380
    %5438 = vmatpush1.msra.mxu0 %v5379
    %5439 = vmatprep.subr.mxu0 %v5384
    %5440 = vmatpush1.msra.mxu0 %v5383
    %5441 = vmatprep.subr.mxu0 0.0
    %5442 = vmatpush1.msra.mxu0 0.0
    %5443 = vmatprep.subr.mxu0 0.0
    %5444 = vmatpush1.msra.mxu0 0.0
    %5445 = vmatprep.subr.mxu0 0.0
    %5446 = vmatpush1.msra.mxu0 0.0
    %5447 = vmatprep.subr.mxu0 0.0
    %5448 = vmatpush1.msra.mxu0 0.0
    %5449 = vmatprep.subr.mxu0 0.0
    %5450 = vmatpush1.msra.mxu0 0.0
    %5451 = vmatprep.subr.mxu0 0.0
    %5452 = vmatpush1.msra.mxu0 0.0
    %5453 = vmatprep.subr.mxu0 0.0
    %5454 = vmatpush1.msra.mxu0 0.0
    %5455 = vmatprep.subr.mxu0 0.0
    %5456 = vmatpush1.msra.mxu0 0.0
    %5457 = vmatprep.subr.mxu0 0.0
    %5458 = vmatpush1.msra.mxu0 0.0
    %5459 = vmatprep.subr.mxu0 0.0
    %5460 = vmatpush1.msra.mxu0 0.0
    %5461 = vmatprep.subr.mxu0 0.0
    %5462 = vmatpush1.msra.mxu0 0.0
    %5463 = vmatprep.subr.mxu0 0.0
    %5464 = vmatpush1.msra.mxu0 0.0
    %5465 = vmatprep.subr.mxu0 0.0
    %5466 = vmatpush1.msra.mxu0 0.0
    %5467 = vmatprep.subr.mxu0 0.0
    %5468 = vmatpush1.msra.mxu0 0.0
    %5469 = vmatprep.subr.mxu0 0.0
    %5470 = vmatpush1.msra.mxu0 0.0
    %5471 = vmatprep.subr.mxu0 0.0
    %5472 = vmatpush1.msra.mxu0 0.0
    %5473 = vmatprep.mubr.f32.mxu0 0.0
    %5474 = vmatmul.mubr.f32.gmra.mrb[0].mxu0 %v5320
    %v5475 = vpop.f32.mrb[0].mxu0
    %v5476 = vadd.f32 %v5392, %v5475
    %v5477 = vpop.f32.mrb[0].mxu0
    %v5478 = vadd.f32 %v5396, %v5477
    %5479 = vmatprep.mubr.f32.mxu0 0.0
    %5480 = vmatmul.mubr.f32.gmra.mrb[0].mxu0 %v5321
    %v5481 = vpop.f32.mrb[0].mxu0
    %v5482 = vadd.f32 %v5392, %v5481
    %v5483 = vpop.f32.mrb[0].mxu0
    %v5484 = vadd.f32 %v5396, %v5483
    %5485 = vmatprep.mubr.f32.mxu0 0.0
    %5486 = vmatmul.mubr.f32.gmra.mrb[0].mxu0 %v5322
    %v5487 = vpop.f32.mrb[0].mxu0
    %v5488 = vadd.f32 %v5392, %v5487
    %v5489 = vpop.f32.mrb[0].mxu0
    %v5490 = vadd.f32 %v5396, %v5489
    %5491 = vdwg.mxu0
    %5492 = vmatprep.subr.mxu0 %v5326
    %5493 = vmatpush1.msra.mxu0 %v5325
    %5494 = vmatprep.subr.mxu0 %v5330
    %5495 = vmatpush1.msra.mxu0 %v5329
    %5496 = vmatprep.subr.mxu0 %v5334
    %5497 = vmatpush1.msra.mxu0 %v5333
    %5498 = vmatprep.subr.mxu0 %v5338
    %5499 = vmatpush1.msra.mxu0 %v5337
    %5500 = vmatprep.subr.mxu0 %v5342
    %5501 = vmatpush1.msra.mxu0 %v5341
    %5502 = vmatprep.subr.mxu0 %v5346
    %5503 = vmatpush1.msra.mxu0 %v5345
    %5504 = vmatprep.subr.mxu0 %v5350
    %5505 = vmatpush1.msra.mxu0 %v5349
    %5506 = vmatprep.subr.mxu0 %v5354
    %5507 = vmatpush1.msra.mxu0 %v5353
    %5508 = vmatprep.subr.mxu0 %v5358
    %5509 = vmatpush1.msra.mxu0 %v5357
    %5510 = vmatprep.subr.mxu0 %v5362
    %5511 = vmatpush1.msra.mxu0 %v5361
    %5512 = vmatprep.subr.mxu0 %v5366
    %5513 = vmatpush1.msra.mxu0 %v5365
    %5514 = vmatprep.subr.mxu0 %v5370
    %5515 = vmatpush1.msra.mxu0 %v5369
    %5516 = vmatprep.subr.mxu0 %v5374
    %5517 = vmatpush1.msra.mxu0 %v5373
    %5518 = vmatprep.subr.mxu0 %v5378
    %5519 = vmatpush1.msra.mxu0 %v5377
    %5520 = vmatprep.subr.mxu0 %v5382
    %5521 = vmatpush1.msra.mxu0 %v5381
    %5522 = vmatprep.subr.mxu0 %v5386
    %5523 = vmatpush1.msra.mxu0 %v5385
    %5524 = vmatprep.subr.mxu0 0.0
    %5525 = vmatpush1.msra.mxu0 0.0
    %5526 = vmatprep.subr.mxu0 0.0
    %5527 = vmatpush1.msra.mxu0 0.0
    %5528 = vmatprep.subr.mxu0 0.0
    %5529 = vmatpush1.msra.mxu0 0.0
    %5530 = vmatprep.subr.mxu0 0.0
    %5531 = vmatpush1.msra.mxu0 0.0
    %5532 = vmatprep.subr.mxu0 0.0
    %5533 = vmatpush1.msra.mxu0 0.0
    %5534 = vmatprep.subr.mxu0 0.0
    %5535 = vmatpush1.msra.mxu0 0.0
    %5536 = vmatprep.subr.mxu0 0.0
    %5537 = vmatpush1.msra.mxu0 0.0
    %5538 = vmatprep.subr.mxu0 0.0
    %5539 = vmatpush1.msra.mxu0 0.0
    %5540 = vmatprep.subr.mxu0 0.0
    %5541 = vmatpush1.msra.mxu0 0.0
    %5542 = vmatprep.subr.mxu0 0.0
    %5543 = vmatpush1.msra.mxu0 0.0
    %5544 = vmatprep.subr.mxu0 0.0
    %5545 = vmatpush1.msra.mxu0 0.0
    %5546 = vmatprep.subr.mxu0 0.0
    %5547 = vmatpush1.msra.mxu0 0.0
    %5548 = vmatprep.subr.mxu0 0.0
    %5549 = vmatpush1.msra.mxu0 0.0
    %5550 = vmatprep.subr.mxu0 0.0
    %5551 = vmatpush1.msra.mxu0 0.0
    %5552 = vmatprep.subr.mxu0 0.0
    %5553 = vmatpush1.msra.mxu0 0.0
    %5554 = vmatprep.subr.mxu0 0.0
    %5555 = vmatpush1.msra.mxu0 0.0
    %5556 = vmatprep.mubr.f32.mxu0 0.0
    %5557 = vmatmul.mubr.f32.gmra.mrb[0].mxu0 %v5320
    %v5558 = vpop.f32.mrb[0].mxu0
    %v5559 = vadd.f32 %v5400, %v5558
    %v5560 = vpop.f32.mrb[0].mxu0
    %v5561 = vadd.f32 %v5404, %v5560
    %5562 = vmatprep.mubr.f32.mxu0 0.0
    %5563 = vmatmul.mubr.f32.gmra.mrb[0].mxu0 %v5321
    %v5564 = vpop.f32.mrb[0].mxu0
    %v5565 = vadd.f32 %v5400, %v5564
    %v5566 = vpop.f32.mrb[0].mxu0
    %v5567 = vadd.f32 %v5404, %v5566
    %5568 = vmatprep.mubr.f32.mxu0 0.0
    %5569 = vmatmul.mubr.f32.gmra.mrb[0].mxu0 %v5322
    %v5570 = vpop.f32.mrb[0].mxu0
    %v5571 = vadd.f32 %v5400, %v5570
    %v5572 = vpop.f32.mrb[0].mxu0
    %v5573 = vadd.f32 %v5404, %v5572
    %5574 = vdwg.mxu0
    %5575 = vst [vmem:[#allocation4] sm:$0xff] %v5476
    %5576 = vst [vmem:[#allocation4 + $0x8] sm:$0xff] %v5478
    %5577 = vst [vmem:[#allocation4 + $0x10] sm:$0xff] %v5559
    %5578 = vst [vmem:[#allocation4 + $0x18] sm:$0xff] %v5561
    %5579 = vst [vmem:[#allocation4 + $0x20] sm:$0xff] %v5482
    %5580 = vst [vmem:[#allocation4 + $0x28] sm:$0xff] %v5484
    %5581 = vst [vmem:[#allocation4 + $0x30] sm:$0xff] %v5565
    %5582 = vst [vmem:[#allocation4 + $0x38] sm:$0xff] %v5567
    %5583 = vst [vmem:[#allocation4 + $0x40] sm:$0xff] %v5488
    %5584 = vst [vmem:[#allocation4 + $0x48] sm:$0xff] %v5490
    %5585 = vst [vmem:[#allocation4 + $0x50] sm:$0xff] %v5571
    %5586 = vst [vmem:[#allocation4 + $0x58] sm:$0xff] %v5573
    %v5587 = vld [vmem:[#allocation18] sm:$0xff]
    %v5588 = vld [vmem:[#allocation18 + $0x8] sm:$0xff]
    %v5589 = vld [vmem:[#allocation18 + $0x10] sm:$0xff]
    %v5590 = vld [vmem:[#allocation18 + $0x18] sm:$0xff]
    %v5591 = vld [vmem:[#allocation18 + $0x20] sm:$0xff]
    %v5592 = vld [vmem:[#allocation18 + $0x28] sm:$0xff]
    %v5593 = vld [vmem:[#allocation18 + $0x30] sm:$0xff]
    %v5594 = vld [vmem:[#allocation18 + $0x38] sm:$0xff]
    %v5595 = vld [vmem:[#allocation18 + $0x40] sm:$0xff]
    %v5596 = vld [vmem:[#allocation18 + $0x48] sm:$0xff]
    %v5597 = vld [vmem:[#allocation18 + $0x50] sm:$0xff]
    %v5598 = vld [vmem:[#allocation18 + $0x58] sm:$0xff]
    %v5599 = vld [vmem:[#allocation18 + $0x60] sm:$0xff]
    %v5600 = vld [vmem:[#allocation18 + $0x68] sm:$0xff]
    %v5601 = vld [vmem:[#allocation18 + $0x70] sm:$0xff]
    %v5602 = vld [vmem:[#allocation18 + $0x78] sm:$0xff]
    %v5603 = vld [vmem:[#allocation18 + $0x80] sm:$0xff]
    %v5604 = vld [vmem:[#allocation18 + $0x88] sm:$0xff]
    %v5605 = vld [vmem:[#allocation18 + $0x90] sm:$0xff]
    %v5606 = vld [vmem:[#allocation18 + $0x98] sm:$0xff]
    %v5607 = vld [vmem:[#allocation18 + $0xa0] sm:$0xff]
    %v5608 = vld [vmem:[#allocation18 + $0xa8] sm:$0xff]
    %v5609 = vld [vmem:[#allocation18 + $0xb0] sm:$0xff]
    %v5610 = vld [vmem:[#allocation18 + $0xb8] sm:$0xff]
    %v5611 = vld [vmem:[#allocation18 + $0xc0] sm:$0xff]
    %v5612 = vld [vmem:[#allocation18 + $0xc8] sm:$0xff]
    %v5613 = vld [vmem:[#allocation18 + $0xd0] sm:$0xff]
    %v5614 = vld [vmem:[#allocation18 + $0xd8] sm:$0xff]
    %v5615 = vld [vmem:[#allocation18 + $0xe0] sm:$0xff]
    %v5616 = vld [vmem:[#allocation18 + $0xe8] sm:$0xff]
    %v5617 = vld [vmem:[#allocation18 + $0xf0] sm:$0xff]
    %v5618 = vld [vmem:[#allocation18 + $0xf8] sm:$0xff]
    %v5619 = vld [vmem:[#allocation18 + $0x100] sm:$0xff]
    %v5620 = vld [vmem:[#allocation18 + $0x108] sm:$0xff]
    %v5621 = vld [vmem:[#allocation18 + $0x110] sm:$0xff]
    %v5622 = vld [vmem:[#allocation18 + $0x118] sm:$0xff]
    %v5623 = vld [vmem:[#allocation18 + $0x120] sm:$0xff]
    %v5624 = vld [vmem:[#allocation18 + $0x128] sm:$0xff]
    %v5625 = vld [vmem:[#allocation18 + $0x130] sm:$0xff]
    %v5626 = vld [vmem:[#allocation18 + $0x138] sm:$0xff]
    %v5627 = vld [vmem:[#allocation18 + $0x140] sm:$0xff]
    %v5628 = vld [vmem:[#allocation18 + $0x148] sm:$0xff]
    %v5629 = vld [vmem:[#allocation18 + $0x150] sm:$0xff]
    %v5630 = vld [vmem:[#allocation18 + $0x158] sm:$0xff]
    %v5631 = vld [vmem:[#allocation18 + $0x160] sm:$0xff]
    %v5632 = vld [vmem:[#allocation18 + $0x168] sm:$0xff]
    %v5633 = vld [vmem:[#allocation18 + $0x170] sm:$0xff]
    %v5634 = vld [vmem:[#allocation18 + $0x178] sm:$0xff]
    %v5635 = vld [vmem:[#allocation18 + $0x180] sm:$0xff]
    %v5636 = vld [vmem:[#allocation18 + $0x188] sm:$0xff]
    %v5637 = vld [vmem:[#allocation18 + $0x190] sm:$0xff]
    %v5638 = vld [vmem:[#allocation18 + $0x198] sm:$0xff]
    %v5639 = vld [vmem:[#allocation18 + $0x1a0] sm:$0xff]
    %v5640 = vld [vmem:[#allocation18 + $0x1a8] sm:$0xff]
    %v5641 = vld [vmem:[#allocation18 + $0x1b0] sm:$0xff]
    %v5642 = vld [vmem:[#allocation18 + $0x1b8] sm:$0xff]
    %v5643 = vld [vmem:[#allocation18 + $0x1c0] sm:$0xff]
    %v5644 = vld [vmem:[#allocation18 + $0x1c8] sm:$0xff]
    %v5645 = vld [vmem:[#allocation18 + $0x1d0] sm:$0xff]
    %v5646 = vld [vmem:[#allocation18 + $0x1d8] sm:$0xff]
    %v5647 = vld [vmem:[#allocation18 + $0x1e0] sm:$0xff]
    %v5648 = vld [vmem:[#allocation18 + $0x1e8] sm:$0xff]
    %v5649 = vld [vmem:[#allocation18 + $0x1f0] sm:$0xff]
    %v5650 = vld [vmem:[#allocation18 + $0x1f8] sm:$0xff]
    %v5651 = vld [vmem:[#allocation4] sm:$0xff]
    %v5652 = vld [vmem:[#allocation4 + $0x8] sm:$0xff]
    %v5653 = vld [vmem:[#allocation4 + $0x10] sm:$0xff]
    %v5654 = vld [vmem:[#allocation4 + $0x18] sm:$0xff]
    %5655 = vmatprep.subr.mxu0 %v5588
    %5656 = vmatpush1.msra.mxu0 %v5587
    %5657 = vmatprep.subr.mxu0 %v5592
    %5658 = vmatpush1.msra.mxu0 %v5591
    %5659 = vmatprep.subr.mxu0 %v5596
    %5660 = vmatpush1.msra.mxu0 %v5595
    %5661 = vmatprep.subr.mxu0 %v5600
    %5662 = vmatpush1.msra.mxu0 %v5599
    %5663 = vmatprep.subr.mxu0 %v5604
    %5664 = vmatpush1.msra.mxu0 %v5603
    %5665 = vmatprep.subr.mxu0 %v5608
    %5666 = vmatpush1.msra.mxu0 %v5607
    %5667 = vmatprep.subr.mxu0 %v5612
    %5668 = vmatpush1.msra.mxu0 %v5611
    %5669 = vmatprep.subr.mxu0 %v5616
    %5670 = vmatpush1.msra.mxu0 %v5615
    %5671 = vmatprep.subr.mxu0 %v5620
    %5672 = vmatpush1.msra.mxu0 %v5619
    %5673 = vmatprep.subr.mxu0 %v5624
    %5674 = vmatpush1.msra.mxu0 %v5623
    %5675 = vmatprep.subr.mxu0 %v5628
    %5676 = vmatpush1.msra.mxu0 %v5627
    %5677 = vmatprep.subr.mxu0 %v5632
    %5678 = vmatpush1.msra.mxu0 %v5631
    %5679 = vmatprep.subr.mxu0 %v5636
    %5680 = vmatpush1.msra.mxu0 %v5635
    %5681 = vmatprep.subr.mxu0 %v5640
    %5682 = vmatpush1.msra.mxu0 %v5639
    %5683 = vmatprep.subr.mxu0 %v5644
    %5684 = vmatpush1.msra.mxu0 %v5643
    %5685 = vmatprep.subr.mxu0 %v5648
    %5686 = vmatpush1.msra.mxu0 %v5647
    %5687 = vmatprep.subr.mxu0 0.0
    %5688 = vmatpush1.msra.mxu0 0.0
    %5689 = vmatprep.subr.mxu0 0.0
    %5690 = vmatpush1.msra.mxu0 0.0
    %5691 = vmatprep.subr.mxu0 0.0
    %5692 = vmatpush1.msra.mxu0 0.0
    %5693 = vmatprep.subr.mxu0 0.0
    %5694 = vmatpush1.msra.mxu0 0.0
    %5695 = vmatprep.subr.mxu0 0.0
    %5696 = vmatpush1.msra.mxu0 0.0
    %5697 = vmatprep.subr.mxu0 0.0
    %5698 = vmatpush1.msra.mxu0 0.0
    %5699 = vmatprep.subr.mxu0 0.0
    %5700 = vmatpush1.msra.mxu0 0.0
    %5701 = vmatprep.subr.mxu0 0.0
    %5702 = vmatpush1.msra.mxu0 0.0
    %5703 = vmatprep.subr.mxu0 0.0
    %5704 = vmatpush1.msra.mxu0 0.0
    %5705 = vmatprep.subr.mxu0 0.0
    %5706 = vmatpush1.msra.mxu0 0.0
    %5707 = vmatprep.subr.mxu0 0.0
    %5708 = vmatpush1.msra.mxu0 0.0
    %5709 = vmatprep.subr.mxu0 0.0
    %5710 = vmatpush1.msra.mxu0 0.0
    %5711 = vmatprep.subr.mxu0 0.0
    %5712 = vmatpush1.msra.mxu0 0.0
    %5713 = vmatprep.subr.mxu0 0.0
    %5714 = vmatpush1.msra.mxu0 0.0
    %5715 = vmatprep.subr.mxu0 0.0
    %5716 = vmatpush1.msra.mxu0 0.0
    %5717 = vmatprep.subr.mxu0 0.0
    %5718 = vmatpush1.msra.mxu0 0.0
    %5719 = vmatprep.mubr.f32.mxu0 0.0
    %5720 = vmatmul.mubr.f32.gmra.mrb[0].mxu0 0.0
    %v5721 = vpop.f32.mrb[0].mxu0
    %v5722 = vadd.f32 0.0, %v5721
    %v5723 = vpop.f32.mrb[0].mxu0
    %v5724 = vadd.f32 0.0, %v5723
    %5725 = vdwg.mxu0
    %5726 = vmatprep.subr.mxu0 %v5590
    %5727 = vmatpush1.msra.mxu0 %v5589
    %5728 = vmatprep.subr.mxu0 %v5594
    %5729 = vmatpush1.msra.mxu0 %v5593
    %5730 = vmatprep.subr.mxu0 %v5598
    %5731 = vmatpush1.msra.mxu0 %v5597
    %5732 = vmatprep.subr.mxu0 %v5602
    %5733 = vmatpush1.msra.mxu0 %v5601
    %5734 = vmatprep.subr.mxu0 %v5606
    %5735 = vmatpush1.msra.mxu0 %v5605
    %5736 = vmatprep.subr.mxu0 %v5610
    %5737 = vmatpush1.msra.mxu0 %v5609
    %5738 = vmatprep.subr.mxu0 %v5614
    %5739 = vmatpush1.msra.mxu0 %v5613
    %5740 = vmatprep.subr.mxu0 %v5618
    %5741 = vmatpush1.msra.mxu0 %v5617
    %5742 = vmatprep.subr.mxu0 %v5622
    %5743 = vmatpush1.msra.mxu0 %v5621
    %5744 = vmatprep.subr.mxu0 %v5626
    %5745 = vmatpush1.msra.mxu0 %v5625
    %5746 = vmatprep.subr.mxu0 %v5630
    %5747 = vmatpush1.msra.mxu0 %v5629
    %5748 = vmatprep.subr.mxu0 %v5634
    %5749 = vmatpush1.msra.mxu0 %v5633
    %5750 = vmatprep.subr.mxu0 %v5638
    %5751 = vmatpush1.msra.mxu0 %v5637
    %5752 = vmatprep.subr.mxu0 %v5642
    %5753 = vmatpush1.msra.mxu0 %v5641
    %5754 = vmatprep.subr.mxu0 %v5646
    %5755 = vmatpush1.msra.mxu0 %v5645
    %5756 = vmatprep.subr.mxu0 %v5650
    %5757 = vmatpush1.msra.mxu0 %v5649
    %5758 = vmatprep.subr.mxu0 0.0
    %5759 = vmatpush1.msra.mxu0 0.0
    %5760 = vmatprep.subr.mxu0 0.0
    %5761 = vmatpush1.msra.mxu0 0.0
    %5762 = vmatprep.subr.mxu0 0.0
    %5763 = vmatpush1.msra.mxu0 0.0
    %5764 = vmatprep.subr.mxu0 0.0
    %5765 = vmatpush1.msra.mxu0 0.0
    %5766 = vmatprep.subr.mxu0 0.0
    %5767 = vmatpush1.msra.mxu0 0.0
    %5768 = vmatprep.subr.mxu0 0.0
    %5769 = vmatpush1.msra.mxu0 0.0
    %5770 = vmatprep.subr.mxu0 0.0
    %5771 = vmatpush1.msra.mxu0 0.0
    %5772 = vmatprep.subr.mxu0 0.0
    %5773 = vmatpush1.msra.mxu0 0.0
    %5774 = vmatprep.subr.mxu0 0.0
    %5775 = vmatpush1.msra.mxu0 0.0
    %5776 = vmatprep.subr.mxu0 0.0
    %5777 = vmatpush1.msra.mxu0 0.0
    %5778 = vmatprep.subr.mxu0 0.0
    %5779 = vmatpush1.msra.mxu0 0.0
    %5780 = vmatprep.subr.mxu0 0.0
    %5781 = vmatpush1.msra.mxu0 0.0
    %5782 = vmatprep.subr.mxu0 0.0
    %5783 = vmatpush1.msra.mxu0 0.0
    %5784 = vmatprep.subr.mxu0 0.0
    %5785 = vmatpush1.msra.mxu0 0.0
    %5786 = vmatprep.subr.mxu0 0.0
    %5787 = vmatpush1.msra.mxu0 0.0
    %5788 = vmatprep.subr.mxu0 0.0
    %5789 = vmatpush1.msra.mxu0 0.0
    %5790 = vmatprep.mubr.f32.mxu0 0.0
    %5791 = vmatmul.mubr.f32.gmra.mrb[0].mxu0 0.0
    %v5792 = vpop.f32.mrb[0].mxu0
    %v5793 = vadd.f32 0.0, %v5792
    %v5794 = vpop.f32.mrb[0].mxu0
    %v5795 = vadd.f32 0.0, %v5794
    %5796 = vdwg.mxu0
    %v5797 = vadd.f32 %v5651, %v5722
    %v5798 = vadd.f32 %v5652, %v5724
    %v5799 = vadd.f32 %v5653, %v5793
    %v5800 = vadd.f32 %v5654, %v5795
    %v5801 = vxor.u32 %v5797, 2147483648
    %v5802 = vmul.f32 %v5801, 1.442695
    %v5803 = vpow.pop %v5802
    %v5804 = vadd.f32 %v5803, 1.0
    %v5805 = vrcp.pop %v5804
    %v5806 = vmul.f32 1.0, %v5805
    %v5807 = vxor.u32 %v5798, 2147483648
    %v5808 = vmul.f32 %v5807, 1.442695
    %v5809 = vpow.pop %v5808
    %v5810 = vadd.f32 %v5809, 1.0
    %v5811 = vrcp.pop %v5810
    %v5812 = vmul.f32 1.0, %v5811
    %v5813 = vtanh.pop %v5799
    %v5814 = vxor.u32 %v5800, 2147483648
    %v5815 = vmul.f32 %v5814, 1.442695
    %v5816 = vpow.pop %v5815
    %v5817 = vadd.f32 %v5816, 1.0
    %v5818 = vrcp.pop %v5817
    %v5819 = vmul.f32 1.0, %v5818
    %v5820 = vmul.f32 %v5812, 0.0
    %v5821 = vmul.f32 %v5806, %v5813
    %v5822 = vadd.f32 %v5820, %v5821
    %v5823 = vtanh.pop %v5822
    %v5824 = vmul.f32 %v5819, %v5823
    %5825 = vst [vmem:[%s15] sm:$0xff] %v5824
    %v5826 = vld [vmem:[#allocation4 + $0x20] sm:$0xff]
    %v5827 = vld [vmem:[#allocation4 + $0x28] sm:$0xff]
    %v5828 = vld [vmem:[#allocation4 + $0x30] sm:$0xff]
    %v5829 = vld [vmem:[#allocation4 + $0x38] sm:$0xff]
    %5830 = vmatprep.subr.mxu0 %v5588
    %5831 = vmatpush1.msra.mxu0 %v5587
    %5832 = vmatprep.subr.mxu0 %v5592
    %5833 = vmatpush1.msra.mxu0 %v5591
    %5834 = vmatprep.subr.mxu0 %v5596
    %5835 = vmatpush1.msra.mxu0 %v5595
    %5836 = vmatprep.subr.mxu0 %v5600
    %5837 = vmatpush1.msra.mxu0 %v5599
    %5838 = vmatprep.subr.mxu0 %v5604
    %5839 = vmatpush1.msra.mxu0 %v5603
    %5840 = vmatprep.subr.mxu0 %v5608
    %5841 = vmatpush1.msra.mxu0 %v5607
    %5842 = vmatprep.subr.mxu0 %v5612
    %5843 = vmatpush1.msra.mxu0 %v5611
    %5844 = vmatprep.subr.mxu0 %v5616
    %5845 = vmatpush1.msra.mxu0 %v5615
    %5846 = vmatprep.subr.mxu0 %v5620
    %5847 = vmatpush1.msra.mxu0 %v5619
    %5848 = vmatprep.subr.mxu0 %v5624
    %5849 = vmatpush1.msra.mxu0 %v5623
    %5850 = vmatprep.subr.mxu0 %v5628
    %5851 = vmatpush1.msra.mxu0 %v5627
    %5852 = vmatprep.subr.mxu0 %v5632
    %5853 = vmatpush1.msra.mxu0 %v5631
    %5854 = vmatprep.subr.mxu0 %v5636
    %5855 = vmatpush1.msra.mxu0 %v5635
    %5856 = vmatprep.subr.mxu0 %v5640
    %5857 = vmatpush1.msra.mxu0 %v5639
    %5858 = vmatprep.subr.mxu0 %v5644
    %5859 = vmatpush1.msra.mxu0 %v5643
    %5860 = vmatprep.subr.mxu0 %v5648
    %5861 = vmatpush1.msra.mxu0 %v5647
    %5862 = vmatprep.subr.mxu0 0.0
    %5863 = vmatpush1.msra.mxu0 0.0
    %5864 = vmatprep.subr.mxu0 0.0
    %5865 = vmatpush1.msra.mxu0 0.0
    %5866 = vmatprep.subr.mxu0 0.0
    %5867 = vmatpush1.msra.mxu0 0.0
    %5868 = vmatprep.subr.mxu0 0.0
    %5869 = vmatpush1.msra.mxu0 0.0
    %5870 = vmatprep.subr.mxu0 0.0
    %5871 = vmatpush1.msra.mxu0 0.0
    %5872 = vmatprep.subr.mxu0 0.0
    %5873 = vmatpush1.msra.mxu0 0.0
    %5874 = vmatprep.subr.mxu0 0.0
    %5875 = vmatpush1.msra.mxu0 0.0
    %5876 = vmatprep.subr.mxu0 0.0
    %5877 = vmatpush1.msra.mxu0 0.0
    %5878 = vmatprep.subr.mxu0 0.0
    %5879 = vmatpush1.msra.mxu0 0.0
    %5880 = vmatprep.subr.mxu0 0.0
    %5881 = vmatpush1.msra.mxu0 0.0
    %5882 = vmatprep.subr.mxu0 0.0
    %5883 = vmatpush1.msra.mxu0 0.0
    %5884 = vmatprep.subr.mxu0 0.0
    %5885 = vmatpush1.msra.mxu0 0.0
    %5886 = vmatprep.subr.mxu0 0.0
    %5887 = vmatpush1.msra.mxu0 0.0
    %5888 = vmatprep.subr.mxu0 0.0
    %5889 = vmatpush1.msra.mxu0 0.0
    %5890 = vmatprep.subr.mxu0 0.0
    %5891 = vmatpush1.msra.mxu0 0.0
    %5892 = vmatprep.subr.mxu0 0.0
    %5893 = vmatpush1.msra.mxu0 0.0
    %5894 = vmatprep.mubr.f32.mxu0 0.0
    %5895 = vmatmul.mubr.f32.gmra.mrb[0].mxu0 %v5824
    %v5896 = vpop.f32.mrb[0].mxu0
    %v5897 = vadd.f32 0.0, %v5896
    %v5898 = vpop.f32.mrb[0].mxu0
    %v5899 = vadd.f32 0.0, %v5898
    %5900 = vdwg.mxu0
    %5901 = vmatprep.subr.mxu0 %v5590
    %5902 = vmatpush1.msra.mxu0 %v5589
    %5903 = vmatprep.subr.mxu0 %v5594
    %5904 = vmatpush1.msra.mxu0 %v5593
    %5905 = vmatprep.subr.mxu0 %v5598
    %5906 = vmatpush1.msra.mxu0 %v5597
    %5907 = vmatprep.subr.mxu0 %v5602
    %5908 = vmatpush1.msra.mxu0 %v5601
    %5909 = vmatprep.subr.mxu0 %v5606
    %5910 = vmatpush1.msra.mxu0 %v5605
    %5911 = vmatprep.subr.mxu0 %v5610
    %5912 = vmatpush1.msra.mxu0 %v5609
    %5913 = vmatprep.subr.mxu0 %v5614
    %5914 = vmatpush1.msra.mxu0 %v5613
    %5915 = vmatprep.subr.mxu0 %v5618
    %5916 = vmatpush1.msra.mxu0 %v5617
    %5917 = vmatprep.subr.mxu0 %v5622
    %5918 = vmatpush1.msra.mxu0 %v5621
    %5919 = vmatprep.subr.mxu0 %v5626
    %5920 = vmatpush1.msra.mxu0 %v5625
    %5921 = vmatprep.subr.mxu0 %v5630
    %5922 = vmatpush1.msra.mxu0 %v5629
    %5923 = vmatprep.subr.mxu0 %v5634
    %5924 = vmatpush1.msra.mxu0 %v5633
    %5925 = vmatprep.subr.mxu0 %v5638
    %5926 = vmatpush1.msra.mxu0 %v5637
    %5927 = vmatprep.subr.mxu0 %v5642
    %5928 = vmatpush1.msra.mxu0 %v5641
    %5929 = vmatprep.subr.mxu0 %v5646
    %5930 = vmatpush1.msra.mxu0 %v5645
    %5931 = vmatprep.subr.mxu0 %v5650
    %5932 = vmatpush1.msra.mxu0 %v5649
    %5933 = vmatprep.subr.mxu0 0.0
    %5934 = vmatpush1.msra.mxu0 0.0
    %5935 = vmatprep.subr.mxu0 0.0
    %5936 = vmatpush1.msra.mxu0 0.0
    %5937 = vmatprep.subr.mxu0 0.0
    %5938 = vmatpush1.msra.mxu0 0.0
    %5939 = vmatprep.subr.mxu0 0.0
    %5940 = vmatpush1.msra.mxu0 0.0
    %5941 = vmatprep.subr.mxu0 0.0
    %5942 = vmatpush1.msra.mxu0 0.0
    %5943 = vmatprep.subr.mxu0 0.0
    %5944 = vmatpush1.msra.mxu0 0.0
    %5945 = vmatprep.subr.mxu0 0.0
    %5946 = vmatpush1.msra.mxu0 0.0
    %5947 = vmatprep.subr.mxu0 0.0
    %5948 = vmatpush1.msra.mxu0 0.0
    %5949 = vmatprep.subr.mxu0 0.0
    %5950 = vmatpush1.msra.mxu0 0.0
    %5951 = vmatprep.subr.mxu0 0.0
    %5952 = vmatpush1.msra.mxu0 0.0
    %5953 = vmatprep.subr.mxu0 0.0
    %5954 = vmatpush1.msra.mxu0 0.0
    %5955 = vmatprep.subr.mxu0 0.0
    %5956 = vmatpush1.msra.mxu0 0.0
    %5957 = vmatprep.subr.mxu0 0.0
    %5958 = vmatpush1.msra.mxu0 0.0
    %5959 = vmatprep.subr.mxu0 0.0
    %5960 = vmatpush1.msra.mxu0 0.0
    %5961 = vmatprep.subr.mxu0 0.0
    %5962 = vmatpush1.msra.mxu0 0.0
    %5963 = vmatprep.subr.mxu0 0.0
    %5964 = vmatpush1.msra.mxu0 0.0
    %5965 = vmatprep.mubr.f32.mxu0 0.0
    %5966 = vmatmul.mubr.f32.gmra.mrb[0].mxu0 %v5824
    %v5967 = vpop.f32.mrb[0].mxu0
    %v5968 = vadd.f32 0.0, %v5967
    %v5969 = vpop.f32.mrb[0].mxu0
    %v5970 = vadd.f32 0.0, %v5969
    %5971 = vdwg.mxu0
    %v5972 = vadd.f32 %v5826, %v5897
    %v5973 = vadd.f32 %v5827, %v5899
    %v5974 = vadd.f32 %v5828, %v5968
    %v5975 = vadd.f32 %v5829, %v5970
    %v5976 = vxor.u32 %v5972, 2147483648
    %v5977 = vmul.f32 %v5976, 1.442695
    %v5978 = vpow.pop %v5977
    %v5979 = vadd.f32 %v5978, 1.0
    %v5980 = vrcp.pop %v5979
    %v5981 = vmul.f32 1.0, %v5980
    %v5982 = vxor.u32 %v5973, 2147483648
    %v5983 = vmul.f32 %v5982, 1.442695
    %v5984 = vpow.pop %v5983
    %v5985 = vadd.f32 %v5984, 1.0
    %v5986 = vrcp.pop %v5985
    %v5987 = vmul.f32 1.0, %v5986
    %v5988 = vtanh.pop %v5974
    %v5989 = vxor.u32 %v5975, 2147483648
    %v5990 = vmul.f32 %v5989, 1.442695
    %v5991 = vpow.pop %v5990
    %v5992 = vadd.f32 %v5991, 1.0
    %v5993 = vrcp.pop %v5992
    %v5994 = vmul.f32 1.0, %v5993
    %v5995 = vmul.f32 %v5987, %v5822
    %v5996 = vmul.f32 %v5981, %v5988
    %v5997 = vadd.f32 %v5995, %v5996
    %v5998 = vtanh.pop %v5997
    %v5999 = vmul.f32 %v5994, %v5998
    %s6000 = scalar_lea.vmem %s15, 8
    %6001 = vst [vmem:[%s6000] sm:$0xff] %v5999
    %v6002 = vld [vmem:[#allocation4 + $0x40] sm:$0xff]
    %v6003 = vld [vmem:[#allocation4 + $0x48] sm:$0xff]
    %v6004 = vld [vmem:[#allocation4 + $0x50] sm:$0xff]
    %v6005 = vld [vmem:[#allocation4 + $0x58] sm:$0xff]
    %6006 = vmatprep.subr.mxu0 %v5588
    %6007 = vmatpush1.msra.mxu0 %v5587
    %6008 = vmatprep.subr.mxu0 %v5592
    %6009 = vmatpush1.msra.mxu0 %v5591
    %6010 = vmatprep.subr.mxu0 %v5596
    %6011 = vmatpush1.msra.mxu0 %v5595
    %6012 = vmatprep.subr.mxu0 %v5600
    %6013 = vmatpush1.msra.mxu0 %v5599
    %6014 = vmatprep.subr.mxu0 %v5604
    %6015 = vmatpush1.msra.mxu0 %v5603
    %6016 = vmatprep.subr.mxu0 %v5608
    %6017 = vmatpush1.msra.mxu0 %v5607
    %6018 = vmatprep.subr.mxu0 %v5612
    %6019 = vmatpush1.msra.mxu0 %v5611
    %6020 = vmatprep.subr.mxu0 %v5616
    %6021 = vmatpush1.msra.mxu0 %v5615
    %6022 = vmatprep.subr.mxu0 %v5620
    %6023 = vmatpush1.msra.mxu0 %v5619
    %6024 = vmatprep.subr.mxu0 %v5624
    %6025 = vmatpush1.msra.mxu0 %v5623
    %6026 = vmatprep.subr.mxu0 %v5628
    %6027 = vmatpush1.msra.mxu0 %v5627
    %6028 = vmatprep.subr.mxu0 %v5632
    %6029 = vmatpush1.msra.mxu0 %v5631
    %6030 = vmatprep.subr.mxu0 %v5636
    %6031 = vmatpush1.msra.mxu0 %v5635
    %6032 = vmatprep.subr.mxu0 %v5640
    %6033 = vmatpush1.msra.mxu0 %v5639
    %6034 = vmatprep.subr.mxu0 %v5644
    %6035 = vmatpush1.msra.mxu0 %v5643
    %6036 = vmatprep.subr.mxu0 %v5648
    %6037 = vmatpush1.msra.mxu0 %v5647
    %6038 = vmatprep.subr.mxu0 0.0
    %6039 = vmatpush1.msra.mxu0 0.0
    %6040 = vmatprep.subr.mxu0 0.0
    %6041 = vmatpush1.msra.mxu0 0.0
    %6042 = vmatprep.subr.mxu0 0.0
    %6043 = vmatpush1.msra.mxu0 0.0
    %6044 = vmatprep.subr.mxu0 0.0
    %6045 = vmatpush1.msra.mxu0 0.0
    %6046 = vmatprep.subr.mxu0 0.0
    %6047 = vmatpush1.msra.mxu0 0.0
    %6048 = vmatprep.subr.mxu0 0.0
    %6049 = vmatpush1.msra.mxu0 0.0
    %6050 = vmatprep.subr.mxu0 0.0
    %6051 = vmatpush1.msra.mxu0 0.0
    %6052 = vmatprep.subr.mxu0 0.0
    %6053 = vmatpush1.msra.mxu0 0.0
    %6054 = vmatprep.subr.mxu0 0.0
    %6055 = vmatpush1.msra.mxu0 0.0
    %6056 = vmatprep.subr.mxu0 0.0
    %6057 = vmatpush1.msra.mxu0 0.0
    %6058 = vmatprep.subr.mxu0 0.0
    %6059 = vmatpush1.msra.mxu0 0.0
    %6060 = vmatprep.subr.mxu0 0.0
    %6061 = vmatpush1.msra.mxu0 0.0
    %6062 = vmatprep.subr.mxu0 0.0
    %6063 = vmatpush1.msra.mxu0 0.0
    %6064 = vmatprep.subr.mxu0 0.0
    %6065 = vmatpush1.msra.mxu0 0.0
    %6066 = vmatprep.subr.mxu0 0.0
    %6067 = vmatpush1.msra.mxu0 0.0
    %6068 = vmatprep.subr.mxu0 0.0
    %6069 = vmatpush1.msra.mxu0 0.0
    %6070 = vmatprep.mubr.f32.mxu0 0.0
    %6071 = vmatmul.mubr.f32.gmra.mrb[0].mxu0 %v5999
    %v6072 = vpop.f32.mrb[0].mxu0
    %v6073 = vadd.f32 0.0, %v6072
    %v6074 = vpop.f32.mrb[0].mxu0
    %v6075 = vadd.f32 0.0, %v6074
    %6076 = vdwg.mxu0
    %6077 = vmatprep.subr.mxu0 %v5590
    %6078 = vmatpush1.msra.mxu0 %v5589
    %6079 = vmatprep.subr.mxu0 %v5594
    %6080 = vmatpush1.msra.mxu0 %v5593
    %6081 = vmatprep.subr.mxu0 %v5598
    %6082 = vmatpush1.msra.mxu0 %v5597
    %6083 = vmatprep.subr.mxu0 %v5602
    %6084 = vmatpush1.msra.mxu0 %v5601
    %6085 = vmatprep.subr.mxu0 %v5606
    %6086 = vmatpush1.msra.mxu0 %v5605
    %6087 = vmatprep.subr.mxu0 %v5610
    %6088 = vmatpush1.msra.mxu0 %v5609
    %6089 = vmatprep.subr.mxu0 %v5614
    %6090 = vmatpush1.msra.mxu0 %v5613
    %6091 = vmatprep.subr.mxu0 %v5618
    %6092 = vmatpush1.msra.mxu0 %v5617
    %6093 = vmatprep.subr.mxu0 %v5622
    %6094 = vmatpush1.msra.mxu0 %v5621
    %6095 = vmatprep.subr.mxu0 %v5626
    %6096 = vmatpush1.msra.mxu0 %v5625
    %6097 = vmatprep.subr.mxu0 %v5630
    %6098 = vmatpush1.msra.mxu0 %v5629
    %6099 = vmatprep.subr.mxu0 %v5634
    %6100 = vmatpush1.msra.mxu0 %v5633
    %6101 = vmatprep.subr.mxu0 %v5638
    %6102 = vmatpush1.msra.mxu0 %v5637
    %6103 = vmatprep.subr.mxu0 %v5642
    %6104 = vmatpush1.msra.mxu0 %v5641
    %6105 = vmatprep.subr.mxu0 %v5646
    %6106 = vmatpush1.msra.mxu0 %v5645
    %6107 = vmatprep.subr.mxu0 %v5650
    %6108 = vmatpush1.msra.mxu0 %v5649
    %6109 = vmatprep.subr.mxu0 0.0
    %6110 = vmatpush1.msra.mxu0 0.0
    %6111 = vmatprep.subr.mxu0 0.0
    %6112 = vmatpush1.msra.mxu0 0.0
    %6113 = vmatprep.subr.mxu0 0.0
    %6114 = vmatpush1.msra.mxu0 0.0
    %6115 = vmatprep.subr.mxu0 0.0
    %6116 = vmatpush1.msra.mxu0 0.0
    %6117 = vmatprep.subr.mxu0 0.0
    %6118 = vmatpush1.msra.mxu0 0.0
    %6119 = vmatprep.subr.mxu0 0.0
    %6120 = vmatpush1.msra.mxu0 0.0
    %6121 = vmatprep.subr.mxu0 0.0
    %6122 = vmatpush1.msra.mxu0 0.0
    %6123 = vmatprep.subr.mxu0 0.0
    %6124 = vmatpush1.msra.mxu0 0.0
    %6125 = vmatprep.subr.mxu0 0.0
    %6126 = vmatpush1.msra.mxu0 0.0
    %6127 = vmatprep.subr.mxu0 0.0
    %6128 = vmatpush1.msra.mxu0 0.0
    %6129 = vmatprep.subr.mxu0 0.0
    %6130 = vmatpush1.msra.mxu0 0.0
    %6131 = vmatprep.subr.mxu0 0.0
    %6132 = vmatpush1.msra.mxu0 0.0
    %6133 = vmatprep.subr.mxu0 0.0
    %6134 = vmatpush1.msra.mxu0 0.0
    %6135 = vmatprep.subr.mxu0 0.0
    %6136 = vmatpush1.msra.mxu0 0.0
    %6137 = vmatprep.subr.mxu0 0.0
    %6138 = vmatpush1.msra.mxu0 0.0
    %6139 = vmatprep.subr.mxu0 0.0
    %6140 = vmatpush1.msra.mxu0 0.0
    %6141 = vmatprep.mubr.f32.mxu0 0.0
    %6142 = vmatmul.mubr.f32.gmra.mrb[0].mxu0 %v5999
    %v6143 = vpop.f32.mrb[0].mxu0
    %v6144 = vadd.f32 0.0, %v6143
    %v6145 = vpop.f32.mrb[0].mxu0
    %v6146 = vadd.f32 0.0, %v6145
    %6147 = vdwg.mxu0
    %v6148 = vadd.f32 %v6002, %v6073
    %v6149 = vadd.f32 %v6003, %v6075
    %v6150 = vadd.f32 %v6004, %v6144
    %v6151 = vadd.f32 %v6005, %v6146
    %v6152 = vxor.u32 %v6148, 2147483648
    %v6153 = vmul.f32 %v6152, 1.442695
    %v6154 = vpow.pop %v6153
    %v6155 = vadd.f32 %v6154, 1.0
    %v6156 = vrcp.pop %v6155
    %v6157 = vmul.f32 1.0, %v6156
    %v6158 = vxor.u32 %v6149, 2147483648
    %v6159 = vmul.f32 %v6158, 1.442695
    %v6160 = vpow.pop %v6159
    %v6161 = vadd.f32 %v6160, 1.0
    %v6162 = vrcp.pop %v6161
    %v6163 = vmul.f32 1.0, %v6162
    %v6164 = vtanh.pop %v6150
    %v6165 = vxor.u32 %v6151, 2147483648
    %v6166 = vmul.f32 %v6165, 1.442695
    %v6167 = vpow.pop %v6166
    %v6168 = vadd.f32 %v6167, 1.0
    %v6169 = vrcp.pop %v6168
    %v6170 = vmul.f32 1.0, %v6169
    %v6171 = vmul.f32 %v6163, %v5997
    %v6172 = vmul.f32 %v6157, %v6164
    %v6173 = vadd.f32 %v6171, %v6172
    %v6174 = vtanh.pop %v6173
    %v6175 = vmul.f32 %v6170, %v6174
    %s6176 = scalar_lea.vmem %s15, 16
    %6177 = vst [vmem:[%s6176] sm:$0xff] %v6175
    %v6178 = vld [vmem:[%s10] sm:$0xff]
    %v6179 = vld [vmem:[%s10 + $0x8] sm:$0xff]
    %v6180 = vld [vmem:[%s10 + $0x10] sm:$0xff]
    %v6181 = vld [vmem:[%s10 + $0x18] sm:$0xff]
    %v6182 = vld [vmem:[%s10 + $0x20] sm:$0xff]
    %v6183 = vld [vmem:[%s10 + $0x28] sm:$0xff]
    %v6184 = vld [vmem:[%s10 + $0x30] sm:$0xff]
    %v6185 = vld [vmem:[%s10 + $0x38] sm:$0xff]
    %v6186 = vld [vmem:[%s10 + $0x40] sm:$0xff]
    %v6187 = vld [vmem:[%s10 + $0x48] sm:$0xff]
    %v6188 = vld [vmem:[%s10 + $0x50] sm:$0xff]
    %v6189 = vld [vmem:[%s10 + $0x58] sm:$0xff]
    %v6190 = vld [vmem:[%s10 + $0x60] sm:$0xff]
    %v6191 = vld [vmem:[%s10 + $0x68] sm:$0xff]
    %v6192 = vld [vmem:[%s10 + $0x70] sm:$0xff]
    %v6193 = vld [vmem:[%s10 + $0x78] sm:$0xff]
    %v6194 = vld [vmem:[%s11] sm:$0x1]
    %v6196 = vlaneseq
    %v6197 = vshrl.u32 %v6196, 7
    %v6198 = vsub.s32 0, %v6197
    %v6199 = vrot.slane %v6194, %v6198
    %6201 = vmatprep.subr.mxu0 0.0
    %6202 = vmatpush1.msra.mxu0 %v6178
    %6203 = vmatprep.subr.mxu0 0.0
    %6204 = vmatpush1.msra.mxu0 %v6179
    %6205 = vmatprep.subr.mxu0 0.0
    %6206 = vmatpush1.msra.mxu0 %v6180
    %6207 = vmatprep.subr.mxu0 0.0
    %6208 = vmatpush1.msra.mxu0 %v6181
    %6209 = vmatprep.subr.mxu0 0.0
    %6210 = vmatpush1.msra.mxu0 %v6182
    %6211 = vmatprep.subr.mxu0 0.0
    %6212 = vmatpush1.msra.mxu0 %v6183
    %6213 = vmatprep.subr.mxu0 0.0
    %6214 = vmatpush1.msra.mxu0 %v6184
    %6215 = vmatprep.subr.mxu0 0.0
    %6216 = vmatpush1.msra.mxu0 %v6185
    %6217 = vmatprep.subr.mxu0 0.0
    %6218 = vmatpush1.msra.mxu0 %v6186
    %6219 = vmatprep.subr.mxu0 0.0
    %6220 = vmatpush1.msra.mxu0 %v6187
    %6221 = vmatprep.subr.mxu0 0.0
    %6222 = vmatpush1.msra.mxu0 %v6188
    %6223 = vmatprep.subr.mxu0 0.0
    %6224 = vmatpush1.msra.mxu0 %v6189
    %6225 = vmatprep.subr.mxu0 0.0
    %6226 = vmatpush1.msra.mxu0 %v6190
    %6227 = vmatprep.subr.mxu0 0.0
    %6228 = vmatpush1.msra.mxu0 %v6191
    %6229 = vmatprep.subr.mxu0 0.0
    %6230 = vmatpush1.msra.mxu0 %v6192
    %6231 = vmatprep.subr.mxu0 0.0
    %6232 = vmatpush1.msra.mxu0 %v6193
    %6233 = vmatprep.subr.mxu0 0.0
    %6234 = vmatpush1.msra.mxu0 0.0
    %6235 = vmatprep.subr.mxu0 0.0
    %6236 = vmatpush1.msra.mxu0 0.0
    %6237 = vmatprep.subr.mxu0 0.0
    %6238 = vmatpush1.msra.mxu0 0.0
    %6239 = vmatprep.subr.mxu0 0.0
    %6240 = vmatpush1.msra.mxu0 0.0
    %6241 = vmatprep.subr.mxu0 0.0
    %6242 = vmatpush1.msra.mxu0 0.0
    %6243 = vmatprep.subr.mxu0 0.0
    %6244 = vmatpush1.msra.mxu0 0.0
    %6245 = vmatprep.subr.mxu0 0.0
    %6246 = vmatpush1.msra.mxu0 0.0
    %6247 = vmatprep.subr.mxu0 0.0
    %6248 = vmatpush1.msra.mxu0 0.0
    %6249 = vmatprep.subr.mxu0 0.0
    %6250 = vmatpush1.msra.mxu0 0.0
    %6251 = vmatprep.subr.mxu0 0.0
    %6252 = vmatpush1.msra.mxu0 0.0
    %6253 = vmatprep.subr.mxu0 0.0
    %6254 = vmatpush1.msra.mxu0 0.0
    %6255 = vmatprep.subr.mxu0 0.0
    %6256 = vmatpush1.msra.mxu0 0.0
    %6257 = vmatprep.subr.mxu0 0.0
    %6258 = vmatpush1.msra.mxu0 0.0
    %6259 = vmatprep.subr.mxu0 0.0
    %6260 = vmatpush1.msra.mxu0 0.0
    %6261 = vmatprep.subr.mxu0 0.0
    %6262 = vmatpush1.msra.mxu0 0.0
    %6263 = vmatprep.subr.mxu0 0.0
    %6264 = vmatpush1.msra.mxu0 0.0
    %6265 = vmatprep.mubr.f32.mxu0 0.0
    %6266 = vmatmul.mubr.f32.gmra.mrb[0].mxu0 %v6175
    %v6267 = vpop.f32.mrb[0].mxu0
    %v6268 = vadd.f32 %v6199, %v6267
    %v6269 = vpop.f32.mrb[0].mxu0
    %6270 = vdwg.mxu0
    %v6271 = vld [vmem:[%s12] sm:$0xff]
    %v6272 = vld [vmem:[%s12 + $0x8] sm:$0xff]
    %v6273 = vld [vmem:[%s12 + $0x10] sm:$0xff]
    %v6274 = vld [vmem:[%s12 + $0x18] sm:$0xff]
    %v6275 = vld [vmem:[%s12 + $0x20] sm:$0xff]
    %v6276 = vld [vmem:[%s12 + $0x28] sm:$0xff]
    %v6277 = vld [vmem:[%s12 + $0x30] sm:$0xff]
    %v6278 = vld [vmem:[%s12 + $0x38] sm:$0xff]
    %v6279 = vld [vmem:[%s12 + $0x40] sm:$0xff]
    %v6280 = vld [vmem:[%s12 + $0x48] sm:$0xff]
    %v6281 = vld [vmem:[%s12 + $0x50] sm:$0xff]
    %v6282 = vld [vmem:[%s12 + $0x58] sm:$0xff]
    %v6283 = vld [vmem:[%s12 + $0x60] sm:$0xff]
    %v6284 = vld [vmem:[%s12 + $0x68] sm:$0xff]
    %v6285 = vld [vmem:[%s12 + $0x70] sm:$0xff]
    %v6286 = vld [vmem:[%s12 + $0x78] sm:$0xff]
    %v6287 = vld [vmem:[%s13] sm:$0x1]
    %v6289 = vlaneseq
    %v6290 = vshrl.u32 %v6289, 7
    %v6291 = vsub.s32 0, %v6290
    %v6292 = vrot.slane %v6287, %v6291
    %6294 = vmatprep.subr.mxu0 0.0
    %6295 = vmatpush1.msra.mxu0 %v6271
    %6296 = vmatprep.subr.mxu0 0.0
    %6297 = vmatpush1.msra.mxu0 %v6272
    %6298 = vmatprep.subr.mxu0 0.0
    %6299 = vmatpush1.msra.mxu0 %v6273
    %6300 = vmatprep.subr.mxu0 0.0
    %6301 = vmatpush1.msra.mxu0 %v6274
    %6302 = vmatprep.subr.mxu0 0.0
    %6303 = vmatpush1.msra.mxu0 %v6275
    %6304 = vmatprep.subr.mxu0 0.0
    %6305 = vmatpush1.msra.mxu0 %v6276
    %6306 = vmatprep.subr.mxu0 0.0
    %6307 = vmatpush1.msra.mxu0 %v6277
    %6308 = vmatprep.subr.mxu0 0.0
    %6309 = vmatpush1.msra.mxu0 %v6278
    %6310 = vmatprep.subr.mxu0 0.0
    %6311 = vmatpush1.msra.mxu0 %v6279
    %6312 = vmatprep.subr.mxu0 0.0
    %6313 = vmatpush1.msra.mxu0 %v6280
    %6314 = vmatprep.subr.mxu0 0.0
    %6315 = vmatpush1.msra.mxu0 %v6281
    %6316 = vmatprep.subr.mxu0 0.0
    %6317 = vmatpush1.msra.mxu0 %v6282
    %6318 = vmatprep.subr.mxu0 0.0
    %6319 = vmatpush1.msra.mxu0 %v6283
    %6320 = vmatprep.subr.mxu0 0.0
    %6321 = vmatpush1.msra.mxu0 %v6284
    %6322 = vmatprep.subr.mxu0 0.0
    %6323 = vmatpush1.msra.mxu0 %v6285
    %6324 = vmatprep.subr.mxu0 0.0
    %6325 = vmatpush1.msra.mxu0 %v6286
    %6326 = vmatprep.subr.mxu0 0.0
    %6327 = vmatpush1.msra.mxu0 0.0
    %6328 = vmatprep.subr.mxu0 0.0
    %6329 = vmatpush1.msra.mxu0 0.0
    %6330 = vmatprep.subr.mxu0 0.0
    %6331 = vmatpush1.msra.mxu0 0.0
    %6332 = vmatprep.subr.mxu0 0.0
    %6333 = vmatpush1.msra.mxu0 0.0
    %6334 = vmatprep.subr.mxu0 0.0
    %6335 = vmatpush1.msra.mxu0 0.0
    %6336 = vmatprep.subr.mxu0 0.0
    %6337 = vmatpush1.msra.mxu0 0.0
    %6338 = vmatprep.subr.mxu0 0.0
    %6339 = vmatpush1.msra.mxu0 0.0
    %6340 = vmatprep.subr.mxu0 0.0
    %6341 = vmatpush1.msra.mxu0 0.0
    %6342 = vmatprep.subr.mxu0 0.0
    %6343 = vmatpush1.msra.mxu0 0.0
    %6344 = vmatprep.subr.mxu0 0.0
    %6345 = vmatpush1.msra.mxu0 0.0
    %6346 = vmatprep.subr.mxu0 0.0
    %6347 = vmatpush1.msra.mxu0 0.0
    %6348 = vmatprep.subr.mxu0 0.0
    %6349 = vmatpush1.msra.mxu0 0.0
    %6350 = vmatprep.subr.mxu0 0.0
    %6351 = vmatpush1.msra.mxu0 0.0
    %6352 = vmatprep.subr.mxu0 0.0
    %6353 = vmatpush1.msra.mxu0 0.0
    %6354 = vmatprep.subr.mxu0 0.0
    %6355 = vmatpush1.msra.mxu0 0.0
    %6356 = vmatprep.subr.mxu0 0.0
    %6357 = vmatpush1.msra.mxu0 0.0
    %6358 = vmatprep.mubr.f32.mxu0 0.0
    %6359 = vmatmul.mubr.f32.gmra.mrb[0].mxu0 %v6268
    %v6360 = vpop.f32.mrb[0].mxu0
    %v6361 = vadd.f32 %v6292, %v6360
    %v6362 = vpop.f32.mrb[0].mxu0
    %6363 = vdwg.mxu0
    %6364 = vst [vmem:[%s14] sm:$0xff] %v6361
    // Predicated region
    $region94: #{tclstm_forward.1} parent=1 // pred_check
      _
    $region95: #{tclstm_forward.1} parent=1 // pred_check_branch
      %6366 = sbr.rel (0) target = $region97
    $region96: #{tclstm_forward.1} parent=1 // pred_region
      _
    $region97: #{tclstm_forward.1} parent=1 // pred_fallthru
      _
    // Predicated region
    $region98: #{tclstm_forward.1} parent=1 // pred_check
      _
    $region99: #{tclstm_forward.1} parent=1 // pred_check_branch
      %6368 = sbr.rel (0) target = $region101
    $region100: #{tclstm_forward.1} parent=1 // pred_region
      _
    $region101: #{tclstm_forward.1} parent=1 // pred_fallthru
      _
    // Predicated region
    $region102: #{tclstm_forward.1} parent=1 // pred_check
      _
    $region103: #{tclstm_forward.1} parent=1 // pred_check_branch
      %6370 = sbr.rel (0) target = $region105
    $region104: #{tclstm_forward.1} parent=1 // pred_region
      _
    $region105: #{tclstm_forward.1} parent=1 // pred_fallthru
      _
    // Predicated region
    $region106: #{tclstm_forward.1} parent=1 // pred_check
      _
    $region107: #{tclstm_forward.1} parent=1 // pred_check_branch
      %6372 = sbr.rel (0) target = $region109
    $region108: #{tclstm_forward.1} parent=1 // pred_region
      _
    $region109: #{tclstm_forward.1} parent=1 // pred_fallthru
      _
    %6373 = vsyncpa [#allocation8], 1
    %6374 = vsyncpa [#allocation10], 1
    %6375 = vsyncpa [#allocation13], 1
    %6376 = vsyncpa [#allocation16], 1
    %6377 = vsyncpa [#allocation19], 1

</llo_original>
